<compile_context>
chip_gen: v6e
topology: v6e:2x2x1
jax: 0.10.0
libtpu: 0.0.40
codegen_flags: <defaults>
</compile_context>

<pallas_src>
import jax
import jax.numpy as jnp
from jax.experimental import pallas as pl
from jax.experimental.pallas import tpu as pltpu


# ---------------------------------------------------------------------------
# Fused per-bag kernel
# ---------------------------------------------------------------------------

def _attention_mil_kernel(xcat_ref, amask_ref, t1_ref, b1_ref, t2_ref, b2_ref,
                          wf1_ref, bf1_ref, wa1_ref, ba1_ref, wa2_ref, ba2_ref,
                          wc_ref, bc_ref, yprob_ref, yhat_ref, a_ref):
    f32 = jnp.float32
    bf16 = jnp.bfloat16
    n = xcat_ref.shape[0] // 12          # padded bag size (multiple of 8)

    def conv_pool(x_bf16, t_ref, bias):
        # 4 branches = (row parity hp, col parity wp); the elementwise max over
        # the branches IS the 2x2/stride-2 max-pool; bias+ReLU commute with it.
        m = jnp.dot(x_bf16, t_ref[0], preferred_element_type=f32)
        for b in range(1, 4):
            m = jnp.maximum(m, jnp.dot(x_bf16, t_ref[b],
                                       preferred_element_type=f32))
        return jnp.maximum(m + bias, 0.0)

    # conv1 + ReLU + pool: rows (q*n + i), lanes (w2*20 + cout) [240 used /256]
    pooled1 = conv_pool(xcat_ref[...], t1_ref, b1_ref[...])        # (12n, 256)

    # conv2 staging: xs2cat[h3*n + i, j*256 + lane] = pooled1[(2*h3+j)*n + i, lane]
    # Pure aligned sublane/lane slicing + concat (replaces the old O(N^2)
    # 0/1 selection matmuls that were the compute & VMEM scaling wall).
    slabs = []
    for j in range(6):
        slabs.append(jnp.concatenate(
            [pooled1[(2 * h3 + j) * n:(2 * h3 + j + 1) * n] for h3 in range(4)],
            axis=0))
    xs2cat = jnp.concatenate(slabs, axis=1).astype(bf16)           # (4n, 1536)

    # conv2 + ReLU + pool: rows (h3*n + i), lanes (w3*50 + cout) [200 used /256]
    feat = conv_pool(xs2cat, t2_ref, b2_ref[...])                  # (4n, 256)

    # fc1 + ReLU, h3 folded into the contraction (K = 4*256 = 1024)
    featcat = jnp.concatenate([feat[h * n:(h + 1) * n] for h in range(4)],
                              axis=1).astype(bf16)                 # (n, 1024)
    H = jnp.maximum(jnp.dot(featcat, wf1_ref[...],
                            preferred_element_type=f32) + bf1_ref[...], 0.0)

    # attention MLP + masked softmax over the bag (mask: 0 real / -1e30 pad)
    att = jnp.tanh(jnp.dot(H.astype(bf16), wa1_ref[...],
                           preferred_element_type=f32) + ba1_ref[...])  # (n,128)
    a = jnp.sum(att * wa2_ref[...], axis=1, keepdims=True) + ba2_ref[...]
    a = a + amask_ref[...]                                          # (n, 1)
    a_max = jnp.max(a, axis=0, keepdims=True)
    e = jnp.exp(a - a_max)
    A_col = e / jnp.sum(e, axis=0, keepdims=True)                   # (n, 1)

    # bag embedding + classifier + sigmoid + threshold
    # TODO(synk): for very large bags compute M = A @ H on the MXU instead of
    # the sublane reduce (and tile the bag with an online softmax).
    M = jnp.sum(A_col * H, axis=0, keepdims=True)                   # (1, 500)
    logit = jnp.sum(M * wc_ref[...], axis=1, keepdims=True) + bc_ref[...]
    y_prob = 1.0 / (1.0 + jnp.exp(-logit))                          # (1, 1)

    yprob_ref[...] = y_prob
    yhat_ref[...] = jnp.where(y_prob >= 0.5, 1.0, 0.0)

    # lane-dense attention output (1, n): robust (N,1)->(1,N) relayout via
    # broadcast + diagonal mask + sublane reduce (avoids a generic reshape).
    rows = jax.lax.broadcasted_iota(jnp.int32, (n, n), 0)
    cols = jax.lax.broadcasted_iota(jnp.int32, (n, n), 1)
    a_ref[...] = jnp.sum(jnp.where(rows == cols, A_col, 0.0),
                         axis=0, keepdims=True)


# ---------------------------------------------------------------------------
# One-time, bag-size-independent parameter re-layout (outside the hot path)
# ---------------------------------------------------------------------------

def prepare_params(params):
    f32, bf16 = jnp.float32, jnp.bfloat16

    # conv1 banded weights, ki folded into K: 4 branches (hp, wp),
    # rows j*28 + w (K = 168), cols w2*20 + co (240, zero-padded to 256).
    w1 = params["conv1_w"][:, 0]                          # (20, 5, 5) [co,ki,kj]
    hp = jnp.arange(2).reshape(2, 1, 1, 1, 1, 1)
    wp = jnp.arange(2).reshape(1, 2, 1, 1, 1, 1)
    j = jnp.arange(6).reshape(1, 1, 6, 1, 1, 1)
    w = jnp.arange(28).reshape(1, 1, 1, 28, 1, 1)
    w2 = jnp.arange(12).reshape(1, 1, 1, 1, 12, 1)
    co = jnp.arange(20).reshape(1, 1, 1, 1, 1, 20)
    ki = j - hp
    kj = w - 2 * w2 - wp
    valid = (ki >= 0) & (ki < 5) & (kj >= 0) & (kj < 5)
    t1 = jnp.where(valid, w1[co, jnp.clip(ki, 0, 4), jnp.clip(kj, 0, 4)], 0.0)
    t1 = t1.reshape(4, 168, 240)
    t1 = jnp.pad(t1, ((0, 0), (0, 0), (0, 16))).astype(bf16)     # (4, 168, 256)

    # conv2 banded weights, ki folded into K: rows j*256 + (w2*20 + ci)
    # (K = 1536), cols w3*50 + co (200, zero-padded to 256).
    w2c = params["conv2_w"]                               # (50,20,5,5) [co,ci,ki,kj]
    hp = jnp.arange(2).reshape(2, 1, 1, 1, 1, 1, 1)
    wp = jnp.arange(2).reshape(1, 2, 1, 1, 1, 1, 1)
    j = jnp.arange(6).reshape(1, 1, 6, 1, 1, 1, 1)
    w2i = jnp.arange(12).reshape(1, 1, 1, 12, 1, 1, 1)
    ci = jnp.arange(20).reshape(1, 1, 1, 1, 20, 1, 1)
    w3 = jnp.arange(4).reshape(1, 1, 1, 1, 1, 4, 1)
    co = jnp.arange(50).reshape(1, 1, 1, 1, 1, 1, 50)
    ki = j - hp
    kj = w2i - 2 * w3 - wp
    valid = (ki >= 0) & (ki < 5) & (kj >= 0) & (kj < 5)
    t2 = jnp.where(valid, w2c[co, ci, jnp.clip(ki, 0, 4), jnp.clip(kj, 0, 4)], 0.0)
    t2 = t2.reshape(4, 6, 240, 200)
    t2 = jnp.pad(t2, ((0, 0), (0, 0), (0, 16), (0, 56)))
    t2 = t2.reshape(4, 1536, 256).astype(bf16)                   # (4, 1536, 256)

    # biases broadcast across pooled column positions, zero-padded to 256 lanes
    b1 = jnp.concatenate([jnp.tile(params["conv1_b"], 12),
                          jnp.zeros((16,), f32)]).reshape(1, 256).astype(f32)
    b2 = jnp.concatenate([jnp.tile(params["conv2_b"], 4),
                          jnp.zeros((56,), f32)]).reshape(1, 256).astype(f32)

    # fc1 weight re-ordered from PyTorch NCHW flatten (c*16 + h*4 + w) to the
    # kernel's (h, w*50 + c) layout, h folded into K (200 -> 256 zero pad).
    wf1 = params["fc1_w"].reshape(500, 50, 4, 4)          # (jout, c, h, w)
    wf1 = jnp.transpose(wf1, (2, 3, 1, 0)).reshape(4, 200, 500)
    wf1 = jnp.pad(wf1, ((0, 0), (0, 56), (0, 0))).reshape(1024, 500).astype(bf16)
    bf1 = params["fc1_b"].reshape(1, 500).astype(f32)

    wa1 = params["att1_w"].T.astype(bf16)                 # (500, 128)
    ba1 = params["att1_b"].reshape(1, 128).astype(f32)
    wa2 = params["att2_w"].reshape(1, 128).astype(f32)
    ba2 = params["att2_b"].reshape(1, 1).astype(f32)
    wc = params["cls_w"].reshape(1, 500).astype(f32)
    bc = params["cls_b"].reshape(1, 1).astype(f32)

    return dict(t1=t1, b1=b1, t2=t2, b2=b2, wf1=wf1, bf1=bf1,
                wa1=wa1, ba1=ba1, wa2=wa2, ba2=ba2, wc=wc, bc=bc)


# ---------------------------------------------------------------------------
# Forward pass: grid over bags, weights VMEM-resident via constant index maps
# ---------------------------------------------------------------------------

def forward(prep, x):
    """x: (B, N, 1, 28, 28).  B=1 reproduces the PyTorch module (x.squeeze(0));
    B>1 batches independent bags across the grid (weights DMA'd once)."""
    B, n = x.shape[0], x.shape[1]
    n_pad = ((n + 7) // 8) * 8            # sublane alignment for in-kernel slices
    f32, bf16 = jnp.float32, jnp.bfloat16

    xi = x.reshape(B, n, 28, 28).astype(f32)
    if n_pad != n:
        xi = jnp.pad(xi, ((0, 0), (0, n_pad - n), (0, 0), (0, 0)))

    # xcat[b, q*n_pad + i, j*28 + w] = x[b, i, 2q + j, w]   (ki folded into lanes)
    slabs = [jnp.transpose(xi[:, :, j:j + 24:2, :], (0, 2, 1, 3)) for j in range(6)]
    xcat = jnp.concatenate(slabs, axis=-1).reshape(B, 12 * n_pad, 168).astype(bf16)

    # additive softmax mask: 0 for real instances, -1e30 for padding
    amask = jnp.where(jnp.arange(n_pad) < n, 0.0, -1e30).astype(f32)
    amask = jnp.broadcast_to(amask.reshape(1, n_pad, 1), (B, n_pad, 1))

    def full_spec(shape):
        nd = len(shape)
        return pl.BlockSpec(shape, lambda b: (0,) * nd)   # constant -> resident

    in_specs = [
        pl.BlockSpec((None, 12 * n_pad, 168), lambda b: (b, 0, 0)),  # xcat per-bag
        pl.BlockSpec((None, n_pad, 1), lambda b: (b, 0, 0)),         # mask per-bag
        full_spec((4, 168, 256)),    # t1
        full_spec((1, 256)),         # b1
        full_spec((4, 1536, 256)),   # t2
        full_spec((1, 256)),         # b2
        full_spec((1024, 500)),      # wf1
        full_spec((1, 500)),         # bf1
        full_spec((500, 128)),       # wa1
        full_spec((1, 128)),         # ba1
        full_spec((1, 128)),         # wa2
        full_spec((1, 1)),           # ba2
        full_spec((1, 500)),         # wc
        full_spec((1, 1)),           # bc
    ]
    out_specs = (
        pl.BlockSpec((None, 1, 1), lambda b: (b, 0, 0)),
        pl.BlockSpec((None, 1, 1), lambda b: (b, 0, 0)),
        pl.BlockSpec((None, 1, n_pad), lambda b: (b, 0, 0)),
    )
    out_shape = (jax.ShapeDtypeStruct((B, 1, 1), f32),       # Y_prob
                 jax.ShapeDtypeStruct((B, 1, 1), f32),       # Y_hat
                 jax.ShapeDtypeStruct((B, 1, n_pad), f32))   # attention A

    y_prob, y_hat, A = pl.pallas_call(
        _attention_mil_kernel,
        grid=(B,),
        in_specs=in_specs,
        out_specs=out_specs,
        out_shape=out_shape,
        compiler_params=pltpu.CompilerParams(
            dimension_semantics=("parallel",),
            vmem_limit_bytes=32 * 1024 * 1024),
    )(xcat, amask, prep["t1"], prep["b1"], prep["t2"], prep["b2"],
      prep["wf1"], prep["bf1"], prep["wa1"], prep["ba1"],
      prep["wa2"], prep["ba2"], prep["wc"], prep["bc"])

    return (y_prob.reshape(B, 1), y_hat.reshape(B, 1),
            A.reshape(B, n_pad)[:, :n])


# ---------------------------------------------------------------------------
# Parameter init + pure-JAX f32 reference (correctness cross-check)
# ---------------------------------------------------------------------------

def init_params(key):
    ks = jax.random.split(key, 12)
    s = 0.05
    return {
        "conv1_w": jax.random.normal(ks[0], (20, 1, 5, 5), jnp.float32) * s,
        "conv1_b": jax.random.normal(ks[1], (20,), jnp.float32) * s,
        "conv2_w": jax.random.normal(ks[2], (50, 20, 5, 5), jnp.float32) * s,
        "conv2_b": jax.random.normal(ks[3], (50,), jnp.float32) * s,
        "fc1_w": jax.random.normal(ks[4], (500, 800), jnp.float32) * s,
        "fc1_b": jax.random.normal(ks[5], (500,), jnp.float32) * s,
        "att1_w": jax.random.normal(ks[6], (128, 500), jnp.float32) * s,
        "att1_b": jax.random.normal(ks[7], (128,), jnp.float32) * s,
        "att2_w": jax.random.normal(ks[8], (1, 128), jnp.float32) * s,
        "att2_b": jax.random.normal(ks[9], (1,), jnp.float32) * s,
        "cls_w": jax.random.normal(ks[10], (1, 500), jnp.float32) * s,
        "cls_b": jax.random.normal(ks[11], (1,), jnp.float32) * s,
    }


def _pool2x2_nchw(h):
    n, c, hh, ww = h.shape
    return h.reshape(n, c, hh // 2, 2, ww // 2, 2).max(axis=(3, 5))


def reference_forward(params, x):
    xi = x.reshape(-1, 1, 28, 28)
    h = jax.lax.conv_general_dilated(
        xi, params["conv1_w"], (1, 1), "VALID",
        dimension_numbers=("NCHW", "OIHW", "NCHW"))
    h = jnp.maximum(h + params["conv1_b"][None, :, None, None], 0.0)
    h = _pool2x2_nchw(h)
    h = jax.lax.conv_general_dilated(
        h, params["conv2_w"], (1, 1), "VALID",
        dimension_numbers=("NCHW", "OIHW", "NCHW"))
    h = jnp.maximum(h + params["conv2_b"][None, :, None, None], 0.0)
    h = _pool2x2_nchw(h)
    H = h.reshape(-1, 800)
    H = jnp.maximum(H @ params["fc1_w"].T + params["fc1_b"], 0.0)
    att = jnp.tanh(H @ params["att1_w"].T + params["att1_b"])
    a = att @ params["att2_w"].T + params["att2_b"]
    A = jax.nn.softmax(a.T, axis=1)
    M = A @ H
    y_prob = jax.nn.sigmoid(M @ params["cls_w"].T + params["cls_b"])
    y_hat = (y_prob >= 0.5).astype(jnp.float32)
    return y_prob, y_hat, A


if __name__ == "__main__":
    key = jax.random.PRNGKey(0)
    pkey, xkey = jax.random.split(key)
    params = init_params(pkey)
    prep = prepare_params(params)          # bag-size independent

    bag_size = 8
    x = jax.random.normal(xkey, (1, bag_size, 1, 28, 28), jnp.float32)

    fwd = jax.jit(forward)
    y_prob, y_hat, A = fwd(prep, x)
    jax.block_until_ready((y_prob, y_hat, A))

    # shape / invariant checks
    assert y_prob.shape == (1, 1)
    assert y_hat.shape == (1, 1)
    assert A.shape == (1, bag_size)
    assert bool(jnp.all((A >= 0) & (A <= 1)))
    assert abs(float(jnp.sum(A)) - 1.0) < 1e-4
    assert bool(jnp.all(y_hat == jnp.where(y_prob >= 0.5, 1.0, 0.0)))

    # cross-check against a pure-JAX f32 reference of the PyTorch module
    ry, _, rA = jax.jit(reference_forward)(params, x)
    assert bool(jnp.allclose(y_prob, ry, atol=3e-2))
    assert bool(jnp.allclose(A, rA, atol=2e-2))

    print("KERNEL_OK")
</pallas_src>

<mosaic_0001>
module attributes {stable_mosaic.version = 11 : i64} {
  func.func @_attention_mil_kernel(%arg0: i32, %arg1: memref<1x96x168xbf16, #tpu.memory_space<vmem>>, %arg2: memref<1x8x1xf32, #tpu.memory_space<vmem>>, %arg3: memref<4x168x256xbf16, #tpu.memory_space<vmem>>, %arg4: memref<1x256xf32, #tpu.memory_space<vmem>>, %arg5: memref<4x1536x256xbf16, #tpu.memory_space<vmem>>, %arg6: memref<1x256xf32, #tpu.memory_space<vmem>>, %arg7: memref<1024x500xbf16, #tpu.memory_space<vmem>>, %arg8: memref<1x500xf32, #tpu.memory_space<vmem>>, %arg9: memref<500x128xbf16, #tpu.memory_space<vmem>>, %arg10: memref<1x128xf32, #tpu.memory_space<vmem>>, %arg11: memref<1x128xf32, #tpu.memory_space<vmem>>, %arg12: memref<1x1xf32, #tpu.memory_space<vmem>>, %arg13: memref<1x500xf32, #tpu.memory_space<vmem>>, %arg14: memref<1x1xf32, #tpu.memory_space<vmem>>, %arg15: memref<1x1x1xf32, #tpu.memory_space<vmem>>, %arg16: memref<1x1x1xf32, #tpu.memory_space<vmem>>, %arg17: memref<1x1x8xf32, #tpu.memory_space<vmem>>) attributes {dimension_semantics = [#tpu.dimension_semantics<parallel>], iteration_bounds = array<i64: 1>, scalar_prefetch = 0 : i64, scratch_operands = 0 : i64, tpu.core_type = #tpu.core_type<tc>, window_params = [{transform_indices = @transform_0, window_bounds = array<i64: 1, 96, 168>}, {transform_indices = @transform_1, window_bounds = array<i64: 1, 8, 1>}, {pipeline_mode = #tpu.pipeline_mode<synchronous>, transform_indices = @transform_2, window_bounds = array<i64: 4, 168, 256>}, {pipeline_mode = #tpu.pipeline_mode<synchronous>, transform_indices = @transform_3, window_bounds = array<i64: 1, 256>}, {pipeline_mode = #tpu.pipeline_mode<synchronous>, transform_indices = @transform_4, window_bounds = array<i64: 4, 1536, 256>}, {pipeline_mode = #tpu.pipeline_mode<synchronous>, transform_indices = @transform_5, window_bounds = array<i64: 1, 256>}, {pipeline_mode = #tpu.pipeline_mode<synchronous>, transform_indices = @transform_6, window_bounds = array<i64: 1024, 500>}, {pipeline_mode = #tpu.pipeline_mode<synchronous>, transform_indices = @transform_7, window_bounds = array<i64: 1, 500>}, {pipeline_mode = #tpu.pipeline_mode<synchronous>, transform_indices = @transform_8, window_bounds = array<i64: 500, 128>}, {pipeline_mode = #tpu.pipeline_mode<synchronous>, transform_indices = @transform_9, window_bounds = array<i64: 1, 128>}, {pipeline_mode = #tpu.pipeline_mode<synchronous>, transform_indices = @transform_10, window_bounds = array<i64: 1, 128>}, {pipeline_mode = #tpu.pipeline_mode<synchronous>, transform_indices = @transform_11, window_bounds = array<i64: 1, 1>}, {pipeline_mode = #tpu.pipeline_mode<synchronous>, transform_indices = @transform_12, window_bounds = array<i64: 1, 500>}, {pipeline_mode = #tpu.pipeline_mode<synchronous>, transform_indices = @transform_13, window_bounds = array<i64: 1, 1>}, {transform_indices = @transform_14, window_bounds = array<i64: 1, 1, 1>}, {transform_indices = @transform_15, window_bounds = array<i64: 1, 1, 1>}, {transform_indices = @transform_16, window_bounds = array<i64: 1, 1, 8>}]} {
    %c0 = arith.constant 0 : index
    %c0_0 = arith.constant 0 : index
    %c0_1 = arith.constant 0 : index
    %0 = vector.load %arg1[%c0, %c0_0, %c0_1] : memref<1x96x168xbf16, #tpu.memory_space<vmem>>, vector<1x96x168xbf16>
    %1 = vector.shape_cast %0 : vector<1x96x168xbf16> to vector<96x168xbf16>
    %c0_2 = arith.constant 0 : index
    %c0_3 = arith.constant 0 : index
    %2 = vector.load %arg4[%c0_2, %c0_3] : memref<1x256xf32, #tpu.memory_space<vmem>>, vector<1x256xf32>
    %c0_4 = arith.constant 0 : index
    %c0_5 = arith.constant 0 : index
    %c0_6 = arith.constant 0 : index
    %3 = vector.load %arg3[%c0_4, %c0_5, %c0_6] : memref<4x168x256xbf16, #tpu.memory_space<vmem>>, vector<1x168x256xbf16>
    %4 = vector.shape_cast %3 : vector<1x168x256xbf16> to vector<168x256xbf16>
    %cst = arith.constant dense<0.000000e+00> : vector<96x256xf32>
    %5 = tpu.matmul %1, %4, %cst {dimension_numbers = #tpu.dot_dimension_numbers<[1], [0], [0], [1], [0, 0, 1, 1], [], []>} : vector<96x168xbf16>, vector<168x256xbf16>, vector<96x256xf32> -> vector<96x256xf32>
    %c1 = arith.constant 1 : index
    %c0_7 = arith.constant 0 : index
    %c0_8 = arith.constant 0 : index
    %6 = vector.load %arg3[%c1, %c0_7, %c0_8] : memref<4x168x256xbf16, #tpu.memory_space<vmem>>, vector<1x168x256xbf16>
    %7 = vector.shape_cast %6 : vector<1x168x256xbf16> to vector<168x256xbf16>
    %cst_9 = arith.constant dense<0.000000e+00> : vector<96x256xf32>
    %8 = tpu.matmul %1, %7, %cst_9 {dimension_numbers = #tpu.dot_dimension_numbers<[1], [0], [0], [1], [0, 0, 1, 1], [], []>} : vector<96x168xbf16>, vector<168x256xbf16>, vector<96x256xf32> -> vector<96x256xf32>
    %9 = arith.maximumf %5, %8 : vector<96x256xf32>
    %c2 = arith.constant 2 : index
    %c0_10 = arith.constant 0 : index
    %c0_11 = arith.constant 0 : index
    %10 = vector.load %arg3[%c2, %c0_10, %c0_11] : memref<4x168x256xbf16, #tpu.memory_space<vmem>>, vector<1x168x256xbf16>
    %11 = vector.shape_cast %10 : vector<1x168x256xbf16> to vector<168x256xbf16>
    %cst_12 = arith.constant dense<0.000000e+00> : vector<96x256xf32>
    %12 = tpu.matmul %1, %11, %cst_12 {dimension_numbers = #tpu.dot_dimension_numbers<[1], [0], [0], [1], [0, 0, 1, 1], [], []>} : vector<96x168xbf16>, vector<168x256xbf16>, vector<96x256xf32> -> vector<96x256xf32>
    %13 = arith.maximumf %9, %12 : vector<96x256xf32>
    %c3 = arith.constant 3 : index
    %c0_13 = arith.constant 0 : index
    %c0_14 = arith.constant 0 : index
    %14 = vector.load %arg3[%c3, %c0_13, %c0_14] : memref<4x168x256xbf16, #tpu.memory_space<vmem>>, vector<1x168x256xbf16>
    %15 = vector.shape_cast %14 : vector<1x168x256xbf16> to vector<168x256xbf16>
    %cst_15 = arith.constant dense<0.000000e+00> : vector<96x256xf32>
    %16 = tpu.matmul %1, %15, %cst_15 {dimension_numbers = #tpu.dot_dimension_numbers<[1], [0], [0], [1], [0, 0, 1, 1], [], []>} : vector<96x168xbf16>, vector<168x256xbf16>, vector<96x256xf32> -> vector<96x256xf32>
    %17 = arith.maximumf %13, %16 : vector<96x256xf32>
    %18 = vector.broadcast %2 : vector<1x256xf32> to vector<96x256xf32>
    %19 = arith.addf %17, %18 : vector<96x256xf32>
    %cst_16 = arith.constant 0.000000e+00 : f32
    %20 = vector.broadcast %cst_16 : f32 to vector<96x256xf32>
    %21 = arith.maximumf %19, %20 : vector<96x256xf32>
    %22 = vector.extract_strided_slice %21 {offsets = [0, 0], sizes = [8, 256], strides = [1, 1]} : vector<96x256xf32> to vector<8x256xf32>
    %23 = vector.extract_strided_slice %21 {offsets = [16, 0], sizes = [8, 256], strides = [1, 1]} : vector<96x256xf32> to vector<8x256xf32>
    %24 = vector.extract_strided_slice %21 {offsets = [32, 0], sizes = [8, 256], strides = [1, 1]} : vector<96x256xf32> to vector<8x256xf32>
    %25 = vector.extract_strided_slice %21 {offsets = [48, 0], sizes = [8, 256], strides = [1, 1]} : vector<96x256xf32> to vector<8x256xf32>
    %26 = tpu.concatenate %22, %23, %24, %25 in 0 : vector<8x256xf32>, vector<8x256xf32>, vector<8x256xf32>, vector<8x256xf32> -> vector<32x256xf32>
    %27 = vector.extract_strided_slice %21 {offsets = [8, 0], sizes = [8, 256], strides = [1, 1]} : vector<96x256xf32> to vector<8x256xf32>
    %28 = vector.extract_strided_slice %21 {offsets = [24, 0], sizes = [8, 256], strides = [1, 1]} : vector<96x256xf32> to vector<8x256xf32>
    %29 = vector.extract_strided_slice %21 {offsets = [40, 0], sizes = [8, 256], strides = [1, 1]} : vector<96x256xf32> to vector<8x256xf32>
    %30 = vector.extract_strided_slice %21 {offsets = [56, 0], sizes = [8, 256], strides = [1, 1]} : vector<96x256xf32> to vector<8x256xf32>
    %31 = tpu.concatenate %27, %28, %29, %30 in 0 : vector<8x256xf32>, vector<8x256xf32>, vector<8x256xf32>, vector<8x256xf32> -> vector<32x256xf32>
    %32 = vector.extract_strided_slice %21 {offsets = [16, 0], sizes = [8, 256], strides = [1, 1]} : vector<96x256xf32> to vector<8x256xf32>
    %33 = vector.extract_strided_slice %21 {offsets = [32, 0], sizes = [8, 256], strides = [1, 1]} : vector<96x256xf32> to vector<8x256xf32>
    %34 = vector.extract_strided_slice %21 {offsets = [48, 0], sizes = [8, 256], strides = [1, 1]} : vector<96x256xf32> to vector<8x256xf32>
    %35 = vector.extract_strided_slice %21 {offsets = [64, 0], sizes = [8, 256], strides = [1, 1]} : vector<96x256xf32> to vector<8x256xf32>
    %36 = tpu.concatenate %32, %33, %34, %35 in 0 : vector<8x256xf32>, vector<8x256xf32>, vector<8x256xf32>, vector<8x256xf32> -> vector<32x256xf32>
    %37 = vector.extract_strided_slice %21 {offsets = [24, 0], sizes = [8, 256], strides = [1, 1]} : vector<96x256xf32> to vector<8x256xf32>
    %38 = vector.extract_strided_slice %21 {offsets = [40, 0], sizes = [8, 256], strides = [1, 1]} : vector<96x256xf32> to vector<8x256xf32>
    %39 = vector.extract_strided_slice %21 {offsets = [56, 0], sizes = [8, 256], strides = [1, 1]} : vector<96x256xf32> to vector<8x256xf32>
    %40 = vector.extract_strided_slice %21 {offsets = [72, 0], sizes = [8, 256], strides = [1, 1]} : vector<96x256xf32> to vector<8x256xf32>
    %41 = tpu.concatenate %37, %38, %39, %40 in 0 : vector<8x256xf32>, vector<8x256xf32>, vector<8x256xf32>, vector<8x256xf32> -> vector<32x256xf32>
    %42 = vector.extract_strided_slice %21 {offsets = [32, 0], sizes = [8, 256], strides = [1, 1]} : vector<96x256xf32> to vector<8x256xf32>
    %43 = vector.extract_strided_slice %21 {offsets = [48, 0], sizes = [8, 256], strides = [1, 1]} : vector<96x256xf32> to vector<8x256xf32>
    %44 = vector.extract_strided_slice %21 {offsets = [64, 0], sizes = [8, 256], strides = [1, 1]} : vector<96x256xf32> to vector<8x256xf32>
    %45 = vector.extract_strided_slice %21 {offsets = [80, 0], sizes = [8, 256], strides = [1, 1]} : vector<96x256xf32> to vector<8x256xf32>
    %46 = tpu.concatenate %42, %43, %44, %45 in 0 : vector<8x256xf32>, vector<8x256xf32>, vector<8x256xf32>, vector<8x256xf32> -> vector<32x256xf32>
    %47 = vector.extract_strided_slice %21 {offsets = [40, 0], sizes = [8, 256], strides = [1, 1]} : vector<96x256xf32> to vector<8x256xf32>
    %48 = vector.extract_strided_slice %21 {offsets = [56, 0], sizes = [8, 256], strides = [1, 1]} : vector<96x256xf32> to vector<8x256xf32>
    %49 = vector.extract_strided_slice %21 {offsets = [72, 0], sizes = [8, 256], strides = [1, 1]} : vector<96x256xf32> to vector<8x256xf32>
    %50 = vector.extract_strided_slice %21 {offsets = [88, 0], sizes = [8, 256], strides = [1, 1]} : vector<96x256xf32> to vector<8x256xf32>
    %51 = tpu.concatenate %47, %48, %49, %50 in 0 : vector<8x256xf32>, vector<8x256xf32>, vector<8x256xf32>, vector<8x256xf32> -> vector<32x256xf32>
    %52 = tpu.concatenate %26, %31, %36, %41, %46, %51 in 1 : vector<32x256xf32>, vector<32x256xf32>, vector<32x256xf32>, vector<32x256xf32>, vector<32x256xf32>, vector<32x256xf32> -> vector<32x1536xf32>
    %53 = arith.truncf %52 : vector<32x1536xf32> to vector<32x1536xbf16>
    %c0_17 = arith.constant 0 : index
    %c0_18 = arith.constant 0 : index
    %54 = vector.load %arg6[%c0_17, %c0_18] : memref<1x256xf32, #tpu.memory_space<vmem>>, vector<1x256xf32>
    %c0_19 = arith.constant 0 : index
    %c0_20 = arith.constant 0 : index
    %c0_21 = arith.constant 0 : index
    %55 = vector.load %arg5[%c0_19, %c0_20, %c0_21] : memref<4x1536x256xbf16, #tpu.memory_space<vmem>>, vector<1x1536x256xbf16>
    %56 = vector.shape_cast %55 : vector<1x1536x256xbf16> to vector<1536x256xbf16>
    %cst_22 = arith.constant dense<0.000000e+00> : vector<32x256xf32>
    %57 = tpu.matmul %53, %56, %cst_22 {dimension_numbers = #tpu.dot_dimension_numbers<[1], [0], [0], [1], [0, 0, 1, 1], [], []>} : vector<32x1536xbf16>, vector<1536x256xbf16>, vector<32x256xf32> -> vector<32x256xf32>
    %c1_23 = arith.constant 1 : index
    %c0_24 = arith.constant 0 : index
    %c0_25 = arith.constant 0 : index
    %58 = vector.load %arg5[%c1_23, %c0_24, %c0_25] : memref<4x1536x256xbf16, #tpu.memory_space<vmem>>, vector<1x1536x256xbf16>
    %59 = vector.shape_cast %58 : vector<1x1536x256xbf16> to vector<1536x256xbf16>
    %cst_26 = arith.constant dense<0.000000e+00> : vector<32x256xf32>
    %60 = tpu.matmul %53, %59, %cst_26 {dimension_numbers = #tpu.dot_dimension_numbers<[1], [0], [0], [1], [0, 0, 1, 1], [], []>} : vector<32x1536xbf16>, vector<1536x256xbf16>, vector<32x256xf32> -> vector<32x256xf32>
    %61 = arith.maximumf %57, %60 : vector<32x256xf32>
    %c2_27 = arith.constant 2 : index
    %c0_28 = arith.constant 0 : index
    %c0_29 = arith.constant 0 : index
    %62 = vector.load %arg5[%c2_27, %c0_28, %c0_29] : memref<4x1536x256xbf16, #tpu.memory_space<vmem>>, vector<1x1536x256xbf16>
    %63 = vector.shape_cast %62 : vector<1x1536x256xbf16> to vector<1536x256xbf16>
    %cst_30 = arith.constant dense<0.000000e+00> : vector<32x256xf32>
    %64 = tpu.matmul %53, %63, %cst_30 {dimension_numbers = #tpu.dot_dimension_numbers<[1], [0], [0], [1], [0, 0, 1, 1], [], []>} : vector<32x1536xbf16>, vector<1536x256xbf16>, vector<32x256xf32> -> vector<32x256xf32>
    %65 = arith.maximumf %61, %64 : vector<32x256xf32>
    %c3_31 = arith.constant 3 : index
    %c0_32 = arith.constant 0 : index
    %c0_33 = arith.constant 0 : index
    %66 = vector.load %arg5[%c3_31, %c0_32, %c0_33] : memref<4x1536x256xbf16, #tpu.memory_space<vmem>>, vector<1x1536x256xbf16>
    %67 = vector.shape_cast %66 : vector<1x1536x256xbf16> to vector<1536x256xbf16>
    %cst_34 = arith.constant dense<0.000000e+00> : vector<32x256xf32>
    %68 = tpu.matmul %53, %67, %cst_34 {dimension_numbers = #tpu.dot_dimension_numbers<[1], [0], [0], [1], [0, 0, 1, 1], [], []>} : vector<32x1536xbf16>, vector<1536x256xbf16>, vector<32x256xf32> -> vector<32x256xf32>
    %69 = arith.maximumf %65, %68 : vector<32x256xf32>
    %70 = vector.broadcast %54 : vector<1x256xf32> to vector<32x256xf32>
    %71 = arith.addf %69, %70 : vector<32x256xf32>
    %cst_35 = arith.constant 0.000000e+00 : f32
    %72 = vector.broadcast %cst_35 : f32 to vector<32x256xf32>
    %73 = arith.maximumf %71, %72 : vector<32x256xf32>
    %74 = vector.extract_strided_slice %73 {offsets = [0, 0], sizes = [8, 256], strides = [1, 1]} : vector<32x256xf32> to vector<8x256xf32>
    %75 = vector.extract_strided_slice %73 {offsets = [8, 0], sizes = [8, 256], strides = [1, 1]} : vector<32x256xf32> to vector<8x256xf32>
    %76 = vector.extract_strided_slice %73 {offsets = [16, 0], sizes = [8, 256], strides = [1, 1]} : vector<32x256xf32> to vector<8x256xf32>
    %77 = vector.extract_strided_slice %73 {offsets = [24, 0], sizes = [8, 256], strides = [1, 1]} : vector<32x256xf32> to vector<8x256xf32>
    %78 = tpu.concatenate %74, %75, %76, %77 in 1 : vector<8x256xf32>, vector<8x256xf32>, vector<8x256xf32>, vector<8x256xf32> -> vector<8x1024xf32>
    %79 = arith.truncf %78 : vector<8x1024xf32> to vector<8x1024xbf16>
    %c0_36 = arith.constant 0 : index
    %c0_37 = arith.constant 0 : index
    %80 = vector.load %arg7[%c0_36, %c0_37] : memref<1024x500xbf16, #tpu.memory_space<vmem>>, vector<1024x500xbf16>
    %cst_38 = arith.constant dense<0.000000e+00> : vector<8x500xf32>
    %81 = tpu.matmul %79, %80, %cst_38 {dimension_numbers = #tpu.dot_dimension_numbers<[1], [0], [0], [1], [0, 0, 1, 1], [], []>} : vector<8x1024xbf16>, vector<1024x500xbf16>, vector<8x500xf32> -> vector<8x500xf32>
    %c0_39 = arith.constant 0 : index
    %c0_40 = arith.constant 0 : index
    %82 = vector.load %arg8[%c0_39, %c0_40] : memref<1x500xf32, #tpu.memory_space<vmem>>, vector<1x500xf32>
    %83 = vector.broadcast %82 : vector<1x500xf32> to vector<8x500xf32>
    %84 = arith.addf %81, %83 : vector<8x500xf32>
    %cst_41 = arith.constant 0.000000e+00 : f32
    %85 = vector.broadcast %cst_41 : f32 to vector<8x500xf32>
    %86 = arith.maximumf %84, %85 : vector<8x500xf32>
    %87 = arith.truncf %86 : vector<8x500xf32> to vector<8x500xbf16>
    %c0_42 = arith.constant 0 : index
    %c0_43 = arith.constant 0 : index
    %88 = vector.load %arg9[%c0_42, %c0_43] : memref<500x128xbf16, #tpu.memory_space<vmem>>, vector<500x128xbf16>
    %cst_44 = arith.constant dense<0.000000e+00> : vector<8x128xf32>
    %89 = tpu.matmul %87, %88, %cst_44 {dimension_numbers = #tpu.dot_dimension_numbers<[1], [0], [0], [1], [0, 0, 1, 1], [], []>} : vector<8x500xbf16>, vector<500x128xbf16>, vector<8x128xf32> -> vector<8x128xf32>
    %c0_45 = arith.constant 0 : index
    %c0_46 = arith.constant 0 : index
    %90 = vector.load %arg10[%c0_45, %c0_46] : memref<1x128xf32, #tpu.memory_space<vmem>>, vector<1x128xf32>
    %91 = vector.broadcast %90 : vector<1x128xf32> to vector<8x128xf32>
    %92 = arith.addf %89, %91 : vector<8x128xf32>
    %93 = math.tanh %92 : vector<8x128xf32>
    %c0_47 = arith.constant 0 : index
    %c0_48 = arith.constant 0 : index
    %94 = vector.load %arg11[%c0_47, %c0_48] : memref<1x128xf32, #tpu.memory_space<vmem>>, vector<1x128xf32>
    %95 = vector.broadcast %94 : vector<1x128xf32> to vector<8x128xf32>
    %96 = arith.mulf %93, %95 : vector<8x128xf32>
    %cst_49 = arith.constant dense<0.000000e+00> : vector<8xf32>
    %97 = vector.multi_reduction <add>, %96, %cst_49 [1] : vector<8x128xf32> to vector<8xf32>
    %98 = vector.shape_cast %97 : vector<8xf32> to vector<8x1xf32>
    %c0_50 = arith.constant 0 : index
    %c0_51 = arith.constant 0 : index
    %99 = vector.load %arg12[%c0_50, %c0_51] : memref<1x1xf32, #tpu.memory_space<vmem>>, vector<1x1xf32>
    %100 = vector.broadcast %99 : vector<1x1xf32> to vector<8x1xf32>
    %101 = arith.addf %98, %100 : vector<8x1xf32>
    %c0_52 = arith.constant 0 : index
    %c0_53 = arith.constant 0 : index
    %c0_54 = arith.constant 0 : index
    %102 = vector.load %arg2[%c0_52, %c0_53, %c0_54] : memref<1x8x1xf32, #tpu.memory_space<vmem>>, vector<1x8x1xf32>
    %103 = vector.shape_cast %102 : vector<1x8x1xf32> to vector<8x1xf32>
    %104 = arith.addf %101, %103 : vector<8x1xf32>
    %cst_55 = arith.constant dense<0xFF800000> : vector<1xf32>
    %105 = vector.multi_reduction <maximumf>, %104, %cst_55 [0] : vector<8x1xf32> to vector<1xf32>
    %106 = vector.shape_cast %105 : vector<1xf32> to vector<1x1xf32>
    %107 = vector.broadcast %106 : vector<1x1xf32> to vector<8x1xf32>
    %108 = arith.subf %104, %107 : vector<8x1xf32>
    %109 = math.exp %108 : vector<8x1xf32>
    %cst_56 = arith.constant dense<0.000000e+00> : vector<1xf32>
    %110 = vector.multi_reduction <add>, %109, %cst_56 [0] : vector<8x1xf32> to vector<1xf32>
    %111 = vector.shape_cast %110 : vector<1xf32> to vector<1x1xf32>
    %112 = vector.broadcast %111 : vector<1x1xf32> to vector<8x1xf32>
    %113 = arith.divf %109, %112 : vector<8x1xf32>
    %114 = vector.broadcast %113 : vector<8x1xf32> to vector<8x500xf32>
    %115 = arith.mulf %114, %86 : vector<8x500xf32>
    %cst_57 = arith.constant dense<0.000000e+00> : vector<500xf32>
    %116 = vector.multi_reduction <add>, %115, %cst_57 [0] : vector<8x500xf32> to vector<500xf32>
    %117 = vector.shape_cast %116 : vector<500xf32> to vector<1x500xf32>
    %c0_58 = arith.constant 0 : index
    %c0_59 = arith.constant 0 : index
    %118 = vector.load %arg13[%c0_58, %c0_59] : memref<1x500xf32, #tpu.memory_space<vmem>>, vector<1x500xf32>
    %119 = arith.mulf %117, %118 : vector<1x500xf32>
    %cst_60 = arith.constant dense<0.000000e+00> : vector<1xf32>
    %120 = vector.multi_reduction <add>, %119, %cst_60 [1] : vector<1x500xf32> to vector<1xf32>
    %121 = vector.shape_cast %120 : vector<1xf32> to vector<1x1xf32>
    %c0_61 = arith.constant 0 : index
    %c0_62 = arith.constant 0 : index
    %122 = vector.load %arg14[%c0_61, %c0_62] : memref<1x1xf32, #tpu.memory_space<vmem>>, vector<1x1xf32>
    %123 = arith.addf %121, %122 : vector<1x1xf32>
    %cst_63 = arith.constant 0.000000e+00 : f32
    %124 = vector.broadcast %cst_63 : f32 to vector<1x1xf32>
    %125 = arith.subf %124, %123 : vector<1x1xf32>
    %126 = math.exp %125 : vector<1x1xf32>
    %cst_64 = arith.constant 1.000000e+00 : f32
    %127 = vector.broadcast %cst_64 : f32 to vector<1x1xf32>
    %128 = arith.addf %127, %126 : vector<1x1xf32>
    %cst_65 = arith.constant 1.000000e+00 : f32
    %129 = vector.broadcast %cst_65 : f32 to vector<1x1xf32>
    %130 = arith.divf %129, %128 : vector<1x1xf32>
    %c0_66 = arith.constant 0 : index
    %c0_67 = arith.constant 0 : index
    %c0_68 = arith.constant 0 : index
    %131 = vector.load %arg15[%c0_66, %c0_67, %c0_68] : memref<1x1x1xf32, #tpu.memory_space<vmem>>, vector<1x1x1xf32>
    %132 = vector.shape_cast %131 : vector<1x1x1xf32> to vector<1x1xf32>
    %133 = vector.shape_cast %130 : vector<1x1xf32> to vector<1x1x1xf32>
    tpu.vector_store %arg15[%c0_66, %c0_67, %c0_68], %133 {strides = array<i32>} : memref<1x1x1xf32, #tpu.memory_space<vmem>>, vector<1x1x1xf32>,
    %cst_69 = arith.constant 5.000000e-01 : f32
    %134 = vector.broadcast %cst_69 : f32 to vector<1x1xf32>
    %135 = arith.cmpf oge, %130, %134 : vector<1x1xf32>
    %cst_70 = arith.constant 1.000000e+00 : f32
    %cst_71 = arith.constant 0.000000e+00 : f32
    %136 = vector.broadcast %cst_70 : f32 to vector<1x1xf32>
    %137 = vector.broadcast %cst_71 : f32 to vector<1x1xf32>
    %138 = arith.select %135, %136, %137 : vector<1x1xi1>, vector<1x1xf32>
    %c0_72 = arith.constant 0 : index
    %c0_73 = arith.constant 0 : index
    %c0_74 = arith.constant 0 : index
    %139 = vector.load %arg16[%c0_72, %c0_73, %c0_74] : memref<1x1x1xf32, #tpu.memory_space<vmem>>, vector<1x1x1xf32>
    %140 = vector.shape_cast %139 : vector<1x1x1xf32> to vector<1x1xf32>
    %141 = vector.shape_cast %138 : vector<1x1xf32> to vector<1x1x1xf32>
    tpu.vector_store %arg16[%c0_72, %c0_73, %c0_74], %141 {strides = array<i32>} : memref<1x1x1xf32, #tpu.memory_space<vmem>>, vector<1x1x1xf32>,
    %142 = tpu.iota {dimensions = array<i32: 0>} : vector<8x8xi32>
    %143 = tpu.iota {dimensions = array<i32: 1>} : vector<8x8xi32>
    %144 = arith.cmpi eq, %142, %143 : vector<8x8xi32>
    %cst_75 = arith.constant 0.000000e+00 : f32
    %145 = vector.shape_cast %113 : vector<8x1xf32> to vector<8x1xf32>
    %146 = vector.broadcast %145 : vector<8x1xf32> to vector<8x8xf32>
    %147 = vector.broadcast %cst_75 : f32 to vector<8x8xf32>
    %148 = arith.select %144, %146, %147 : vector<8x8xi1>, vector<8x8xf32>
    %cst_76 = arith.constant dense<0.000000e+00> : vector<8xf32>
    %149 = vector.multi_reduction <add>, %148, %cst_76 [0] : vector<8x8xf32> to vector<8xf32>
    %150 = vector.shape_cast %149 : vector<8xf32> to vector<1x8xf32>
    %c0_77 = arith.constant 0 : index
    %c0_78 = arith.constant 0 : index
    %c0_79 = arith.constant 0 : index
    %151 = vector.load %arg17[%c0_77, %c0_78, %c0_79] : memref<1x1x8xf32, #tpu.memory_space<vmem>>, vector<1x1x8xf32>
    %152 = vector.shape_cast %151 : vector<1x1x8xf32> to vector<1x8xf32>
    %153 = vector.shape_cast %150 : vector<1x8xf32> to vector<1x1x8xf32>
    tpu.vector_store %arg17[%c0_77, %c0_78, %c0_79], %153 {strides = array<i32>} : memref<1x1x8xf32, #tpu.memory_space<vmem>>, vector<1x1x8xf32>,
    return
  }
  func.func @transform_0(%arg0: i32) -> (i32, i32, i32) {
    %c0_i32 = arith.constant 0 : i32
    %c0_i32_0 = arith.constant 0 : i32
    %c0_i32_1 = arith.constant 0 : i32
    return %arg0, %c0_i32, %c0_i32_0 : i32, i32, i32
  }
  func.func @transform_1(%arg0: i32) -> (i32, i32, i32) {
    %c0_i32 = arith.constant 0 : i32
    %c0_i32_0 = arith.constant 0 : i32
    %c0_i32_1 = arith.constant 0 : i32
    return %arg0, %c0_i32, %c0_i32_0 : i32, i32, i32
  }
  func.func @transform_2(%arg0: i32) -> (i32, i32, i32) {
    %c0_i32 = arith.constant 0 : i32
    %c0_i32_0 = arith.constant 0 : i32
    %c0_i32_1 = arith.constant 0 : i32
    %c0_i32_2 = arith.constant 0 : i32
    return %c0_i32, %c0_i32_0, %c0_i32_1 : i32, i32, i32
  }
  func.func @transform_3(%arg0: i32) -> (i32, i32) {
    %c0_i32 = arith.constant 0 : i32
    %c0_i32_0 = arith.constant 0 : i32
    %c0_i32_1 = arith.constant 0 : i32
    return %c0_i32, %c0_i32_0 : i32, i32
  }
  func.func @transform_4(%arg0: i32) -> (i32, i32, i32) {
    %c0_i32 = arith.constant 0 : i32
    %c0_i32_0 = arith.constant 0 : i32
    %c0_i32_1 = arith.constant 0 : i32
    %c0_i32_2 = arith.constant 0 : i32
    return %c0_i32, %c0_i32_0, %c0_i32_1 : i32, i32, i32
  }
  func.func @transform_5(%arg0: i32) -> (i32, i32) {
    %c0_i32 = arith.constant 0 : i32
    %c0_i32_0 = arith.constant 0 : i32
    %c0_i32_1 = arith.constant 0 : i32
    return %c0_i32, %c0_i32_0 : i32, i32
  }
  func.func @transform_6(%arg0: i32) -> (i32, i32) {
    %c0_i32 = arith.constant 0 : i32
    %c0_i32_0 = arith.constant 0 : i32
    %c0_i32_1 = arith.constant 0 : i32
    return %c0_i32, %c0_i32_0 : i32, i32
  }
  func.func @transform_7(%arg0: i32) -> (i32, i32) {
    %c0_i32 = arith.constant 0 : i32
    %c0_i32_0 = arith.constant 0 : i32
    %c0_i32_1 = arith.constant 0 : i32
    return %c0_i32, %c0_i32_0 : i32, i32
  }
  func.func @transform_8(%arg0: i32) -> (i32, i32) {
    %c0_i32 = arith.constant 0 : i32
    %c0_i32_0 = arith.constant 0 : i32
    %c0_i32_1 = arith.constant 0 : i32
    return %c0_i32, %c0_i32_0 : i32, i32
  }
  func.func @transform_9(%arg0: i32) -> (i32, i32) {
    %c0_i32 = arith.constant 0 : i32
    %c0_i32_0 = arith.constant 0 : i32
    %c0_i32_1 = arith.constant 0 : i32
    return %c0_i32, %c0_i32_0 : i32, i32
  }
  func.func @transform_10(%arg0: i32) -> (i32, i32) {
    %c0_i32 = arith.constant 0 : i32
    %c0_i32_0 = arith.constant 0 : i32
    %c0_i32_1 = arith.constant 0 : i32
    return %c0_i32, %c0_i32_0 : i32, i32
  }
  func.func @transform_11(%arg0: i32) -> (i32, i32) {
    %c0_i32 = arith.constant 0 : i32
    %c0_i32_0 = arith.constant 0 : i32
    %c0_i32_1 = arith.constant 0 : i32
    return %c0_i32, %c0_i32_0 : i32, i32
  }
  func.func @transform_12(%arg0: i32) -> (i32, i32) {
    %c0_i32 = arith.constant 0 : i32
    %c0_i32_0 = arith.constant 0 : i32
    %c0_i32_1 = arith.constant 0 : i32
    return %c0_i32, %c0_i32_0 : i32, i32
  }
  func.func @transform_13(%arg0: i32) -> (i32, i32) {
    %c0_i32 = arith.constant 0 : i32
    %c0_i32_0 = arith.constant 0 : i32
    %c0_i32_1 = arith.constant 0 : i32
    return %c0_i32, %c0_i32_0 : i32, i32
  }
  func.func @transform_14(%arg0: i32) -> (i32, i32, i32) {
    %c0_i32 = arith.constant 0 : i32
    %c0_i32_0 = arith.constant 0 : i32
    %c0_i32_1 = arith.constant 0 : i32
    return %arg0, %c0_i32, %c0_i32_0 : i32, i32, i32
  }
  func.func @transform_15(%arg0: i32) -> (i32, i32, i32) {
    %c0_i32 = arith.constant 0 : i32
    %c0_i32_0 = arith.constant 0 : i32
    %c0_i32_1 = arith.constant 0 : i32
    return %arg0, %c0_i32, %c0_i32_0 : i32, i32, i32
  }
  func.func @transform_16(%arg0: i32) -> (i32, i32, i32) {
    %c0_i32 = arith.constant 0 : i32
    %c0_i32_0 = arith.constant 0 : i32
    %c0_i32_1 = arith.constant 0 : i32
    return %arg0, %c0_i32, %c0_i32_0 : i32, i32, i32
  }
}

</mosaic_0001>

<llo_original>
// kernel: forward.1
$region0: #{forward.1}
  #allocation0 [shape = 'u32[]', space=smem, size = 0x4, offset = 0x4, fixed_abs, tag = 'smem constant byte address 0x4 - core index']
  #allocation1 [shape = 'u32[144,128]{1,0:T(1,128)}', space=vmem, size = 0x12000, scoped, tag = 'internal scratch']
  #allocation2 [shape = 'f32[1,1]{1,0:T(1,128)S(1)}', space=vmem, size = 0x200, scoped, tag = 'scoped memory for forward.1']
  #allocation3 [shape = 'f32[1,1]{1,0:T(1,128)S(1)}', space=vmem, size = 0x200, scoped, tag = 'scoped memory for forward.1']
  %s0 = inlined_call_operand.vmem [shape: bf16[1,96,168], index: 0, kind: input, shape index: {}]
  %s1 = inlined_call_operand.vmem [shape: f32[1,8,1], index: 1, kind: input, shape index: {}]
  %s2 = inlined_call_operand.hbm [shape: bf16[4,168,256], index: 2, kind: input, shape index: {}]
  %s3 = inlined_call_operand.hbm [shape: f32[1,256], index: 3, kind: input, shape index: {}]
  %s4 = inlined_call_operand.hbm [shape: bf16[4,1536,256], index: 4, kind: input, shape index: {}]
  %s5 = inlined_call_operand.hbm [shape: f32[1,256], index: 5, kind: input, shape index: {}]
  %s6 = inlined_call_operand.vmem [shape: bf16[1024,500], index: 6, kind: input, shape index: {}]
  %s7 = inlined_call_operand.hbm [shape: f32[1,500], index: 7, kind: input, shape index: {}]
  %s8 = inlined_call_operand.hbm [shape: bf16[500,128], index: 8, kind: input, shape index: {}]
  %s9 = inlined_call_operand.hbm [shape: f32[1,128], index: 9, kind: input, shape index: {}]
  %s10 = inlined_call_operand.hbm [shape: f32[1,128], index: 10, kind: input, shape index: {}]
  %s11 = inlined_call_operand.<no memory space> [shape: f32[1,1], index: 11, kind: input, shape index: {}]
  %s12 = inlined_call_operand.hbm [shape: f32[1,500], index: 12, kind: input, shape index: {}]
  %s13 = inlined_call_operand.<no memory space> [shape: f32[1,1], index: 13, kind: input, shape index: {}]
  %s14 = inlined_call_operand.hbm [shape: f32[1,1,1], index: 14, kind: output, shape index: {0}]
  %s15 = inlined_call_operand.hbm [shape: f32[1,1,1], index: 15, kind: output, shape index: {1}]
  %s16 = inlined_call_operand.hbm [shape: f32[1,1,8], index: 16, kind: output, shape index: {2}]
  %17 = xla_tuple %s14, %s15, %s16
  %s18 = sld [smem:[#allocation0]]
  $region118: #{forward.1} parent=0
    _
  %s20 = ssub.s32 1, %s18
  %s21 = scalar_select 0, %s20, %s18
  %v22 = vstv %s11
  %23 = vst [vmem:[#allocation2] sm:$0x1] %v22
  %v24 = vstv %s13
  %25 = vst [vmem:[#allocation3] sm:$0x1] %v24
  $region1: #{forward.1} parent=0
    #allocation4 [shape = 'u8[344064]{0}', space=vmem, size = 0x54000, scoped, tag = 'input window, operand 2, single buffered']
    #allocation5 [shape = 's32[1]{0}', space=sflag, size = 0x4, scoped, tag = 'scoped memory for forward.1']
    #allocation6 [shape = 's32[1]{0}', space=sflag, size = 0x4, scoped, tag = 'scoped memory for forward.1']
    #allocation7 [shape = 'u8[1024]{0}', space=vmem, size = 0x400, scoped, tag = 'input window, operand 3, single buffered']
    #allocation8 [shape = 's32[1]{0}', space=sflag, size = 0x4, scoped, tag = 'scoped memory for forward.1']
    #allocation9 [shape = 'u8[3145728]{0}', space=vmem, size = 0x300000, scoped, tag = 'input window, operand 4, single buffered']
    #allocation10 [shape = 'u8[1024]{0}', space=vmem, size = 0x400, scoped, tag = 'input window, operand 5, single buffered']
    #allocation11 [shape = 's32[1]{0}', space=sflag, size = 0x4, scoped, tag = 'scoped memory for forward.1']
    #allocation12 [shape = 'u8[2048]{0}', space=vmem, size = 0x800, scoped, tag = 'input window, operand 7, single buffered']
    #allocation13 [shape = 'u8[129024]{0}', space=vmem, size = 0x1f800, scoped, tag = 'input window, operand 8, single buffered']
    #allocation14 [shape = 's32[1]{0}', space=sflag, size = 0x4, scoped, tag = 'scoped memory for forward.1']
    #allocation15 [shape = 'u8[512]{0}', space=vmem, size = 0x400, scoped, tag = 'input window, operand 9, single buffered']
    #allocation16 [shape = 'u8[512]{0}', space=vmem, size = 0x400, scoped, tag = 'input window, operand 10, single buffered']
    #allocation17 [shape = 's32[1]{0}', space=sflag, size = 0x4, scoped, tag = 'scoped memory for forward.1']
    #allocation18 [shape = 'u8[2048]{0}', space=vmem, size = 0x800, scoped, tag = 'input window, operand 12, single buffered']
    #allocation19 [shape = 'u8[512]{0}', space=vmem, size = 0x400, scoped, tag = 'output window, operand 0, single buffered']
    #allocation20 [shape = 'u8[512]{0}', space=vmem, size = 0x400, scoped, tag = 'output window, operand 1, single buffered']
    #allocation21 [shape = 's32[1]{0}', space=sflag, size = 0x4, scoped, tag = 'scoped memory for forward.1']
    #allocation22 [shape = 'u8[512]{0}', space=vmem, size = 0x400, scoped, tag = 'output window, operand 2, single buffered']
    %26 = vsyncpa [#allocation5], 0
    %27 = vsyncpa [#allocation8], 0
    %28 = vsyncpa [#allocation11], 0
    %29 = vsyncpa [#allocation14], 0
    %30 = vsyncpa [#allocation17], 0
    %31 = vsyncpa [#allocation6], 0
    %32 = vsyncpa [#allocation21], 0
    // Predicated region
    $region2: #{forward.1} parent=1 // pred_check
      _
    $region3: #{forward.1} parent=1 // pred_check_branch
      %34 = sbr.rel (0) target = $region5
    $region4: #{forward.1} parent=1 // pred_region
      _
    $region5: #{forward.1} parent=1 // pred_fallthru
      _
    // Predicated region
    $region6: #{forward.1} parent=1 // pred_check
      _
    $region7: #{forward.1} parent=1 // pred_check_branch
      %36 = sbr.rel (0) target = $region9
    $region8: #{forward.1} parent=1 // pred_region
      _
    $region9: #{forward.1} parent=1 // pred_fallthru
      _
    // Predicated region
    $region10: #{forward.1} parent=1 // pred_check
      _
    $region11: #{forward.1} parent=1 // pred_check_branch
      %38 = sbr.rel (0) target = $region13
    $region12: #{forward.1} parent=1 // pred_region
      %s40 = ssub.s32 10752, 10752
      %41 = vsyncadd [#allocation5], %s40
      %s42 = sshll.u32 [#allocation4], 4
      %s43 = int_to_ptr.vmem [resolvable:$true] %s42
      %48 = dma.hbm_to_vmem [thread:$0]  %s2, 10752, %s43, [#allocation5], 128, 128, 8
    $region13: #{forward.1} parent=1 // pred_fallthru
      _
    // Predicated region
    $region14: #{forward.1} parent=1 // pred_check
      _
    $region15: #{forward.1} parent=1 // pred_check_branch
      %50 = sbr.rel (0) target = $region17
    $region16: #{forward.1} parent=1 // pred_region
      %s52 = ssub.s32 32, 32
      %53 = vsyncadd [#allocation8], %s52
      %s55 = sshll.u32 [#allocation7], 4
      %s56 = int_to_ptr.vmem [resolvable:$true] %s55
      %58 = dma.hbm_to_vmem [thread:$0]  %s3, 32, %s56, [#allocation8]
    $region17: #{forward.1} parent=1 // pred_fallthru
      _
    // Predicated region
    $region18: #{forward.1} parent=1 // pred_check
      _
    $region19: #{forward.1} parent=1 // pred_check_branch
      %60 = sbr.rel (0) target = $region21
    $region20: #{forward.1} parent=1 // pred_region
      %s62 = ssub.s32 98304, 98304
      %63 = vsyncadd [#allocation8], %s62
      %s64 = sshll.u32 [#allocation9], 4
      %s65 = int_to_ptr.vmem [resolvable:$true] %s64
      %70 = dma.hbm_to_vmem [thread:$0]  %s4, 98304, %s65, [#allocation8], 128, 128, 8
    $region21: #{forward.1} parent=1 // pred_fallthru
      _
    // Predicated region
    $region22: #{forward.1} parent=1 // pred_check
      _
    $region23: #{forward.1} parent=1 // pred_check_branch
      %72 = sbr.rel (0) target = $region25
    $region24: #{forward.1} parent=1 // pred_region
      %s74 = ssub.s32 32, 32
      %75 = vsyncadd [#allocation11], %s74
      %s77 = sshll.u32 [#allocation10], 4
      %s78 = int_to_ptr.vmem [resolvable:$true] %s77
      %80 = dma.hbm_to_vmem [thread:$0]  %s5, 32, %s78, [#allocation11]
    $region25: #{forward.1} parent=1 // pred_fallthru
      _
    // Predicated region
    $region26: #{forward.1} parent=1 // pred_check
      _
    $region27: #{forward.1} parent=1 // pred_check_branch
      %82 = sbr.rel (0) target = $region29
    $region28: #{forward.1} parent=1 // pred_region
      _
    $region29: #{forward.1} parent=1 // pred_fallthru
      _
    // Predicated region
    $region30: #{forward.1} parent=1 // pred_check
      _
    $region31: #{forward.1} parent=1 // pred_check_branch
      %84 = sbr.rel (0) target = $region33
    $region32: #{forward.1} parent=1 // pred_region
      %s86 = ssub.s32 64, 64
      %87 = vsyncadd [#allocation11], %s86
      %s89 = sshll.u32 [#allocation12], 4
      %s90 = int_to_ptr.vmem [resolvable:$true] %s89
      %92 = dma.hbm_to_vmem [thread:$0]  %s7, 64, %s90, [#allocation11]
    $region33: #{forward.1} parent=1 // pred_fallthru
      _
    // Predicated region
    $region34: #{forward.1} parent=1 // pred_check
      _
    $region35: #{forward.1} parent=1 // pred_check_branch
      %94 = sbr.rel (0) target = $region37
    $region36: #{forward.1} parent=1 // pred_region
      %s96 = ssub.s32 4032, 4032
      %97 = vsyncadd [#allocation14], %s96
      %s98 = sshll.u32 [#allocation13], 4
      %s99 = int_to_ptr.vmem [resolvable:$true] %s98
      %104 = dma.hbm_to_vmem [thread:$0]  %s8, 4032, %s99, [#allocation14], 64, 64, 4
    $region37: #{forward.1} parent=1 // pred_fallthru
      _
    // Predicated region
    $region38: #{forward.1} parent=1 // pred_check
      _
    $region39: #{forward.1} parent=1 // pred_check_branch
      %106 = sbr.rel (0) target = $region41
    $region40: #{forward.1} parent=1 // pred_region
      %s108 = ssub.s32 16, 16
      %109 = vsyncadd [#allocation14], %s108
      %s111 = sshll.u32 [#allocation15], 4
      %s112 = int_to_ptr.vmem [resolvable:$true] %s111
      %114 = dma.hbm_to_vmem [thread:$0]  %s9, 16, %s112, [#allocation14]
    $region41: #{forward.1} parent=1 // pred_fallthru
      _
    // Predicated region
    $region42: #{forward.1} parent=1 // pred_check
      _
    $region43: #{forward.1} parent=1 // pred_check_branch
      %116 = sbr.rel (0) target = $region45
    $region44: #{forward.1} parent=1 // pred_region
      %s118 = ssub.s32 16, 16
      %119 = vsyncadd [#allocation17], %s118
      %s121 = sshll.u32 [#allocation16], 4
      %s122 = int_to_ptr.vmem [resolvable:$true] %s121
      %124 = dma.hbm_to_vmem [thread:$0]  %s10, 16, %s122, [#allocation17]
    $region45: #{forward.1} parent=1 // pred_fallthru
      _
    // Predicated region
    $region46: #{forward.1} parent=1 // pred_check
      _
    $region47: #{forward.1} parent=1 // pred_check_branch
      %126 = sbr.rel (0) target = $region49
    $region48: #{forward.1} parent=1 // pred_region
      _
    $region49: #{forward.1} parent=1 // pred_fallthru
      _
    // Predicated region
    $region50: #{forward.1} parent=1 // pred_check
      _
    $region51: #{forward.1} parent=1 // pred_check_branch
      %128 = sbr.rel (0) target = $region53
    $region52: #{forward.1} parent=1 // pred_region
      %s130 = ssub.s32 64, 64
      %131 = vsyncadd [#allocation17], %s130
      %s133 = sshll.u32 [#allocation18], 4
      %s134 = int_to_ptr.vmem [resolvable:$true] %s133
      %136 = dma.hbm_to_vmem [thread:$0]  %s12, 64, %s134, [#allocation17]
    $region53: #{forward.1} parent=1 // pred_fallthru
      _
    // Predicated region
    $region54: #{forward.1} parent=1 // pred_check
      _
    $region55: #{forward.1} parent=1 // pred_check_branch
      %138 = sbr.rel (0) target = $region57
    $region56: #{forward.1} parent=1 // pred_region
      _
    $region57: #{forward.1} parent=1 // pred_fallthru
      _
    // Predicated region
    $region58: #{forward.1} parent=1 // pred_check
      _
    $region59: #{forward.1} parent=1 // pred_check_branch
      %140 = sbr.rel (0) target = $region61
    $region60: #{forward.1} parent=1 // pred_region
      %141 = dma.done [#allocation5], 10752
    $region61: #{forward.1} parent=1 // pred_fallthru
      _
    // Predicated region
    $region62: #{forward.1} parent=1 // pred_check
      _
    $region63: #{forward.1} parent=1 // pred_check_branch
      %143 = sbr.rel (0) target = $region65
    $region64: #{forward.1} parent=1 // pred_region
      %144 = dma.done [#allocation8], 32
    $region65: #{forward.1} parent=1 // pred_fallthru
      _
    // Predicated region
    $region66: #{forward.1} parent=1 // pred_check
      _
    $region67: #{forward.1} parent=1 // pred_check_branch
      %146 = sbr.rel (0) target = $region69
    $region68: #{forward.1} parent=1 // pred_region
      %147 = dma.done [#allocation8], 98304
    $region69: #{forward.1} parent=1 // pred_fallthru
      _
    // Predicated region
    $region70: #{forward.1} parent=1 // pred_check
      _
    $region71: #{forward.1} parent=1 // pred_check_branch
      %149 = sbr.rel (0) target = $region73
    $region72: #{forward.1} parent=1 // pred_region
      %150 = dma.done [#allocation11], 32
    $region73: #{forward.1} parent=1 // pred_fallthru
      _
    // Predicated region
    $region74: #{forward.1} parent=1 // pred_check
      _
    $region75: #{forward.1} parent=1 // pred_check_branch
      %152 = sbr.rel (0) target = $region77
    $region76: #{forward.1} parent=1 // pred_region
      %153 = dma.done [#allocation11], 64
    $region77: #{forward.1} parent=1 // pred_fallthru
      _
    // Predicated region
    $region78: #{forward.1} parent=1 // pred_check
      _
    $region79: #{forward.1} parent=1 // pred_check_branch
      %155 = sbr.rel (0) target = $region81
    $region80: #{forward.1} parent=1 // pred_region
      %156 = dma.done [#allocation14], 4032
    $region81: #{forward.1} parent=1 // pred_fallthru
      _
    // Predicated region
    $region82: #{forward.1} parent=1 // pred_check
      _
    $region83: #{forward.1} parent=1 // pred_check_branch
      %158 = sbr.rel (0) target = $region85
    $region84: #{forward.1} parent=1 // pred_region
      %159 = dma.done [#allocation14], 16
    $region85: #{forward.1} parent=1 // pred_fallthru
      _
    // Predicated region
    $region86: #{forward.1} parent=1 // pred_check
      _
    $region87: #{forward.1} parent=1 // pred_check_branch
      %161 = sbr.rel (0) target = $region89
    $region88: #{forward.1} parent=1 // pred_region
      %162 = dma.done [#allocation17], 16
    $region89: #{forward.1} parent=1 // pred_fallthru
      _
    // Predicated region
    $region90: #{forward.1} parent=1 // pred_check
      _
    $region91: #{forward.1} parent=1 // pred_check_branch
      %164 = sbr.rel (0) target = $region93
    $region92: #{forward.1} parent=1 // pred_region
      %165 = dma.done [#allocation17], 64
    $region93: #{forward.1} parent=1 // pred_fallthru
      _
    %v167 = vld [vmem:[%s0] sm:$0xff]
    %v168 = vld [vmem:[%s0 + $0x8] sm:$0xff]
    %v169 = vld [vmem:[%s0 + $0x10] sm:$0xff]
    %v170 = vld [vmem:[%s0 + $0x18] sm:$0xff]
    %v171 = vld [vmem:[%s0 + $0x20] sm:$0xff]
    %v172 = vld [vmem:[%s0 + $0x28] sm:$0xff]
    %v173 = vld [vmem:[%s0 + $0x30] sm:$0xff]
    %v174 = vld [vmem:[%s0 + $0x38] sm:$0xff]
    %v175 = vld [vmem:[%s0 + $0x40] sm:$0xff]
    %v176 = vld [vmem:[%s0 + $0x48] sm:$0xff]
    %v177 = vld [vmem:[%s0 + $0x50] sm:$0xff]
    %v178 = vld [vmem:[%s0 + $0x58] sm:$0xff]
    %v179 = vld [vmem:[#allocation7] sm:$0x3]
    %v180 = vld [vmem:[#allocation4] sm:$0xff]
    %v181 = vld [vmem:[#allocation4 + $0x8] sm:$0xff]
    %v182 = vld [vmem:[#allocation4 + $0x10] sm:$0xff]
    %v183 = vld [vmem:[#allocation4 + $0x18] sm:$0xff]
    %v184 = vld [vmem:[#allocation4 + $0x20] sm:$0xff]
    %v185 = vld [vmem:[#allocation4 + $0x28] sm:$0xff]
    %v186 = vld [vmem:[#allocation4 + $0x30] sm:$0xff]
    %v187 = vld [vmem:[#allocation4 + $0x38] sm:$0xff]
    %v188 = vld [vmem:[#allocation4 + $0x40] sm:$0xff]
    %v189 = vld [vmem:[#allocation4 + $0x48] sm:$0xff]
    %v190 = vld [vmem:[#allocation4 + $0x50] sm:$0xff]
    %v191 = vld [vmem:[#allocation4 + $0x58] sm:$0xff]
    %v192 = vld [vmem:[#allocation4 + $0x60] sm:$0xff]
    %v193 = vld [vmem:[#allocation4 + $0x68] sm:$0xff]
    %v194 = vld [vmem:[#allocation4 + $0x70] sm:$0xff]
    %v195 = vld [vmem:[#allocation4 + $0x78] sm:$0xff]
    %v196 = vld [vmem:[#allocation4 + $0x80] sm:$0xff]
    %v197 = vld [vmem:[#allocation4 + $0x88] sm:$0xff]
    %v198 = vld [vmem:[#allocation4 + $0x90] sm:$0xff]
    %v199 = vld [vmem:[#allocation4 + $0x98] sm:$0xff]
    %v200 = vld [vmem:[#allocation4 + $0xa0] sm:$0xff]
    %v213 = vunpack.c.l.b16 %v167
    %v214 = vunpack.c.h.b16 %v167
    %v215 = vunpack.c.l.b16 %v168
    %v216 = vunpack.c.h.b16 %v168
    %v217 = vunpack.c.l.b16 %v169
    %v218 = vunpack.c.h.b16 %v169
    %v219 = vunpack.c.l.b16 %v170
    %v220 = vunpack.c.h.b16 %v170
    %v221 = vunpack.c.l.b16 %v171
    %v222 = vunpack.c.h.b16 %v171
    %v223 = vunpack.c.l.b16 %v172
    %v224 = vunpack.c.h.b16 %v172
    %v225 = vunpack.c.l.b16 %v173
    %v226 = vunpack.c.h.b16 %v173
    %v227 = vunpack.c.l.b16 %v174
    %v228 = vunpack.c.h.b16 %v174
    %v229 = vunpack.c.l.b16 %v175
    %v230 = vunpack.c.h.b16 %v175
    %v231 = vunpack.c.l.b16 %v176
    %v232 = vunpack.c.h.b16 %v176
    %v233 = vunpack.c.l.b16 %v177
    %v234 = vunpack.c.h.b16 %v177
    %v235 = vunpack.c.l.b16 %v178
    %v236 = vunpack.c.h.b16 %v178
    %v237 = vpack.c.b16 %v215, %v213
    %v238 = vpack.c.b16 %v216, %v214
    %v239 = vpack.c.b16 %v219, %v217
    %v240 = vpack.c.b16 %v220, %v218
    %v241 = vpack.c.b16 %v223, %v221
    %v242 = vpack.c.b16 %v224, %v222
    %v243 = vpack.c.b16 %v227, %v225
    %v244 = vpack.c.b16 %v228, %v226
    %v245 = vpack.c.b16 %v231, %v229
    %v246 = vpack.c.b16 %v232, %v230
    %v247 = vpack.c.b16 %v235, %v233
    %v248 = vpack.c.b16 %v236, %v234
    %v276 = vunpack.c.l.b16 %v180
    %v277 = vunpack.c.h.b16 %v180
    %v278 = vunpack.c.l.b16 %v181
    %v279 = vunpack.c.h.b16 %v181
    %v280 = vunpack.c.l.b16 %v182
    %v281 = vunpack.c.h.b16 %v182
    %v282 = vunpack.c.l.b16 %v183
    %v283 = vunpack.c.h.b16 %v183
    %v284 = vunpack.c.l.b16 %v184
    %v285 = vunpack.c.h.b16 %v184
    %v286 = vunpack.c.l.b16 %v185
    %v287 = vunpack.c.h.b16 %v185
    %v288 = vunpack.c.l.b16 %v186
    %v289 = vunpack.c.h.b16 %v186
    %v290 = vunpack.c.l.b16 %v187
    %v291 = vunpack.c.h.b16 %v187
    %v292 = vunpack.c.l.b16 %v188
    %v293 = vunpack.c.h.b16 %v188
    %v294 = vunpack.c.l.b16 %v189
    %v295 = vunpack.c.h.b16 %v189
    %v296 = vunpack.c.l.b16 %v190
    %v297 = vunpack.c.h.b16 %v190
    %v298 = vunpack.c.l.b16 %v191
    %v299 = vunpack.c.h.b16 %v191
    %v300 = vunpack.c.l.b16 %v192
    %v301 = vunpack.c.h.b16 %v192
    %v302 = vunpack.c.l.b16 %v193
    %v303 = vunpack.c.h.b16 %v193
    %v304 = vunpack.c.l.b16 %v194
    %v305 = vunpack.c.h.b16 %v194
    %v306 = vunpack.c.l.b16 %v195
    %v307 = vunpack.c.h.b16 %v195
    %v308 = vunpack.c.l.b16 %v196
    %v309 = vunpack.c.h.b16 %v196
    %v310 = vunpack.c.l.b16 %v197
    %v311 = vunpack.c.h.b16 %v197
    %v312 = vunpack.c.l.b16 %v198
    %v313 = vunpack.c.h.b16 %v198
    %v314 = vunpack.c.l.b16 %v199
    %v315 = vunpack.c.h.b16 %v199
    %v316 = vunpack.c.l.b16 %v200
    %v317 = vunpack.c.h.b16 %v200
    %v318 = vpack.c.b16 %v278, %v276
    %v319 = vpack.c.b16 %v279, %v277
    %v320 = vpack.c.b16 %v282, %v280
    %v321 = vpack.c.b16 %v283, %v281
    %v322 = vpack.c.b16 %v286, %v284
    %v323 = vpack.c.b16 %v287, %v285
    %v324 = vpack.c.b16 %v290, %v288
    %v325 = vpack.c.b16 %v291, %v289
    %v326 = vpack.c.b16 %v294, %v292
    %v327 = vpack.c.b16 %v295, %v293
    %v328 = vpack.c.b16 %v298, %v296
    %v329 = vpack.c.b16 %v299, %v297
    %v330 = vpack.c.b16 %v302, %v300
    %v331 = vpack.c.b16 %v303, %v301
    %v332 = vpack.c.b16 %v306, %v304
    %v333 = vpack.c.b16 %v307, %v305
    %v334 = vpack.c.b16 %v310, %v308
    %v335 = vpack.c.b16 %v311, %v309
    %v336 = vpack.c.b16 %v314, %v312
    %v337 = vpack.c.b16 %v315, %v313
    %v338 = vpack.c.b16 %v316, %v316
    %v339 = vpack.c.b16 %v317, %v317
    %vm360 = vcmask 326656
    %v362 = vsel %vm360, %v238, 0
    %v365 = vsel %vm360, %v240, 0
    %v368 = vsel %vm360, %v242, 0
    %v371 = vsel %vm360, %v244, 0
    %v374 = vsel %vm360, %v246, 0
    %v377 = vsel %vm360, %v248, 0
    %vm379 = vcmask 1043456
    %v381 = vsel %vm379, %v338, 0
    %v384 = vsel %vm379, %v339, 0
    %386 = vmatprep.subr.bf16.mxu0 %v333
    %387 = vmatpush1.bf16.msra.mxu0 %v332
    %388 = vmatprep.subr.bf16.mxu0 %v331
    %389 = vmatpush1.bf16.msra.mxu0 %v330
    %390 = vmatprep.subr.bf16.mxu0 %v329
    %391 = vmatpush1.bf16.msra.mxu0 %v328
    %392 = vmatprep.subr.bf16.mxu0 %v327
    %393 = vmatpush1.bf16.msra.mxu0 %v326
    %394 = vmatprep.subr.bf16.mxu0 %v325
    %395 = vmatpush1.bf16.msra.mxu0 %v324
    %396 = vmatprep.subr.bf16.mxu0 %v323
    %397 = vmatpush1.bf16.msra.mxu0 %v322
    %398 = vmatprep.subr.bf16.mxu0 %v321
    %399 = vmatpush1.bf16.msra.mxu0 %v320
    %400 = vmatprep.subr.bf16.mxu0 %v319
    %401 = vmatpush1.bf16.msra.mxu0 %v318
    %402 = vmatprep.subr.bf16.mxu0 0
    %403 = vmatpush2.bf16.msra.mxu0 0
    %404 = vmatprep.subr.bf16.mxu0 0
    %405 = vmatpush2.bf16.msra.mxu0 0
    %406 = vmatprep.subr.bf16.mxu0 0
    %407 = vmatpush2.bf16.msra.mxu0 0
    %408 = vmatprep.subr.bf16.mxu0 0
    %409 = vmatpush2.bf16.msra.mxu0 0
    %410 = vmatprep.subr.bf16.mxu0 0
    %411 = vmatpush2.bf16.msra.mxu0 0
    %412 = vmatprep.subr.bf16.mxu0 %v384
    %413 = vmatpush2.bf16.msra.mxu0 %v381
    %414 = vmatprep.subr.bf16.mxu0 %v337
    %415 = vmatpush2.bf16.msra.mxu0 %v336
    %416 = vmatprep.subr.bf16.mxu0 %v335
    %417 = vmatpush2.bf16.msra.mxu0 %v334
    %418 = vmatprep.mubr.bf16.mxu0 %v362
    %419 = vmatmul.mubr.bf16.gmra.mxu0 %v237
    %v420 = vpop.f32.mrf.mxu0
    %v421 = vadd.f32 0.0, %v420
    %v422 = vpop.f32.mrf.mxu0
    %v423 = vadd.f32 0.0, %v422
    %v424 = vpop.f32.mrf.mxu0
    %v425 = vadd.f32 0.0, %v424
    %v426 = vpop.f32.mrf.mxu0
    %v427 = vadd.f32 0.0, %v426
    %428 = vmatprep.mubr.bf16.mxu0 %v365
    %429 = vmatmul.mubr.bf16.gmra.mxu0 %v239
    %v430 = vpop.f32.mrf.mxu0
    %v431 = vadd.f32 0.0, %v430
    %v432 = vpop.f32.mrf.mxu0
    %v433 = vadd.f32 0.0, %v432
    %v434 = vpop.f32.mrf.mxu0
    %v435 = vadd.f32 0.0, %v434
    %v436 = vpop.f32.mrf.mxu0
    %v437 = vadd.f32 0.0, %v436
    %438 = vmatprep.mubr.bf16.mxu0 %v368
    %439 = vmatmul.mubr.bf16.gmra.mxu0 %v241
    %v440 = vpop.f32.mrf.mxu0
    %v441 = vadd.f32 0.0, %v440
    %v442 = vpop.f32.mrf.mxu0
    %v443 = vadd.f32 0.0, %v442
    %v444 = vpop.f32.mrf.mxu0
    %v445 = vadd.f32 0.0, %v444
    %v446 = vpop.f32.mrf.mxu0
    %v447 = vadd.f32 0.0, %v446
    %448 = vmatprep.mubr.bf16.mxu0 %v371
    %449 = vmatmul.mubr.bf16.gmra.mxu0 %v243
    %v450 = vpop.f32.mrf.mxu0
    %v451 = vadd.f32 0.0, %v450
    %v452 = vpop.f32.mrf.mxu0
    %v453 = vadd.f32 0.0, %v452
    %v454 = vpop.f32.mrf.mxu0
    %v455 = vadd.f32 0.0, %v454
    %v456 = vpop.f32.mrf.mxu0
    %v457 = vadd.f32 0.0, %v456
    %458 = vmatprep.mubr.bf16.mxu0 %v374
    %459 = vmatmul.mubr.bf16.gmra.mxu0 %v245
    %v460 = vpop.f32.mrf.mxu0
    %v461 = vadd.f32 0.0, %v460
    %v462 = vpop.f32.mrf.mxu0
    %v463 = vadd.f32 0.0, %v462
    %v464 = vpop.f32.mrf.mxu0
    %v465 = vadd.f32 0.0, %v464
    %v466 = vpop.f32.mrf.mxu0
    %v467 = vadd.f32 0.0, %v466
    %468 = vmatprep.mubr.bf16.mxu0 %v377
    %469 = vmatmul.mubr.bf16.gmra.mxu0 %v247
    %v470 = vpop.f32.mrf.mxu0
    %v471 = vadd.f32 0.0, %v470
    %v472 = vpop.f32.mrf.mxu0
    %v473 = vadd.f32 0.0, %v472
    %v474 = vpop.f32.mrf.mxu0
    %v475 = vadd.f32 0.0, %v474
    %v476 = vpop.f32.mrf.mxu0
    %v477 = vadd.f32 0.0, %v476
    %478 = vdwg.mxu0
    %s479 = scalar_lea.vmem [#allocation4], 168
    %v480 = vld [vmem:[%s479] sm:$0xff]
    %v481 = vld [vmem:[%s479 + $0x8] sm:$0xff]
    %v482 = vld [vmem:[%s479 + $0x10] sm:$0xff]
    %v483 = vld [vmem:[%s479 + $0x18] sm:$0xff]
    %v484 = vld [vmem:[%s479 + $0x20] sm:$0xff]
    %v485 = vld [vmem:[%s479 + $0x28] sm:$0xff]
    %v486 = vld [vmem:[%s479 + $0x30] sm:$0xff]
    %v487 = vld [vmem:[%s479 + $0x38] sm:$0xff]
    %v488 = vld [vmem:[%s479 + $0x40] sm:$0xff]
    %v489 = vld [vmem:[%s479 + $0x48] sm:$0xff]
    %v490 = vld [vmem:[%s479 + $0x50] sm:$0xff]
    %v491 = vld [vmem:[%s479 + $0x58] sm:$0xff]
    %v492 = vld [vmem:[%s479 + $0x60] sm:$0xff]
    %v493 = vld [vmem:[%s479 + $0x68] sm:$0xff]
    %v494 = vld [vmem:[%s479 + $0x70] sm:$0xff]
    %v495 = vld [vmem:[%s479 + $0x78] sm:$0xff]
    %v496 = vld [vmem:[%s479 + $0x80] sm:$0xff]
    %v497 = vld [vmem:[%s479 + $0x88] sm:$0xff]
    %v498 = vld [vmem:[%s479 + $0x90] sm:$0xff]
    %v499 = vld [vmem:[%s479 + $0x98] sm:$0xff]
    %v500 = vld [vmem:[%s479 + $0xa0] sm:$0xff]
    %v522 = vunpack.c.l.b16 %v480
    %v523 = vunpack.c.h.b16 %v480
    %v524 = vunpack.c.l.b16 %v481
    %v525 = vunpack.c.h.b16 %v481
    %v526 = vunpack.c.l.b16 %v482
    %v527 = vunpack.c.h.b16 %v482
    %v528 = vunpack.c.l.b16 %v483
    %v529 = vunpack.c.h.b16 %v483
    %v530 = vunpack.c.l.b16 %v484
    %v531 = vunpack.c.h.b16 %v484
    %v532 = vunpack.c.l.b16 %v485
    %v533 = vunpack.c.h.b16 %v485
    %v534 = vunpack.c.l.b16 %v486
    %v535 = vunpack.c.h.b16 %v486
    %v536 = vunpack.c.l.b16 %v487
    %v537 = vunpack.c.h.b16 %v487
    %v538 = vunpack.c.l.b16 %v488
    %v539 = vunpack.c.h.b16 %v488
    %v540 = vunpack.c.l.b16 %v489
    %v541 = vunpack.c.h.b16 %v489
    %v542 = vunpack.c.l.b16 %v490
    %v543 = vunpack.c.h.b16 %v490
    %v544 = vunpack.c.l.b16 %v491
    %v545 = vunpack.c.h.b16 %v491
    %v546 = vunpack.c.l.b16 %v492
    %v547 = vunpack.c.h.b16 %v492
    %v548 = vunpack.c.l.b16 %v493
    %v549 = vunpack.c.h.b16 %v493
    %v550 = vunpack.c.l.b16 %v494
    %v551 = vunpack.c.h.b16 %v494
    %v552 = vunpack.c.l.b16 %v495
    %v553 = vunpack.c.h.b16 %v495
    %v554 = vunpack.c.l.b16 %v496
    %v555 = vunpack.c.h.b16 %v496
    %v556 = vunpack.c.l.b16 %v497
    %v557 = vunpack.c.h.b16 %v497
    %v558 = vunpack.c.l.b16 %v498
    %v559 = vunpack.c.h.b16 %v498
    %v560 = vunpack.c.l.b16 %v499
    %v561 = vunpack.c.h.b16 %v499
    %v562 = vunpack.c.l.b16 %v500
    %v563 = vunpack.c.h.b16 %v500
    %v564 = vpack.c.b16 %v524, %v522
    %v565 = vpack.c.b16 %v525, %v523
    %v566 = vpack.c.b16 %v528, %v526
    %v567 = vpack.c.b16 %v529, %v527
    %v568 = vpack.c.b16 %v532, %v530
    %v569 = vpack.c.b16 %v533, %v531
    %v570 = vpack.c.b16 %v536, %v534
    %v571 = vpack.c.b16 %v537, %v535
    %v572 = vpack.c.b16 %v540, %v538
    %v573 = vpack.c.b16 %v541, %v539
    %v574 = vpack.c.b16 %v544, %v542
    %v575 = vpack.c.b16 %v545, %v543
    %v576 = vpack.c.b16 %v548, %v546
    %v577 = vpack.c.b16 %v549, %v547
    %v578 = vpack.c.b16 %v552, %v550
    %v579 = vpack.c.b16 %v553, %v551
    %v580 = vpack.c.b16 %v556, %v554
    %v581 = vpack.c.b16 %v557, %v555
    %v582 = vpack.c.b16 %v560, %v558
    %v583 = vpack.c.b16 %v561, %v559
    %v584 = vpack.c.b16 %v562, %v562
    %v585 = vpack.c.b16 %v563, %v563
    %v607 = vsel %vm379, %v584, 0
    %v610 = vsel %vm379, %v585, 0
    %612 = vmatprep.subr.bf16.mxu0 %v579
    %613 = vmatpush1.bf16.msra.mxu0 %v578
    %614 = vmatprep.subr.bf16.mxu0 %v577
    %615 = vmatpush1.bf16.msra.mxu0 %v576
    %616 = vmatprep.subr.bf16.mxu0 %v575
    %617 = vmatpush1.bf16.msra.mxu0 %v574
    %618 = vmatprep.subr.bf16.mxu0 %v573
    %619 = vmatpush1.bf16.msra.mxu0 %v572
    %620 = vmatprep.subr.bf16.mxu0 %v571
    %621 = vmatpush1.bf16.msra.mxu0 %v570
    %622 = vmatprep.subr.bf16.mxu0 %v569
    %623 = vmatpush1.bf16.msra.mxu0 %v568
    %624 = vmatprep.subr.bf16.mxu0 %v567
    %625 = vmatpush1.bf16.msra.mxu0 %v566
    %626 = vmatprep.subr.bf16.mxu0 %v565
    %627 = vmatpush1.bf16.msra.mxu0 %v564
    %628 = vmatprep.subr.bf16.mxu0 0
    %629 = vmatpush2.bf16.msra.mxu0 0
    %630 = vmatprep.subr.bf16.mxu0 0
    %631 = vmatpush2.bf16.msra.mxu0 0
    %632 = vmatprep.subr.bf16.mxu0 0
    %633 = vmatpush2.bf16.msra.mxu0 0
    %634 = vmatprep.subr.bf16.mxu0 0
    %635 = vmatpush2.bf16.msra.mxu0 0
    %636 = vmatprep.subr.bf16.mxu0 0
    %637 = vmatpush2.bf16.msra.mxu0 0
    %638 = vmatprep.subr.bf16.mxu0 %v610
    %639 = vmatpush2.bf16.msra.mxu0 %v607
    %640 = vmatprep.subr.bf16.mxu0 %v583
    %641 = vmatpush2.bf16.msra.mxu0 %v582
    %642 = vmatprep.subr.bf16.mxu0 %v581
    %643 = vmatpush2.bf16.msra.mxu0 %v580
    %644 = vmatprep.mubr.bf16.mxu0 %v362
    %645 = vmatmul.mubr.bf16.gmra.mxu0 %v237
    %v646 = vpop.f32.mrf.mxu0
    %v647 = vadd.f32 0.0, %v646
    %v648 = vpop.f32.mrf.mxu0
    %v649 = vadd.f32 0.0, %v648
    %v650 = vpop.f32.mrf.mxu0
    %v651 = vadd.f32 0.0, %v650
    %v652 = vpop.f32.mrf.mxu0
    %v653 = vadd.f32 0.0, %v652
    %654 = vmatprep.mubr.bf16.mxu0 %v365
    %655 = vmatmul.mubr.bf16.gmra.mxu0 %v239
    %v656 = vpop.f32.mrf.mxu0
    %v657 = vadd.f32 0.0, %v656
    %v658 = vpop.f32.mrf.mxu0
    %v659 = vadd.f32 0.0, %v658
    %v660 = vpop.f32.mrf.mxu0
    %v661 = vadd.f32 0.0, %v660
    %v662 = vpop.f32.mrf.mxu0
    %v663 = vadd.f32 0.0, %v662
    %664 = vmatprep.mubr.bf16.mxu0 %v368
    %665 = vmatmul.mubr.bf16.gmra.mxu0 %v241
    %v666 = vpop.f32.mrf.mxu0
    %v667 = vadd.f32 0.0, %v666
    %v668 = vpop.f32.mrf.mxu0
    %v669 = vadd.f32 0.0, %v668
    %v670 = vpop.f32.mrf.mxu0
    %v671 = vadd.f32 0.0, %v670
    %v672 = vpop.f32.mrf.mxu0
    %v673 = vadd.f32 0.0, %v672
    %674 = vmatprep.mubr.bf16.mxu0 %v371
    %675 = vmatmul.mubr.bf16.gmra.mxu0 %v243
    %v676 = vpop.f32.mrf.mxu0
    %v677 = vadd.f32 0.0, %v676
    %v678 = vpop.f32.mrf.mxu0
    %v679 = vadd.f32 0.0, %v678
    %v680 = vpop.f32.mrf.mxu0
    %v681 = vadd.f32 0.0, %v680
    %v682 = vpop.f32.mrf.mxu0
    %v683 = vadd.f32 0.0, %v682
    %684 = vmatprep.mubr.bf16.mxu0 %v374
    %685 = vmatmul.mubr.bf16.gmra.mxu0 %v245
    %v686 = vpop.f32.mrf.mxu0
    %v687 = vadd.f32 0.0, %v686
    %v688 = vpop.f32.mrf.mxu0
    %v689 = vadd.f32 0.0, %v688
    %v690 = vpop.f32.mrf.mxu0
    %v691 = vadd.f32 0.0, %v690
    %v692 = vpop.f32.mrf.mxu0
    %v693 = vadd.f32 0.0, %v692
    %694 = vmatprep.mubr.bf16.mxu0 %v377
    %695 = vmatmul.mubr.bf16.gmra.mxu0 %v247
    %v696 = vpop.f32.mrf.mxu0
    %v697 = vadd.f32 0.0, %v696
    %v698 = vpop.f32.mrf.mxu0
    %v699 = vadd.f32 0.0, %v698
    %v700 = vpop.f32.mrf.mxu0
    %v701 = vadd.f32 0.0, %v700
    %v702 = vpop.f32.mrf.mxu0
    %v703 = vadd.f32 0.0, %v702
    %704 = vdwg.mxu0
    %v705 = vmax.f32 %v421, %v647
    %v706 = vmax.f32 %v423, %v649
    %v707 = vmax.f32 %v425, %v651
    %v708 = vmax.f32 %v427, %v653
    %v709 = vmax.f32 %v431, %v657
    %v710 = vmax.f32 %v433, %v659
    %v711 = vmax.f32 %v435, %v661
    %v712 = vmax.f32 %v437, %v663
    %v713 = vmax.f32 %v441, %v667
    %v714 = vmax.f32 %v443, %v669
    %v715 = vmax.f32 %v445, %v671
    %v716 = vmax.f32 %v447, %v673
    %v717 = vmax.f32 %v451, %v677
    %v718 = vmax.f32 %v453, %v679
    %v719 = vmax.f32 %v455, %v681
    %v720 = vmax.f32 %v457, %v683
    %v721 = vmax.f32 %v461, %v687
    %v722 = vmax.f32 %v463, %v689
    %v723 = vmax.f32 %v465, %v691
    %v724 = vmax.f32 %v467, %v693
    %v725 = vmax.f32 %v471, %v697
    %v726 = vmax.f32 %v473, %v699
    %v727 = vmax.f32 %v475, %v701
    %v728 = vmax.f32 %v477, %v703
    %s729 = scalar_lea.vmem [#allocation4], 336
    %v730 = vld [vmem:[%s729] sm:$0xff]
    %v731 = vld [vmem:[%s729 + $0x8] sm:$0xff]
    %v732 = vld [vmem:[%s729 + $0x10] sm:$0xff]
    %v733 = vld [vmem:[%s729 + $0x18] sm:$0xff]
    %v734 = vld [vmem:[%s729 + $0x20] sm:$0xff]
    %v735 = vld [vmem:[%s729 + $0x28] sm:$0xff]
    %v736 = vld [vmem:[%s729 + $0x30] sm:$0xff]
    %v737 = vld [vmem:[%s729 + $0x38] sm:$0xff]
    %v738 = vld [vmem:[%s729 + $0x40] sm:$0xff]
    %v739 = vld [vmem:[%s729 + $0x48] sm:$0xff]
    %v740 = vld [vmem:[%s729 + $0x50] sm:$0xff]
    %v741 = vld [vmem:[%s729 + $0x58] sm:$0xff]
    %v742 = vld [vmem:[%s729 + $0x60] sm:$0xff]
    %v743 = vld [vmem:[%s729 + $0x68] sm:$0xff]
    %v744 = vld [vmem:[%s729 + $0x70] sm:$0xff]
    %v745 = vld [vmem:[%s729 + $0x78] sm:$0xff]
    %v746 = vld [vmem:[%s729 + $0x80] sm:$0xff]
    %v747 = vld [vmem:[%s729 + $0x88] sm:$0xff]
    %v748 = vld [vmem:[%s729 + $0x90] sm:$0xff]
    %v749 = vld [vmem:[%s729 + $0x98] sm:$0xff]
    %v750 = vld [vmem:[%s729 + $0xa0] sm:$0xff]
    %v772 = vunpack.c.l.b16 %v730
    %v773 = vunpack.c.h.b16 %v730
    %v774 = vunpack.c.l.b16 %v731
    %v775 = vunpack.c.h.b16 %v731
    %v776 = vunpack.c.l.b16 %v732
    %v777 = vunpack.c.h.b16 %v732
    %v778 = vunpack.c.l.b16 %v733
    %v779 = vunpack.c.h.b16 %v733
    %v780 = vunpack.c.l.b16 %v734
    %v781 = vunpack.c.h.b16 %v734
    %v782 = vunpack.c.l.b16 %v735
    %v783 = vunpack.c.h.b16 %v735
    %v784 = vunpack.c.l.b16 %v736
    %v785 = vunpack.c.h.b16 %v736
    %v786 = vunpack.c.l.b16 %v737
    %v787 = vunpack.c.h.b16 %v737
    %v788 = vunpack.c.l.b16 %v738
    %v789 = vunpack.c.h.b16 %v738
    %v790 = vunpack.c.l.b16 %v739
    %v791 = vunpack.c.h.b16 %v739
    %v792 = vunpack.c.l.b16 %v740
    %v793 = vunpack.c.h.b16 %v740
    %v794 = vunpack.c.l.b16 %v741
    %v795 = vunpack.c.h.b16 %v741
    %v796 = vunpack.c.l.b16 %v742
    %v797 = vunpack.c.h.b16 %v742
    %v798 = vunpack.c.l.b16 %v743
    %v799 = vunpack.c.h.b16 %v743
    %v800 = vunpack.c.l.b16 %v744
    %v801 = vunpack.c.h.b16 %v744
    %v802 = vunpack.c.l.b16 %v745
    %v803 = vunpack.c.h.b16 %v745
    %v804 = vunpack.c.l.b16 %v746
    %v805 = vunpack.c.h.b16 %v746
    %v806 = vunpack.c.l.b16 %v747
    %v807 = vunpack.c.h.b16 %v747
    %v808 = vunpack.c.l.b16 %v748
    %v809 = vunpack.c.h.b16 %v748
    %v810 = vunpack.c.l.b16 %v749
    %v811 = vunpack.c.h.b16 %v749
    %v812 = vunpack.c.l.b16 %v750
    %v813 = vunpack.c.h.b16 %v750
    %v814 = vpack.c.b16 %v774, %v772
    %v815 = vpack.c.b16 %v775, %v773
    %v816 = vpack.c.b16 %v778, %v776
    %v817 = vpack.c.b16 %v779, %v777
    %v818 = vpack.c.b16 %v782, %v780
    %v819 = vpack.c.b16 %v783, %v781
    %v820 = vpack.c.b16 %v786, %v784
    %v821 = vpack.c.b16 %v787, %v785
    %v822 = vpack.c.b16 %v790, %v788
    %v823 = vpack.c.b16 %v791, %v789
    %v824 = vpack.c.b16 %v794, %v792
    %v825 = vpack.c.b16 %v795, %v793
    %v826 = vpack.c.b16 %v798, %v796
    %v827 = vpack.c.b16 %v799, %v797
    %v828 = vpack.c.b16 %v802, %v800
    %v829 = vpack.c.b16 %v803, %v801
    %v830 = vpack.c.b16 %v806, %v804
    %v831 = vpack.c.b16 %v807, %v805
    %v832 = vpack.c.b16 %v810, %v808
    %v833 = vpack.c.b16 %v811, %v809
    %v834 = vpack.c.b16 %v812, %v812
    %v835 = vpack.c.b16 %v813, %v813
    %v857 = vsel %vm379, %v834, 0
    %v860 = vsel %vm379, %v835, 0
    %862 = vmatprep.subr.bf16.mxu0 %v829
    %863 = vmatpush1.bf16.msra.mxu0 %v828
    %864 = vmatprep.subr.bf16.mxu0 %v827
    %865 = vmatpush1.bf16.msra.mxu0 %v826
    %866 = vmatprep.subr.bf16.mxu0 %v825
    %867 = vmatpush1.bf16.msra.mxu0 %v824
    %868 = vmatprep.subr.bf16.mxu0 %v823
    %869 = vmatpush1.bf16.msra.mxu0 %v822
    %870 = vmatprep.subr.bf16.mxu0 %v821
    %871 = vmatpush1.bf16.msra.mxu0 %v820
    %872 = vmatprep.subr.bf16.mxu0 %v819
    %873 = vmatpush1.bf16.msra.mxu0 %v818
    %874 = vmatprep.subr.bf16.mxu0 %v817
    %875 = vmatpush1.bf16.msra.mxu0 %v816
    %876 = vmatprep.subr.bf16.mxu0 %v815
    %877 = vmatpush1.bf16.msra.mxu0 %v814
    %878 = vmatprep.subr.bf16.mxu0 0
    %879 = vmatpush2.bf16.msra.mxu0 0
    %880 = vmatprep.subr.bf16.mxu0 0
    %881 = vmatpush2.bf16.msra.mxu0 0
    %882 = vmatprep.subr.bf16.mxu0 0
    %883 = vmatpush2.bf16.msra.mxu0 0
    %884 = vmatprep.subr.bf16.mxu0 0
    %885 = vmatpush2.bf16.msra.mxu0 0
    %886 = vmatprep.subr.bf16.mxu0 0
    %887 = vmatpush2.bf16.msra.mxu0 0
    %888 = vmatprep.subr.bf16.mxu0 %v860
    %889 = vmatpush2.bf16.msra.mxu0 %v857
    %890 = vmatprep.subr.bf16.mxu0 %v833
    %891 = vmatpush2.bf16.msra.mxu0 %v832
    %892 = vmatprep.subr.bf16.mxu0 %v831
    %893 = vmatpush2.bf16.msra.mxu0 %v830
    %894 = vmatprep.mubr.bf16.mxu0 %v362
    %895 = vmatmul.mubr.bf16.gmra.mxu0 %v237
    %v896 = vpop.f32.mrf.mxu0
    %v897 = vadd.f32 0.0, %v896
    %v898 = vpop.f32.mrf.mxu0
    %v899 = vadd.f32 0.0, %v898
    %v900 = vpop.f32.mrf.mxu0
    %v901 = vadd.f32 0.0, %v900
    %v902 = vpop.f32.mrf.mxu0
    %v903 = vadd.f32 0.0, %v902
    %904 = vmatprep.mubr.bf16.mxu0 %v365
    %905 = vmatmul.mubr.bf16.gmra.mxu0 %v239
    %v906 = vpop.f32.mrf.mxu0
    %v907 = vadd.f32 0.0, %v906
    %v908 = vpop.f32.mrf.mxu0
    %v909 = vadd.f32 0.0, %v908
    %v910 = vpop.f32.mrf.mxu0
    %v911 = vadd.f32 0.0, %v910
    %v912 = vpop.f32.mrf.mxu0
    %v913 = vadd.f32 0.0, %v912
    %914 = vmatprep.mubr.bf16.mxu0 %v368
    %915 = vmatmul.mubr.bf16.gmra.mxu0 %v241
    %v916 = vpop.f32.mrf.mxu0
    %v917 = vadd.f32 0.0, %v916
    %v918 = vpop.f32.mrf.mxu0
    %v919 = vadd.f32 0.0, %v918
    %v920 = vpop.f32.mrf.mxu0
    %v921 = vadd.f32 0.0, %v920
    %v922 = vpop.f32.mrf.mxu0
    %v923 = vadd.f32 0.0, %v922
    %924 = vmatprep.mubr.bf16.mxu0 %v371
    %925 = vmatmul.mubr.bf16.gmra.mxu0 %v243
    %v926 = vpop.f32.mrf.mxu0
    %v927 = vadd.f32 0.0, %v926
    %v928 = vpop.f32.mrf.mxu0
    %v929 = vadd.f32 0.0, %v928
    %v930 = vpop.f32.mrf.mxu0
    %v931 = vadd.f32 0.0, %v930
    %v932 = vpop.f32.mrf.mxu0
    %v933 = vadd.f32 0.0, %v932
    %934 = vmatprep.mubr.bf16.mxu0 %v374
    %935 = vmatmul.mubr.bf16.gmra.mxu0 %v245
    %v936 = vpop.f32.mrf.mxu0
    %v937 = vadd.f32 0.0, %v936
    %v938 = vpop.f32.mrf.mxu0
    %v939 = vadd.f32 0.0, %v938
    %v940 = vpop.f32.mrf.mxu0
    %v941 = vadd.f32 0.0, %v940
    %v942 = vpop.f32.mrf.mxu0
    %v943 = vadd.f32 0.0, %v942
    %944 = vmatprep.mubr.bf16.mxu0 %v377
    %945 = vmatmul.mubr.bf16.gmra.mxu0 %v247
    %v946 = vpop.f32.mrf.mxu0
    %v947 = vadd.f32 0.0, %v946
    %v948 = vpop.f32.mrf.mxu0
    %v949 = vadd.f32 0.0, %v948
    %v950 = vpop.f32.mrf.mxu0
    %v951 = vadd.f32 0.0, %v950
    %v952 = vpop.f32.mrf.mxu0
    %v953 = vadd.f32 0.0, %v952
    %954 = vdwg.mxu0
    %v955 = vmax.f32 %v705, %v897
    %v956 = vmax.f32 %v706, %v899
    %v957 = vmax.f32 %v707, %v901
    %v958 = vmax.f32 %v708, %v903
    %v959 = vmax.f32 %v709, %v907
    %v960 = vmax.f32 %v710, %v909
    %v961 = vmax.f32 %v711, %v911
    %v962 = vmax.f32 %v712, %v913
    %v963 = vmax.f32 %v713, %v917
    %v964 = vmax.f32 %v714, %v919
    %v965 = vmax.f32 %v715, %v921
    %v966 = vmax.f32 %v716, %v923
    %v967 = vmax.f32 %v717, %v927
    %v968 = vmax.f32 %v718, %v929
    %v969 = vmax.f32 %v719, %v931
    %v970 = vmax.f32 %v720, %v933
    %v971 = vmax.f32 %v721, %v937
    %v972 = vmax.f32 %v722, %v939
    %v973 = vmax.f32 %v723, %v941
    %v974 = vmax.f32 %v724, %v943
    %v975 = vmax.f32 %v725, %v947
    %v976 = vmax.f32 %v726, %v949
    %v977 = vmax.f32 %v727, %v951
    %v978 = vmax.f32 %v728, %v953
    %s979 = scalar_lea.vmem [#allocation4], 504
    %v980 = vld [vmem:[%s979] sm:$0xff]
    %v981 = vld [vmem:[%s979 + $0x8] sm:$0xff]
    %v982 = vld [vmem:[%s979 + $0x10] sm:$0xff]
    %v983 = vld [vmem:[%s979 + $0x18] sm:$0xff]
    %v984 = vld [vmem:[%s979 + $0x20] sm:$0xff]
    %v985 = vld [vmem:[%s979 + $0x28] sm:$0xff]
    %v986 = vld [vmem:[%s979 + $0x30] sm:$0xff]
    %v987 = vld [vmem:[%s979 + $0x38] sm:$0xff]
    %v988 = vld [vmem:[%s979 + $0x40] sm:$0xff]
    %v989 = vld [vmem:[%s979 + $0x48] sm:$0xff]
    %v990 = vld [vmem:[%s979 + $0x50] sm:$0xff]
    %v991 = vld [vmem:[%s979 + $0x58] sm:$0xff]
    %v992 = vld [vmem:[%s979 + $0x60] sm:$0xff]
    %v993 = vld [vmem:[%s979 + $0x68] sm:$0xff]
    %v994 = vld [vmem:[%s979 + $0x70] sm:$0xff]
    %v995 = vld [vmem:[%s979 + $0x78] sm:$0xff]
    %v996 = vld [vmem:[%s979 + $0x80] sm:$0xff]
    %v997 = vld [vmem:[%s979 + $0x88] sm:$0xff]
    %v998 = vld [vmem:[%s979 + $0x90] sm:$0xff]
    %v999 = vld [vmem:[%s979 + $0x98] sm:$0xff]
    %v1000 = vld [vmem:[%s979 + $0xa0] sm:$0xff]
    %v1022 = vunpack.c.l.b16 %v980
    %v1023 = vunpack.c.h.b16 %v980
    %v1024 = vunpack.c.l.b16 %v981
    %v1025 = vunpack.c.h.b16 %v981
    %v1026 = vunpack.c.l.b16 %v982
    %v1027 = vunpack.c.h.b16 %v982
    %v1028 = vunpack.c.l.b16 %v983
    %v1029 = vunpack.c.h.b16 %v983
    %v1030 = vunpack.c.l.b16 %v984
    %v1031 = vunpack.c.h.b16 %v984
    %v1032 = vunpack.c.l.b16 %v985
    %v1033 = vunpack.c.h.b16 %v985
    %v1034 = vunpack.c.l.b16 %v986
    %v1035 = vunpack.c.h.b16 %v986
    %v1036 = vunpack.c.l.b16 %v987
    %v1037 = vunpack.c.h.b16 %v987
    %v1038 = vunpack.c.l.b16 %v988
    %v1039 = vunpack.c.h.b16 %v988
    %v1040 = vunpack.c.l.b16 %v989
    %v1041 = vunpack.c.h.b16 %v989
    %v1042 = vunpack.c.l.b16 %v990
    %v1043 = vunpack.c.h.b16 %v990
    %v1044 = vunpack.c.l.b16 %v991
    %v1045 = vunpack.c.h.b16 %v991
    %v1046 = vunpack.c.l.b16 %v992
    %v1047 = vunpack.c.h.b16 %v992
    %v1048 = vunpack.c.l.b16 %v993
    %v1049 = vunpack.c.h.b16 %v993
    %v1050 = vunpack.c.l.b16 %v994
    %v1051 = vunpack.c.h.b16 %v994
    %v1052 = vunpack.c.l.b16 %v995
    %v1053 = vunpack.c.h.b16 %v995
    %v1054 = vunpack.c.l.b16 %v996
    %v1055 = vunpack.c.h.b16 %v996
    %v1056 = vunpack.c.l.b16 %v997
    %v1057 = vunpack.c.h.b16 %v997
    %v1058 = vunpack.c.l.b16 %v998
    %v1059 = vunpack.c.h.b16 %v998
    %v1060 = vunpack.c.l.b16 %v999
    %v1061 = vunpack.c.h.b16 %v999
    %v1062 = vunpack.c.l.b16 %v1000
    %v1063 = vunpack.c.h.b16 %v1000
    %v1064 = vpack.c.b16 %v1024, %v1022
    %v1065 = vpack.c.b16 %v1025, %v1023
    %v1066 = vpack.c.b16 %v1028, %v1026
    %v1067 = vpack.c.b16 %v1029, %v1027
    %v1068 = vpack.c.b16 %v1032, %v1030
    %v1069 = vpack.c.b16 %v1033, %v1031
    %v1070 = vpack.c.b16 %v1036, %v1034
    %v1071 = vpack.c.b16 %v1037, %v1035
    %v1072 = vpack.c.b16 %v1040, %v1038
    %v1073 = vpack.c.b16 %v1041, %v1039
    %v1074 = vpack.c.b16 %v1044, %v1042
    %v1075 = vpack.c.b16 %v1045, %v1043
    %v1076 = vpack.c.b16 %v1048, %v1046
    %v1077 = vpack.c.b16 %v1049, %v1047
    %v1078 = vpack.c.b16 %v1052, %v1050
    %v1079 = vpack.c.b16 %v1053, %v1051
    %v1080 = vpack.c.b16 %v1056, %v1054
    %v1081 = vpack.c.b16 %v1057, %v1055
    %v1082 = vpack.c.b16 %v1060, %v1058
    %v1083 = vpack.c.b16 %v1061, %v1059
    %v1084 = vpack.c.b16 %v1062, %v1062
    %v1085 = vpack.c.b16 %v1063, %v1063
    %v1107 = vsel %vm379, %v1084, 0
    %v1110 = vsel %vm379, %v1085, 0
    %1112 = vmatprep.subr.bf16.mxu0 %v1079
    %1113 = vmatpush1.bf16.msra.mxu0 %v1078
    %1114 = vmatprep.subr.bf16.mxu0 %v1077
    %1115 = vmatpush1.bf16.msra.mxu0 %v1076
    %1116 = vmatprep.subr.bf16.mxu0 %v1075
    %1117 = vmatpush1.bf16.msra.mxu0 %v1074
    %1118 = vmatprep.subr.bf16.mxu0 %v1073
    %1119 = vmatpush1.bf16.msra.mxu0 %v1072
    %1120 = vmatprep.subr.bf16.mxu0 %v1071
    %1121 = vmatpush1.bf16.msra.mxu0 %v1070
    %1122 = vmatprep.subr.bf16.mxu0 %v1069
    %1123 = vmatpush1.bf16.msra.mxu0 %v1068
    %1124 = vmatprep.subr.bf16.mxu0 %v1067
    %1125 = vmatpush1.bf16.msra.mxu0 %v1066
    %1126 = vmatprep.subr.bf16.mxu0 %v1065
    %1127 = vmatpush1.bf16.msra.mxu0 %v1064
    %1128 = vmatprep.subr.bf16.mxu0 0
    %1129 = vmatpush2.bf16.msra.mxu0 0
    %1130 = vmatprep.subr.bf16.mxu0 0
    %1131 = vmatpush2.bf16.msra.mxu0 0
    %1132 = vmatprep.subr.bf16.mxu0 0
    %1133 = vmatpush2.bf16.msra.mxu0 0
    %1134 = vmatprep.subr.bf16.mxu0 0
    %1135 = vmatpush2.bf16.msra.mxu0 0
    %1136 = vmatprep.subr.bf16.mxu0 0
    %1137 = vmatpush2.bf16.msra.mxu0 0
    %1138 = vmatprep.subr.bf16.mxu0 %v1110
    %1139 = vmatpush2.bf16.msra.mxu0 %v1107
    %1140 = vmatprep.subr.bf16.mxu0 %v1083
    %1141 = vmatpush2.bf16.msra.mxu0 %v1082
    %1142 = vmatprep.subr.bf16.mxu0 %v1081
    %1143 = vmatpush2.bf16.msra.mxu0 %v1080
    %1144 = vmatprep.mubr.bf16.mxu0 %v362
    %1145 = vmatmul.mubr.bf16.gmra.mxu0 %v237
    %v1146 = vpop.f32.mrf.mxu0
    %v1147 = vadd.f32 0.0, %v1146
    %v1148 = vpop.f32.mrf.mxu0
    %v1149 = vadd.f32 0.0, %v1148
    %v1150 = vpop.f32.mrf.mxu0
    %v1151 = vadd.f32 0.0, %v1150
    %v1152 = vpop.f32.mrf.mxu0
    %v1153 = vadd.f32 0.0, %v1152
    %1154 = vmatprep.mubr.bf16.mxu0 %v365
    %1155 = vmatmul.mubr.bf16.gmra.mxu0 %v239
    %v1156 = vpop.f32.mrf.mxu0
    %v1157 = vadd.f32 0.0, %v1156
    %v1158 = vpop.f32.mrf.mxu0
    %v1159 = vadd.f32 0.0, %v1158
    %v1160 = vpop.f32.mrf.mxu0
    %v1161 = vadd.f32 0.0, %v1160
    %v1162 = vpop.f32.mrf.mxu0
    %v1163 = vadd.f32 0.0, %v1162
    %1164 = vmatprep.mubr.bf16.mxu0 %v368
    %1165 = vmatmul.mubr.bf16.gmra.mxu0 %v241
    %v1166 = vpop.f32.mrf.mxu0
    %v1167 = vadd.f32 0.0, %v1166
    %v1168 = vpop.f32.mrf.mxu0
    %v1169 = vadd.f32 0.0, %v1168
    %v1170 = vpop.f32.mrf.mxu0
    %v1171 = vadd.f32 0.0, %v1170
    %v1172 = vpop.f32.mrf.mxu0
    %v1173 = vadd.f32 0.0, %v1172
    %1174 = vmatprep.mubr.bf16.mxu0 %v371
    %1175 = vmatmul.mubr.bf16.gmra.mxu0 %v243
    %v1176 = vpop.f32.mrf.mxu0
    %v1177 = vadd.f32 0.0, %v1176
    %v1178 = vpop.f32.mrf.mxu0
    %v1179 = vadd.f32 0.0, %v1178
    %v1180 = vpop.f32.mrf.mxu0
    %v1181 = vadd.f32 0.0, %v1180
    %v1182 = vpop.f32.mrf.mxu0
    %v1183 = vadd.f32 0.0, %v1182
    %1184 = vmatprep.mubr.bf16.mxu0 %v374
    %1185 = vmatmul.mubr.bf16.gmra.mxu0 %v245
    %v1186 = vpop.f32.mrf.mxu0
    %v1187 = vadd.f32 0.0, %v1186
    %v1188 = vpop.f32.mrf.mxu0
    %v1189 = vadd.f32 0.0, %v1188
    %v1190 = vpop.f32.mrf.mxu0
    %v1191 = vadd.f32 0.0, %v1190
    %v1192 = vpop.f32.mrf.mxu0
    %v1193 = vadd.f32 0.0, %v1192
    %1194 = vmatprep.mubr.bf16.mxu0 %v377
    %1195 = vmatmul.mubr.bf16.gmra.mxu0 %v247
    %v1196 = vpop.f32.mrf.mxu0
    %v1197 = vadd.f32 0.0, %v1196
    %v1198 = vpop.f32.mrf.mxu0
    %v1199 = vadd.f32 0.0, %v1198
    %v1200 = vpop.f32.mrf.mxu0
    %v1201 = vadd.f32 0.0, %v1200
    %v1202 = vpop.f32.mrf.mxu0
    %v1203 = vadd.f32 0.0, %v1202
    %1204 = vdwg.mxu0
    %v1205 = vmax.f32 %v955, %v1147
    %v1206 = vmax.f32 %v956, %v1149
    %v1207 = vmax.f32 %v957, %v1151
    %v1208 = vmax.f32 %v958, %v1153
    %v1209 = vmax.f32 %v959, %v1157
    %v1210 = vmax.f32 %v960, %v1159
    %v1211 = vmax.f32 %v961, %v1161
    %v1212 = vmax.f32 %v962, %v1163
    %v1213 = vmax.f32 %v963, %v1167
    %v1214 = vmax.f32 %v964, %v1169
    %v1215 = vmax.f32 %v965, %v1171
    %v1216 = vmax.f32 %v966, %v1173
    %v1217 = vmax.f32 %v967, %v1177
    %v1218 = vmax.f32 %v968, %v1179
    %v1219 = vmax.f32 %v969, %v1181
    %v1220 = vmax.f32 %v970, %v1183
    %v1221 = vmax.f32 %v971, %v1187
    %v1222 = vmax.f32 %v972, %v1189
    %v1223 = vmax.f32 %v973, %v1191
    %v1224 = vmax.f32 %v974, %v1193
    %v1225 = vmax.f32 %v975, %v1197
    %v1226 = vmax.f32 %v976, %v1199
    %v1227 = vmax.f32 %v977, %v1201
    %v1228 = vmax.f32 %v978, %v1203
    %v1230 = vlaneseq
    %v1231 = vshrl.u32 %v1230, 7
    %v1232 = vsub.s32 0, %v1231
    %v1233 = vrot.slane %v179, %v1232
    %v1234 = vlaneseq
    %v1235 = vshrl.u32 %v1234, 7
    %v1236 = vsub.s32 1, %v1235
    %v1237 = vrot.slane %v179, %v1236
    %v1240 = vadd.f32 %v1205, %v1233
    %v1241 = vadd.f32 %v1206, %v1237
    %v1242 = vadd.f32 %v1207, %v1233
    %v1243 = vadd.f32 %v1208, %v1237
    %v1244 = vadd.f32 %v1209, %v1233
    %v1245 = vadd.f32 %v1210, %v1237
    %v1246 = vadd.f32 %v1211, %v1233
    %v1247 = vadd.f32 %v1212, %v1237
    %v1248 = vadd.f32 %v1213, %v1233
    %v1249 = vadd.f32 %v1214, %v1237
    %v1250 = vadd.f32 %v1215, %v1233
    %v1251 = vadd.f32 %v1216, %v1237
    %v1252 = vadd.f32 %v1217, %v1233
    %v1253 = vadd.f32 %v1218, %v1237
    %v1254 = vadd.f32 %v1219, %v1233
    %v1255 = vadd.f32 %v1220, %v1237
    %v1256 = vadd.f32 %v1221, %v1233
    %v1257 = vadd.f32 %v1222, %v1237
    %v1258 = vadd.f32 %v1223, %v1233
    %v1259 = vadd.f32 %v1224, %v1237
    %v1260 = vadd.f32 %v1225, %v1233
    %v1261 = vadd.f32 %v1226, %v1237
    %v1262 = vadd.f32 %v1227, %v1233
    %v1263 = vadd.f32 %v1228, %v1237
    %v1264 = vmax.f32 %v1240, 0.0
    %v1265 = vmax.f32 %v1241, 0.0
    %v1266 = vmax.f32 %v1242, 0.0
    %v1267 = vmax.f32 %v1243, 0.0
    %v1268 = vmax.f32 %v1244, 0.0
    %v1269 = vmax.f32 %v1245, 0.0
    %v1270 = vmax.f32 %v1246, 0.0
    %v1271 = vmax.f32 %v1247, 0.0
    %v1272 = vmax.f32 %v1248, 0.0
    %v1273 = vmax.f32 %v1249, 0.0
    %v1274 = vmax.f32 %v1250, 0.0
    %v1275 = vmax.f32 %v1251, 0.0
    %v1276 = vmax.f32 %v1252, 0.0
    %v1277 = vmax.f32 %v1253, 0.0
    %v1278 = vmax.f32 %v1254, 0.0
    %v1279 = vmax.f32 %v1255, 0.0
    %v1280 = vmax.f32 %v1256, 0.0
    %v1281 = vmax.f32 %v1257, 0.0
    %v1282 = vmax.f32 %v1258, 0.0
    %v1283 = vmax.f32 %v1259, 0.0
    %v1284 = vmax.f32 %v1260, 0.0
    %v1285 = vmax.f32 %v1261, 0.0
    %v1286 = vmax.f32 %v1262, 0.0
    %v1287 = vmax.f32 %v1263, 0.0
    %v1288 = vpack.c.bf16 %v1268, %v1264
    %v1289 = vpack.c.bf16 %v1269, %v1265
    %v1290 = vpack.c.bf16 %v1270, %v1266
    %v1291 = vpack.c.bf16 %v1271, %v1267
    %v1292 = vpack.c.bf16 %v1272, %v1268
    %v1293 = vpack.c.bf16 %v1273, %v1269
    %v1294 = vpack.c.bf16 %v1274, %v1270
    %v1295 = vpack.c.bf16 %v1275, %v1271
    %v1296 = vpack.c.bf16 %v1276, %v1272
    %v1297 = vpack.c.bf16 %v1277, %v1273
    %v1298 = vpack.c.bf16 %v1278, %v1274
    %v1299 = vpack.c.bf16 %v1279, %v1275
    %v1300 = vpack.c.bf16 %v1280, %v1276
    %v1301 = vpack.c.bf16 %v1281, %v1277
    %v1302 = vpack.c.bf16 %v1282, %v1278
    %v1303 = vpack.c.bf16 %v1283, %v1279
    %v1304 = vpack.c.bf16 %v1284, %v1280
    %v1305 = vpack.c.bf16 %v1285, %v1281
    %v1306 = vpack.c.bf16 %v1286, %v1282
    %v1307 = vpack.c.bf16 %v1287, %v1283
    %v1308 = vld [vmem:[#allocation10] sm:$0x3]
    %v1309 = vld [vmem:[#allocation9] sm:$0xff]
    %v1310 = vld [vmem:[#allocation9 + $0x8] sm:$0xff]
    %v1311 = vld [vmem:[#allocation9 + $0x10] sm:$0xff]
    %v1312 = vld [vmem:[#allocation9 + $0x18] sm:$0xff]
    %v1313 = vld [vmem:[#allocation9 + $0x20] sm:$0xff]
    %v1314 = vld [vmem:[#allocation9 + $0x28] sm:$0xff]
    %v1315 = vld [vmem:[#allocation9 + $0x30] sm:$0xff]
    %v1316 = vld [vmem:[#allocation9 + $0x38] sm:$0xff]
    %v1317 = vld [vmem:[#allocation9 + $0x40] sm:$0xff]
    %v1318 = vld [vmem:[#allocation9 + $0x48] sm:$0xff]
    %v1319 = vld [vmem:[#allocation9 + $0x50] sm:$0xff]
    %v1320 = vld [vmem:[#allocation9 + $0x58] sm:$0xff]
    %v1321 = vld [vmem:[#allocation9 + $0x60] sm:$0xff]
    %v1322 = vld [vmem:[#allocation9 + $0x68] sm:$0xff]
    %v1323 = vld [vmem:[#allocation9 + $0x70] sm:$0xff]
    %v1324 = vld [vmem:[#allocation9 + $0x78] sm:$0xff]
    %v1325 = vld [vmem:[#allocation9 + $0x80] sm:$0xff]
    %v1326 = vld [vmem:[#allocation9 + $0x88] sm:$0xff]
    %v1327 = vld [vmem:[#allocation9 + $0x90] sm:$0xff]
    %v1328 = vld [vmem:[#allocation9 + $0x98] sm:$0xff]
    %v1329 = vld [vmem:[#allocation9 + $0xa0] sm:$0xff]
    %v1330 = vld [vmem:[#allocation9 + $0xa8] sm:$0xff]
    %v1331 = vld [vmem:[#allocation9 + $0xb0] sm:$0xff]
    %v1332 = vld [vmem:[#allocation9 + $0xb8] sm:$0xff]
    %v1333 = vld [vmem:[#allocation9 + $0xc0] sm:$0xff]
    %v1334 = vld [vmem:[#allocation9 + $0xc8] sm:$0xff]
    %v1335 = vld [vmem:[#allocation9 + $0xd0] sm:$0xff]
    %v1336 = vld [vmem:[#allocation9 + $0xd8] sm:$0xff]
    %v1337 = vld [vmem:[#allocation9 + $0xe0] sm:$0xff]
    %v1338 = vld [vmem:[#allocation9 + $0xe8] sm:$0xff]
    %v1339 = vld [vmem:[#allocation9 + $0xf0] sm:$0xff]
    %v1340 = vld [vmem:[#allocation9 + $0xf8] sm:$0xff]
    %v1341 = vld [vmem:[#allocation9 + $0x100] sm:$0xff]
    %v1342 = vld [vmem:[#allocation9 + $0x108] sm:$0xff]
    %v1343 = vld [vmem:[#allocation9 + $0x110] sm:$0xff]
    %v1344 = vld [vmem:[#allocation9 + $0x118] sm:$0xff]
    %v1345 = vld [vmem:[#allocation9 + $0x120] sm:$0xff]
    %v1346 = vld [vmem:[#allocation9 + $0x128] sm:$0xff]
    %v1347 = vld [vmem:[#allocation9 + $0x130] sm:$0xff]
    %v1348 = vld [vmem:[#allocation9 + $0x138] sm:$0xff]
    %v1349 = vld [vmem:[#allocation9 + $0x140] sm:$0xff]
    %v1350 = vld [vmem:[#allocation9 + $0x148] sm:$0xff]
    %v1351 = vld [vmem:[#allocation9 + $0x150] sm:$0xff]
    %v1352 = vld [vmem:[#allocation9 + $0x158] sm:$0xff]
    %v1353 = vld [vmem:[#allocation9 + $0x160] sm:$0xff]
    %v1354 = vld [vmem:[#allocation9 + $0x168] sm:$0xff]
    %v1355 = vld [vmem:[#allocation9 + $0x170] sm:$0xff]
    %v1356 = vld [vmem:[#allocation9 + $0x178] sm:$0xff]
    %v1357 = vld [vmem:[#allocation9 + $0x180] sm:$0xff]
    %v1358 = vld [vmem:[#allocation9 + $0x188] sm:$0xff]
    %v1359 = vld [vmem:[#allocation9 + $0x190] sm:$0xff]
    %v1360 = vld [vmem:[#allocation9 + $0x198] sm:$0xff]
    %v1361 = vld [vmem:[#allocation9 + $0x1a0] sm:$0xff]
    %v1362 = vld [vmem:[#allocation9 + $0x1a8] sm:$0xff]
    %v1363 = vld [vmem:[#allocation9 + $0x1b0] sm:$0xff]
    %v1364 = vld [vmem:[#allocation9 + $0x1b8] sm:$0xff]
    %v1365 = vld [vmem:[#allocation9 + $0x1c0] sm:$0xff]
    %v1366 = vld [vmem:[#allocation9 + $0x1c8] sm:$0xff]
    %v1367 = vld [vmem:[#allocation9 + $0x1d0] sm:$0xff]
    %v1368 = vld [vmem:[#allocation9 + $0x1d8] sm:$0xff]
    %v1369 = vld [vmem:[#allocation9 + $0x1e0] sm:$0xff]
    %v1370 = vld [vmem:[#allocation9 + $0x1e8] sm:$0xff]
    %v1371 = vld [vmem:[#allocation9 + $0x1f0] sm:$0xff]
    %v1372 = vld [vmem:[#allocation9 + $0x1f8] sm:$0xff]
    %v1373 = vld [vmem:[#allocation9 + $0x200] sm:$0xff]
    %v1374 = vld [vmem:[#allocation9 + $0x208] sm:$0xff]
    %v1375 = vld [vmem:[#allocation9 + $0x210] sm:$0xff]
    %v1376 = vld [vmem:[#allocation9 + $0x218] sm:$0xff]
    %v1377 = vld [vmem:[#allocation9 + $0x220] sm:$0xff]
    %v1378 = vld [vmem:[#allocation9 + $0x228] sm:$0xff]
    %v1379 = vld [vmem:[#allocation9 + $0x230] sm:$0xff]
    %v1380 = vld [vmem:[#allocation9 + $0x238] sm:$0xff]
    %v1381 = vld [vmem:[#allocation9 + $0x240] sm:$0xff]
    %v1382 = vld [vmem:[#allocation9 + $0x248] sm:$0xff]
    %v1383 = vld [vmem:[#allocation9 + $0x250] sm:$0xff]
    %v1384 = vld [vmem:[#allocation9 + $0x258] sm:$0xff]
    %v1385 = vld [vmem:[#allocation9 + $0x260] sm:$0xff]
    %v1386 = vld [vmem:[#allocation9 + $0x268] sm:$0xff]
    %v1387 = vld [vmem:[#allocation9 + $0x270] sm:$0xff]
    %v1388 = vld [vmem:[#allocation9 + $0x278] sm:$0xff]
    %v1389 = vld [vmem:[#allocation9 + $0x280] sm:$0xff]
    %v1390 = vld [vmem:[#allocation9 + $0x288] sm:$0xff]
    %v1391 = vld [vmem:[#allocation9 + $0x290] sm:$0xff]
    %v1392 = vld [vmem:[#allocation9 + $0x298] sm:$0xff]
    %v1393 = vld [vmem:[#allocation9 + $0x2a0] sm:$0xff]
    %v1394 = vld [vmem:[#allocation9 + $0x2a8] sm:$0xff]
    %v1395 = vld [vmem:[#allocation9 + $0x2b0] sm:$0xff]
    %v1396 = vld [vmem:[#allocation9 + $0x2b8] sm:$0xff]
    %v1397 = vld [vmem:[#allocation9 + $0x2c0] sm:$0xff]
    %v1398 = vld [vmem:[#allocation9 + $0x2c8] sm:$0xff]
    %v1399 = vld [vmem:[#allocation9 + $0x2d0] sm:$0xff]
    %v1400 = vld [vmem:[#allocation9 + $0x2d8] sm:$0xff]
    %v1401 = vld [vmem:[#allocation9 + $0x2e0] sm:$0xff]
    %v1402 = vld [vmem:[#allocation9 + $0x2e8] sm:$0xff]
    %v1403 = vld [vmem:[#allocation9 + $0x2f0] sm:$0xff]
    %v1404 = vld [vmem:[#allocation9 + $0x2f8] sm:$0xff]
    %v1405 = vld [vmem:[#allocation9 + $0x300] sm:$0xff]
    %v1406 = vld [vmem:[#allocation9 + $0x308] sm:$0xff]
    %v1407 = vld [vmem:[#allocation9 + $0x310] sm:$0xff]
    %v1408 = vld [vmem:[#allocation9 + $0x318] sm:$0xff]
    %v1409 = vld [vmem:[#allocation9 + $0x320] sm:$0xff]
    %v1410 = vld [vmem:[#allocation9 + $0x328] sm:$0xff]
    %v1411 = vld [vmem:[#allocation9 + $0x330] sm:$0xff]
    %v1412 = vld [vmem:[#allocation9 + $0x338] sm:$0xff]
    %v1413 = vld [vmem:[#allocation9 + $0x340] sm:$0xff]
    %v1414 = vld [vmem:[#allocation9 + $0x348] sm:$0xff]
    %v1415 = vld [vmem:[#allocation9 + $0x350] sm:$0xff]
    %v1416 = vld [vmem:[#allocation9 + $0x358] sm:$0xff]
    %v1417 = vld [vmem:[#allocation9 + $0x360] sm:$0xff]
    %v1418 = vld [vmem:[#allocation9 + $0x368] sm:$0xff]
    %v1419 = vld [vmem:[#allocation9 + $0x370] sm:$0xff]
    %v1420 = vld [vmem:[#allocation9 + $0x378] sm:$0xff]
    %v1421 = vld [vmem:[#allocation9 + $0x380] sm:$0xff]
    %v1422 = vld [vmem:[#allocation9 + $0x388] sm:$0xff]
    %v1423 = vld [vmem:[#allocation9 + $0x390] sm:$0xff]
    %v1424 = vld [vmem:[#allocation9 + $0x398] sm:$0xff]
    %v1425 = vld [vmem:[#allocation9 + $0x3a0] sm:$0xff]
    %v1426 = vld [vmem:[#allocation9 + $0x3a8] sm:$0xff]
    %v1427 = vld [vmem:[#allocation9 + $0x3b0] sm:$0xff]
    %v1428 = vld [vmem:[#allocation9 + $0x3b8] sm:$0xff]
    %v1429 = vld [vmem:[#allocation9 + $0x3c0] sm:$0xff]
    %v1430 = vld [vmem:[#allocation9 + $0x3c8] sm:$0xff]
    %v1431 = vld [vmem:[#allocation9 + $0x3d0] sm:$0xff]
    %v1432 = vld [vmem:[#allocation9 + $0x3d8] sm:$0xff]
    %v1433 = vld [vmem:[#allocation9 + $0x3e0] sm:$0xff]
    %v1434 = vld [vmem:[#allocation9 + $0x3e8] sm:$0xff]
    %v1435 = vld [vmem:[#allocation9 + $0x3f0] sm:$0xff]
    %v1436 = vld [vmem:[#allocation9 + $0x3f8] sm:$0xff]
    %v1437 = vld [vmem:[#allocation9 + $0x400] sm:$0xff]
    %v1438 = vld [vmem:[#allocation9 + $0x408] sm:$0xff]
    %v1439 = vld [vmem:[#allocation9 + $0x410] sm:$0xff]
    %v1440 = vld [vmem:[#allocation9 + $0x418] sm:$0xff]
    %v1441 = vld [vmem:[#allocation9 + $0x420] sm:$0xff]
    %v1442 = vld [vmem:[#allocation9 + $0x428] sm:$0xff]
    %v1443 = vld [vmem:[#allocation9 + $0x430] sm:$0xff]
    %v1444 = vld [vmem:[#allocation9 + $0x438] sm:$0xff]
    %v1445 = vld [vmem:[#allocation9 + $0x440] sm:$0xff]
    %v1446 = vld [vmem:[#allocation9 + $0x448] sm:$0xff]
    %v1447 = vld [vmem:[#allocation9 + $0x450] sm:$0xff]
    %v1448 = vld [vmem:[#allocation9 + $0x458] sm:$0xff]
    %v1449 = vld [vmem:[#allocation9 + $0x460] sm:$0xff]
    %v1450 = vld [vmem:[#allocation9 + $0x468] sm:$0xff]
    %v1451 = vld [vmem:[#allocation9 + $0x470] sm:$0xff]
    %v1452 = vld [vmem:[#allocation9 + $0x478] sm:$0xff]
    %v1453 = vld [vmem:[#allocation9 + $0x480] sm:$0xff]
    %v1454 = vld [vmem:[#allocation9 + $0x488] sm:$0xff]
    %v1455 = vld [vmem:[#allocation9 + $0x490] sm:$0xff]
    %v1456 = vld [vmem:[#allocation9 + $0x498] sm:$0xff]
    %v1457 = vld [vmem:[#allocation9 + $0x4a0] sm:$0xff]
    %v1458 = vld [vmem:[#allocation9 + $0x4a8] sm:$0xff]
    %v1459 = vld [vmem:[#allocation9 + $0x4b0] sm:$0xff]
    %v1460 = vld [vmem:[#allocation9 + $0x4b8] sm:$0xff]
    %v1461 = vld [vmem:[#allocation9 + $0x4c0] sm:$0xff]
    %v1462 = vld [vmem:[#allocation9 + $0x4c8] sm:$0xff]
    %v1463 = vld [vmem:[#allocation9 + $0x4d0] sm:$0xff]
    %v1464 = vld [vmem:[#allocation9 + $0x4d8] sm:$0xff]
    %v1465 = vld [vmem:[#allocation9 + $0x4e0] sm:$0xff]
    %v1466 = vld [vmem:[#allocation9 + $0x4e8] sm:$0xff]
    %v1467 = vld [vmem:[#allocation9 + $0x4f0] sm:$0xff]
    %v1468 = vld [vmem:[#allocation9 + $0x4f8] sm:$0xff]
    %v1469 = vld [vmem:[#allocation9 + $0x500] sm:$0xff]
    %v1470 = vld [vmem:[#allocation9 + $0x508] sm:$0xff]
    %v1471 = vld [vmem:[#allocation9 + $0x510] sm:$0xff]
    %v1472 = vld [vmem:[#allocation9 + $0x518] sm:$0xff]
    %v1473 = vld [vmem:[#allocation9 + $0x520] sm:$0xff]
    %v1474 = vld [vmem:[#allocation9 + $0x528] sm:$0xff]
    %v1475 = vld [vmem:[#allocation9 + $0x530] sm:$0xff]
    %v1476 = vld [vmem:[#allocation9 + $0x538] sm:$0xff]
    %v1477 = vld [vmem:[#allocation9 + $0x540] sm:$0xff]
    %v1478 = vld [vmem:[#allocation9 + $0x548] sm:$0xff]
    %v1479 = vld [vmem:[#allocation9 + $0x550] sm:$0xff]
    %v1480 = vld [vmem:[#allocation9 + $0x558] sm:$0xff]
    %v1481 = vld [vmem:[#allocation9 + $0x560] sm:$0xff]
    %v1482 = vld [vmem:[#allocation9 + $0x568] sm:$0xff]
    %v1483 = vld [vmem:[#allocation9 + $0x570] sm:$0xff]
    %v1484 = vld [vmem:[#allocation9 + $0x578] sm:$0xff]
    %v1485 = vld [vmem:[#allocation9 + $0x580] sm:$0xff]
    %v1486 = vld [vmem:[#allocation9 + $0x588] sm:$0xff]
    %v1487 = vld [vmem:[#allocation9 + $0x590] sm:$0xff]
    %v1488 = vld [vmem:[#allocation9 + $0x598] sm:$0xff]
    %v1489 = vld [vmem:[#allocation9 + $0x5a0] sm:$0xff]
    %v1490 = vld [vmem:[#allocation9 + $0x5a8] sm:$0xff]
    %v1491 = vld [vmem:[#allocation9 + $0x5b0] sm:$0xff]
    %v1492 = vld [vmem:[#allocation9 + $0x5b8] sm:$0xff]
    %v1493 = vld [vmem:[#allocation9 + $0x5c0] sm:$0xff]
    %v1494 = vld [vmem:[#allocation9 + $0x5c8] sm:$0xff]
    %v1495 = vld [vmem:[#allocation9 + $0x5d0] sm:$0xff]
    %v1496 = vld [vmem:[#allocation9 + $0x5d8] sm:$0xff]
    %v1497 = vld [vmem:[#allocation9 + $0x5e0] sm:$0xff]
    %v1498 = vld [vmem:[#allocation9 + $0x5e8] sm:$0xff]
    %v1499 = vld [vmem:[#allocation9 + $0x5f0] sm:$0xff]
    %v1500 = vld [vmem:[#allocation9 + $0x5f8] sm:$0xff]
    %v1693 = vunpack.c.l.b16 %v1309
    %v1694 = vunpack.c.h.b16 %v1309
    %v1695 = vunpack.c.l.b16 %v1310
    %v1696 = vunpack.c.h.b16 %v1310
    %v1697 = vunpack.c.l.b16 %v1311
    %v1698 = vunpack.c.h.b16 %v1311
    %v1699 = vunpack.c.l.b16 %v1312
    %v1700 = vunpack.c.h.b16 %v1312
    %v1701 = vunpack.c.l.b16 %v1313
    %v1702 = vunpack.c.h.b16 %v1313
    %v1703 = vunpack.c.l.b16 %v1314
    %v1704 = vunpack.c.h.b16 %v1314
    %v1705 = vunpack.c.l.b16 %v1315
    %v1706 = vunpack.c.h.b16 %v1315
    %v1707 = vunpack.c.l.b16 %v1316
    %v1708 = vunpack.c.h.b16 %v1316
    %v1709 = vunpack.c.l.b16 %v1317
    %v1710 = vunpack.c.h.b16 %v1317
    %v1711 = vunpack.c.l.b16 %v1318
    %v1712 = vunpack.c.h.b16 %v1318
    %v1713 = vunpack.c.l.b16 %v1319
    %v1714 = vunpack.c.h.b16 %v1319
    %v1715 = vunpack.c.l.b16 %v1320
    %v1716 = vunpack.c.h.b16 %v1320
    %v1717 = vunpack.c.l.b16 %v1321
    %v1718 = vunpack.c.h.b16 %v1321
    %v1719 = vunpack.c.l.b16 %v1322
    %v1720 = vunpack.c.h.b16 %v1322
    %v1721 = vunpack.c.l.b16 %v1323
    %v1722 = vunpack.c.h.b16 %v1323
    %v1723 = vunpack.c.l.b16 %v1324
    %v1724 = vunpack.c.h.b16 %v1324
    %v1725 = vunpack.c.l.b16 %v1325
    %v1726 = vunpack.c.h.b16 %v1325
    %v1727 = vunpack.c.l.b16 %v1326
    %v1728 = vunpack.c.h.b16 %v1326
    %v1729 = vunpack.c.l.b16 %v1327
    %v1730 = vunpack.c.h.b16 %v1327
    %v1731 = vunpack.c.l.b16 %v1328
    %v1732 = vunpack.c.h.b16 %v1328
    %v1733 = vunpack.c.l.b16 %v1329
    %v1734 = vunpack.c.h.b16 %v1329
    %v1735 = vunpack.c.l.b16 %v1330
    %v1736 = vunpack.c.h.b16 %v1330
    %v1737 = vunpack.c.l.b16 %v1331
    %v1738 = vunpack.c.h.b16 %v1331
    %v1739 = vunpack.c.l.b16 %v1332
    %v1740 = vunpack.c.h.b16 %v1332
    %v1741 = vunpack.c.l.b16 %v1333
    %v1742 = vunpack.c.h.b16 %v1333
    %v1743 = vunpack.c.l.b16 %v1334
    %v1744 = vunpack.c.h.b16 %v1334
    %v1745 = vunpack.c.l.b16 %v1335
    %v1746 = vunpack.c.h.b16 %v1335
    %v1747 = vunpack.c.l.b16 %v1336
    %v1748 = vunpack.c.h.b16 %v1336
    %v1749 = vunpack.c.l.b16 %v1337
    %v1750 = vunpack.c.h.b16 %v1337
    %v1751 = vunpack.c.l.b16 %v1338
    %v1752 = vunpack.c.h.b16 %v1338
    %v1753 = vunpack.c.l.b16 %v1339
    %v1754 = vunpack.c.h.b16 %v1339
    %v1755 = vunpack.c.l.b16 %v1340
    %v1756 = vunpack.c.h.b16 %v1340
    %v1757 = vunpack.c.l.b16 %v1341
    %v1758 = vunpack.c.h.b16 %v1341
    %v1759 = vunpack.c.l.b16 %v1342
    %v1760 = vunpack.c.h.b16 %v1342
    %v1761 = vunpack.c.l.b16 %v1343
    %v1762 = vunpack.c.h.b16 %v1343
    %v1763 = vunpack.c.l.b16 %v1344
    %v1764 = vunpack.c.h.b16 %v1344
    %v1765 = vunpack.c.l.b16 %v1345
    %v1766 = vunpack.c.h.b16 %v1345
    %v1767 = vunpack.c.l.b16 %v1346
    %v1768 = vunpack.c.h.b16 %v1346
    %v1769 = vunpack.c.l.b16 %v1347
    %v1770 = vunpack.c.h.b16 %v1347
    %v1771 = vunpack.c.l.b16 %v1348
    %v1772 = vunpack.c.h.b16 %v1348
    %v1773 = vunpack.c.l.b16 %v1349
    %v1774 = vunpack.c.h.b16 %v1349
    %v1775 = vunpack.c.l.b16 %v1350
    %v1776 = vunpack.c.h.b16 %v1350
    %v1777 = vunpack.c.l.b16 %v1351
    %v1778 = vunpack.c.h.b16 %v1351
    %v1779 = vunpack.c.l.b16 %v1352
    %v1780 = vunpack.c.h.b16 %v1352
    %v1781 = vunpack.c.l.b16 %v1353
    %v1782 = vunpack.c.h.b16 %v1353
    %v1783 = vunpack.c.l.b16 %v1354
    %v1784 = vunpack.c.h.b16 %v1354
    %v1785 = vunpack.c.l.b16 %v1355
    %v1786 = vunpack.c.h.b16 %v1355
    %v1787 = vunpack.c.l.b16 %v1356
    %v1788 = vunpack.c.h.b16 %v1356
    %v1789 = vunpack.c.l.b16 %v1357
    %v1790 = vunpack.c.h.b16 %v1357
    %v1791 = vunpack.c.l.b16 %v1358
    %v1792 = vunpack.c.h.b16 %v1358
    %v1793 = vunpack.c.l.b16 %v1359
    %v1794 = vunpack.c.h.b16 %v1359
    %v1795 = vunpack.c.l.b16 %v1360
    %v1796 = vunpack.c.h.b16 %v1360
    %v1797 = vunpack.c.l.b16 %v1361
    %v1798 = vunpack.c.h.b16 %v1361
    %v1799 = vunpack.c.l.b16 %v1362
    %v1800 = vunpack.c.h.b16 %v1362
    %v1801 = vunpack.c.l.b16 %v1363
    %v1802 = vunpack.c.h.b16 %v1363
    %v1803 = vunpack.c.l.b16 %v1364
    %v1804 = vunpack.c.h.b16 %v1364
    %v1805 = vunpack.c.l.b16 %v1365
    %v1806 = vunpack.c.h.b16 %v1365
    %v1807 = vunpack.c.l.b16 %v1366
    %v1808 = vunpack.c.h.b16 %v1366
    %v1809 = vunpack.c.l.b16 %v1367
    %v1810 = vunpack.c.h.b16 %v1367
    %v1811 = vunpack.c.l.b16 %v1368
    %v1812 = vunpack.c.h.b16 %v1368
    %v1813 = vunpack.c.l.b16 %v1369
    %v1814 = vunpack.c.h.b16 %v1369
    %v1815 = vunpack.c.l.b16 %v1370
    %v1816 = vunpack.c.h.b16 %v1370
    %v1817 = vunpack.c.l.b16 %v1371
    %v1818 = vunpack.c.h.b16 %v1371
    %v1819 = vunpack.c.l.b16 %v1372
    %v1820 = vunpack.c.h.b16 %v1372
    %v1821 = vunpack.c.l.b16 %v1373
    %v1822 = vunpack.c.h.b16 %v1373
    %v1823 = vunpack.c.l.b16 %v1374
    %v1824 = vunpack.c.h.b16 %v1374
    %v1825 = vunpack.c.l.b16 %v1375
    %v1826 = vunpack.c.h.b16 %v1375
    %v1827 = vunpack.c.l.b16 %v1376
    %v1828 = vunpack.c.h.b16 %v1376
    %v1829 = vunpack.c.l.b16 %v1377
    %v1830 = vunpack.c.h.b16 %v1377
    %v1831 = vunpack.c.l.b16 %v1378
    %v1832 = vunpack.c.h.b16 %v1378
    %v1833 = vunpack.c.l.b16 %v1379
    %v1834 = vunpack.c.h.b16 %v1379
    %v1835 = vunpack.c.l.b16 %v1380
    %v1836 = vunpack.c.h.b16 %v1380
    %v1837 = vunpack.c.l.b16 %v1381
    %v1838 = vunpack.c.h.b16 %v1381
    %v1839 = vunpack.c.l.b16 %v1382
    %v1840 = vunpack.c.h.b16 %v1382
    %v1841 = vunpack.c.l.b16 %v1383
    %v1842 = vunpack.c.h.b16 %v1383
    %v1843 = vunpack.c.l.b16 %v1384
    %v1844 = vunpack.c.h.b16 %v1384
    %v1845 = vunpack.c.l.b16 %v1385
    %v1846 = vunpack.c.h.b16 %v1385
    %v1847 = vunpack.c.l.b16 %v1386
    %v1848 = vunpack.c.h.b16 %v1386
    %v1849 = vunpack.c.l.b16 %v1387
    %v1850 = vunpack.c.h.b16 %v1387
    %v1851 = vunpack.c.l.b16 %v1388
    %v1852 = vunpack.c.h.b16 %v1388
    %v1853 = vunpack.c.l.b16 %v1389
    %v1854 = vunpack.c.h.b16 %v1389
    %v1855 = vunpack.c.l.b16 %v1390
    %v1856 = vunpack.c.h.b16 %v1390
    %v1857 = vunpack.c.l.b16 %v1391
    %v1858 = vunpack.c.h.b16 %v1391
    %v1859 = vunpack.c.l.b16 %v1392
    %v1860 = vunpack.c.h.b16 %v1392
    %v1861 = vunpack.c.l.b16 %v1393
    %v1862 = vunpack.c.h.b16 %v1393
    %v1863 = vunpack.c.l.b16 %v1394
    %v1864 = vunpack.c.h.b16 %v1394
    %v1865 = vunpack.c.l.b16 %v1395
    %v1866 = vunpack.c.h.b16 %v1395
    %v1867 = vunpack.c.l.b16 %v1396
    %v1868 = vunpack.c.h.b16 %v1396
    %v1869 = vunpack.c.l.b16 %v1397
    %v1870 = vunpack.c.h.b16 %v1397
    %v1871 = vunpack.c.l.b16 %v1398
    %v1872 = vunpack.c.h.b16 %v1398
    %v1873 = vunpack.c.l.b16 %v1399
    %v1874 = vunpack.c.h.b16 %v1399
    %v1875 = vunpack.c.l.b16 %v1400
    %v1876 = vunpack.c.h.b16 %v1400
    %v1877 = vunpack.c.l.b16 %v1401
    %v1878 = vunpack.c.h.b16 %v1401
    %v1879 = vunpack.c.l.b16 %v1402
    %v1880 = vunpack.c.h.b16 %v1402
    %v1881 = vunpack.c.l.b16 %v1403
    %v1882 = vunpack.c.h.b16 %v1403
    %v1883 = vunpack.c.l.b16 %v1404
    %v1884 = vunpack.c.h.b16 %v1404
    %v1885 = vunpack.c.l.b16 %v1405
    %v1886 = vunpack.c.h.b16 %v1405
    %v1887 = vunpack.c.l.b16 %v1406
    %v1888 = vunpack.c.h.b16 %v1406
    %v1889 = vunpack.c.l.b16 %v1407
    %v1890 = vunpack.c.h.b16 %v1407
    %v1891 = vunpack.c.l.b16 %v1408
    %v1892 = vunpack.c.h.b16 %v1408
    %v1893 = vunpack.c.l.b16 %v1409
    %v1894 = vunpack.c.h.b16 %v1409
    %v1895 = vunpack.c.l.b16 %v1410
    %v1896 = vunpack.c.h.b16 %v1410
    %v1897 = vunpack.c.l.b16 %v1411
    %v1898 = vunpack.c.h.b16 %v1411
    %v1899 = vunpack.c.l.b16 %v1412
    %v1900 = vunpack.c.h.b16 %v1412
    %v1901 = vunpack.c.l.b16 %v1413
    %v1902 = vunpack.c.h.b16 %v1413
    %v1903 = vunpack.c.l.b16 %v1414
    %v1904 = vunpack.c.h.b16 %v1414
    %v1905 = vunpack.c.l.b16 %v1415
    %v1906 = vunpack.c.h.b16 %v1415
    %v1907 = vunpack.c.l.b16 %v1416
    %v1908 = vunpack.c.h.b16 %v1416
    %v1909 = vunpack.c.l.b16 %v1417
    %v1910 = vunpack.c.h.b16 %v1417
    %v1911 = vunpack.c.l.b16 %v1418
    %v1912 = vunpack.c.h.b16 %v1418
    %v1913 = vunpack.c.l.b16 %v1419
    %v1914 = vunpack.c.h.b16 %v1419
    %v1915 = vunpack.c.l.b16 %v1420
    %v1916 = vunpack.c.h.b16 %v1420
    %v1917 = vunpack.c.l.b16 %v1421
    %v1918 = vunpack.c.h.b16 %v1421
    %v1919 = vunpack.c.l.b16 %v1422
    %v1920 = vunpack.c.h.b16 %v1422
    %v1921 = vunpack.c.l.b16 %v1423
    %v1922 = vunpack.c.h.b16 %v1423
    %v1923 = vunpack.c.l.b16 %v1424
    %v1924 = vunpack.c.h.b16 %v1424
    %v1925 = vunpack.c.l.b16 %v1425
    %v1926 = vunpack.c.h.b16 %v1425
    %v1927 = vunpack.c.l.b16 %v1426
    %v1928 = vunpack.c.h.b16 %v1426
    %v1929 = vunpack.c.l.b16 %v1427
    %v1930 = vunpack.c.h.b16 %v1427
    %v1931 = vunpack.c.l.b16 %v1428
    %v1932 = vunpack.c.h.b16 %v1428
    %v1933 = vunpack.c.l.b16 %v1429
    %v1934 = vunpack.c.h.b16 %v1429
    %v1935 = vunpack.c.l.b16 %v1430
    %v1936 = vunpack.c.h.b16 %v1430
    %v1937 = vunpack.c.l.b16 %v1431
    %v1938 = vunpack.c.h.b16 %v1431
    %v1939 = vunpack.c.l.b16 %v1432
    %v1940 = vunpack.c.h.b16 %v1432
    %v1941 = vunpack.c.l.b16 %v1433
    %v1942 = vunpack.c.h.b16 %v1433
    %v1943 = vunpack.c.l.b16 %v1434
    %v1944 = vunpack.c.h.b16 %v1434
    %v1945 = vunpack.c.l.b16 %v1435
    %v1946 = vunpack.c.h.b16 %v1435
    %v1947 = vunpack.c.l.b16 %v1436
    %v1948 = vunpack.c.h.b16 %v1436
    %v1949 = vunpack.c.l.b16 %v1437
    %v1950 = vunpack.c.h.b16 %v1437
    %v1951 = vunpack.c.l.b16 %v1438
    %v1952 = vunpack.c.h.b16 %v1438
    %v1953 = vunpack.c.l.b16 %v1439
    %v1954 = vunpack.c.h.b16 %v1439
    %v1955 = vunpack.c.l.b16 %v1440
    %v1956 = vunpack.c.h.b16 %v1440
    %v1957 = vunpack.c.l.b16 %v1441
    %v1958 = vunpack.c.h.b16 %v1441
    %v1959 = vunpack.c.l.b16 %v1442
    %v1960 = vunpack.c.h.b16 %v1442
    %v1961 = vunpack.c.l.b16 %v1443
    %v1962 = vunpack.c.h.b16 %v1443
    %v1963 = vunpack.c.l.b16 %v1444
    %v1964 = vunpack.c.h.b16 %v1444
    %v1965 = vunpack.c.l.b16 %v1445
    %v1966 = vunpack.c.h.b16 %v1445
    %v1967 = vunpack.c.l.b16 %v1446
    %v1968 = vunpack.c.h.b16 %v1446
    %v1969 = vunpack.c.l.b16 %v1447
    %v1970 = vunpack.c.h.b16 %v1447
    %v1971 = vunpack.c.l.b16 %v1448
    %v1972 = vunpack.c.h.b16 %v1448
    %v1973 = vunpack.c.l.b16 %v1449
    %v1974 = vunpack.c.h.b16 %v1449
    %v1975 = vunpack.c.l.b16 %v1450
    %v1976 = vunpack.c.h.b16 %v1450
    %v1977 = vunpack.c.l.b16 %v1451
    %v1978 = vunpack.c.h.b16 %v1451
    %v1979 = vunpack.c.l.b16 %v1452
    %v1980 = vunpack.c.h.b16 %v1452
    %v1981 = vunpack.c.l.b16 %v1453
    %v1982 = vunpack.c.h.b16 %v1453
    %v1983 = vunpack.c.l.b16 %v1454
    %v1984 = vunpack.c.h.b16 %v1454
    %v1985 = vunpack.c.l.b16 %v1455
    %v1986 = vunpack.c.h.b16 %v1455
    %v1987 = vunpack.c.l.b16 %v1456
    %v1988 = vunpack.c.h.b16 %v1456
    %v1989 = vunpack.c.l.b16 %v1457
    %v1990 = vunpack.c.h.b16 %v1457
    %v1991 = vunpack.c.l.b16 %v1458
    %v1992 = vunpack.c.h.b16 %v1458
    %v1993 = vunpack.c.l.b16 %v1459
    %v1994 = vunpack.c.h.b16 %v1459
    %v1995 = vunpack.c.l.b16 %v1460
    %v1996 = vunpack.c.h.b16 %v1460
    %v1997 = vunpack.c.l.b16 %v1461
    %v1998 = vunpack.c.h.b16 %v1461
    %v1999 = vunpack.c.l.b16 %v1462
    %v2000 = vunpack.c.h.b16 %v1462
    %v2001 = vunpack.c.l.b16 %v1463
    %v2002 = vunpack.c.h.b16 %v1463
    %v2003 = vunpack.c.l.b16 %v1464
    %v2004 = vunpack.c.h.b16 %v1464
    %v2005 = vunpack.c.l.b16 %v1465
    %v2006 = vunpack.c.h.b16 %v1465
    %v2007 = vunpack.c.l.b16 %v1466
    %v2008 = vunpack.c.h.b16 %v1466
    %v2009 = vunpack.c.l.b16 %v1467
    %v2010 = vunpack.c.h.b16 %v1467
    %v2011 = vunpack.c.l.b16 %v1468
    %v2012 = vunpack.c.h.b16 %v1468
    %v2013 = vunpack.c.l.b16 %v1469
    %v2014 = vunpack.c.h.b16 %v1469
    %v2015 = vunpack.c.l.b16 %v1470
    %v2016 = vunpack.c.h.b16 %v1470
    %v2017 = vunpack.c.l.b16 %v1471
    %v2018 = vunpack.c.h.b16 %v1471
    %v2019 = vunpack.c.l.b16 %v1472
    %v2020 = vunpack.c.h.b16 %v1472
    %v2021 = vunpack.c.l.b16 %v1473
    %v2022 = vunpack.c.h.b16 %v1473
    %v2023 = vunpack.c.l.b16 %v1474
    %v2024 = vunpack.c.h.b16 %v1474
    %v2025 = vunpack.c.l.b16 %v1475
    %v2026 = vunpack.c.h.b16 %v1475
    %v2027 = vunpack.c.l.b16 %v1476
    %v2028 = vunpack.c.h.b16 %v1476
    %v2029 = vunpack.c.l.b16 %v1477
    %v2030 = vunpack.c.h.b16 %v1477
    %v2031 = vunpack.c.l.b16 %v1478
    %v2032 = vunpack.c.h.b16 %v1478
    %v2033 = vunpack.c.l.b16 %v1479
    %v2034 = vunpack.c.h.b16 %v1479
    %v2035 = vunpack.c.l.b16 %v1480
    %v2036 = vunpack.c.h.b16 %v1480
    %v2037 = vunpack.c.l.b16 %v1481
    %v2038 = vunpack.c.h.b16 %v1481
    %v2039 = vunpack.c.l.b16 %v1482
    %v2040 = vunpack.c.h.b16 %v1482
    %v2041 = vunpack.c.l.b16 %v1483
    %v2042 = vunpack.c.h.b16 %v1483
    %v2043 = vunpack.c.l.b16 %v1484
    %v2044 = vunpack.c.h.b16 %v1484
    %v2045 = vunpack.c.l.b16 %v1485
    %v2046 = vunpack.c.h.b16 %v1485
    %v2047 = vunpack.c.l.b16 %v1486
    %v2048 = vunpack.c.h.b16 %v1486
    %v2049 = vunpack.c.l.b16 %v1487
    %v2050 = vunpack.c.h.b16 %v1487
    %v2051 = vunpack.c.l.b16 %v1488
    %v2052 = vunpack.c.h.b16 %v1488
    %v2053 = vunpack.c.l.b16 %v1489
    %v2054 = vunpack.c.h.b16 %v1489
    %v2055 = vunpack.c.l.b16 %v1490
    %v2056 = vunpack.c.h.b16 %v1490
    %v2057 = vunpack.c.l.b16 %v1491
    %v2058 = vunpack.c.h.b16 %v1491
    %v2059 = vunpack.c.l.b16 %v1492
    %v2060 = vunpack.c.h.b16 %v1492
    %v2061 = vunpack.c.l.b16 %v1493
    %v2062 = vunpack.c.h.b16 %v1493
    %v2063 = vunpack.c.l.b16 %v1494
    %v2064 = vunpack.c.h.b16 %v1494
    %v2065 = vunpack.c.l.b16 %v1495
    %v2066 = vunpack.c.h.b16 %v1495
    %v2067 = vunpack.c.l.b16 %v1496
    %v2068 = vunpack.c.h.b16 %v1496
    %v2069 = vunpack.c.l.b16 %v1497
    %v2070 = vunpack.c.h.b16 %v1497
    %v2071 = vunpack.c.l.b16 %v1498
    %v2072 = vunpack.c.h.b16 %v1498
    %v2073 = vunpack.c.l.b16 %v1499
    %v2074 = vunpack.c.h.b16 %v1499
    %v2075 = vunpack.c.l.b16 %v1500
    %v2076 = vunpack.c.h.b16 %v1500
    %v2077 = vpack.c.b16 %v1695, %v1693
    %v2078 = vpack.c.b16 %v1696, %v1694
    %v2079 = vpack.c.b16 %v1699, %v1697
    %v2080 = vpack.c.b16 %v1700, %v1698
    %v2081 = vpack.c.b16 %v1703, %v1701
    %v2082 = vpack.c.b16 %v1704, %v1702
    %v2083 = vpack.c.b16 %v1707, %v1705
    %v2084 = vpack.c.b16 %v1708, %v1706
    %v2085 = vpack.c.b16 %v1711, %v1709
    %v2086 = vpack.c.b16 %v1712, %v1710
    %v2087 = vpack.c.b16 %v1715, %v1713
    %v2088 = vpack.c.b16 %v1716, %v1714
    %v2089 = vpack.c.b16 %v1719, %v1717
    %v2090 = vpack.c.b16 %v1720, %v1718
    %v2091 = vpack.c.b16 %v1723, %v1721
    %v2092 = vpack.c.b16 %v1724, %v1722
    %v2093 = vpack.c.b16 %v1727, %v1725
    %v2094 = vpack.c.b16 %v1728, %v1726
    %v2095 = vpack.c.b16 %v1731, %v1729
    %v2096 = vpack.c.b16 %v1732, %v1730
    %v2097 = vpack.c.b16 %v1735, %v1733
    %v2098 = vpack.c.b16 %v1736, %v1734
    %v2099 = vpack.c.b16 %v1739, %v1737
    %v2100 = vpack.c.b16 %v1740, %v1738
    %v2101 = vpack.c.b16 %v1743, %v1741
    %v2102 = vpack.c.b16 %v1744, %v1742
    %v2103 = vpack.c.b16 %v1747, %v1745
    %v2104 = vpack.c.b16 %v1748, %v1746
    %v2105 = vpack.c.b16 %v1751, %v1749
    %v2106 = vpack.c.b16 %v1752, %v1750
    %v2107 = vpack.c.b16 %v1755, %v1753
    %v2108 = vpack.c.b16 %v1756, %v1754
    %v2109 = vpack.c.b16 %v1759, %v1757
    %v2110 = vpack.c.b16 %v1760, %v1758
    %v2111 = vpack.c.b16 %v1763, %v1761
    %v2112 = vpack.c.b16 %v1764, %v1762
    %v2113 = vpack.c.b16 %v1767, %v1765
    %v2114 = vpack.c.b16 %v1768, %v1766
    %v2115 = vpack.c.b16 %v1771, %v1769
    %v2116 = vpack.c.b16 %v1772, %v1770
    %v2117 = vpack.c.b16 %v1775, %v1773
    %v2118 = vpack.c.b16 %v1776, %v1774
    %v2119 = vpack.c.b16 %v1779, %v1777
    %v2120 = vpack.c.b16 %v1780, %v1778
    %v2121 = vpack.c.b16 %v1783, %v1781
    %v2122 = vpack.c.b16 %v1784, %v1782
    %v2123 = vpack.c.b16 %v1787, %v1785
    %v2124 = vpack.c.b16 %v1788, %v1786
    %v2125 = vpack.c.b16 %v1791, %v1789
    %v2126 = vpack.c.b16 %v1792, %v1790
    %v2127 = vpack.c.b16 %v1795, %v1793
    %v2128 = vpack.c.b16 %v1796, %v1794
    %v2129 = vpack.c.b16 %v1799, %v1797
    %v2130 = vpack.c.b16 %v1800, %v1798
    %v2131 = vpack.c.b16 %v1803, %v1801
    %v2132 = vpack.c.b16 %v1804, %v1802
    %v2133 = vpack.c.b16 %v1807, %v1805
    %v2134 = vpack.c.b16 %v1808, %v1806
    %v2135 = vpack.c.b16 %v1811, %v1809
    %v2136 = vpack.c.b16 %v1812, %v1810
    %v2137 = vpack.c.b16 %v1815, %v1813
    %v2138 = vpack.c.b16 %v1816, %v1814
    %v2139 = vpack.c.b16 %v1819, %v1817
    %v2140 = vpack.c.b16 %v1820, %v1818
    %v2141 = vpack.c.b16 %v1823, %v1821
    %v2142 = vpack.c.b16 %v1824, %v1822
    %v2143 = vpack.c.b16 %v1827, %v1825
    %v2144 = vpack.c.b16 %v1828, %v1826
    %v2145 = vpack.c.b16 %v1831, %v1829
    %v2146 = vpack.c.b16 %v1832, %v1830
    %v2147 = vpack.c.b16 %v1835, %v1833
    %v2148 = vpack.c.b16 %v1836, %v1834
    %v2149 = vpack.c.b16 %v1839, %v1837
    %v2150 = vpack.c.b16 %v1840, %v1838
    %v2151 = vpack.c.b16 %v1843, %v1841
    %v2152 = vpack.c.b16 %v1844, %v1842
    %v2153 = vpack.c.b16 %v1847, %v1845
    %v2154 = vpack.c.b16 %v1848, %v1846
    %v2155 = vpack.c.b16 %v1851, %v1849
    %v2156 = vpack.c.b16 %v1852, %v1850
    %v2157 = vpack.c.b16 %v1855, %v1853
    %v2158 = vpack.c.b16 %v1856, %v1854
    %v2159 = vpack.c.b16 %v1859, %v1857
    %v2160 = vpack.c.b16 %v1860, %v1858
    %v2161 = vpack.c.b16 %v1863, %v1861
    %v2162 = vpack.c.b16 %v1864, %v1862
    %v2163 = vpack.c.b16 %v1867, %v1865
    %v2164 = vpack.c.b16 %v1868, %v1866
    %v2165 = vpack.c.b16 %v1871, %v1869
    %v2166 = vpack.c.b16 %v1872, %v1870
    %v2167 = vpack.c.b16 %v1875, %v1873
    %v2168 = vpack.c.b16 %v1876, %v1874
    %v2169 = vpack.c.b16 %v1879, %v1877
    %v2170 = vpack.c.b16 %v1880, %v1878
    %v2171 = vpack.c.b16 %v1883, %v1881
    %v2172 = vpack.c.b16 %v1884, %v1882
    %v2173 = vpack.c.b16 %v1887, %v1885
    %v2174 = vpack.c.b16 %v1888, %v1886
    %v2175 = vpack.c.b16 %v1891, %v1889
    %v2176 = vpack.c.b16 %v1892, %v1890
    %v2177 = vpack.c.b16 %v1895, %v1893
    %v2178 = vpack.c.b16 %v1896, %v1894
    %v2179 = vpack.c.b16 %v1899, %v1897
    %v2180 = vpack.c.b16 %v1900, %v1898
    %v2181 = vpack.c.b16 %v1903, %v1901
    %v2182 = vpack.c.b16 %v1904, %v1902
    %v2183 = vpack.c.b16 %v1907, %v1905
    %v2184 = vpack.c.b16 %v1908, %v1906
    %v2185 = vpack.c.b16 %v1911, %v1909
    %v2186 = vpack.c.b16 %v1912, %v1910
    %v2187 = vpack.c.b16 %v1915, %v1913
    %v2188 = vpack.c.b16 %v1916, %v1914
    %v2189 = vpack.c.b16 %v1919, %v1917
    %v2190 = vpack.c.b16 %v1920, %v1918
    %v2191 = vpack.c.b16 %v1923, %v1921
    %v2192 = vpack.c.b16 %v1924, %v1922
    %v2193 = vpack.c.b16 %v1927, %v1925
    %v2194 = vpack.c.b16 %v1928, %v1926
    %v2195 = vpack.c.b16 %v1931, %v1929
    %v2196 = vpack.c.b16 %v1932, %v1930
    %v2197 = vpack.c.b16 %v1935, %v1933
    %v2198 = vpack.c.b16 %v1936, %v1934
    %v2199 = vpack.c.b16 %v1939, %v1937
    %v2200 = vpack.c.b16 %v1940, %v1938
    %v2201 = vpack.c.b16 %v1943, %v1941
    %v2202 = vpack.c.b16 %v1944, %v1942
    %v2203 = vpack.c.b16 %v1947, %v1945
    %v2204 = vpack.c.b16 %v1948, %v1946
    %v2205 = vpack.c.b16 %v1951, %v1949
    %v2206 = vpack.c.b16 %v1952, %v1950
    %v2207 = vpack.c.b16 %v1955, %v1953
    %v2208 = vpack.c.b16 %v1956, %v1954
    %v2209 = vpack.c.b16 %v1959, %v1957
    %v2210 = vpack.c.b16 %v1960, %v1958
    %v2211 = vpack.c.b16 %v1963, %v1961
    %v2212 = vpack.c.b16 %v1964, %v1962
    %v2213 = vpack.c.b16 %v1967, %v1965
    %v2214 = vpack.c.b16 %v1968, %v1966
    %v2215 = vpack.c.b16 %v1971, %v1969
    %v2216 = vpack.c.b16 %v1972, %v1970
    %v2217 = vpack.c.b16 %v1975, %v1973
    %v2218 = vpack.c.b16 %v1976, %v1974
    %v2219 = vpack.c.b16 %v1979, %v1977
    %v2220 = vpack.c.b16 %v1980, %v1978
    %v2221 = vpack.c.b16 %v1983, %v1981
    %v2222 = vpack.c.b16 %v1984, %v1982
    %v2223 = vpack.c.b16 %v1987, %v1985
    %v2224 = vpack.c.b16 %v1988, %v1986
    %v2225 = vpack.c.b16 %v1991, %v1989
    %v2226 = vpack.c.b16 %v1992, %v1990
    %v2227 = vpack.c.b16 %v1995, %v1993
    %v2228 = vpack.c.b16 %v1996, %v1994
    %v2229 = vpack.c.b16 %v1999, %v1997
    %v2230 = vpack.c.b16 %v2000, %v1998
    %v2231 = vpack.c.b16 %v2003, %v2001
    %v2232 = vpack.c.b16 %v2004, %v2002
    %v2233 = vpack.c.b16 %v2007, %v2005
    %v2234 = vpack.c.b16 %v2008, %v2006
    %v2235 = vpack.c.b16 %v2011, %v2009
    %v2236 = vpack.c.b16 %v2012, %v2010
    %v2237 = vpack.c.b16 %v2015, %v2013
    %v2238 = vpack.c.b16 %v2016, %v2014
    %v2239 = vpack.c.b16 %v2019, %v2017
    %v2240 = vpack.c.b16 %v2020, %v2018
    %v2241 = vpack.c.b16 %v2023, %v2021
    %v2242 = vpack.c.b16 %v2024, %v2022
    %v2243 = vpack.c.b16 %v2027, %v2025
    %v2244 = vpack.c.b16 %v2028, %v2026
    %v2245 = vpack.c.b16 %v2031, %v2029
    %v2246 = vpack.c.b16 %v2032, %v2030
    %v2247 = vpack.c.b16 %v2035, %v2033
    %v2248 = vpack.c.b16 %v2036, %v2034
    %v2249 = vpack.c.b16 %v2039, %v2037
    %v2250 = vpack.c.b16 %v2040, %v2038
    %v2251 = vpack.c.b16 %v2043, %v2041
    %v2252 = vpack.c.b16 %v2044, %v2042
    %v2253 = vpack.c.b16 %v2047, %v2045
    %v2254 = vpack.c.b16 %v2048, %v2046
    %v2255 = vpack.c.b16 %v2051, %v2049
    %v2256 = vpack.c.b16 %v2052, %v2050
    %v2257 = vpack.c.b16 %v2055, %v2053
    %v2258 = vpack.c.b16 %v2056, %v2054
    %v2259 = vpack.c.b16 %v2059, %v2057
    %v2260 = vpack.c.b16 %v2060, %v2058
    %v2261 = vpack.c.b16 %v2063, %v2061
    %v2262 = vpack.c.b16 %v2064, %v2062
    %v2263 = vpack.c.b16 %v2067, %v2065
    %v2264 = vpack.c.b16 %v2068, %v2066
    %v2265 = vpack.c.b16 %v2071, %v2069
    %v2266 = vpack.c.b16 %v2072, %v2070
    %v2267 = vpack.c.b16 %v2075, %v2073
    %v2268 = vpack.c.b16 %v2076, %v2074
    %2461 = vmatprep.subr.bf16.mxu0 %v2092
    %2462 = vmatpush1.bf16.msra.mxu0 %v2091
    %2463 = vmatprep.subr.bf16.mxu0 %v2090
    %2464 = vmatpush1.bf16.msra.mxu0 %v2089
    %2465 = vmatprep.subr.bf16.mxu0 %v2088
    %2466 = vmatpush1.bf16.msra.mxu0 %v2087
    %2467 = vmatprep.subr.bf16.mxu0 %v2086
    %2468 = vmatpush1.bf16.msra.mxu0 %v2085
    %2469 = vmatprep.subr.bf16.mxu0 %v2084
    %2470 = vmatpush1.bf16.msra.mxu0 %v2083
    %2471 = vmatprep.subr.bf16.mxu0 %v2082
    %2472 = vmatpush1.bf16.msra.mxu0 %v2081
    %2473 = vmatprep.subr.bf16.mxu0 %v2080
    %2474 = vmatpush1.bf16.msra.mxu0 %v2079
    %2475 = vmatprep.subr.bf16.mxu0 %v2078
    %2476 = vmatpush1.bf16.msra.mxu0 %v2077
    %2477 = vmatprep.subr.bf16.mxu0 %v2108
    %2478 = vmatpush2.bf16.msra.mxu0 %v2107
    %2479 = vmatprep.subr.bf16.mxu0 %v2106
    %2480 = vmatpush2.bf16.msra.mxu0 %v2105
    %2481 = vmatprep.subr.bf16.mxu0 %v2104
    %2482 = vmatpush2.bf16.msra.mxu0 %v2103
    %2483 = vmatprep.subr.bf16.mxu0 %v2102
    %2484 = vmatpush2.bf16.msra.mxu0 %v2101
    %2485 = vmatprep.subr.bf16.mxu0 %v2100
    %2486 = vmatpush2.bf16.msra.mxu0 %v2099
    %2487 = vmatprep.subr.bf16.mxu0 %v2098
    %2488 = vmatpush2.bf16.msra.mxu0 %v2097
    %2489 = vmatprep.subr.bf16.mxu0 %v2096
    %2490 = vmatpush2.bf16.msra.mxu0 %v2095
    %2491 = vmatprep.subr.bf16.mxu0 %v2094
    %2492 = vmatpush2.bf16.msra.mxu0 %v2093
    %2493 = vmatprep.mubr.bf16.mxu0 %v1289
    %2494 = vmatmul.mubr.bf16.gmra.mxu0 %v1288
    %v2495 = vpop.f32.mrf.mxu0
    %v2496 = vadd.f32 0.0, %v2495
    %v2497 = vpop.f32.mrf.mxu0
    %v2498 = vadd.f32 0.0, %v2497
    %v2499 = vpop.f32.mrf.mxu0
    %v2500 = vadd.f32 0.0, %v2499
    %v2501 = vpop.f32.mrf.mxu0
    %v2502 = vadd.f32 0.0, %v2501
    %2503 = vmatprep.mubr.bf16.mxu0 %v1297
    %2504 = vmatmul.mubr.bf16.gmra.mxu0 %v1296
    %v2505 = vpop.f32.mrf.mxu0
    %v2506 = vadd.f32 0.0, %v2505
    %v2507 = vpop.f32.mrf.mxu0
    %v2508 = vadd.f32 0.0, %v2507
    %v2509 = vpop.f32.mrf.mxu0
    %v2510 = vadd.f32 0.0, %v2509
    %v2511 = vpop.f32.mrf.mxu0
    %v2512 = vadd.f32 0.0, %v2511
    %2513 = vdwg.mxu0
    %2514 = vmatprep.subr.bf16.mxu0 %v2124
    %2515 = vmatpush1.bf16.msra.mxu0 %v2123
    %2516 = vmatprep.subr.bf16.mxu0 %v2122
    %2517 = vmatpush1.bf16.msra.mxu0 %v2121
    %2518 = vmatprep.subr.bf16.mxu0 %v2120
    %2519 = vmatpush1.bf16.msra.mxu0 %v2119
    %2520 = vmatprep.subr.bf16.mxu0 %v2118
    %2521 = vmatpush1.bf16.msra.mxu0 %v2117
    %2522 = vmatprep.subr.bf16.mxu0 %v2116
    %2523 = vmatpush1.bf16.msra.mxu0 %v2115
    %2524 = vmatprep.subr.bf16.mxu0 %v2114
    %2525 = vmatpush1.bf16.msra.mxu0 %v2113
    %2526 = vmatprep.subr.bf16.mxu0 %v2112
    %2527 = vmatpush1.bf16.msra.mxu0 %v2111
    %2528 = vmatprep.subr.bf16.mxu0 %v2110
    %2529 = vmatpush1.bf16.msra.mxu0 %v2109
    %2530 = vmatprep.subr.bf16.mxu0 %v2140
    %2531 = vmatpush2.bf16.msra.mxu0 %v2139
    %2532 = vmatprep.subr.bf16.mxu0 %v2138
    %2533 = vmatpush2.bf16.msra.mxu0 %v2137
    %2534 = vmatprep.subr.bf16.mxu0 %v2136
    %2535 = vmatpush2.bf16.msra.mxu0 %v2135
    %2536 = vmatprep.subr.bf16.mxu0 %v2134
    %2537 = vmatpush2.bf16.msra.mxu0 %v2133
    %2538 = vmatprep.subr.bf16.mxu0 %v2132
    %2539 = vmatpush2.bf16.msra.mxu0 %v2131
    %2540 = vmatprep.subr.bf16.mxu0 %v2130
    %2541 = vmatpush2.bf16.msra.mxu0 %v2129
    %2542 = vmatprep.subr.bf16.mxu0 %v2128
    %2543 = vmatpush2.bf16.msra.mxu0 %v2127
    %2544 = vmatprep.subr.bf16.mxu0 %v2126
    %2545 = vmatpush2.bf16.msra.mxu0 %v2125
    %2546 = vmatprep.mubr.bf16.mxu0 %v1291
    %2547 = vmatmul.mubr.bf16.gmra.mxu0 %v1290
    %v2548 = vpop.f32.mrf.mxu0
    %v2549 = vadd.f32 %v2496, %v2548
    %v2550 = vpop.f32.mrf.mxu0
    %v2551 = vadd.f32 %v2498, %v2550
    %v2552 = vpop.f32.mrf.mxu0
    %v2553 = vadd.f32 %v2500, %v2552
    %v2554 = vpop.f32.mrf.mxu0
    %v2555 = vadd.f32 %v2502, %v2554
    %2556 = vmatprep.mubr.bf16.mxu0 %v1299
    %2557 = vmatmul.mubr.bf16.gmra.mxu0 %v1298
    %v2558 = vpop.f32.mrf.mxu0
    %v2559 = vadd.f32 %v2506, %v2558
    %v2560 = vpop.f32.mrf.mxu0
    %v2561 = vadd.f32 %v2508, %v2560
    %v2562 = vpop.f32.mrf.mxu0
    %v2563 = vadd.f32 %v2510, %v2562
    %v2564 = vpop.f32.mrf.mxu0
    %v2565 = vadd.f32 %v2512, %v2564
    %2566 = vdwg.mxu0
    %2567 = vmatprep.subr.bf16.mxu0 %v2156
    %2568 = vmatpush1.bf16.msra.mxu0 %v2155
    %2569 = vmatprep.subr.bf16.mxu0 %v2154
    %2570 = vmatpush1.bf16.msra.mxu0 %v2153
    %2571 = vmatprep.subr.bf16.mxu0 %v2152
    %2572 = vmatpush1.bf16.msra.mxu0 %v2151
    %2573 = vmatprep.subr.bf16.mxu0 %v2150
    %2574 = vmatpush1.bf16.msra.mxu0 %v2149
    %2575 = vmatprep.subr.bf16.mxu0 %v2148
    %2576 = vmatpush1.bf16.msra.mxu0 %v2147
    %2577 = vmatprep.subr.bf16.mxu0 %v2146
    %2578 = vmatpush1.bf16.msra.mxu0 %v2145
    %2579 = vmatprep.subr.bf16.mxu0 %v2144
    %2580 = vmatpush1.bf16.msra.mxu0 %v2143
    %2581 = vmatprep.subr.bf16.mxu0 %v2142
    %2582 = vmatpush1.bf16.msra.mxu0 %v2141
    %2583 = vmatprep.subr.bf16.mxu0 %v2172
    %2584 = vmatpush2.bf16.msra.mxu0 %v2171
    %2585 = vmatprep.subr.bf16.mxu0 %v2170
    %2586 = vmatpush2.bf16.msra.mxu0 %v2169
    %2587 = vmatprep.subr.bf16.mxu0 %v2168
    %2588 = vmatpush2.bf16.msra.mxu0 %v2167
    %2589 = vmatprep.subr.bf16.mxu0 %v2166
    %2590 = vmatpush2.bf16.msra.mxu0 %v2165
    %2591 = vmatprep.subr.bf16.mxu0 %v2164
    %2592 = vmatpush2.bf16.msra.mxu0 %v2163
    %2593 = vmatprep.subr.bf16.mxu0 %v2162
    %2594 = vmatpush2.bf16.msra.mxu0 %v2161
    %2595 = vmatprep.subr.bf16.mxu0 %v2160
    %2596 = vmatpush2.bf16.msra.mxu0 %v2159
    %2597 = vmatprep.subr.bf16.mxu0 %v2158
    %2598 = vmatpush2.bf16.msra.mxu0 %v2157
    %2599 = vmatprep.mubr.bf16.mxu0 %v1293
    %2600 = vmatmul.mubr.bf16.gmra.mxu0 %v1292
    %v2601 = vpop.f32.mrf.mxu0
    %v2602 = vadd.f32 %v2549, %v2601
    %v2603 = vpop.f32.mrf.mxu0
    %v2604 = vadd.f32 %v2551, %v2603
    %v2605 = vpop.f32.mrf.mxu0
    %v2606 = vadd.f32 %v2553, %v2605
    %v2607 = vpop.f32.mrf.mxu0
    %v2608 = vadd.f32 %v2555, %v2607
    %2609 = vmatprep.mubr.bf16.mxu0 %v1301
    %2610 = vmatmul.mubr.bf16.gmra.mxu0 %v1300
    %v2611 = vpop.f32.mrf.mxu0
    %v2612 = vadd.f32 %v2559, %v2611
    %v2613 = vpop.f32.mrf.mxu0
    %v2614 = vadd.f32 %v2561, %v2613
    %v2615 = vpop.f32.mrf.mxu0
    %v2616 = vadd.f32 %v2563, %v2615
    %v2617 = vpop.f32.mrf.mxu0
    %v2618 = vadd.f32 %v2565, %v2617
    %2619 = vdwg.mxu0
    %2620 = vmatprep.subr.bf16.mxu0 %v2188
    %2621 = vmatpush1.bf16.msra.mxu0 %v2187
    %2622 = vmatprep.subr.bf16.mxu0 %v2186
    %2623 = vmatpush1.bf16.msra.mxu0 %v2185
    %2624 = vmatprep.subr.bf16.mxu0 %v2184
    %2625 = vmatpush1.bf16.msra.mxu0 %v2183
    %2626 = vmatprep.subr.bf16.mxu0 %v2182
    %2627 = vmatpush1.bf16.msra.mxu0 %v2181
    %2628 = vmatprep.subr.bf16.mxu0 %v2180
    %2629 = vmatpush1.bf16.msra.mxu0 %v2179
    %2630 = vmatprep.subr.bf16.mxu0 %v2178
    %2631 = vmatpush1.bf16.msra.mxu0 %v2177
    %2632 = vmatprep.subr.bf16.mxu0 %v2176
    %2633 = vmatpush1.bf16.msra.mxu0 %v2175
    %2634 = vmatprep.subr.bf16.mxu0 %v2174
    %2635 = vmatpush1.bf16.msra.mxu0 %v2173
    %2636 = vmatprep.subr.bf16.mxu0 %v2204
    %2637 = vmatpush2.bf16.msra.mxu0 %v2203
    %2638 = vmatprep.subr.bf16.mxu0 %v2202
    %2639 = vmatpush2.bf16.msra.mxu0 %v2201
    %2640 = vmatprep.subr.bf16.mxu0 %v2200
    %2641 = vmatpush2.bf16.msra.mxu0 %v2199
    %2642 = vmatprep.subr.bf16.mxu0 %v2198
    %2643 = vmatpush2.bf16.msra.mxu0 %v2197
    %2644 = vmatprep.subr.bf16.mxu0 %v2196
    %2645 = vmatpush2.bf16.msra.mxu0 %v2195
    %2646 = vmatprep.subr.bf16.mxu0 %v2194
    %2647 = vmatpush2.bf16.msra.mxu0 %v2193
    %2648 = vmatprep.subr.bf16.mxu0 %v2192
    %2649 = vmatpush2.bf16.msra.mxu0 %v2191
    %2650 = vmatprep.subr.bf16.mxu0 %v2190
    %2651 = vmatpush2.bf16.msra.mxu0 %v2189
    %2652 = vmatprep.mubr.bf16.mxu0 %v1295
    %2653 = vmatmul.mubr.bf16.gmra.mxu0 %v1294
    %v2654 = vpop.f32.mrf.mxu0
    %v2655 = vadd.f32 %v2602, %v2654
    %v2656 = vpop.f32.mrf.mxu0
    %v2657 = vadd.f32 %v2604, %v2656
    %v2658 = vpop.f32.mrf.mxu0
    %v2659 = vadd.f32 %v2606, %v2658
    %v2660 = vpop.f32.mrf.mxu0
    %v2661 = vadd.f32 %v2608, %v2660
    %2662 = vmatprep.mubr.bf16.mxu0 %v1303
    %2663 = vmatmul.mubr.bf16.gmra.mxu0 %v1302
    %v2664 = vpop.f32.mrf.mxu0
    %v2665 = vadd.f32 %v2612, %v2664
    %v2666 = vpop.f32.mrf.mxu0
    %v2667 = vadd.f32 %v2614, %v2666
    %v2668 = vpop.f32.mrf.mxu0
    %v2669 = vadd.f32 %v2616, %v2668
    %v2670 = vpop.f32.mrf.mxu0
    %v2671 = vadd.f32 %v2618, %v2670
    %2672 = vdwg.mxu0
    %2673 = vmatprep.subr.bf16.mxu0 %v2220
    %2674 = vmatpush1.bf16.msra.mxu0 %v2219
    %2675 = vmatprep.subr.bf16.mxu0 %v2218
    %2676 = vmatpush1.bf16.msra.mxu0 %v2217
    %2677 = vmatprep.subr.bf16.mxu0 %v2216
    %2678 = vmatpush1.bf16.msra.mxu0 %v2215
    %2679 = vmatprep.subr.bf16.mxu0 %v2214
    %2680 = vmatpush1.bf16.msra.mxu0 %v2213
    %2681 = vmatprep.subr.bf16.mxu0 %v2212
    %2682 = vmatpush1.bf16.msra.mxu0 %v2211
    %2683 = vmatprep.subr.bf16.mxu0 %v2210
    %2684 = vmatpush1.bf16.msra.mxu0 %v2209
    %2685 = vmatprep.subr.bf16.mxu0 %v2208
    %2686 = vmatpush1.bf16.msra.mxu0 %v2207
    %2687 = vmatprep.subr.bf16.mxu0 %v2206
    %2688 = vmatpush1.bf16.msra.mxu0 %v2205
    %2689 = vmatprep.subr.bf16.mxu0 %v2236
    %2690 = vmatpush2.bf16.msra.mxu0 %v2235
    %2691 = vmatprep.subr.bf16.mxu0 %v2234
    %2692 = vmatpush2.bf16.msra.mxu0 %v2233
    %2693 = vmatprep.subr.bf16.mxu0 %v2232
    %2694 = vmatpush2.bf16.msra.mxu0 %v2231
    %2695 = vmatprep.subr.bf16.mxu0 %v2230
    %2696 = vmatpush2.bf16.msra.mxu0 %v2229
    %2697 = vmatprep.subr.bf16.mxu0 %v2228
    %2698 = vmatpush2.bf16.msra.mxu0 %v2227
    %2699 = vmatprep.subr.bf16.mxu0 %v2226
    %2700 = vmatpush2.bf16.msra.mxu0 %v2225
    %2701 = vmatprep.subr.bf16.mxu0 %v2224
    %2702 = vmatpush2.bf16.msra.mxu0 %v2223
    %2703 = vmatprep.subr.bf16.mxu0 %v2222
    %2704 = vmatpush2.bf16.msra.mxu0 %v2221
    %2705 = vmatprep.mubr.bf16.mxu0 %v1297
    %2706 = vmatmul.mubr.bf16.gmra.mxu0 %v1296
    %v2707 = vpop.f32.mrf.mxu0
    %v2708 = vadd.f32 %v2655, %v2707
    %v2709 = vpop.f32.mrf.mxu0
    %v2710 = vadd.f32 %v2657, %v2709
    %v2711 = vpop.f32.mrf.mxu0
    %v2712 = vadd.f32 %v2659, %v2711
    %v2713 = vpop.f32.mrf.mxu0
    %v2714 = vadd.f32 %v2661, %v2713
    %2715 = vmatprep.mubr.bf16.mxu0 %v1305
    %2716 = vmatmul.mubr.bf16.gmra.mxu0 %v1304
    %v2717 = vpop.f32.mrf.mxu0
    %v2718 = vadd.f32 %v2665, %v2717
    %v2719 = vpop.f32.mrf.mxu0
    %v2720 = vadd.f32 %v2667, %v2719
    %v2721 = vpop.f32.mrf.mxu0
    %v2722 = vadd.f32 %v2669, %v2721
    %v2723 = vpop.f32.mrf.mxu0
    %v2724 = vadd.f32 %v2671, %v2723
    %2725 = vdwg.mxu0
    %2726 = vmatprep.subr.bf16.mxu0 %v2252
    %2727 = vmatpush1.bf16.msra.mxu0 %v2251
    %2728 = vmatprep.subr.bf16.mxu0 %v2250
    %2729 = vmatpush1.bf16.msra.mxu0 %v2249
    %2730 = vmatprep.subr.bf16.mxu0 %v2248
    %2731 = vmatpush1.bf16.msra.mxu0 %v2247
    %2732 = vmatprep.subr.bf16.mxu0 %v2246
    %2733 = vmatpush1.bf16.msra.mxu0 %v2245
    %2734 = vmatprep.subr.bf16.mxu0 %v2244
    %2735 = vmatpush1.bf16.msra.mxu0 %v2243
    %2736 = vmatprep.subr.bf16.mxu0 %v2242
    %2737 = vmatpush1.bf16.msra.mxu0 %v2241
    %2738 = vmatprep.subr.bf16.mxu0 %v2240
    %2739 = vmatpush1.bf16.msra.mxu0 %v2239
    %2740 = vmatprep.subr.bf16.mxu0 %v2238
    %2741 = vmatpush1.bf16.msra.mxu0 %v2237
    %2742 = vmatprep.subr.bf16.mxu0 %v2268
    %2743 = vmatpush2.bf16.msra.mxu0 %v2267
    %2744 = vmatprep.subr.bf16.mxu0 %v2266
    %2745 = vmatpush2.bf16.msra.mxu0 %v2265
    %2746 = vmatprep.subr.bf16.mxu0 %v2264
    %2747 = vmatpush2.bf16.msra.mxu0 %v2263
    %2748 = vmatprep.subr.bf16.mxu0 %v2262
    %2749 = vmatpush2.bf16.msra.mxu0 %v2261
    %2750 = vmatprep.subr.bf16.mxu0 %v2260
    %2751 = vmatpush2.bf16.msra.mxu0 %v2259
    %2752 = vmatprep.subr.bf16.mxu0 %v2258
    %2753 = vmatpush2.bf16.msra.mxu0 %v2257
    %2754 = vmatprep.subr.bf16.mxu0 %v2256
    %2755 = vmatpush2.bf16.msra.mxu0 %v2255
    %2756 = vmatprep.subr.bf16.mxu0 %v2254
    %2757 = vmatpush2.bf16.msra.mxu0 %v2253
    %2758 = vmatprep.mubr.bf16.mxu0 %v1299
    %2759 = vmatmul.mubr.bf16.gmra.mxu0 %v1298
    %v2760 = vpop.f32.mrf.mxu0
    %v2761 = vadd.f32 %v2708, %v2760
    %v2762 = vpop.f32.mrf.mxu0
    %v2763 = vadd.f32 %v2710, %v2762
    %v2764 = vpop.f32.mrf.mxu0
    %v2765 = vadd.f32 %v2712, %v2764
    %v2766 = vpop.f32.mrf.mxu0
    %v2767 = vadd.f32 %v2714, %v2766
    %2768 = vmatprep.mubr.bf16.mxu0 %v1307
    %2769 = vmatmul.mubr.bf16.gmra.mxu0 %v1306
    %v2770 = vpop.f32.mrf.mxu0
    %v2771 = vadd.f32 %v2718, %v2770
    %v2772 = vpop.f32.mrf.mxu0
    %v2773 = vadd.f32 %v2720, %v2772
    %v2774 = vpop.f32.mrf.mxu0
    %v2775 = vadd.f32 %v2722, %v2774
    %v2776 = vpop.f32.mrf.mxu0
    %v2777 = vadd.f32 %v2724, %v2776
    %2778 = vdwg.mxu0
    %s2779 = scalar_lea.vmem [#allocation9], 1536
    %v2780 = vld [vmem:[%s2779] sm:$0xff]
    %v2781 = vld [vmem:[%s2779 + $0x8] sm:$0xff]
    %v2782 = vld [vmem:[%s2779 + $0x10] sm:$0xff]
    %v2783 = vld [vmem:[%s2779 + $0x18] sm:$0xff]
    %v2784 = vld [vmem:[%s2779 + $0x20] sm:$0xff]
    %v2785 = vld [vmem:[%s2779 + $0x28] sm:$0xff]
    %v2786 = vld [vmem:[%s2779 + $0x30] sm:$0xff]
    %v2787 = vld [vmem:[%s2779 + $0x38] sm:$0xff]
    %v2788 = vld [vmem:[%s2779 + $0x40] sm:$0xff]
    %v2789 = vld [vmem:[%s2779 + $0x48] sm:$0xff]
    %v2790 = vld [vmem:[%s2779 + $0x50] sm:$0xff]
    %v2791 = vld [vmem:[%s2779 + $0x58] sm:$0xff]
    %v2792 = vld [vmem:[%s2779 + $0x60] sm:$0xff]
    %v2793 = vld [vmem:[%s2779 + $0x68] sm:$0xff]
    %v2794 = vld [vmem:[%s2779 + $0x70] sm:$0xff]
    %v2795 = vld [vmem:[%s2779 + $0x78] sm:$0xff]
    %v2796 = vld [vmem:[%s2779 + $0x80] sm:$0xff]
    %v2797 = vld [vmem:[%s2779 + $0x88] sm:$0xff]
    %v2798 = vld [vmem:[%s2779 + $0x90] sm:$0xff]
    %v2799 = vld [vmem:[%s2779 + $0x98] sm:$0xff]
    %v2800 = vld [vmem:[%s2779 + $0xa0] sm:$0xff]
    %v2801 = vld [vmem:[%s2779 + $0xa8] sm:$0xff]
    %v2802 = vld [vmem:[%s2779 + $0xb0] sm:$0xff]
    %v2803 = vld [vmem:[%s2779 + $0xb8] sm:$0xff]
    %v2804 = vld [vmem:[%s2779 + $0xc0] sm:$0xff]
    %v2805 = vld [vmem:[%s2779 + $0xc8] sm:$0xff]
    %v2806 = vld [vmem:[%s2779 + $0xd0] sm:$0xff]
    %v2807 = vld [vmem:[%s2779 + $0xd8] sm:$0xff]
    %v2808 = vld [vmem:[%s2779 + $0xe0] sm:$0xff]
    %v2809 = vld [vmem:[%s2779 + $0xe8] sm:$0xff]
    %v2810 = vld [vmem:[%s2779 + $0xf0] sm:$0xff]
    %v2811 = vld [vmem:[%s2779 + $0xf8] sm:$0xff]
    %v2812 = vld [vmem:[%s2779 + $0x100] sm:$0xff]
    %v2813 = vld [vmem:[%s2779 + $0x108] sm:$0xff]
    %v2814 = vld [vmem:[%s2779 + $0x110] sm:$0xff]
    %v2815 = vld [vmem:[%s2779 + $0x118] sm:$0xff]
    %v2816 = vld [vmem:[%s2779 + $0x120] sm:$0xff]
    %v2817 = vld [vmem:[%s2779 + $0x128] sm:$0xff]
    %v2818 = vld [vmem:[%s2779 + $0x130] sm:$0xff]
    %v2819 = vld [vmem:[%s2779 + $0x138] sm:$0xff]
    %v2820 = vld [vmem:[%s2779 + $0x140] sm:$0xff]
    %v2821 = vld [vmem:[%s2779 + $0x148] sm:$0xff]
    %v2822 = vld [vmem:[%s2779 + $0x150] sm:$0xff]
    %v2823 = vld [vmem:[%s2779 + $0x158] sm:$0xff]
    %v2824 = vld [vmem:[%s2779 + $0x160] sm:$0xff]
    %v2825 = vld [vmem:[%s2779 + $0x168] sm:$0xff]
    %v2826 = vld [vmem:[%s2779 + $0x170] sm:$0xff]
    %v2827 = vld [vmem:[%s2779 + $0x178] sm:$0xff]
    %v2828 = vld [vmem:[%s2779 + $0x180] sm:$0xff]
    %v2829 = vld [vmem:[%s2779 + $0x188] sm:$0xff]
    %v2830 = vld [vmem:[%s2779 + $0x190] sm:$0xff]
    %v2831 = vld [vmem:[%s2779 + $0x198] sm:$0xff]
    %v2832 = vld [vmem:[%s2779 + $0x1a0] sm:$0xff]
    %v2833 = vld [vmem:[%s2779 + $0x1a8] sm:$0xff]
    %v2834 = vld [vmem:[%s2779 + $0x1b0] sm:$0xff]
    %v2835 = vld [vmem:[%s2779 + $0x1b8] sm:$0xff]
    %v2836 = vld [vmem:[%s2779 + $0x1c0] sm:$0xff]
    %v2837 = vld [vmem:[%s2779 + $0x1c8] sm:$0xff]
    %v2838 = vld [vmem:[%s2779 + $0x1d0] sm:$0xff]
    %v2839 = vld [vmem:[%s2779 + $0x1d8] sm:$0xff]
    %v2840 = vld [vmem:[%s2779 + $0x1e0] sm:$0xff]
    %v2841 = vld [vmem:[%s2779 + $0x1e8] sm:$0xff]
    %v2842 = vld [vmem:[%s2779 + $0x1f0] sm:$0xff]
    %v2843 = vld [vmem:[%s2779 + $0x1f8] sm:$0xff]
    %v2844 = vld [vmem:[%s2779 + $0x200] sm:$0xff]
    %v2845 = vld [vmem:[%s2779 + $0x208] sm:$0xff]
    %v2846 = vld [vmem:[%s2779 + $0x210] sm:$0xff]
    %v2847 = vld [vmem:[%s2779 + $0x218] sm:$0xff]
    %v2848 = vld [vmem:[%s2779 + $0x220] sm:$0xff]
    %v2849 = vld [vmem:[%s2779 + $0x228] sm:$0xff]
    %v2850 = vld [vmem:[%s2779 + $0x230] sm:$0xff]
    %v2851 = vld [vmem:[%s2779 + $0x238] sm:$0xff]
    %v2852 = vld [vmem:[%s2779 + $0x240] sm:$0xff]
    %v2853 = vld [vmem:[%s2779 + $0x248] sm:$0xff]
    %v2854 = vld [vmem:[%s2779 + $0x250] sm:$0xff]
    %v2855 = vld [vmem:[%s2779 + $0x258] sm:$0xff]
    %v2856 = vld [vmem:[%s2779 + $0x260] sm:$0xff]
    %v2857 = vld [vmem:[%s2779 + $0x268] sm:$0xff]
    %v2858 = vld [vmem:[%s2779 + $0x270] sm:$0xff]
    %v2859 = vld [vmem:[%s2779 + $0x278] sm:$0xff]
    %v2860 = vld [vmem:[%s2779 + $0x280] sm:$0xff]
    %v2861 = vld [vmem:[%s2779 + $0x288] sm:$0xff]
    %v2862 = vld [vmem:[%s2779 + $0x290] sm:$0xff]
    %v2863 = vld [vmem:[%s2779 + $0x298] sm:$0xff]
    %v2864 = vld [vmem:[%s2779 + $0x2a0] sm:$0xff]
    %v2865 = vld [vmem:[%s2779 + $0x2a8] sm:$0xff]
    %v2866 = vld [vmem:[%s2779 + $0x2b0] sm:$0xff]
    %v2867 = vld [vmem:[%s2779 + $0x2b8] sm:$0xff]
    %v2868 = vld [vmem:[%s2779 + $0x2c0] sm:$0xff]
    %v2869 = vld [vmem:[%s2779 + $0x2c8] sm:$0xff]
    %v2870 = vld [vmem:[%s2779 + $0x2d0] sm:$0xff]
    %v2871 = vld [vmem:[%s2779 + $0x2d8] sm:$0xff]
    %v2872 = vld [vmem:[%s2779 + $0x2e0] sm:$0xff]
    %v2873 = vld [vmem:[%s2779 + $0x2e8] sm:$0xff]
    %v2874 = vld [vmem:[%s2779 + $0x2f0] sm:$0xff]
    %v2875 = vld [vmem:[%s2779 + $0x2f8] sm:$0xff]
    %v2876 = vld [vmem:[%s2779 + $0x300] sm:$0xff]
    %v2877 = vld [vmem:[%s2779 + $0x308] sm:$0xff]
    %v2878 = vld [vmem:[%s2779 + $0x310] sm:$0xff]
    %v2879 = vld [vmem:[%s2779 + $0x318] sm:$0xff]
    %v2880 = vld [vmem:[%s2779 + $0x320] sm:$0xff]
    %v2881 = vld [vmem:[%s2779 + $0x328] sm:$0xff]
    %v2882 = vld [vmem:[%s2779 + $0x330] sm:$0xff]
    %v2883 = vld [vmem:[%s2779 + $0x338] sm:$0xff]
    %v2884 = vld [vmem:[%s2779 + $0x340] sm:$0xff]
    %v2885 = vld [vmem:[%s2779 + $0x348] sm:$0xff]
    %v2886 = vld [vmem:[%s2779 + $0x350] sm:$0xff]
    %v2887 = vld [vmem:[%s2779 + $0x358] sm:$0xff]
    %v2888 = vld [vmem:[%s2779 + $0x360] sm:$0xff]
    %v2889 = vld [vmem:[%s2779 + $0x368] sm:$0xff]
    %v2890 = vld [vmem:[%s2779 + $0x370] sm:$0xff]
    %v2891 = vld [vmem:[%s2779 + $0x378] sm:$0xff]
    %v2892 = vld [vmem:[%s2779 + $0x380] sm:$0xff]
    %v2893 = vld [vmem:[%s2779 + $0x388] sm:$0xff]
    %v2894 = vld [vmem:[%s2779 + $0x390] sm:$0xff]
    %v2895 = vld [vmem:[%s2779 + $0x398] sm:$0xff]
    %v2896 = vld [vmem:[%s2779 + $0x3a0] sm:$0xff]
    %v2897 = vld [vmem:[%s2779 + $0x3a8] sm:$0xff]
    %v2898 = vld [vmem:[%s2779 + $0x3b0] sm:$0xff]
    %v2899 = vld [vmem:[%s2779 + $0x3b8] sm:$0xff]
    %v2900 = vld [vmem:[%s2779 + $0x3c0] sm:$0xff]
    %v2901 = vld [vmem:[%s2779 + $0x3c8] sm:$0xff]
    %v2902 = vld [vmem:[%s2779 + $0x3d0] sm:$0xff]
    %v2903 = vld [vmem:[%s2779 + $0x3d8] sm:$0xff]
    %v2904 = vld [vmem:[%s2779 + $0x3e0] sm:$0xff]
    %v2905 = vld [vmem:[%s2779 + $0x3e8] sm:$0xff]
    %v2906 = vld [vmem:[%s2779 + $0x3f0] sm:$0xff]
    %v2907 = vld [vmem:[%s2779 + $0x3f8] sm:$0xff]
    %v2908 = vld [vmem:[%s2779 + $0x400] sm:$0xff]
    %v2909 = vld [vmem:[%s2779 + $0x408] sm:$0xff]
    %v2910 = vld [vmem:[%s2779 + $0x410] sm:$0xff]
    %v2911 = vld [vmem:[%s2779 + $0x418] sm:$0xff]
    %v2912 = vld [vmem:[%s2779 + $0x420] sm:$0xff]
    %v2913 = vld [vmem:[%s2779 + $0x428] sm:$0xff]
    %v2914 = vld [vmem:[%s2779 + $0x430] sm:$0xff]
    %v2915 = vld [vmem:[%s2779 + $0x438] sm:$0xff]
    %v2916 = vld [vmem:[%s2779 + $0x440] sm:$0xff]
    %v2917 = vld [vmem:[%s2779 + $0x448] sm:$0xff]
    %v2918 = vld [vmem:[%s2779 + $0x450] sm:$0xff]
    %v2919 = vld [vmem:[%s2779 + $0x458] sm:$0xff]
    %v2920 = vld [vmem:[%s2779 + $0x460] sm:$0xff]
    %v2921 = vld [vmem:[%s2779 + $0x468] sm:$0xff]
    %v2922 = vld [vmem:[%s2779 + $0x470] sm:$0xff]
    %v2923 = vld [vmem:[%s2779 + $0x478] sm:$0xff]
    %v2924 = vld [vmem:[%s2779 + $0x480] sm:$0xff]
    %v2925 = vld [vmem:[%s2779 + $0x488] sm:$0xff]
    %v2926 = vld [vmem:[%s2779 + $0x490] sm:$0xff]
    %v2927 = vld [vmem:[%s2779 + $0x498] sm:$0xff]
    %v2928 = vld [vmem:[%s2779 + $0x4a0] sm:$0xff]
    %v2929 = vld [vmem:[%s2779 + $0x4a8] sm:$0xff]
    %v2930 = vld [vmem:[%s2779 + $0x4b0] sm:$0xff]
    %v2931 = vld [vmem:[%s2779 + $0x4b8] sm:$0xff]
    %v2932 = vld [vmem:[%s2779 + $0x4c0] sm:$0xff]
    %v2933 = vld [vmem:[%s2779 + $0x4c8] sm:$0xff]
    %v2934 = vld [vmem:[%s2779 + $0x4d0] sm:$0xff]
    %v2935 = vld [vmem:[%s2779 + $0x4d8] sm:$0xff]
    %v2936 = vld [vmem:[%s2779 + $0x4e0] sm:$0xff]
    %v2937 = vld [vmem:[%s2779 + $0x4e8] sm:$0xff]
    %v2938 = vld [vmem:[%s2779 + $0x4f0] sm:$0xff]
    %v2939 = vld [vmem:[%s2779 + $0x4f8] sm:$0xff]
    %v2940 = vld [vmem:[%s2779 + $0x500] sm:$0xff]
    %v2941 = vld [vmem:[%s2779 + $0x508] sm:$0xff]
    %v2942 = vld [vmem:[%s2779 + $0x510] sm:$0xff]
    %v2943 = vld [vmem:[%s2779 + $0x518] sm:$0xff]
    %v2944 = vld [vmem:[%s2779 + $0x520] sm:$0xff]
    %v2945 = vld [vmem:[%s2779 + $0x528] sm:$0xff]
    %v2946 = vld [vmem:[%s2779 + $0x530] sm:$0xff]
    %v2947 = vld [vmem:[%s2779 + $0x538] sm:$0xff]
    %v2948 = vld [vmem:[%s2779 + $0x540] sm:$0xff]
    %v2949 = vld [vmem:[%s2779 + $0x548] sm:$0xff]
    %v2950 = vld [vmem:[%s2779 + $0x550] sm:$0xff]
    %v2951 = vld [vmem:[%s2779 + $0x558] sm:$0xff]
    %v2952 = vld [vmem:[%s2779 + $0x560] sm:$0xff]
    %v2953 = vld [vmem:[%s2779 + $0x568] sm:$0xff]
    %v2954 = vld [vmem:[%s2779 + $0x570] sm:$0xff]
    %v2955 = vld [vmem:[%s2779 + $0x578] sm:$0xff]
    %v2956 = vld [vmem:[%s2779 + $0x580] sm:$0xff]
    %v2957 = vld [vmem:[%s2779 + $0x588] sm:$0xff]
    %v2958 = vld [vmem:[%s2779 + $0x590] sm:$0xff]
    %v2959 = vld [vmem:[%s2779 + $0x598] sm:$0xff]
    %v2960 = vld [vmem:[%s2779 + $0x5a0] sm:$0xff]
    %v2961 = vld [vmem:[%s2779 + $0x5a8] sm:$0xff]
    %v2962 = vld [vmem:[%s2779 + $0x5b0] sm:$0xff]
    %v2963 = vld [vmem:[%s2779 + $0x5b8] sm:$0xff]
    %v2964 = vld [vmem:[%s2779 + $0x5c0] sm:$0xff]
    %v2965 = vld [vmem:[%s2779 + $0x5c8] sm:$0xff]
    %v2966 = vld [vmem:[%s2779 + $0x5d0] sm:$0xff]
    %v2967 = vld [vmem:[%s2779 + $0x5d8] sm:$0xff]
    %v2968 = vld [vmem:[%s2779 + $0x5e0] sm:$0xff]
    %v2969 = vld [vmem:[%s2779 + $0x5e8] sm:$0xff]
    %v2970 = vld [vmem:[%s2779 + $0x5f0] sm:$0xff]
    %v2971 = vld [vmem:[%s2779 + $0x5f8] sm:$0xff]
    %v3164 = vunpack.c.l.b16 %v2780
    %v3165 = vunpack.c.h.b16 %v2780
    %v3166 = vunpack.c.l.b16 %v2781
    %v3167 = vunpack.c.h.b16 %v2781
    %v3168 = vunpack.c.l.b16 %v2782
    %v3169 = vunpack.c.h.b16 %v2782
    %v3170 = vunpack.c.l.b16 %v2783
    %v3171 = vunpack.c.h.b16 %v2783
    %v3172 = vunpack.c.l.b16 %v2784
    %v3173 = vunpack.c.h.b16 %v2784
    %v3174 = vunpack.c.l.b16 %v2785
    %v3175 = vunpack.c.h.b16 %v2785
    %v3176 = vunpack.c.l.b16 %v2786
    %v3177 = vunpack.c.h.b16 %v2786
    %v3178 = vunpack.c.l.b16 %v2787
    %v3179 = vunpack.c.h.b16 %v2787
    %v3180 = vunpack.c.l.b16 %v2788
    %v3181 = vunpack.c.h.b16 %v2788
    %v3182 = vunpack.c.l.b16 %v2789
    %v3183 = vunpack.c.h.b16 %v2789
    %v3184 = vunpack.c.l.b16 %v2790
    %v3185 = vunpack.c.h.b16 %v2790
    %v3186 = vunpack.c.l.b16 %v2791
    %v3187 = vunpack.c.h.b16 %v2791
    %v3188 = vunpack.c.l.b16 %v2792
    %v3189 = vunpack.c.h.b16 %v2792
    %v3190 = vunpack.c.l.b16 %v2793
    %v3191 = vunpack.c.h.b16 %v2793
    %v3192 = vunpack.c.l.b16 %v2794
    %v3193 = vunpack.c.h.b16 %v2794
    %v3194 = vunpack.c.l.b16 %v2795
    %v3195 = vunpack.c.h.b16 %v2795
    %v3196 = vunpack.c.l.b16 %v2796
    %v3197 = vunpack.c.h.b16 %v2796
    %v3198 = vunpack.c.l.b16 %v2797
    %v3199 = vunpack.c.h.b16 %v2797
    %v3200 = vunpack.c.l.b16 %v2798
    %v3201 = vunpack.c.h.b16 %v2798
    %v3202 = vunpack.c.l.b16 %v2799
    %v3203 = vunpack.c.h.b16 %v2799
    %v3204 = vunpack.c.l.b16 %v2800
    %v3205 = vunpack.c.h.b16 %v2800
    %v3206 = vunpack.c.l.b16 %v2801
    %v3207 = vunpack.c.h.b16 %v2801
    %v3208 = vunpack.c.l.b16 %v2802
    %v3209 = vunpack.c.h.b16 %v2802
    %v3210 = vunpack.c.l.b16 %v2803
    %v3211 = vunpack.c.h.b16 %v2803
    %v3212 = vunpack.c.l.b16 %v2804
    %v3213 = vunpack.c.h.b16 %v2804
    %v3214 = vunpack.c.l.b16 %v2805
    %v3215 = vunpack.c.h.b16 %v2805
    %v3216 = vunpack.c.l.b16 %v2806
    %v3217 = vunpack.c.h.b16 %v2806
    %v3218 = vunpack.c.l.b16 %v2807
    %v3219 = vunpack.c.h.b16 %v2807
    %v3220 = vunpack.c.l.b16 %v2808
    %v3221 = vunpack.c.h.b16 %v2808
    %v3222 = vunpack.c.l.b16 %v2809
    %v3223 = vunpack.c.h.b16 %v2809
    %v3224 = vunpack.c.l.b16 %v2810
    %v3225 = vunpack.c.h.b16 %v2810
    %v3226 = vunpack.c.l.b16 %v2811
    %v3227 = vunpack.c.h.b16 %v2811
    %v3228 = vunpack.c.l.b16 %v2812
    %v3229 = vunpack.c.h.b16 %v2812
    %v3230 = vunpack.c.l.b16 %v2813
    %v3231 = vunpack.c.h.b16 %v2813
    %v3232 = vunpack.c.l.b16 %v2814
    %v3233 = vunpack.c.h.b16 %v2814
    %v3234 = vunpack.c.l.b16 %v2815
    %v3235 = vunpack.c.h.b16 %v2815
    %v3236 = vunpack.c.l.b16 %v2816
    %v3237 = vunpack.c.h.b16 %v2816
    %v3238 = vunpack.c.l.b16 %v2817
    %v3239 = vunpack.c.h.b16 %v2817
    %v3240 = vunpack.c.l.b16 %v2818
    %v3241 = vunpack.c.h.b16 %v2818
    %v3242 = vunpack.c.l.b16 %v2819
    %v3243 = vunpack.c.h.b16 %v2819
    %v3244 = vunpack.c.l.b16 %v2820
    %v3245 = vunpack.c.h.b16 %v2820
    %v3246 = vunpack.c.l.b16 %v2821
    %v3247 = vunpack.c.h.b16 %v2821
    %v3248 = vunpack.c.l.b16 %v2822
    %v3249 = vunpack.c.h.b16 %v2822
    %v3250 = vunpack.c.l.b16 %v2823
    %v3251 = vunpack.c.h.b16 %v2823
    %v3252 = vunpack.c.l.b16 %v2824
    %v3253 = vunpack.c.h.b16 %v2824
    %v3254 = vunpack.c.l.b16 %v2825
    %v3255 = vunpack.c.h.b16 %v2825
    %v3256 = vunpack.c.l.b16 %v2826
    %v3257 = vunpack.c.h.b16 %v2826
    %v3258 = vunpack.c.l.b16 %v2827
    %v3259 = vunpack.c.h.b16 %v2827
    %v3260 = vunpack.c.l.b16 %v2828
    %v3261 = vunpack.c.h.b16 %v2828
    %v3262 = vunpack.c.l.b16 %v2829
    %v3263 = vunpack.c.h.b16 %v2829
    %v3264 = vunpack.c.l.b16 %v2830
    %v3265 = vunpack.c.h.b16 %v2830
    %v3266 = vunpack.c.l.b16 %v2831
    %v3267 = vunpack.c.h.b16 %v2831
    %v3268 = vunpack.c.l.b16 %v2832
    %v3269 = vunpack.c.h.b16 %v2832
    %v3270 = vunpack.c.l.b16 %v2833
    %v3271 = vunpack.c.h.b16 %v2833
    %v3272 = vunpack.c.l.b16 %v2834
    %v3273 = vunpack.c.h.b16 %v2834
    %v3274 = vunpack.c.l.b16 %v2835
    %v3275 = vunpack.c.h.b16 %v2835
    %v3276 = vunpack.c.l.b16 %v2836
    %v3277 = vunpack.c.h.b16 %v2836
    %v3278 = vunpack.c.l.b16 %v2837
    %v3279 = vunpack.c.h.b16 %v2837
    %v3280 = vunpack.c.l.b16 %v2838
    %v3281 = vunpack.c.h.b16 %v2838
    %v3282 = vunpack.c.l.b16 %v2839
    %v3283 = vunpack.c.h.b16 %v2839
    %v3284 = vunpack.c.l.b16 %v2840
    %v3285 = vunpack.c.h.b16 %v2840
    %v3286 = vunpack.c.l.b16 %v2841
    %v3287 = vunpack.c.h.b16 %v2841
    %v3288 = vunpack.c.l.b16 %v2842
    %v3289 = vunpack.c.h.b16 %v2842
    %v3290 = vunpack.c.l.b16 %v2843
    %v3291 = vunpack.c.h.b16 %v2843
    %v3292 = vunpack.c.l.b16 %v2844
    %v3293 = vunpack.c.h.b16 %v2844
    %v3294 = vunpack.c.l.b16 %v2845
    %v3295 = vunpack.c.h.b16 %v2845
    %v3296 = vunpack.c.l.b16 %v2846
    %v3297 = vunpack.c.h.b16 %v2846
    %v3298 = vunpack.c.l.b16 %v2847
    %v3299 = vunpack.c.h.b16 %v2847
    %v3300 = vunpack.c.l.b16 %v2848
    %v3301 = vunpack.c.h.b16 %v2848
    %v3302 = vunpack.c.l.b16 %v2849
    %v3303 = vunpack.c.h.b16 %v2849
    %v3304 = vunpack.c.l.b16 %v2850
    %v3305 = vunpack.c.h.b16 %v2850
    %v3306 = vunpack.c.l.b16 %v2851
    %v3307 = vunpack.c.h.b16 %v2851
    %v3308 = vunpack.c.l.b16 %v2852
    %v3309 = vunpack.c.h.b16 %v2852
    %v3310 = vunpack.c.l.b16 %v2853
    %v3311 = vunpack.c.h.b16 %v2853
    %v3312 = vunpack.c.l.b16 %v2854
    %v3313 = vunpack.c.h.b16 %v2854
    %v3314 = vunpack.c.l.b16 %v2855
    %v3315 = vunpack.c.h.b16 %v2855
    %v3316 = vunpack.c.l.b16 %v2856
    %v3317 = vunpack.c.h.b16 %v2856
    %v3318 = vunpack.c.l.b16 %v2857
    %v3319 = vunpack.c.h.b16 %v2857
    %v3320 = vunpack.c.l.b16 %v2858
    %v3321 = vunpack.c.h.b16 %v2858
    %v3322 = vunpack.c.l.b16 %v2859
    %v3323 = vunpack.c.h.b16 %v2859
    %v3324 = vunpack.c.l.b16 %v2860
    %v3325 = vunpack.c.h.b16 %v2860
    %v3326 = vunpack.c.l.b16 %v2861
    %v3327 = vunpack.c.h.b16 %v2861
    %v3328 = vunpack.c.l.b16 %v2862
    %v3329 = vunpack.c.h.b16 %v2862
    %v3330 = vunpack.c.l.b16 %v2863
    %v3331 = vunpack.c.h.b16 %v2863
    %v3332 = vunpack.c.l.b16 %v2864
    %v3333 = vunpack.c.h.b16 %v2864
    %v3334 = vunpack.c.l.b16 %v2865
    %v3335 = vunpack.c.h.b16 %v2865
    %v3336 = vunpack.c.l.b16 %v2866
    %v3337 = vunpack.c.h.b16 %v2866
    %v3338 = vunpack.c.l.b16 %v2867
    %v3339 = vunpack.c.h.b16 %v2867
    %v3340 = vunpack.c.l.b16 %v2868
    %v3341 = vunpack.c.h.b16 %v2868
    %v3342 = vunpack.c.l.b16 %v2869
    %v3343 = vunpack.c.h.b16 %v2869
    %v3344 = vunpack.c.l.b16 %v2870
    %v3345 = vunpack.c.h.b16 %v2870
    %v3346 = vunpack.c.l.b16 %v2871
    %v3347 = vunpack.c.h.b16 %v2871
    %v3348 = vunpack.c.l.b16 %v2872
    %v3349 = vunpack.c.h.b16 %v2872
    %v3350 = vunpack.c.l.b16 %v2873
    %v3351 = vunpack.c.h.b16 %v2873
    %v3352 = vunpack.c.l.b16 %v2874
    %v3353 = vunpack.c.h.b16 %v2874
    %v3354 = vunpack.c.l.b16 %v2875
    %v3355 = vunpack.c.h.b16 %v2875
    %v3356 = vunpack.c.l.b16 %v2876
    %v3357 = vunpack.c.h.b16 %v2876
    %v3358 = vunpack.c.l.b16 %v2877
    %v3359 = vunpack.c.h.b16 %v2877
    %v3360 = vunpack.c.l.b16 %v2878
    %v3361 = vunpack.c.h.b16 %v2878
    %v3362 = vunpack.c.l.b16 %v2879
    %v3363 = vunpack.c.h.b16 %v2879
    %v3364 = vunpack.c.l.b16 %v2880
    %v3365 = vunpack.c.h.b16 %v2880
    %v3366 = vunpack.c.l.b16 %v2881
    %v3367 = vunpack.c.h.b16 %v2881
    %v3368 = vunpack.c.l.b16 %v2882
    %v3369 = vunpack.c.h.b16 %v2882
    %v3370 = vunpack.c.l.b16 %v2883
    %v3371 = vunpack.c.h.b16 %v2883
    %v3372 = vunpack.c.l.b16 %v2884
    %v3373 = vunpack.c.h.b16 %v2884
    %v3374 = vunpack.c.l.b16 %v2885
    %v3375 = vunpack.c.h.b16 %v2885
    %v3376 = vunpack.c.l.b16 %v2886
    %v3377 = vunpack.c.h.b16 %v2886
    %v3378 = vunpack.c.l.b16 %v2887
    %v3379 = vunpack.c.h.b16 %v2887
    %v3380 = vunpack.c.l.b16 %v2888
    %v3381 = vunpack.c.h.b16 %v2888
    %v3382 = vunpack.c.l.b16 %v2889
    %v3383 = vunpack.c.h.b16 %v2889
    %v3384 = vunpack.c.l.b16 %v2890
    %v3385 = vunpack.c.h.b16 %v2890
    %v3386 = vunpack.c.l.b16 %v2891
    %v3387 = vunpack.c.h.b16 %v2891
    %v3388 = vunpack.c.l.b16 %v2892
    %v3389 = vunpack.c.h.b16 %v2892
    %v3390 = vunpack.c.l.b16 %v2893
    %v3391 = vunpack.c.h.b16 %v2893
    %v3392 = vunpack.c.l.b16 %v2894
    %v3393 = vunpack.c.h.b16 %v2894
    %v3394 = vunpack.c.l.b16 %v2895
    %v3395 = vunpack.c.h.b16 %v2895
    %v3396 = vunpack.c.l.b16 %v2896
    %v3397 = vunpack.c.h.b16 %v2896
    %v3398 = vunpack.c.l.b16 %v2897
    %v3399 = vunpack.c.h.b16 %v2897
    %v3400 = vunpack.c.l.b16 %v2898
    %v3401 = vunpack.c.h.b16 %v2898
    %v3402 = vunpack.c.l.b16 %v2899
    %v3403 = vunpack.c.h.b16 %v2899
    %v3404 = vunpack.c.l.b16 %v2900
    %v3405 = vunpack.c.h.b16 %v2900
    %v3406 = vunpack.c.l.b16 %v2901
    %v3407 = vunpack.c.h.b16 %v2901
    %v3408 = vunpack.c.l.b16 %v2902
    %v3409 = vunpack.c.h.b16 %v2902
    %v3410 = vunpack.c.l.b16 %v2903
    %v3411 = vunpack.c.h.b16 %v2903
    %v3412 = vunpack.c.l.b16 %v2904
    %v3413 = vunpack.c.h.b16 %v2904
    %v3414 = vunpack.c.l.b16 %v2905
    %v3415 = vunpack.c.h.b16 %v2905
    %v3416 = vunpack.c.l.b16 %v2906
    %v3417 = vunpack.c.h.b16 %v2906
    %v3418 = vunpack.c.l.b16 %v2907
    %v3419 = vunpack.c.h.b16 %v2907
    %v3420 = vunpack.c.l.b16 %v2908
    %v3421 = vunpack.c.h.b16 %v2908
    %v3422 = vunpack.c.l.b16 %v2909
    %v3423 = vunpack.c.h.b16 %v2909
    %v3424 = vunpack.c.l.b16 %v2910
    %v3425 = vunpack.c.h.b16 %v2910
    %v3426 = vunpack.c.l.b16 %v2911
    %v3427 = vunpack.c.h.b16 %v2911
    %v3428 = vunpack.c.l.b16 %v2912
    %v3429 = vunpack.c.h.b16 %v2912
    %v3430 = vunpack.c.l.b16 %v2913
    %v3431 = vunpack.c.h.b16 %v2913
    %v3432 = vunpack.c.l.b16 %v2914
    %v3433 = vunpack.c.h.b16 %v2914
    %v3434 = vunpack.c.l.b16 %v2915
    %v3435 = vunpack.c.h.b16 %v2915
    %v3436 = vunpack.c.l.b16 %v2916
    %v3437 = vunpack.c.h.b16 %v2916
    %v3438 = vunpack.c.l.b16 %v2917
    %v3439 = vunpack.c.h.b16 %v2917
    %v3440 = vunpack.c.l.b16 %v2918
    %v3441 = vunpack.c.h.b16 %v2918
    %v3442 = vunpack.c.l.b16 %v2919
    %v3443 = vunpack.c.h.b16 %v2919
    %v3444 = vunpack.c.l.b16 %v2920
    %v3445 = vunpack.c.h.b16 %v2920
    %v3446 = vunpack.c.l.b16 %v2921
    %v3447 = vunpack.c.h.b16 %v2921
    %v3448 = vunpack.c.l.b16 %v2922
    %v3449 = vunpack.c.h.b16 %v2922
    %v3450 = vunpack.c.l.b16 %v2923
    %v3451 = vunpack.c.h.b16 %v2923
    %v3452 = vunpack.c.l.b16 %v2924
    %v3453 = vunpack.c.h.b16 %v2924
    %v3454 = vunpack.c.l.b16 %v2925
    %v3455 = vunpack.c.h.b16 %v2925
    %v3456 = vunpack.c.l.b16 %v2926
    %v3457 = vunpack.c.h.b16 %v2926
    %v3458 = vunpack.c.l.b16 %v2927
    %v3459 = vunpack.c.h.b16 %v2927
    %v3460 = vunpack.c.l.b16 %v2928
    %v3461 = vunpack.c.h.b16 %v2928
    %v3462 = vunpack.c.l.b16 %v2929
    %v3463 = vunpack.c.h.b16 %v2929
    %v3464 = vunpack.c.l.b16 %v2930
    %v3465 = vunpack.c.h.b16 %v2930
    %v3466 = vunpack.c.l.b16 %v2931
    %v3467 = vunpack.c.h.b16 %v2931
    %v3468 = vunpack.c.l.b16 %v2932
    %v3469 = vunpack.c.h.b16 %v2932
    %v3470 = vunpack.c.l.b16 %v2933
    %v3471 = vunpack.c.h.b16 %v2933
    %v3472 = vunpack.c.l.b16 %v2934
    %v3473 = vunpack.c.h.b16 %v2934
    %v3474 = vunpack.c.l.b16 %v2935
    %v3475 = vunpack.c.h.b16 %v2935
    %v3476 = vunpack.c.l.b16 %v2936
    %v3477 = vunpack.c.h.b16 %v2936
    %v3478 = vunpack.c.l.b16 %v2937
    %v3479 = vunpack.c.h.b16 %v2937
    %v3480 = vunpack.c.l.b16 %v2938
    %v3481 = vunpack.c.h.b16 %v2938
    %v3482 = vunpack.c.l.b16 %v2939
    %v3483 = vunpack.c.h.b16 %v2939
    %v3484 = vunpack.c.l.b16 %v2940
    %v3485 = vunpack.c.h.b16 %v2940
    %v3486 = vunpack.c.l.b16 %v2941
    %v3487 = vunpack.c.h.b16 %v2941
    %v3488 = vunpack.c.l.b16 %v2942
    %v3489 = vunpack.c.h.b16 %v2942
    %v3490 = vunpack.c.l.b16 %v2943
    %v3491 = vunpack.c.h.b16 %v2943
    %v3492 = vunpack.c.l.b16 %v2944
    %v3493 = vunpack.c.h.b16 %v2944
    %v3494 = vunpack.c.l.b16 %v2945
    %v3495 = vunpack.c.h.b16 %v2945
    %v3496 = vunpack.c.l.b16 %v2946
    %v3497 = vunpack.c.h.b16 %v2946
    %v3498 = vunpack.c.l.b16 %v2947
    %v3499 = vunpack.c.h.b16 %v2947
    %v3500 = vunpack.c.l.b16 %v2948
    %v3501 = vunpack.c.h.b16 %v2948
    %v3502 = vunpack.c.l.b16 %v2949
    %v3503 = vunpack.c.h.b16 %v2949
    %v3504 = vunpack.c.l.b16 %v2950
    %v3505 = vunpack.c.h.b16 %v2950
    %v3506 = vunpack.c.l.b16 %v2951
    %v3507 = vunpack.c.h.b16 %v2951
    %v3508 = vunpack.c.l.b16 %v2952
    %v3509 = vunpack.c.h.b16 %v2952
    %v3510 = vunpack.c.l.b16 %v2953
    %v3511 = vunpack.c.h.b16 %v2953
    %v3512 = vunpack.c.l.b16 %v2954
    %v3513 = vunpack.c.h.b16 %v2954
    %v3514 = vunpack.c.l.b16 %v2955
    %v3515 = vunpack.c.h.b16 %v2955
    %v3516 = vunpack.c.l.b16 %v2956
    %v3517 = vunpack.c.h.b16 %v2956
    %v3518 = vunpack.c.l.b16 %v2957
    %v3519 = vunpack.c.h.b16 %v2957
    %v3520 = vunpack.c.l.b16 %v2958
    %v3521 = vunpack.c.h.b16 %v2958
    %v3522 = vunpack.c.l.b16 %v2959
    %v3523 = vunpack.c.h.b16 %v2959
    %v3524 = vunpack.c.l.b16 %v2960
    %v3525 = vunpack.c.h.b16 %v2960
    %v3526 = vunpack.c.l.b16 %v2961
    %v3527 = vunpack.c.h.b16 %v2961
    %v3528 = vunpack.c.l.b16 %v2962
    %v3529 = vunpack.c.h.b16 %v2962
    %v3530 = vunpack.c.l.b16 %v2963
    %v3531 = vunpack.c.h.b16 %v2963
    %v3532 = vunpack.c.l.b16 %v2964
    %v3533 = vunpack.c.h.b16 %v2964
    %v3534 = vunpack.c.l.b16 %v2965
    %v3535 = vunpack.c.h.b16 %v2965
    %v3536 = vunpack.c.l.b16 %v2966
    %v3537 = vunpack.c.h.b16 %v2966
    %v3538 = vunpack.c.l.b16 %v2967
    %v3539 = vunpack.c.h.b16 %v2967
    %v3540 = vunpack.c.l.b16 %v2968
    %v3541 = vunpack.c.h.b16 %v2968
    %v3542 = vunpack.c.l.b16 %v2969
    %v3543 = vunpack.c.h.b16 %v2969
    %v3544 = vunpack.c.l.b16 %v2970
    %v3545 = vunpack.c.h.b16 %v2970
    %v3546 = vunpack.c.l.b16 %v2971
    %v3547 = vunpack.c.h.b16 %v2971
    %v3548 = vpack.c.b16 %v3166, %v3164
    %v3549 = vpack.c.b16 %v3167, %v3165
    %v3550 = vpack.c.b16 %v3170, %v3168
    %v3551 = vpack.c.b16 %v3171, %v3169
    %v3552 = vpack.c.b16 %v3174, %v3172
    %v3553 = vpack.c.b16 %v3175, %v3173
    %v3554 = vpack.c.b16 %v3178, %v3176
    %v3555 = vpack.c.b16 %v3179, %v3177
    %v3556 = vpack.c.b16 %v3182, %v3180
    %v3557 = vpack.c.b16 %v3183, %v3181
    %v3558 = vpack.c.b16 %v3186, %v3184
    %v3559 = vpack.c.b16 %v3187, %v3185
    %v3560 = vpack.c.b16 %v3190, %v3188
    %v3561 = vpack.c.b16 %v3191, %v3189
    %v3562 = vpack.c.b16 %v3194, %v3192
    %v3563 = vpack.c.b16 %v3195, %v3193
    %v3564 = vpack.c.b16 %v3198, %v3196
    %v3565 = vpack.c.b16 %v3199, %v3197
    %v3566 = vpack.c.b16 %v3202, %v3200
    %v3567 = vpack.c.b16 %v3203, %v3201
    %v3568 = vpack.c.b16 %v3206, %v3204
    %v3569 = vpack.c.b16 %v3207, %v3205
    %v3570 = vpack.c.b16 %v3210, %v3208
    %v3571 = vpack.c.b16 %v3211, %v3209
    %v3572 = vpack.c.b16 %v3214, %v3212
    %v3573 = vpack.c.b16 %v3215, %v3213
    %v3574 = vpack.c.b16 %v3218, %v3216
    %v3575 = vpack.c.b16 %v3219, %v3217
    %v3576 = vpack.c.b16 %v3222, %v3220
    %v3577 = vpack.c.b16 %v3223, %v3221
    %v3578 = vpack.c.b16 %v3226, %v3224
    %v3579 = vpack.c.b16 %v3227, %v3225
    %v3580 = vpack.c.b16 %v3230, %v3228
    %v3581 = vpack.c.b16 %v3231, %v3229
    %v3582 = vpack.c.b16 %v3234, %v3232
    %v3583 = vpack.c.b16 %v3235, %v3233
    %v3584 = vpack.c.b16 %v3238, %v3236
    %v3585 = vpack.c.b16 %v3239, %v3237
    %v3586 = vpack.c.b16 %v3242, %v3240
    %v3587 = vpack.c.b16 %v3243, %v3241
    %v3588 = vpack.c.b16 %v3246, %v3244
    %v3589 = vpack.c.b16 %v3247, %v3245
    %v3590 = vpack.c.b16 %v3250, %v3248
    %v3591 = vpack.c.b16 %v3251, %v3249
    %v3592 = vpack.c.b16 %v3254, %v3252
    %v3593 = vpack.c.b16 %v3255, %v3253
    %v3594 = vpack.c.b16 %v3258, %v3256
    %v3595 = vpack.c.b16 %v3259, %v3257
    %v3596 = vpack.c.b16 %v3262, %v3260
    %v3597 = vpack.c.b16 %v3263, %v3261
    %v3598 = vpack.c.b16 %v3266, %v3264
    %v3599 = vpack.c.b16 %v3267, %v3265
    %v3600 = vpack.c.b16 %v3270, %v3268
    %v3601 = vpack.c.b16 %v3271, %v3269
    %v3602 = vpack.c.b16 %v3274, %v3272
    %v3603 = vpack.c.b16 %v3275, %v3273
    %v3604 = vpack.c.b16 %v3278, %v3276
    %v3605 = vpack.c.b16 %v3279, %v3277
    %v3606 = vpack.c.b16 %v3282, %v3280
    %v3607 = vpack.c.b16 %v3283, %v3281
    %v3608 = vpack.c.b16 %v3286, %v3284
    %v3609 = vpack.c.b16 %v3287, %v3285
    %v3610 = vpack.c.b16 %v3290, %v3288
    %v3611 = vpack.c.b16 %v3291, %v3289
    %v3612 = vpack.c.b16 %v3294, %v3292
    %v3613 = vpack.c.b16 %v3295, %v3293
    %v3614 = vpack.c.b16 %v3298, %v3296
    %v3615 = vpack.c.b16 %v3299, %v3297
    %v3616 = vpack.c.b16 %v3302, %v3300
    %v3617 = vpack.c.b16 %v3303, %v3301
    %v3618 = vpack.c.b16 %v3306, %v3304
    %v3619 = vpack.c.b16 %v3307, %v3305
    %v3620 = vpack.c.b16 %v3310, %v3308
    %v3621 = vpack.c.b16 %v3311, %v3309
    %v3622 = vpack.c.b16 %v3314, %v3312
    %v3623 = vpack.c.b16 %v3315, %v3313
    %v3624 = vpack.c.b16 %v3318, %v3316
    %v3625 = vpack.c.b16 %v3319, %v3317
    %v3626 = vpack.c.b16 %v3322, %v3320
    %v3627 = vpack.c.b16 %v3323, %v3321
    %v3628 = vpack.c.b16 %v3326, %v3324
    %v3629 = vpack.c.b16 %v3327, %v3325
    %v3630 = vpack.c.b16 %v3330, %v3328
    %v3631 = vpack.c.b16 %v3331, %v3329
    %v3632 = vpack.c.b16 %v3334, %v3332
    %v3633 = vpack.c.b16 %v3335, %v3333
    %v3634 = vpack.c.b16 %v3338, %v3336
    %v3635 = vpack.c.b16 %v3339, %v3337
    %v3636 = vpack.c.b16 %v3342, %v3340
    %v3637 = vpack.c.b16 %v3343, %v3341
    %v3638 = vpack.c.b16 %v3346, %v3344
    %v3639 = vpack.c.b16 %v3347, %v3345
    %v3640 = vpack.c.b16 %v3350, %v3348
    %v3641 = vpack.c.b16 %v3351, %v3349
    %v3642 = vpack.c.b16 %v3354, %v3352
    %v3643 = vpack.c.b16 %v3355, %v3353
    %v3644 = vpack.c.b16 %v3358, %v3356
    %v3645 = vpack.c.b16 %v3359, %v3357
    %v3646 = vpack.c.b16 %v3362, %v3360
    %v3647 = vpack.c.b16 %v3363, %v3361
    %v3648 = vpack.c.b16 %v3366, %v3364
    %v3649 = vpack.c.b16 %v3367, %v3365
    %v3650 = vpack.c.b16 %v3370, %v3368
    %v3651 = vpack.c.b16 %v3371, %v3369
    %v3652 = vpack.c.b16 %v3374, %v3372
    %v3653 = vpack.c.b16 %v3375, %v3373
    %v3654 = vpack.c.b16 %v3378, %v3376
    %v3655 = vpack.c.b16 %v3379, %v3377
    %v3656 = vpack.c.b16 %v3382, %v3380
    %v3657 = vpack.c.b16 %v3383, %v3381
    %v3658 = vpack.c.b16 %v3386, %v3384
    %v3659 = vpack.c.b16 %v3387, %v3385
    %v3660 = vpack.c.b16 %v3390, %v3388
    %v3661 = vpack.c.b16 %v3391, %v3389
    %v3662 = vpack.c.b16 %v3394, %v3392
    %v3663 = vpack.c.b16 %v3395, %v3393
    %v3664 = vpack.c.b16 %v3398, %v3396
    %v3665 = vpack.c.b16 %v3399, %v3397
    %v3666 = vpack.c.b16 %v3402, %v3400
    %v3667 = vpack.c.b16 %v3403, %v3401
    %v3668 = vpack.c.b16 %v3406, %v3404
    %v3669 = vpack.c.b16 %v3407, %v3405
    %v3670 = vpack.c.b16 %v3410, %v3408
    %v3671 = vpack.c.b16 %v3411, %v3409
    %v3672 = vpack.c.b16 %v3414, %v3412
    %v3673 = vpack.c.b16 %v3415, %v3413
    %v3674 = vpack.c.b16 %v3418, %v3416
    %v3675 = vpack.c.b16 %v3419, %v3417
    %v3676 = vpack.c.b16 %v3422, %v3420
    %v3677 = vpack.c.b16 %v3423, %v3421
    %v3678 = vpack.c.b16 %v3426, %v3424
    %v3679 = vpack.c.b16 %v3427, %v3425
    %v3680 = vpack.c.b16 %v3430, %v3428
    %v3681 = vpack.c.b16 %v3431, %v3429
    %v3682 = vpack.c.b16 %v3434, %v3432
    %v3683 = vpack.c.b16 %v3435, %v3433
    %v3684 = vpack.c.b16 %v3438, %v3436
    %v3685 = vpack.c.b16 %v3439, %v3437
    %v3686 = vpack.c.b16 %v3442, %v3440
    %v3687 = vpack.c.b16 %v3443, %v3441
    %v3688 = vpack.c.b16 %v3446, %v3444
    %v3689 = vpack.c.b16 %v3447, %v3445
    %v3690 = vpack.c.b16 %v3450, %v3448
    %v3691 = vpack.c.b16 %v3451, %v3449
    %v3692 = vpack.c.b16 %v3454, %v3452
    %v3693 = vpack.c.b16 %v3455, %v3453
    %v3694 = vpack.c.b16 %v3458, %v3456
    %v3695 = vpack.c.b16 %v3459, %v3457
    %v3696 = vpack.c.b16 %v3462, %v3460
    %v3697 = vpack.c.b16 %v3463, %v3461
    %v3698 = vpack.c.b16 %v3466, %v3464
    %v3699 = vpack.c.b16 %v3467, %v3465
    %v3700 = vpack.c.b16 %v3470, %v3468
    %v3701 = vpack.c.b16 %v3471, %v3469
    %v3702 = vpack.c.b16 %v3474, %v3472
    %v3703 = vpack.c.b16 %v3475, %v3473
    %v3704 = vpack.c.b16 %v3478, %v3476
    %v3705 = vpack.c.b16 %v3479, %v3477
    %v3706 = vpack.c.b16 %v3482, %v3480
    %v3707 = vpack.c.b16 %v3483, %v3481
    %v3708 = vpack.c.b16 %v3486, %v3484
    %v3709 = vpack.c.b16 %v3487, %v3485
    %v3710 = vpack.c.b16 %v3490, %v3488
    %v3711 = vpack.c.b16 %v3491, %v3489
    %v3712 = vpack.c.b16 %v3494, %v3492
    %v3713 = vpack.c.b16 %v3495, %v3493
    %v3714 = vpack.c.b16 %v3498, %v3496
    %v3715 = vpack.c.b16 %v3499, %v3497
    %v3716 = vpack.c.b16 %v3502, %v3500
    %v3717 = vpack.c.b16 %v3503, %v3501
    %v3718 = vpack.c.b16 %v3506, %v3504
    %v3719 = vpack.c.b16 %v3507, %v3505
    %v3720 = vpack.c.b16 %v3510, %v3508
    %v3721 = vpack.c.b16 %v3511, %v3509
    %v3722 = vpack.c.b16 %v3514, %v3512
    %v3723 = vpack.c.b16 %v3515, %v3513
    %v3724 = vpack.c.b16 %v3518, %v3516
    %v3725 = vpack.c.b16 %v3519, %v3517
    %v3726 = vpack.c.b16 %v3522, %v3520
    %v3727 = vpack.c.b16 %v3523, %v3521
    %v3728 = vpack.c.b16 %v3526, %v3524
    %v3729 = vpack.c.b16 %v3527, %v3525
    %v3730 = vpack.c.b16 %v3530, %v3528
    %v3731 = vpack.c.b16 %v3531, %v3529
    %v3732 = vpack.c.b16 %v3534, %v3532
    %v3733 = vpack.c.b16 %v3535, %v3533
    %v3734 = vpack.c.b16 %v3538, %v3536
    %v3735 = vpack.c.b16 %v3539, %v3537
    %v3736 = vpack.c.b16 %v3542, %v3540
    %v3737 = vpack.c.b16 %v3543, %v3541
    %v3738 = vpack.c.b16 %v3546, %v3544
    %v3739 = vpack.c.b16 %v3547, %v3545
    %3932 = vmatprep.subr.bf16.mxu0 %v3563
    %3933 = vmatpush1.bf16.msra.mxu0 %v3562
    %3934 = vmatprep.subr.bf16.mxu0 %v3561
    %3935 = vmatpush1.bf16.msra.mxu0 %v3560
    %3936 = vmatprep.subr.bf16.mxu0 %v3559
    %3937 = vmatpush1.bf16.msra.mxu0 %v3558
    %3938 = vmatprep.subr.bf16.mxu0 %v3557
    %3939 = vmatpush1.bf16.msra.mxu0 %v3556
    %3940 = vmatprep.subr.bf16.mxu0 %v3555
    %3941 = vmatpush1.bf16.msra.mxu0 %v3554
    %3942 = vmatprep.subr.bf16.mxu0 %v3553
    %3943 = vmatpush1.bf16.msra.mxu0 %v3552
    %3944 = vmatprep.subr.bf16.mxu0 %v3551
    %3945 = vmatpush1.bf16.msra.mxu0 %v3550
    %3946 = vmatprep.subr.bf16.mxu0 %v3549
    %3947 = vmatpush1.bf16.msra.mxu0 %v3548
    %3948 = vmatprep.subr.bf16.mxu0 %v3579
    %3949 = vmatpush2.bf16.msra.mxu0 %v3578
    %3950 = vmatprep.subr.bf16.mxu0 %v3577
    %3951 = vmatpush2.bf16.msra.mxu0 %v3576
    %3952 = vmatprep.subr.bf16.mxu0 %v3575
    %3953 = vmatpush2.bf16.msra.mxu0 %v3574
    %3954 = vmatprep.subr.bf16.mxu0 %v3573
    %3955 = vmatpush2.bf16.msra.mxu0 %v3572
    %3956 = vmatprep.subr.bf16.mxu0 %v3571
    %3957 = vmatpush2.bf16.msra.mxu0 %v3570
    %3958 = vmatprep.subr.bf16.mxu0 %v3569
    %3959 = vmatpush2.bf16.msra.mxu0 %v3568
    %3960 = vmatprep.subr.bf16.mxu0 %v3567
    %3961 = vmatpush2.bf16.msra.mxu0 %v3566
    %3962 = vmatprep.subr.bf16.mxu0 %v3565
    %3963 = vmatpush2.bf16.msra.mxu0 %v3564
    %3964 = vmatprep.mubr.bf16.mxu0 %v1289
    %3965 = vmatmul.mubr.bf16.gmra.mxu0 %v1288
    %v3966 = vpop.f32.mrf.mxu0
    %v3967 = vadd.f32 0.0, %v3966
    %v3968 = vpop.f32.mrf.mxu0
    %v3969 = vadd.f32 0.0, %v3968
    %v3970 = vpop.f32.mrf.mxu0
    %v3971 = vadd.f32 0.0, %v3970
    %v3972 = vpop.f32.mrf.mxu0
    %v3973 = vadd.f32 0.0, %v3972
    %3974 = vmatprep.mubr.bf16.mxu0 %v1297
    %3975 = vmatmul.mubr.bf16.gmra.mxu0 %v1296
    %v3976 = vpop.f32.mrf.mxu0
    %v3977 = vadd.f32 0.0, %v3976
    %v3978 = vpop.f32.mrf.mxu0
    %v3979 = vadd.f32 0.0, %v3978
    %v3980 = vpop.f32.mrf.mxu0
    %v3981 = vadd.f32 0.0, %v3980
    %v3982 = vpop.f32.mrf.mxu0
    %v3983 = vadd.f32 0.0, %v3982
    %3984 = vdwg.mxu0
    %3985 = vmatprep.subr.bf16.mxu0 %v3595
    %3986 = vmatpush1.bf16.msra.mxu0 %v3594
    %3987 = vmatprep.subr.bf16.mxu0 %v3593
    %3988 = vmatpush1.bf16.msra.mxu0 %v3592
    %3989 = vmatprep.subr.bf16.mxu0 %v3591
    %3990 = vmatpush1.bf16.msra.mxu0 %v3590
    %3991 = vmatprep.subr.bf16.mxu0 %v3589
    %3992 = vmatpush1.bf16.msra.mxu0 %v3588
    %3993 = vmatprep.subr.bf16.mxu0 %v3587
    %3994 = vmatpush1.bf16.msra.mxu0 %v3586
    %3995 = vmatprep.subr.bf16.mxu0 %v3585
    %3996 = vmatpush1.bf16.msra.mxu0 %v3584
    %3997 = vmatprep.subr.bf16.mxu0 %v3583
    %3998 = vmatpush1.bf16.msra.mxu0 %v3582
    %3999 = vmatprep.subr.bf16.mxu0 %v3581
    %4000 = vmatpush1.bf16.msra.mxu0 %v3580
    %4001 = vmatprep.subr.bf16.mxu0 %v3611
    %4002 = vmatpush2.bf16.msra.mxu0 %v3610
    %4003 = vmatprep.subr.bf16.mxu0 %v3609
    %4004 = vmatpush2.bf16.msra.mxu0 %v3608
    %4005 = vmatprep.subr.bf16.mxu0 %v3607
    %4006 = vmatpush2.bf16.msra.mxu0 %v3606
    %4007 = vmatprep.subr.bf16.mxu0 %v3605
    %4008 = vmatpush2.bf16.msra.mxu0 %v3604
    %4009 = vmatprep.subr.bf16.mxu0 %v3603
    %4010 = vmatpush2.bf16.msra.mxu0 %v3602
    %4011 = vmatprep.subr.bf16.mxu0 %v3601
    %4012 = vmatpush2.bf16.msra.mxu0 %v3600
    %4013 = vmatprep.subr.bf16.mxu0 %v3599
    %4014 = vmatpush2.bf16.msra.mxu0 %v3598
    %4015 = vmatprep.subr.bf16.mxu0 %v3597
    %4016 = vmatpush2.bf16.msra.mxu0 %v3596
    %4017 = vmatprep.mubr.bf16.mxu0 %v1291
    %4018 = vmatmul.mubr.bf16.gmra.mxu0 %v1290
    %v4019 = vpop.f32.mrf.mxu0
    %v4020 = vadd.f32 %v3967, %v4019
    %v4021 = vpop.f32.mrf.mxu0
    %v4022 = vadd.f32 %v3969, %v4021
    %v4023 = vpop.f32.mrf.mxu0
    %v4024 = vadd.f32 %v3971, %v4023
    %v4025 = vpop.f32.mrf.mxu0
    %v4026 = vadd.f32 %v3973, %v4025
    %4027 = vmatprep.mubr.bf16.mxu0 %v1299
    %4028 = vmatmul.mubr.bf16.gmra.mxu0 %v1298
    %v4029 = vpop.f32.mrf.mxu0
    %v4030 = vadd.f32 %v3977, %v4029
    %v4031 = vpop.f32.mrf.mxu0
    %v4032 = vadd.f32 %v3979, %v4031
    %v4033 = vpop.f32.mrf.mxu0
    %v4034 = vadd.f32 %v3981, %v4033
    %v4035 = vpop.f32.mrf.mxu0
    %v4036 = vadd.f32 %v3983, %v4035
    %4037 = vdwg.mxu0
    %4038 = vmatprep.subr.bf16.mxu0 %v3627
    %4039 = vmatpush1.bf16.msra.mxu0 %v3626
    %4040 = vmatprep.subr.bf16.mxu0 %v3625
    %4041 = vmatpush1.bf16.msra.mxu0 %v3624
    %4042 = vmatprep.subr.bf16.mxu0 %v3623
    %4043 = vmatpush1.bf16.msra.mxu0 %v3622
    %4044 = vmatprep.subr.bf16.mxu0 %v3621
    %4045 = vmatpush1.bf16.msra.mxu0 %v3620
    %4046 = vmatprep.subr.bf16.mxu0 %v3619
    %4047 = vmatpush1.bf16.msra.mxu0 %v3618
    %4048 = vmatprep.subr.bf16.mxu0 %v3617
    %4049 = vmatpush1.bf16.msra.mxu0 %v3616
    %4050 = vmatprep.subr.bf16.mxu0 %v3615
    %4051 = vmatpush1.bf16.msra.mxu0 %v3614
    %4052 = vmatprep.subr.bf16.mxu0 %v3613
    %4053 = vmatpush1.bf16.msra.mxu0 %v3612
    %4054 = vmatprep.subr.bf16.mxu0 %v3643
    %4055 = vmatpush2.bf16.msra.mxu0 %v3642
    %4056 = vmatprep.subr.bf16.mxu0 %v3641
    %4057 = vmatpush2.bf16.msra.mxu0 %v3640
    %4058 = vmatprep.subr.bf16.mxu0 %v3639
    %4059 = vmatpush2.bf16.msra.mxu0 %v3638
    %4060 = vmatprep.subr.bf16.mxu0 %v3637
    %4061 = vmatpush2.bf16.msra.mxu0 %v3636
    %4062 = vmatprep.subr.bf16.mxu0 %v3635
    %4063 = vmatpush2.bf16.msra.mxu0 %v3634
    %4064 = vmatprep.subr.bf16.mxu0 %v3633
    %4065 = vmatpush2.bf16.msra.mxu0 %v3632
    %4066 = vmatprep.subr.bf16.mxu0 %v3631
    %4067 = vmatpush2.bf16.msra.mxu0 %v3630
    %4068 = vmatprep.subr.bf16.mxu0 %v3629
    %4069 = vmatpush2.bf16.msra.mxu0 %v3628
    %4070 = vmatprep.mubr.bf16.mxu0 %v1293
    %4071 = vmatmul.mubr.bf16.gmra.mxu0 %v1292
    %v4072 = vpop.f32.mrf.mxu0
    %v4073 = vadd.f32 %v4020, %v4072
    %v4074 = vpop.f32.mrf.mxu0
    %v4075 = vadd.f32 %v4022, %v4074
    %v4076 = vpop.f32.mrf.mxu0
    %v4077 = vadd.f32 %v4024, %v4076
    %v4078 = vpop.f32.mrf.mxu0
    %v4079 = vadd.f32 %v4026, %v4078
    %4080 = vmatprep.mubr.bf16.mxu0 %v1301
    %4081 = vmatmul.mubr.bf16.gmra.mxu0 %v1300
    %v4082 = vpop.f32.mrf.mxu0
    %v4083 = vadd.f32 %v4030, %v4082
    %v4084 = vpop.f32.mrf.mxu0
    %v4085 = vadd.f32 %v4032, %v4084
    %v4086 = vpop.f32.mrf.mxu0
    %v4087 = vadd.f32 %v4034, %v4086
    %v4088 = vpop.f32.mrf.mxu0
    %v4089 = vadd.f32 %v4036, %v4088
    %4090 = vdwg.mxu0
    %4091 = vmatprep.subr.bf16.mxu0 %v3659
    %4092 = vmatpush1.bf16.msra.mxu0 %v3658
    %4093 = vmatprep.subr.bf16.mxu0 %v3657
    %4094 = vmatpush1.bf16.msra.mxu0 %v3656
    %4095 = vmatprep.subr.bf16.mxu0 %v3655
    %4096 = vmatpush1.bf16.msra.mxu0 %v3654
    %4097 = vmatprep.subr.bf16.mxu0 %v3653
    %4098 = vmatpush1.bf16.msra.mxu0 %v3652
    %4099 = vmatprep.subr.bf16.mxu0 %v3651
    %4100 = vmatpush1.bf16.msra.mxu0 %v3650
    %4101 = vmatprep.subr.bf16.mxu0 %v3649
    %4102 = vmatpush1.bf16.msra.mxu0 %v3648
    %4103 = vmatprep.subr.bf16.mxu0 %v3647
    %4104 = vmatpush1.bf16.msra.mxu0 %v3646
    %4105 = vmatprep.subr.bf16.mxu0 %v3645
    %4106 = vmatpush1.bf16.msra.mxu0 %v3644
    %4107 = vmatprep.subr.bf16.mxu0 %v3675
    %4108 = vmatpush2.bf16.msra.mxu0 %v3674
    %4109 = vmatprep.subr.bf16.mxu0 %v3673
    %4110 = vmatpush2.bf16.msra.mxu0 %v3672
    %4111 = vmatprep.subr.bf16.mxu0 %v3671
    %4112 = vmatpush2.bf16.msra.mxu0 %v3670
    %4113 = vmatprep.subr.bf16.mxu0 %v3669
    %4114 = vmatpush2.bf16.msra.mxu0 %v3668
    %4115 = vmatprep.subr.bf16.mxu0 %v3667
    %4116 = vmatpush2.bf16.msra.mxu0 %v3666
    %4117 = vmatprep.subr.bf16.mxu0 %v3665
    %4118 = vmatpush2.bf16.msra.mxu0 %v3664
    %4119 = vmatprep.subr.bf16.mxu0 %v3663
    %4120 = vmatpush2.bf16.msra.mxu0 %v3662
    %4121 = vmatprep.subr.bf16.mxu0 %v3661
    %4122 = vmatpush2.bf16.msra.mxu0 %v3660
    %4123 = vmatprep.mubr.bf16.mxu0 %v1295
    %4124 = vmatmul.mubr.bf16.gmra.mxu0 %v1294
    %v4125 = vpop.f32.mrf.mxu0
    %v4126 = vadd.f32 %v4073, %v4125
    %v4127 = vpop.f32.mrf.mxu0
    %v4128 = vadd.f32 %v4075, %v4127
    %v4129 = vpop.f32.mrf.mxu0
    %v4130 = vadd.f32 %v4077, %v4129
    %v4131 = vpop.f32.mrf.mxu0
    %v4132 = vadd.f32 %v4079, %v4131
    %4133 = vmatprep.mubr.bf16.mxu0 %v1303
    %4134 = vmatmul.mubr.bf16.gmra.mxu0 %v1302
    %v4135 = vpop.f32.mrf.mxu0
    %v4136 = vadd.f32 %v4083, %v4135
    %v4137 = vpop.f32.mrf.mxu0
    %v4138 = vadd.f32 %v4085, %v4137
    %v4139 = vpop.f32.mrf.mxu0
    %v4140 = vadd.f32 %v4087, %v4139
    %v4141 = vpop.f32.mrf.mxu0
    %v4142 = vadd.f32 %v4089, %v4141
    %4143 = vdwg.mxu0
    %4144 = vmatprep.subr.bf16.mxu0 %v3691
    %4145 = vmatpush1.bf16.msra.mxu0 %v3690
    %4146 = vmatprep.subr.bf16.mxu0 %v3689
    %4147 = vmatpush1.bf16.msra.mxu0 %v3688
    %4148 = vmatprep.subr.bf16.mxu0 %v3687
    %4149 = vmatpush1.bf16.msra.mxu0 %v3686
    %4150 = vmatprep.subr.bf16.mxu0 %v3685
    %4151 = vmatpush1.bf16.msra.mxu0 %v3684
    %4152 = vmatprep.subr.bf16.mxu0 %v3683
    %4153 = vmatpush1.bf16.msra.mxu0 %v3682
    %4154 = vmatprep.subr.bf16.mxu0 %v3681
    %4155 = vmatpush1.bf16.msra.mxu0 %v3680
    %4156 = vmatprep.subr.bf16.mxu0 %v3679
    %4157 = vmatpush1.bf16.msra.mxu0 %v3678
    %4158 = vmatprep.subr.bf16.mxu0 %v3677
    %4159 = vmatpush1.bf16.msra.mxu0 %v3676
    %4160 = vmatprep.subr.bf16.mxu0 %v3707
    %4161 = vmatpush2.bf16.msra.mxu0 %v3706
    %4162 = vmatprep.subr.bf16.mxu0 %v3705
    %4163 = vmatpush2.bf16.msra.mxu0 %v3704
    %4164 = vmatprep.subr.bf16.mxu0 %v3703
    %4165 = vmatpush2.bf16.msra.mxu0 %v3702
    %4166 = vmatprep.subr.bf16.mxu0 %v3701
    %4167 = vmatpush2.bf16.msra.mxu0 %v3700
    %4168 = vmatprep.subr.bf16.mxu0 %v3699
    %4169 = vmatpush2.bf16.msra.mxu0 %v3698
    %4170 = vmatprep.subr.bf16.mxu0 %v3697
    %4171 = vmatpush2.bf16.msra.mxu0 %v3696
    %4172 = vmatprep.subr.bf16.mxu0 %v3695
    %4173 = vmatpush2.bf16.msra.mxu0 %v3694
    %4174 = vmatprep.subr.bf16.mxu0 %v3693
    %4175 = vmatpush2.bf16.msra.mxu0 %v3692
    %4176 = vmatprep.mubr.bf16.mxu0 %v1297
    %4177 = vmatmul.mubr.bf16.gmra.mxu0 %v1296
    %v4178 = vpop.f32.mrf.mxu0
    %v4179 = vadd.f32 %v4126, %v4178
    %v4180 = vpop.f32.mrf.mxu0
    %v4181 = vadd.f32 %v4128, %v4180
    %v4182 = vpop.f32.mrf.mxu0
    %v4183 = vadd.f32 %v4130, %v4182
    %v4184 = vpop.f32.mrf.mxu0
    %v4185 = vadd.f32 %v4132, %v4184
    %4186 = vmatprep.mubr.bf16.mxu0 %v1305
    %4187 = vmatmul.mubr.bf16.gmra.mxu0 %v1304
    %v4188 = vpop.f32.mrf.mxu0
    %v4189 = vadd.f32 %v4136, %v4188
    %v4190 = vpop.f32.mrf.mxu0
    %v4191 = vadd.f32 %v4138, %v4190
    %v4192 = vpop.f32.mrf.mxu0
    %v4193 = vadd.f32 %v4140, %v4192
    %v4194 = vpop.f32.mrf.mxu0
    %v4195 = vadd.f32 %v4142, %v4194
    %4196 = vdwg.mxu0
    %4197 = vmatprep.subr.bf16.mxu0 %v3723
    %4198 = vmatpush1.bf16.msra.mxu0 %v3722
    %4199 = vmatprep.subr.bf16.mxu0 %v3721
    %4200 = vmatpush1.bf16.msra.mxu0 %v3720
    %4201 = vmatprep.subr.bf16.mxu0 %v3719
    %4202 = vmatpush1.bf16.msra.mxu0 %v3718
    %4203 = vmatprep.subr.bf16.mxu0 %v3717
    %4204 = vmatpush1.bf16.msra.mxu0 %v3716
    %4205 = vmatprep.subr.bf16.mxu0 %v3715
    %4206 = vmatpush1.bf16.msra.mxu0 %v3714
    %4207 = vmatprep.subr.bf16.mxu0 %v3713
    %4208 = vmatpush1.bf16.msra.mxu0 %v3712
    %4209 = vmatprep.subr.bf16.mxu0 %v3711
    %4210 = vmatpush1.bf16.msra.mxu0 %v3710
    %4211 = vmatprep.subr.bf16.mxu0 %v3709
    %4212 = vmatpush1.bf16.msra.mxu0 %v3708
    %4213 = vmatprep.subr.bf16.mxu0 %v3739
    %4214 = vmatpush2.bf16.msra.mxu0 %v3738
    %4215 = vmatprep.subr.bf16.mxu0 %v3737
    %4216 = vmatpush2.bf16.msra.mxu0 %v3736
    %4217 = vmatprep.subr.bf16.mxu0 %v3735
    %4218 = vmatpush2.bf16.msra.mxu0 %v3734
    %4219 = vmatprep.subr.bf16.mxu0 %v3733
    %4220 = vmatpush2.bf16.msra.mxu0 %v3732
    %4221 = vmatprep.subr.bf16.mxu0 %v3731
    %4222 = vmatpush2.bf16.msra.mxu0 %v3730
    %4223 = vmatprep.subr.bf16.mxu0 %v3729
    %4224 = vmatpush2.bf16.msra.mxu0 %v3728
    %4225 = vmatprep.subr.bf16.mxu0 %v3727
    %4226 = vmatpush2.bf16.msra.mxu0 %v3726
    %4227 = vmatprep.subr.bf16.mxu0 %v3725
    %4228 = vmatpush2.bf16.msra.mxu0 %v3724
    %4229 = vmatprep.mubr.bf16.mxu0 %v1299
    %4230 = vmatmul.mubr.bf16.gmra.mxu0 %v1298
    %v4231 = vpop.f32.mrf.mxu0
    %v4232 = vadd.f32 %v4179, %v4231
    %v4233 = vpop.f32.mrf.mxu0
    %v4234 = vadd.f32 %v4181, %v4233
    %v4235 = vpop.f32.mrf.mxu0
    %v4236 = vadd.f32 %v4183, %v4235
    %v4237 = vpop.f32.mrf.mxu0
    %v4238 = vadd.f32 %v4185, %v4237
    %4239 = vmatprep.mubr.bf16.mxu0 %v1307
    %4240 = vmatmul.mubr.bf16.gmra.mxu0 %v1306
    %v4241 = vpop.f32.mrf.mxu0
    %v4242 = vadd.f32 %v4189, %v4241
    %v4243 = vpop.f32.mrf.mxu0
    %v4244 = vadd.f32 %v4191, %v4243
    %v4245 = vpop.f32.mrf.mxu0
    %v4246 = vadd.f32 %v4193, %v4245
    %v4247 = vpop.f32.mrf.mxu0
    %v4248 = vadd.f32 %v4195, %v4247
    %4249 = vdwg.mxu0
    %v4250 = vmax.f32 %v2761, %v4232
    %v4251 = vmax.f32 %v2763, %v4234
    %v4252 = vmax.f32 %v2765, %v4236
    %v4253 = vmax.f32 %v2767, %v4238
    %v4254 = vmax.f32 %v2771, %v4242
    %v4255 = vmax.f32 %v2773, %v4244
    %v4256 = vmax.f32 %v2775, %v4246
    %v4257 = vmax.f32 %v2777, %v4248
    %s4258 = scalar_lea.vmem [#allocation9], 3072
    %v4259 = vld [vmem:[%s4258] sm:$0xff]
    %v4260 = vld [vmem:[%s4258 + $0x8] sm:$0xff]
    %v4261 = vld [vmem:[%s4258 + $0x10] sm:$0xff]
    %v4262 = vld [vmem:[%s4258 + $0x18] sm:$0xff]
    %v4263 = vld [vmem:[%s4258 + $0x20] sm:$0xff]
    %v4264 = vld [vmem:[%s4258 + $0x28] sm:$0xff]
    %v4265 = vld [vmem:[%s4258 + $0x30] sm:$0xff]
    %v4266 = vld [vmem:[%s4258 + $0x38] sm:$0xff]
    %v4267 = vld [vmem:[%s4258 + $0x40] sm:$0xff]
    %v4268 = vld [vmem:[%s4258 + $0x48] sm:$0xff]
    %v4269 = vld [vmem:[%s4258 + $0x50] sm:$0xff]
    %v4270 = vld [vmem:[%s4258 + $0x58] sm:$0xff]
    %v4271 = vld [vmem:[%s4258 + $0x60] sm:$0xff]
    %v4272 = vld [vmem:[%s4258 + $0x68] sm:$0xff]
    %v4273 = vld [vmem:[%s4258 + $0x70] sm:$0xff]
    %v4274 = vld [vmem:[%s4258 + $0x78] sm:$0xff]
    %v4275 = vld [vmem:[%s4258 + $0x80] sm:$0xff]
    %v4276 = vld [vmem:[%s4258 + $0x88] sm:$0xff]
    %v4277 = vld [vmem:[%s4258 + $0x90] sm:$0xff]
    %v4278 = vld [vmem:[%s4258 + $0x98] sm:$0xff]
    %v4279 = vld [vmem:[%s4258 + $0xa0] sm:$0xff]
    %v4280 = vld [vmem:[%s4258 + $0xa8] sm:$0xff]
    %v4281 = vld [vmem:[%s4258 + $0xb0] sm:$0xff]
    %v4282 = vld [vmem:[%s4258 + $0xb8] sm:$0xff]
    %v4283 = vld [vmem:[%s4258 + $0xc0] sm:$0xff]
    %v4284 = vld [vmem:[%s4258 + $0xc8] sm:$0xff]
    %v4285 = vld [vmem:[%s4258 + $0xd0] sm:$0xff]
    %v4286 = vld [vmem:[%s4258 + $0xd8] sm:$0xff]
    %v4287 = vld [vmem:[%s4258 + $0xe0] sm:$0xff]
    %v4288 = vld [vmem:[%s4258 + $0xe8] sm:$0xff]
    %v4289 = vld [vmem:[%s4258 + $0xf0] sm:$0xff]
    %v4290 = vld [vmem:[%s4258 + $0xf8] sm:$0xff]
    %v4291 = vld [vmem:[%s4258 + $0x100] sm:$0xff]
    %v4292 = vld [vmem:[%s4258 + $0x108] sm:$0xff]
    %v4293 = vld [vmem:[%s4258 + $0x110] sm:$0xff]
    %v4294 = vld [vmem:[%s4258 + $0x118] sm:$0xff]
    %v4295 = vld [vmem:[%s4258 + $0x120] sm:$0xff]
    %v4296 = vld [vmem:[%s4258 + $0x128] sm:$0xff]
    %v4297 = vld [vmem:[%s4258 + $0x130] sm:$0xff]
    %v4298 = vld [vmem:[%s4258 + $0x138] sm:$0xff]
    %v4299 = vld [vmem:[%s4258 + $0x140] sm:$0xff]
    %v4300 = vld [vmem:[%s4258 + $0x148] sm:$0xff]
    %v4301 = vld [vmem:[%s4258 + $0x150] sm:$0xff]
    %v4302 = vld [vmem:[%s4258 + $0x158] sm:$0xff]
    %v4303 = vld [vmem:[%s4258 + $0x160] sm:$0xff]
    %v4304 = vld [vmem:[%s4258 + $0x168] sm:$0xff]
    %v4305 = vld [vmem:[%s4258 + $0x170] sm:$0xff]
    %v4306 = vld [vmem:[%s4258 + $0x178] sm:$0xff]
    %v4307 = vld [vmem:[%s4258 + $0x180] sm:$0xff]
    %v4308 = vld [vmem:[%s4258 + $0x188] sm:$0xff]
    %v4309 = vld [vmem:[%s4258 + $0x190] sm:$0xff]
    %v4310 = vld [vmem:[%s4258 + $0x198] sm:$0xff]
    %v4311 = vld [vmem:[%s4258 + $0x1a0] sm:$0xff]
    %v4312 = vld [vmem:[%s4258 + $0x1a8] sm:$0xff]
    %v4313 = vld [vmem:[%s4258 + $0x1b0] sm:$0xff]
    %v4314 = vld [vmem:[%s4258 + $0x1b8] sm:$0xff]
    %v4315 = vld [vmem:[%s4258 + $0x1c0] sm:$0xff]
    %v4316 = vld [vmem:[%s4258 + $0x1c8] sm:$0xff]
    %v4317 = vld [vmem:[%s4258 + $0x1d0] sm:$0xff]
    %v4318 = vld [vmem:[%s4258 + $0x1d8] sm:$0xff]
    %v4319 = vld [vmem:[%s4258 + $0x1e0] sm:$0xff]
    %v4320 = vld [vmem:[%s4258 + $0x1e8] sm:$0xff]
    %v4321 = vld [vmem:[%s4258 + $0x1f0] sm:$0xff]
    %v4322 = vld [vmem:[%s4258 + $0x1f8] sm:$0xff]
    %v4323 = vld [vmem:[%s4258 + $0x200] sm:$0xff]
    %v4324 = vld [vmem:[%s4258 + $0x208] sm:$0xff]
    %v4325 = vld [vmem:[%s4258 + $0x210] sm:$0xff]
    %v4326 = vld [vmem:[%s4258 + $0x218] sm:$0xff]
    %v4327 = vld [vmem:[%s4258 + $0x220] sm:$0xff]
    %v4328 = vld [vmem:[%s4258 + $0x228] sm:$0xff]
    %v4329 = vld [vmem:[%s4258 + $0x230] sm:$0xff]
    %v4330 = vld [vmem:[%s4258 + $0x238] sm:$0xff]
    %v4331 = vld [vmem:[%s4258 + $0x240] sm:$0xff]
    %v4332 = vld [vmem:[%s4258 + $0x248] sm:$0xff]
    %v4333 = vld [vmem:[%s4258 + $0x250] sm:$0xff]
    %v4334 = vld [vmem:[%s4258 + $0x258] sm:$0xff]
    %v4335 = vld [vmem:[%s4258 + $0x260] sm:$0xff]
    %v4336 = vld [vmem:[%s4258 + $0x268] sm:$0xff]
    %v4337 = vld [vmem:[%s4258 + $0x270] sm:$0xff]
    %v4338 = vld [vmem:[%s4258 + $0x278] sm:$0xff]
    %v4339 = vld [vmem:[%s4258 + $0x280] sm:$0xff]
    %v4340 = vld [vmem:[%s4258 + $0x288] sm:$0xff]
    %v4341 = vld [vmem:[%s4258 + $0x290] sm:$0xff]
    %v4342 = vld [vmem:[%s4258 + $0x298] sm:$0xff]
    %v4343 = vld [vmem:[%s4258 + $0x2a0] sm:$0xff]
    %v4344 = vld [vmem:[%s4258 + $0x2a8] sm:$0xff]
    %v4345 = vld [vmem:[%s4258 + $0x2b0] sm:$0xff]
    %v4346 = vld [vmem:[%s4258 + $0x2b8] sm:$0xff]
    %v4347 = vld [vmem:[%s4258 + $0x2c0] sm:$0xff]
    %v4348 = vld [vmem:[%s4258 + $0x2c8] sm:$0xff]
    %v4349 = vld [vmem:[%s4258 + $0x2d0] sm:$0xff]
    %v4350 = vld [vmem:[%s4258 + $0x2d8] sm:$0xff]
    %v4351 = vld [vmem:[%s4258 + $0x2e0] sm:$0xff]
    %v4352 = vld [vmem:[%s4258 + $0x2e8] sm:$0xff]
    %v4353 = vld [vmem:[%s4258 + $0x2f0] sm:$0xff]
    %v4354 = vld [vmem:[%s4258 + $0x2f8] sm:$0xff]
    %v4355 = vld [vmem:[%s4258 + $0x300] sm:$0xff]
    %v4356 = vld [vmem:[%s4258 + $0x308] sm:$0xff]
    %v4357 = vld [vmem:[%s4258 + $0x310] sm:$0xff]
    %v4358 = vld [vmem:[%s4258 + $0x318] sm:$0xff]
    %v4359 = vld [vmem:[%s4258 + $0x320] sm:$0xff]
    %v4360 = vld [vmem:[%s4258 + $0x328] sm:$0xff]
    %v4361 = vld [vmem:[%s4258 + $0x330] sm:$0xff]
    %v4362 = vld [vmem:[%s4258 + $0x338] sm:$0xff]
    %v4363 = vld [vmem:[%s4258 + $0x340] sm:$0xff]
    %v4364 = vld [vmem:[%s4258 + $0x348] sm:$0xff]
    %v4365 = vld [vmem:[%s4258 + $0x350] sm:$0xff]
    %v4366 = vld [vmem:[%s4258 + $0x358] sm:$0xff]
    %v4367 = vld [vmem:[%s4258 + $0x360] sm:$0xff]
    %v4368 = vld [vmem:[%s4258 + $0x368] sm:$0xff]
    %v4369 = vld [vmem:[%s4258 + $0x370] sm:$0xff]
    %v4370 = vld [vmem:[%s4258 + $0x378] sm:$0xff]
    %v4371 = vld [vmem:[%s4258 + $0x380] sm:$0xff]
    %v4372 = vld [vmem:[%s4258 + $0x388] sm:$0xff]
    %v4373 = vld [vmem:[%s4258 + $0x390] sm:$0xff]
    %v4374 = vld [vmem:[%s4258 + $0x398] sm:$0xff]
    %v4375 = vld [vmem:[%s4258 + $0x3a0] sm:$0xff]
    %v4376 = vld [vmem:[%s4258 + $0x3a8] sm:$0xff]
    %v4377 = vld [vmem:[%s4258 + $0x3b0] sm:$0xff]
    %v4378 = vld [vmem:[%s4258 + $0x3b8] sm:$0xff]
    %v4379 = vld [vmem:[%s4258 + $0x3c0] sm:$0xff]
    %v4380 = vld [vmem:[%s4258 + $0x3c8] sm:$0xff]
    %v4381 = vld [vmem:[%s4258 + $0x3d0] sm:$0xff]
    %v4382 = vld [vmem:[%s4258 + $0x3d8] sm:$0xff]
    %v4383 = vld [vmem:[%s4258 + $0x3e0] sm:$0xff]
    %v4384 = vld [vmem:[%s4258 + $0x3e8] sm:$0xff]
    %v4385 = vld [vmem:[%s4258 + $0x3f0] sm:$0xff]
    %v4386 = vld [vmem:[%s4258 + $0x3f8] sm:$0xff]
    %v4387 = vld [vmem:[%s4258 + $0x400] sm:$0xff]
    %v4388 = vld [vmem:[%s4258 + $0x408] sm:$0xff]
    %v4389 = vld [vmem:[%s4258 + $0x410] sm:$0xff]
    %v4390 = vld [vmem:[%s4258 + $0x418] sm:$0xff]
    %v4391 = vld [vmem:[%s4258 + $0x420] sm:$0xff]
    %v4392 = vld [vmem:[%s4258 + $0x428] sm:$0xff]
    %v4393 = vld [vmem:[%s4258 + $0x430] sm:$0xff]
    %v4394 = vld [vmem:[%s4258 + $0x438] sm:$0xff]
    %v4395 = vld [vmem:[%s4258 + $0x440] sm:$0xff]
    %v4396 = vld [vmem:[%s4258 + $0x448] sm:$0xff]
    %v4397 = vld [vmem:[%s4258 + $0x450] sm:$0xff]
    %v4398 = vld [vmem:[%s4258 + $0x458] sm:$0xff]
    %v4399 = vld [vmem:[%s4258 + $0x460] sm:$0xff]
    %v4400 = vld [vmem:[%s4258 + $0x468] sm:$0xff]
    %v4401 = vld [vmem:[%s4258 + $0x470] sm:$0xff]
    %v4402 = vld [vmem:[%s4258 + $0x478] sm:$0xff]
    %v4403 = vld [vmem:[%s4258 + $0x480] sm:$0xff]
    %v4404 = vld [vmem:[%s4258 + $0x488] sm:$0xff]
    %v4405 = vld [vmem:[%s4258 + $0x490] sm:$0xff]
    %v4406 = vld [vmem:[%s4258 + $0x498] sm:$0xff]
    %v4407 = vld [vmem:[%s4258 + $0x4a0] sm:$0xff]
    %v4408 = vld [vmem:[%s4258 + $0x4a8] sm:$0xff]
    %v4409 = vld [vmem:[%s4258 + $0x4b0] sm:$0xff]
    %v4410 = vld [vmem:[%s4258 + $0x4b8] sm:$0xff]
    %v4411 = vld [vmem:[%s4258 + $0x4c0] sm:$0xff]
    %v4412 = vld [vmem:[%s4258 + $0x4c8] sm:$0xff]
    %v4413 = vld [vmem:[%s4258 + $0x4d0] sm:$0xff]
    %v4414 = vld [vmem:[%s4258 + $0x4d8] sm:$0xff]
    %v4415 = vld [vmem:[%s4258 + $0x4e0] sm:$0xff]
    %v4416 = vld [vmem:[%s4258 + $0x4e8] sm:$0xff]
    %v4417 = vld [vmem:[%s4258 + $0x4f0] sm:$0xff]
    %v4418 = vld [vmem:[%s4258 + $0x4f8] sm:$0xff]
    %v4419 = vld [vmem:[%s4258 + $0x500] sm:$0xff]
    %v4420 = vld [vmem:[%s4258 + $0x508] sm:$0xff]
    %v4421 = vld [vmem:[%s4258 + $0x510] sm:$0xff]
    %v4422 = vld [vmem:[%s4258 + $0x518] sm:$0xff]
    %v4423 = vld [vmem:[%s4258 + $0x520] sm:$0xff]
    %v4424 = vld [vmem:[%s4258 + $0x528] sm:$0xff]
    %v4425 = vld [vmem:[%s4258 + $0x530] sm:$0xff]
    %v4426 = vld [vmem:[%s4258 + $0x538] sm:$0xff]
    %v4427 = vld [vmem:[%s4258 + $0x540] sm:$0xff]
    %v4428 = vld [vmem:[%s4258 + $0x548] sm:$0xff]
    %v4429 = vld [vmem:[%s4258 + $0x550] sm:$0xff]
    %v4430 = vld [vmem:[%s4258 + $0x558] sm:$0xff]
    %v4431 = vld [vmem:[%s4258 + $0x560] sm:$0xff]
    %v4432 = vld [vmem:[%s4258 + $0x568] sm:$0xff]
    %v4433 = vld [vmem:[%s4258 + $0x570] sm:$0xff]
    %v4434 = vld [vmem:[%s4258 + $0x578] sm:$0xff]
    %v4435 = vld [vmem:[%s4258 + $0x580] sm:$0xff]
    %v4436 = vld [vmem:[%s4258 + $0x588] sm:$0xff]
    %v4437 = vld [vmem:[%s4258 + $0x590] sm:$0xff]
    %v4438 = vld [vmem:[%s4258 + $0x598] sm:$0xff]
    %v4439 = vld [vmem:[%s4258 + $0x5a0] sm:$0xff]
    %v4440 = vld [vmem:[%s4258 + $0x5a8] sm:$0xff]
    %v4441 = vld [vmem:[%s4258 + $0x5b0] sm:$0xff]
    %v4442 = vld [vmem:[%s4258 + $0x5b8] sm:$0xff]
    %v4443 = vld [vmem:[%s4258 + $0x5c0] sm:$0xff]
    %v4444 = vld [vmem:[%s4258 + $0x5c8] sm:$0xff]
    %v4445 = vld [vmem:[%s4258 + $0x5d0] sm:$0xff]
    %v4446 = vld [vmem:[%s4258 + $0x5d8] sm:$0xff]
    %v4447 = vld [vmem:[%s4258 + $0x5e0] sm:$0xff]
    %v4448 = vld [vmem:[%s4258 + $0x5e8] sm:$0xff]
    %v4449 = vld [vmem:[%s4258 + $0x5f0] sm:$0xff]
    %v4450 = vld [vmem:[%s4258 + $0x5f8] sm:$0xff]
    %v4643 = vunpack.c.l.b16 %v4259
    %v4644 = vunpack.c.h.b16 %v4259
    %v4645 = vunpack.c.l.b16 %v4260
    %v4646 = vunpack.c.h.b16 %v4260
    %v4647 = vunpack.c.l.b16 %v4261
    %v4648 = vunpack.c.h.b16 %v4261
    %v4649 = vunpack.c.l.b16 %v4262
    %v4650 = vunpack.c.h.b16 %v4262
    %v4651 = vunpack.c.l.b16 %v4263
    %v4652 = vunpack.c.h.b16 %v4263
    %v4653 = vunpack.c.l.b16 %v4264
    %v4654 = vunpack.c.h.b16 %v4264
    %v4655 = vunpack.c.l.b16 %v4265
    %v4656 = vunpack.c.h.b16 %v4265
    %v4657 = vunpack.c.l.b16 %v4266
    %v4658 = vunpack.c.h.b16 %v4266
    %v4659 = vunpack.c.l.b16 %v4267
    %v4660 = vunpack.c.h.b16 %v4267
    %v4661 = vunpack.c.l.b16 %v4268
    %v4662 = vunpack.c.h.b16 %v4268
    %v4663 = vunpack.c.l.b16 %v4269
    %v4664 = vunpack.c.h.b16 %v4269
    %v4665 = vunpack.c.l.b16 %v4270
    %v4666 = vunpack.c.h.b16 %v4270
    %v4667 = vunpack.c.l.b16 %v4271
    %v4668 = vunpack.c.h.b16 %v4271
    %v4669 = vunpack.c.l.b16 %v4272
    %v4670 = vunpack.c.h.b16 %v4272
    %v4671 = vunpack.c.l.b16 %v4273
    %v4672 = vunpack.c.h.b16 %v4273
    %v4673 = vunpack.c.l.b16 %v4274
    %v4674 = vunpack.c.h.b16 %v4274
    %v4675 = vunpack.c.l.b16 %v4275
    %v4676 = vunpack.c.h.b16 %v4275
    %v4677 = vunpack.c.l.b16 %v4276
    %v4678 = vunpack.c.h.b16 %v4276
    %v4679 = vunpack.c.l.b16 %v4277
    %v4680 = vunpack.c.h.b16 %v4277
    %v4681 = vunpack.c.l.b16 %v4278
    %v4682 = vunpack.c.h.b16 %v4278
    %v4683 = vunpack.c.l.b16 %v4279
    %v4684 = vunpack.c.h.b16 %v4279
    %v4685 = vunpack.c.l.b16 %v4280
    %v4686 = vunpack.c.h.b16 %v4280
    %v4687 = vunpack.c.l.b16 %v4281
    %v4688 = vunpack.c.h.b16 %v4281
    %v4689 = vunpack.c.l.b16 %v4282
    %v4690 = vunpack.c.h.b16 %v4282
    %v4691 = vunpack.c.l.b16 %v4283
    %v4692 = vunpack.c.h.b16 %v4283
    %v4693 = vunpack.c.l.b16 %v4284
    %v4694 = vunpack.c.h.b16 %v4284
    %v4695 = vunpack.c.l.b16 %v4285
    %v4696 = vunpack.c.h.b16 %v4285
    %v4697 = vunpack.c.l.b16 %v4286
    %v4698 = vunpack.c.h.b16 %v4286
    %v4699 = vunpack.c.l.b16 %v4287
    %v4700 = vunpack.c.h.b16 %v4287
    %v4701 = vunpack.c.l.b16 %v4288
    %v4702 = vunpack.c.h.b16 %v4288
    %v4703 = vunpack.c.l.b16 %v4289
    %v4704 = vunpack.c.h.b16 %v4289
    %v4705 = vunpack.c.l.b16 %v4290
    %v4706 = vunpack.c.h.b16 %v4290
    %v4707 = vunpack.c.l.b16 %v4291
    %v4708 = vunpack.c.h.b16 %v4291
    %v4709 = vunpack.c.l.b16 %v4292
    %v4710 = vunpack.c.h.b16 %v4292
    %v4711 = vunpack.c.l.b16 %v4293
    %v4712 = vunpack.c.h.b16 %v4293
    %v4713 = vunpack.c.l.b16 %v4294
    %v4714 = vunpack.c.h.b16 %v4294
    %v4715 = vunpack.c.l.b16 %v4295
    %v4716 = vunpack.c.h.b16 %v4295
    %v4717 = vunpack.c.l.b16 %v4296
    %v4718 = vunpack.c.h.b16 %v4296
    %v4719 = vunpack.c.l.b16 %v4297
    %v4720 = vunpack.c.h.b16 %v4297
    %v4721 = vunpack.c.l.b16 %v4298
    %v4722 = vunpack.c.h.b16 %v4298
    %v4723 = vunpack.c.l.b16 %v4299
    %v4724 = vunpack.c.h.b16 %v4299
    %v4725 = vunpack.c.l.b16 %v4300
    %v4726 = vunpack.c.h.b16 %v4300
    %v4727 = vunpack.c.l.b16 %v4301
    %v4728 = vunpack.c.h.b16 %v4301
    %v4729 = vunpack.c.l.b16 %v4302
    %v4730 = vunpack.c.h.b16 %v4302
    %v4731 = vunpack.c.l.b16 %v4303
    %v4732 = vunpack.c.h.b16 %v4303
    %v4733 = vunpack.c.l.b16 %v4304
    %v4734 = vunpack.c.h.b16 %v4304
    %v4735 = vunpack.c.l.b16 %v4305
    %v4736 = vunpack.c.h.b16 %v4305
    %v4737 = vunpack.c.l.b16 %v4306
    %v4738 = vunpack.c.h.b16 %v4306
    %v4739 = vunpack.c.l.b16 %v4307
    %v4740 = vunpack.c.h.b16 %v4307
    %v4741 = vunpack.c.l.b16 %v4308
    %v4742 = vunpack.c.h.b16 %v4308
    %v4743 = vunpack.c.l.b16 %v4309
    %v4744 = vunpack.c.h.b16 %v4309
    %v4745 = vunpack.c.l.b16 %v4310
    %v4746 = vunpack.c.h.b16 %v4310
    %v4747 = vunpack.c.l.b16 %v4311
    %v4748 = vunpack.c.h.b16 %v4311
    %v4749 = vunpack.c.l.b16 %v4312
    %v4750 = vunpack.c.h.b16 %v4312
    %v4751 = vunpack.c.l.b16 %v4313
    %v4752 = vunpack.c.h.b16 %v4313
    %v4753 = vunpack.c.l.b16 %v4314
    %v4754 = vunpack.c.h.b16 %v4314
    %v4755 = vunpack.c.l.b16 %v4315
    %v4756 = vunpack.c.h.b16 %v4315
    %v4757 = vunpack.c.l.b16 %v4316
    %v4758 = vunpack.c.h.b16 %v4316
    %v4759 = vunpack.c.l.b16 %v4317
    %v4760 = vunpack.c.h.b16 %v4317
    %v4761 = vunpack.c.l.b16 %v4318
    %v4762 = vunpack.c.h.b16 %v4318
    %v4763 = vunpack.c.l.b16 %v4319
    %v4764 = vunpack.c.h.b16 %v4319
    %v4765 = vunpack.c.l.b16 %v4320
    %v4766 = vunpack.c.h.b16 %v4320
    %v4767 = vunpack.c.l.b16 %v4321
    %v4768 = vunpack.c.h.b16 %v4321
    %v4769 = vunpack.c.l.b16 %v4322
    %v4770 = vunpack.c.h.b16 %v4322
    %v4771 = vunpack.c.l.b16 %v4323
    %v4772 = vunpack.c.h.b16 %v4323
    %v4773 = vunpack.c.l.b16 %v4324
    %v4774 = vunpack.c.h.b16 %v4324
    %v4775 = vunpack.c.l.b16 %v4325
    %v4776 = vunpack.c.h.b16 %v4325
    %v4777 = vunpack.c.l.b16 %v4326
    %v4778 = vunpack.c.h.b16 %v4326
    %v4779 = vunpack.c.l.b16 %v4327
    %v4780 = vunpack.c.h.b16 %v4327
    %v4781 = vunpack.c.l.b16 %v4328
    %v4782 = vunpack.c.h.b16 %v4328
    %v4783 = vunpack.c.l.b16 %v4329
    %v4784 = vunpack.c.h.b16 %v4329
    %v4785 = vunpack.c.l.b16 %v4330
    %v4786 = vunpack.c.h.b16 %v4330
    %v4787 = vunpack.c.l.b16 %v4331
    %v4788 = vunpack.c.h.b16 %v4331
    %v4789 = vunpack.c.l.b16 %v4332
    %v4790 = vunpack.c.h.b16 %v4332
    %v4791 = vunpack.c.l.b16 %v4333
    %v4792 = vunpack.c.h.b16 %v4333
    %v4793 = vunpack.c.l.b16 %v4334
    %v4794 = vunpack.c.h.b16 %v4334
    %v4795 = vunpack.c.l.b16 %v4335
    %v4796 = vunpack.c.h.b16 %v4335
    %v4797 = vunpack.c.l.b16 %v4336
    %v4798 = vunpack.c.h.b16 %v4336
    %v4799 = vunpack.c.l.b16 %v4337
    %v4800 = vunpack.c.h.b16 %v4337
    %v4801 = vunpack.c.l.b16 %v4338
    %v4802 = vunpack.c.h.b16 %v4338
    %v4803 = vunpack.c.l.b16 %v4339
    %v4804 = vunpack.c.h.b16 %v4339
    %v4805 = vunpack.c.l.b16 %v4340
    %v4806 = vunpack.c.h.b16 %v4340
    %v4807 = vunpack.c.l.b16 %v4341
    %v4808 = vunpack.c.h.b16 %v4341
    %v4809 = vunpack.c.l.b16 %v4342
    %v4810 = vunpack.c.h.b16 %v4342
    %v4811 = vunpack.c.l.b16 %v4343
    %v4812 = vunpack.c.h.b16 %v4343
    %v4813 = vunpack.c.l.b16 %v4344
    %v4814 = vunpack.c.h.b16 %v4344
    %v4815 = vunpack.c.l.b16 %v4345
    %v4816 = vunpack.c.h.b16 %v4345
    %v4817 = vunpack.c.l.b16 %v4346
    %v4818 = vunpack.c.h.b16 %v4346
    %v4819 = vunpack.c.l.b16 %v4347
    %v4820 = vunpack.c.h.b16 %v4347
    %v4821 = vunpack.c.l.b16 %v4348
    %v4822 = vunpack.c.h.b16 %v4348
    %v4823 = vunpack.c.l.b16 %v4349
    %v4824 = vunpack.c.h.b16 %v4349
    %v4825 = vunpack.c.l.b16 %v4350
    %v4826 = vunpack.c.h.b16 %v4350
    %v4827 = vunpack.c.l.b16 %v4351
    %v4828 = vunpack.c.h.b16 %v4351
    %v4829 = vunpack.c.l.b16 %v4352
    %v4830 = vunpack.c.h.b16 %v4352
    %v4831 = vunpack.c.l.b16 %v4353
    %v4832 = vunpack.c.h.b16 %v4353
    %v4833 = vunpack.c.l.b16 %v4354
    %v4834 = vunpack.c.h.b16 %v4354
    %v4835 = vunpack.c.l.b16 %v4355
    %v4836 = vunpack.c.h.b16 %v4355
    %v4837 = vunpack.c.l.b16 %v4356
    %v4838 = vunpack.c.h.b16 %v4356
    %v4839 = vunpack.c.l.b16 %v4357
    %v4840 = vunpack.c.h.b16 %v4357
    %v4841 = vunpack.c.l.b16 %v4358
    %v4842 = vunpack.c.h.b16 %v4358
    %v4843 = vunpack.c.l.b16 %v4359
    %v4844 = vunpack.c.h.b16 %v4359
    %v4845 = vunpack.c.l.b16 %v4360
    %v4846 = vunpack.c.h.b16 %v4360
    %v4847 = vunpack.c.l.b16 %v4361
    %v4848 = vunpack.c.h.b16 %v4361
    %v4849 = vunpack.c.l.b16 %v4362
    %v4850 = vunpack.c.h.b16 %v4362
    %v4851 = vunpack.c.l.b16 %v4363
    %v4852 = vunpack.c.h.b16 %v4363
    %v4853 = vunpack.c.l.b16 %v4364
    %v4854 = vunpack.c.h.b16 %v4364
    %v4855 = vunpack.c.l.b16 %v4365
    %v4856 = vunpack.c.h.b16 %v4365
    %v4857 = vunpack.c.l.b16 %v4366
    %v4858 = vunpack.c.h.b16 %v4366
    %v4859 = vunpack.c.l.b16 %v4367
    %v4860 = vunpack.c.h.b16 %v4367
    %v4861 = vunpack.c.l.b16 %v4368
    %v4862 = vunpack.c.h.b16 %v4368
    %v4863 = vunpack.c.l.b16 %v4369
    %v4864 = vunpack.c.h.b16 %v4369
    %v4865 = vunpack.c.l.b16 %v4370
    %v4866 = vunpack.c.h.b16 %v4370
    %v4867 = vunpack.c.l.b16 %v4371
    %v4868 = vunpack.c.h.b16 %v4371
    %v4869 = vunpack.c.l.b16 %v4372
    %v4870 = vunpack.c.h.b16 %v4372
    %v4871 = vunpack.c.l.b16 %v4373
    %v4872 = vunpack.c.h.b16 %v4373
    %v4873 = vunpack.c.l.b16 %v4374
    %v4874 = vunpack.c.h.b16 %v4374
    %v4875 = vunpack.c.l.b16 %v4375
    %v4876 = vunpack.c.h.b16 %v4375
    %v4877 = vunpack.c.l.b16 %v4376
    %v4878 = vunpack.c.h.b16 %v4376
    %v4879 = vunpack.c.l.b16 %v4377
    %v4880 = vunpack.c.h.b16 %v4377
    %v4881 = vunpack.c.l.b16 %v4378
    %v4882 = vunpack.c.h.b16 %v4378
    %v4883 = vunpack.c.l.b16 %v4379
    %v4884 = vunpack.c.h.b16 %v4379
    %v4885 = vunpack.c.l.b16 %v4380
    %v4886 = vunpack.c.h.b16 %v4380
    %v4887 = vunpack.c.l.b16 %v4381
    %v4888 = vunpack.c.h.b16 %v4381
    %v4889 = vunpack.c.l.b16 %v4382
    %v4890 = vunpack.c.h.b16 %v4382
    %v4891 = vunpack.c.l.b16 %v4383
    %v4892 = vunpack.c.h.b16 %v4383
    %v4893 = vunpack.c.l.b16 %v4384
    %v4894 = vunpack.c.h.b16 %v4384
    %v4895 = vunpack.c.l.b16 %v4385
    %v4896 = vunpack.c.h.b16 %v4385
    %v4897 = vunpack.c.l.b16 %v4386
    %v4898 = vunpack.c.h.b16 %v4386
    %v4899 = vunpack.c.l.b16 %v4387
    %v4900 = vunpack.c.h.b16 %v4387
    %v4901 = vunpack.c.l.b16 %v4388
    %v4902 = vunpack.c.h.b16 %v4388
    %v4903 = vunpack.c.l.b16 %v4389
    %v4904 = vunpack.c.h.b16 %v4389
    %v4905 = vunpack.c.l.b16 %v4390
    %v4906 = vunpack.c.h.b16 %v4390
    %v4907 = vunpack.c.l.b16 %v4391
    %v4908 = vunpack.c.h.b16 %v4391
    %v4909 = vunpack.c.l.b16 %v4392
    %v4910 = vunpack.c.h.b16 %v4392
    %v4911 = vunpack.c.l.b16 %v4393
    %v4912 = vunpack.c.h.b16 %v4393
    %v4913 = vunpack.c.l.b16 %v4394
    %v4914 = vunpack.c.h.b16 %v4394
    %v4915 = vunpack.c.l.b16 %v4395
    %v4916 = vunpack.c.h.b16 %v4395
    %v4917 = vunpack.c.l.b16 %v4396
    %v4918 = vunpack.c.h.b16 %v4396
    %v4919 = vunpack.c.l.b16 %v4397
    %v4920 = vunpack.c.h.b16 %v4397
    %v4921 = vunpack.c.l.b16 %v4398
    %v4922 = vunpack.c.h.b16 %v4398
    %v4923 = vunpack.c.l.b16 %v4399
    %v4924 = vunpack.c.h.b16 %v4399
    %v4925 = vunpack.c.l.b16 %v4400
    %v4926 = vunpack.c.h.b16 %v4400
    %v4927 = vunpack.c.l.b16 %v4401
    %v4928 = vunpack.c.h.b16 %v4401
    %v4929 = vunpack.c.l.b16 %v4402
    %v4930 = vunpack.c.h.b16 %v4402
    %v4931 = vunpack.c.l.b16 %v4403
    %v4932 = vunpack.c.h.b16 %v4403
    %v4933 = vunpack.c.l.b16 %v4404
    %v4934 = vunpack.c.h.b16 %v4404
    %v4935 = vunpack.c.l.b16 %v4405
    %v4936 = vunpack.c.h.b16 %v4405
    %v4937 = vunpack.c.l.b16 %v4406
    %v4938 = vunpack.c.h.b16 %v4406
    %v4939 = vunpack.c.l.b16 %v4407
    %v4940 = vunpack.c.h.b16 %v4407
    %v4941 = vunpack.c.l.b16 %v4408
    %v4942 = vunpack.c.h.b16 %v4408
    %v4943 = vunpack.c.l.b16 %v4409
    %v4944 = vunpack.c.h.b16 %v4409
    %v4945 = vunpack.c.l.b16 %v4410
    %v4946 = vunpack.c.h.b16 %v4410
    %v4947 = vunpack.c.l.b16 %v4411
    %v4948 = vunpack.c.h.b16 %v4411
    %v4949 = vunpack.c.l.b16 %v4412
    %v4950 = vunpack.c.h.b16 %v4412
    %v4951 = vunpack.c.l.b16 %v4413
    %v4952 = vunpack.c.h.b16 %v4413
    %v4953 = vunpack.c.l.b16 %v4414
    %v4954 = vunpack.c.h.b16 %v4414
    %v4955 = vunpack.c.l.b16 %v4415
    %v4956 = vunpack.c.h.b16 %v4415
    %v4957 = vunpack.c.l.b16 %v4416
    %v4958 = vunpack.c.h.b16 %v4416
    %v4959 = vunpack.c.l.b16 %v4417
    %v4960 = vunpack.c.h.b16 %v4417
    %v4961 = vunpack.c.l.b16 %v4418
    %v4962 = vunpack.c.h.b16 %v4418
    %v4963 = vunpack.c.l.b16 %v4419
    %v4964 = vunpack.c.h.b16 %v4419
    %v4965 = vunpack.c.l.b16 %v4420
    %v4966 = vunpack.c.h.b16 %v4420
    %v4967 = vunpack.c.l.b16 %v4421
    %v4968 = vunpack.c.h.b16 %v4421
    %v4969 = vunpack.c.l.b16 %v4422
    %v4970 = vunpack.c.h.b16 %v4422
    %v4971 = vunpack.c.l.b16 %v4423
    %v4972 = vunpack.c.h.b16 %v4423
    %v4973 = vunpack.c.l.b16 %v4424
    %v4974 = vunpack.c.h.b16 %v4424
    %v4975 = vunpack.c.l.b16 %v4425
    %v4976 = vunpack.c.h.b16 %v4425
    %v4977 = vunpack.c.l.b16 %v4426
    %v4978 = vunpack.c.h.b16 %v4426
    %v4979 = vunpack.c.l.b16 %v4427
    %v4980 = vunpack.c.h.b16 %v4427
    %v4981 = vunpack.c.l.b16 %v4428
    %v4982 = vunpack.c.h.b16 %v4428
    %v4983 = vunpack.c.l.b16 %v4429
    %v4984 = vunpack.c.h.b16 %v4429
    %v4985 = vunpack.c.l.b16 %v4430
    %v4986 = vunpack.c.h.b16 %v4430
    %v4987 = vunpack.c.l.b16 %v4431
    %v4988 = vunpack.c.h.b16 %v4431
    %v4989 = vunpack.c.l.b16 %v4432
    %v4990 = vunpack.c.h.b16 %v4432
    %v4991 = vunpack.c.l.b16 %v4433
    %v4992 = vunpack.c.h.b16 %v4433
    %v4993 = vunpack.c.l.b16 %v4434
    %v4994 = vunpack.c.h.b16 %v4434
    %v4995 = vunpack.c.l.b16 %v4435
    %v4996 = vunpack.c.h.b16 %v4435
    %v4997 = vunpack.c.l.b16 %v4436
    %v4998 = vunpack.c.h.b16 %v4436
    %v4999 = vunpack.c.l.b16 %v4437
    %v5000 = vunpack.c.h.b16 %v4437
    %v5001 = vunpack.c.l.b16 %v4438
    %v5002 = vunpack.c.h.b16 %v4438
    %v5003 = vunpack.c.l.b16 %v4439
    %v5004 = vunpack.c.h.b16 %v4439
    %v5005 = vunpack.c.l.b16 %v4440
    %v5006 = vunpack.c.h.b16 %v4440
    %v5007 = vunpack.c.l.b16 %v4441
    %v5008 = vunpack.c.h.b16 %v4441
    %v5009 = vunpack.c.l.b16 %v4442
    %v5010 = vunpack.c.h.b16 %v4442
    %v5011 = vunpack.c.l.b16 %v4443
    %v5012 = vunpack.c.h.b16 %v4443
    %v5013 = vunpack.c.l.b16 %v4444
    %v5014 = vunpack.c.h.b16 %v4444
    %v5015 = vunpack.c.l.b16 %v4445
    %v5016 = vunpack.c.h.b16 %v4445
    %v5017 = vunpack.c.l.b16 %v4446
    %v5018 = vunpack.c.h.b16 %v4446
    %v5019 = vunpack.c.l.b16 %v4447
    %v5020 = vunpack.c.h.b16 %v4447
    %v5021 = vunpack.c.l.b16 %v4448
    %v5022 = vunpack.c.h.b16 %v4448
    %v5023 = vunpack.c.l.b16 %v4449
    %v5024 = vunpack.c.h.b16 %v4449
    %v5025 = vunpack.c.l.b16 %v4450
    %v5026 = vunpack.c.h.b16 %v4450
    %v5027 = vpack.c.b16 %v4645, %v4643
    %v5028 = vpack.c.b16 %v4646, %v4644
    %v5029 = vpack.c.b16 %v4649, %v4647
    %v5030 = vpack.c.b16 %v4650, %v4648
    %v5031 = vpack.c.b16 %v4653, %v4651
    %v5032 = vpack.c.b16 %v4654, %v4652
    %v5033 = vpack.c.b16 %v4657, %v4655
    %v5034 = vpack.c.b16 %v4658, %v4656
    %v5035 = vpack.c.b16 %v4661, %v4659
    %v5036 = vpack.c.b16 %v4662, %v4660
    %v5037 = vpack.c.b16 %v4665, %v4663
    %v5038 = vpack.c.b16 %v4666, %v4664
    %v5039 = vpack.c.b16 %v4669, %v4667
    %v5040 = vpack.c.b16 %v4670, %v4668
    %v5041 = vpack.c.b16 %v4673, %v4671
    %v5042 = vpack.c.b16 %v4674, %v4672
    %v5043 = vpack.c.b16 %v4677, %v4675
    %v5044 = vpack.c.b16 %v4678, %v4676
    %v5045 = vpack.c.b16 %v4681, %v4679
    %v5046 = vpack.c.b16 %v4682, %v4680
    %v5047 = vpack.c.b16 %v4685, %v4683
    %v5048 = vpack.c.b16 %v4686, %v4684
    %v5049 = vpack.c.b16 %v4689, %v4687
    %v5050 = vpack.c.b16 %v4690, %v4688
    %v5051 = vpack.c.b16 %v4693, %v4691
    %v5052 = vpack.c.b16 %v4694, %v4692
    %v5053 = vpack.c.b16 %v4697, %v4695
    %v5054 = vpack.c.b16 %v4698, %v4696
    %v5055 = vpack.c.b16 %v4701, %v4699
    %v5056 = vpack.c.b16 %v4702, %v4700
    %v5057 = vpack.c.b16 %v4705, %v4703
    %v5058 = vpack.c.b16 %v4706, %v4704
    %v5059 = vpack.c.b16 %v4709, %v4707
    %v5060 = vpack.c.b16 %v4710, %v4708
    %v5061 = vpack.c.b16 %v4713, %v4711
    %v5062 = vpack.c.b16 %v4714, %v4712
    %v5063 = vpack.c.b16 %v4717, %v4715
    %v5064 = vpack.c.b16 %v4718, %v4716
    %v5065 = vpack.c.b16 %v4721, %v4719
    %v5066 = vpack.c.b16 %v4722, %v4720
    %v5067 = vpack.c.b16 %v4725, %v4723
    %v5068 = vpack.c.b16 %v4726, %v4724
    %v5069 = vpack.c.b16 %v4729, %v4727
    %v5070 = vpack.c.b16 %v4730, %v4728
    %v5071 = vpack.c.b16 %v4733, %v4731
    %v5072 = vpack.c.b16 %v4734, %v4732
    %v5073 = vpack.c.b16 %v4737, %v4735
    %v5074 = vpack.c.b16 %v4738, %v4736
    %v5075 = vpack.c.b16 %v4741, %v4739
    %v5076 = vpack.c.b16 %v4742, %v4740
    %v5077 = vpack.c.b16 %v4745, %v4743
    %v5078 = vpack.c.b16 %v4746, %v4744
    %v5079 = vpack.c.b16 %v4749, %v4747
    %v5080 = vpack.c.b16 %v4750, %v4748
    %v5081 = vpack.c.b16 %v4753, %v4751
    %v5082 = vpack.c.b16 %v4754, %v4752
    %v5083 = vpack.c.b16 %v4757, %v4755
    %v5084 = vpack.c.b16 %v4758, %v4756
    %v5085 = vpack.c.b16 %v4761, %v4759
    %v5086 = vpack.c.b16 %v4762, %v4760
    %v5087 = vpack.c.b16 %v4765, %v4763
    %v5088 = vpack.c.b16 %v4766, %v4764
    %v5089 = vpack.c.b16 %v4769, %v4767
    %v5090 = vpack.c.b16 %v4770, %v4768
    %v5091 = vpack.c.b16 %v4773, %v4771
    %v5092 = vpack.c.b16 %v4774, %v4772
    %v5093 = vpack.c.b16 %v4777, %v4775
    %v5094 = vpack.c.b16 %v4778, %v4776
    %v5095 = vpack.c.b16 %v4781, %v4779
    %v5096 = vpack.c.b16 %v4782, %v4780
    %v5097 = vpack.c.b16 %v4785, %v4783
    %v5098 = vpack.c.b16 %v4786, %v4784
    %v5099 = vpack.c.b16 %v4789, %v4787
    %v5100 = vpack.c.b16 %v4790, %v4788
    %v5101 = vpack.c.b16 %v4793, %v4791
    %v5102 = vpack.c.b16 %v4794, %v4792
    %v5103 = vpack.c.b16 %v4797, %v4795
    %v5104 = vpack.c.b16 %v4798, %v4796
    %v5105 = vpack.c.b16 %v4801, %v4799
    %v5106 = vpack.c.b16 %v4802, %v4800
    %v5107 = vpack.c.b16 %v4805, %v4803
    %v5108 = vpack.c.b16 %v4806, %v4804
    %v5109 = vpack.c.b16 %v4809, %v4807
    %v5110 = vpack.c.b16 %v4810, %v4808
    %v5111 = vpack.c.b16 %v4813, %v4811
    %v5112 = vpack.c.b16 %v4814, %v4812
    %v5113 = vpack.c.b16 %v4817, %v4815
    %v5114 = vpack.c.b16 %v4818, %v4816
    %v5115 = vpack.c.b16 %v4821, %v4819
    %v5116 = vpack.c.b16 %v4822, %v4820
    %v5117 = vpack.c.b16 %v4825, %v4823
    %v5118 = vpack.c.b16 %v4826, %v4824
    %v5119 = vpack.c.b16 %v4829, %v4827
    %v5120 = vpack.c.b16 %v4830, %v4828
    %v5121 = vpack.c.b16 %v4833, %v4831
    %v5122 = vpack.c.b16 %v4834, %v4832
    %v5123 = vpack.c.b16 %v4837, %v4835
    %v5124 = vpack.c.b16 %v4838, %v4836
    %v5125 = vpack.c.b16 %v4841, %v4839
    %v5126 = vpack.c.b16 %v4842, %v4840
    %v5127 = vpack.c.b16 %v4845, %v4843
    %v5128 = vpack.c.b16 %v4846, %v4844
    %v5129 = vpack.c.b16 %v4849, %v4847
    %v5130 = vpack.c.b16 %v4850, %v4848
    %v5131 = vpack.c.b16 %v4853, %v4851
    %v5132 = vpack.c.b16 %v4854, %v4852
    %v5133 = vpack.c.b16 %v4857, %v4855
    %v5134 = vpack.c.b16 %v4858, %v4856
    %v5135 = vpack.c.b16 %v4861, %v4859
    %v5136 = vpack.c.b16 %v4862, %v4860
    %v5137 = vpack.c.b16 %v4865, %v4863
    %v5138 = vpack.c.b16 %v4866, %v4864
    %v5139 = vpack.c.b16 %v4869, %v4867
    %v5140 = vpack.c.b16 %v4870, %v4868
    %v5141 = vpack.c.b16 %v4873, %v4871
    %v5142 = vpack.c.b16 %v4874, %v4872
    %v5143 = vpack.c.b16 %v4877, %v4875
    %v5144 = vpack.c.b16 %v4878, %v4876
    %v5145 = vpack.c.b16 %v4881, %v4879
    %v5146 = vpack.c.b16 %v4882, %v4880
    %v5147 = vpack.c.b16 %v4885, %v4883
    %v5148 = vpack.c.b16 %v4886, %v4884
    %v5149 = vpack.c.b16 %v4889, %v4887
    %v5150 = vpack.c.b16 %v4890, %v4888
    %v5151 = vpack.c.b16 %v4893, %v4891
    %v5152 = vpack.c.b16 %v4894, %v4892
    %v5153 = vpack.c.b16 %v4897, %v4895
    %v5154 = vpack.c.b16 %v4898, %v4896
    %v5155 = vpack.c.b16 %v4901, %v4899
    %v5156 = vpack.c.b16 %v4902, %v4900
    %v5157 = vpack.c.b16 %v4905, %v4903
    %v5158 = vpack.c.b16 %v4906, %v4904
    %v5159 = vpack.c.b16 %v4909, %v4907
    %v5160 = vpack.c.b16 %v4910, %v4908
    %v5161 = vpack.c.b16 %v4913, %v4911
    %v5162 = vpack.c.b16 %v4914, %v4912
    %v5163 = vpack.c.b16 %v4917, %v4915
    %v5164 = vpack.c.b16 %v4918, %v4916
    %v5165 = vpack.c.b16 %v4921, %v4919
    %v5166 = vpack.c.b16 %v4922, %v4920
    %v5167 = vpack.c.b16 %v4925, %v4923
    %v5168 = vpack.c.b16 %v4926, %v4924
    %v5169 = vpack.c.b16 %v4929, %v4927
    %v5170 = vpack.c.b16 %v4930, %v4928
    %v5171 = vpack.c.b16 %v4933, %v4931
    %v5172 = vpack.c.b16 %v4934, %v4932
    %v5173 = vpack.c.b16 %v4937, %v4935
    %v5174 = vpack.c.b16 %v4938, %v4936
    %v5175 = vpack.c.b16 %v4941, %v4939
    %v5176 = vpack.c.b16 %v4942, %v4940
    %v5177 = vpack.c.b16 %v4945, %v4943
    %v5178 = vpack.c.b16 %v4946, %v4944
    %v5179 = vpack.c.b16 %v4949, %v4947
    %v5180 = vpack.c.b16 %v4950, %v4948
    %v5181 = vpack.c.b16 %v4953, %v4951
    %v5182 = vpack.c.b16 %v4954, %v4952
    %v5183 = vpack.c.b16 %v4957, %v4955
    %v5184 = vpack.c.b16 %v4958, %v4956
    %v5185 = vpack.c.b16 %v4961, %v4959
    %v5186 = vpack.c.b16 %v4962, %v4960
    %v5187 = vpack.c.b16 %v4965, %v4963
    %v5188 = vpack.c.b16 %v4966, %v4964
    %v5189 = vpack.c.b16 %v4969, %v4967
    %v5190 = vpack.c.b16 %v4970, %v4968
    %v5191 = vpack.c.b16 %v4973, %v4971
    %v5192 = vpack.c.b16 %v4974, %v4972
    %v5193 = vpack.c.b16 %v4977, %v4975
    %v5194 = vpack.c.b16 %v4978, %v4976
    %v5195 = vpack.c.b16 %v4981, %v4979
    %v5196 = vpack.c.b16 %v4982, %v4980
    %v5197 = vpack.c.b16 %v4985, %v4983
    %v5198 = vpack.c.b16 %v4986, %v4984
    %v5199 = vpack.c.b16 %v4989, %v4987
    %v5200 = vpack.c.b16 %v4990, %v4988
    %v5201 = vpack.c.b16 %v4993, %v4991
    %v5202 = vpack.c.b16 %v4994, %v4992
    %v5203 = vpack.c.b16 %v4997, %v4995
    %v5204 = vpack.c.b16 %v4998, %v4996
    %v5205 = vpack.c.b16 %v5001, %v4999
    %v5206 = vpack.c.b16 %v5002, %v5000
    %v5207 = vpack.c.b16 %v5005, %v5003
    %v5208 = vpack.c.b16 %v5006, %v5004
    %v5209 = vpack.c.b16 %v5009, %v5007
    %v5210 = vpack.c.b16 %v5010, %v5008
    %v5211 = vpack.c.b16 %v5013, %v5011
    %v5212 = vpack.c.b16 %v5014, %v5012
    %v5213 = vpack.c.b16 %v5017, %v5015
    %v5214 = vpack.c.b16 %v5018, %v5016
    %v5215 = vpack.c.b16 %v5021, %v5019
    %v5216 = vpack.c.b16 %v5022, %v5020
    %v5217 = vpack.c.b16 %v5025, %v5023
    %v5218 = vpack.c.b16 %v5026, %v5024
    %5411 = vmatprep.subr.bf16.mxu0 %v5042
    %5412 = vmatpush1.bf16.msra.mxu0 %v5041
    %5413 = vmatprep.subr.bf16.mxu0 %v5040
    %5414 = vmatpush1.bf16.msra.mxu0 %v5039
    %5415 = vmatprep.subr.bf16.mxu0 %v5038
    %5416 = vmatpush1.bf16.msra.mxu0 %v5037
    %5417 = vmatprep.subr.bf16.mxu0 %v5036
    %5418 = vmatpush1.bf16.msra.mxu0 %v5035
    %5419 = vmatprep.subr.bf16.mxu0 %v5034
    %5420 = vmatpush1.bf16.msra.mxu0 %v5033
    %5421 = vmatprep.subr.bf16.mxu0 %v5032
    %5422 = vmatpush1.bf16.msra.mxu0 %v5031
    %5423 = vmatprep.subr.bf16.mxu0 %v5030
    %5424 = vmatpush1.bf16.msra.mxu0 %v5029
    %5425 = vmatprep.subr.bf16.mxu0 %v5028
    %5426 = vmatpush1.bf16.msra.mxu0 %v5027
    %5427 = vmatprep.subr.bf16.mxu0 %v5058
    %5428 = vmatpush2.bf16.msra.mxu0 %v5057
    %5429 = vmatprep.subr.bf16.mxu0 %v5056
    %5430 = vmatpush2.bf16.msra.mxu0 %v5055
    %5431 = vmatprep.subr.bf16.mxu0 %v5054
    %5432 = vmatpush2.bf16.msra.mxu0 %v5053
    %5433 = vmatprep.subr.bf16.mxu0 %v5052
    %5434 = vmatpush2.bf16.msra.mxu0 %v5051
    %5435 = vmatprep.subr.bf16.mxu0 %v5050
    %5436 = vmatpush2.bf16.msra.mxu0 %v5049
    %5437 = vmatprep.subr.bf16.mxu0 %v5048
    %5438 = vmatpush2.bf16.msra.mxu0 %v5047
    %5439 = vmatprep.subr.bf16.mxu0 %v5046
    %5440 = vmatpush2.bf16.msra.mxu0 %v5045
    %5441 = vmatprep.subr.bf16.mxu0 %v5044
    %5442 = vmatpush2.bf16.msra.mxu0 %v5043
    %5443 = vmatprep.mubr.bf16.mxu0 %v1289
    %5444 = vmatmul.mubr.bf16.gmra.mxu0 %v1288
    %v5445 = vpop.f32.mrf.mxu0
    %v5446 = vadd.f32 0.0, %v5445
    %v5447 = vpop.f32.mrf.mxu0
    %v5448 = vadd.f32 0.0, %v5447
    %v5449 = vpop.f32.mrf.mxu0
    %v5450 = vadd.f32 0.0, %v5449
    %v5451 = vpop.f32.mrf.mxu0
    %v5452 = vadd.f32 0.0, %v5451
    %5453 = vmatprep.mubr.bf16.mxu0 %v1297
    %5454 = vmatmul.mubr.bf16.gmra.mxu0 %v1296
    %v5455 = vpop.f32.mrf.mxu0
    %v5456 = vadd.f32 0.0, %v5455
    %v5457 = vpop.f32.mrf.mxu0
    %v5458 = vadd.f32 0.0, %v5457
    %v5459 = vpop.f32.mrf.mxu0
    %v5460 = vadd.f32 0.0, %v5459
    %v5461 = vpop.f32.mrf.mxu0
    %v5462 = vadd.f32 0.0, %v5461
    %5463 = vdwg.mxu0
    %5464 = vmatprep.subr.bf16.mxu0 %v5074
    %5465 = vmatpush1.bf16.msra.mxu0 %v5073
    %5466 = vmatprep.subr.bf16.mxu0 %v5072
    %5467 = vmatpush1.bf16.msra.mxu0 %v5071
    %5468 = vmatprep.subr.bf16.mxu0 %v5070
    %5469 = vmatpush1.bf16.msra.mxu0 %v5069
    %5470 = vmatprep.subr.bf16.mxu0 %v5068
    %5471 = vmatpush1.bf16.msra.mxu0 %v5067
    %5472 = vmatprep.subr.bf16.mxu0 %v5066
    %5473 = vmatpush1.bf16.msra.mxu0 %v5065
    %5474 = vmatprep.subr.bf16.mxu0 %v5064
    %5475 = vmatpush1.bf16.msra.mxu0 %v5063
    %5476 = vmatprep.subr.bf16.mxu0 %v5062
    %5477 = vmatpush1.bf16.msra.mxu0 %v5061
    %5478 = vmatprep.subr.bf16.mxu0 %v5060
    %5479 = vmatpush1.bf16.msra.mxu0 %v5059
    %5480 = vmatprep.subr.bf16.mxu0 %v5090
    %5481 = vmatpush2.bf16.msra.mxu0 %v5089
    %5482 = vmatprep.subr.bf16.mxu0 %v5088
    %5483 = vmatpush2.bf16.msra.mxu0 %v5087
    %5484 = vmatprep.subr.bf16.mxu0 %v5086
    %5485 = vmatpush2.bf16.msra.mxu0 %v5085
    %5486 = vmatprep.subr.bf16.mxu0 %v5084
    %5487 = vmatpush2.bf16.msra.mxu0 %v5083
    %5488 = vmatprep.subr.bf16.mxu0 %v5082
    %5489 = vmatpush2.bf16.msra.mxu0 %v5081
    %5490 = vmatprep.subr.bf16.mxu0 %v5080
    %5491 = vmatpush2.bf16.msra.mxu0 %v5079
    %5492 = vmatprep.subr.bf16.mxu0 %v5078
    %5493 = vmatpush2.bf16.msra.mxu0 %v5077
    %5494 = vmatprep.subr.bf16.mxu0 %v5076
    %5495 = vmatpush2.bf16.msra.mxu0 %v5075
    %5496 = vmatprep.mubr.bf16.mxu0 %v1291
    %5497 = vmatmul.mubr.bf16.gmra.mxu0 %v1290
    %v5498 = vpop.f32.mrf.mxu0
    %v5499 = vadd.f32 %v5446, %v5498
    %v5500 = vpop.f32.mrf.mxu0
    %v5501 = vadd.f32 %v5448, %v5500
    %v5502 = vpop.f32.mrf.mxu0
    %v5503 = vadd.f32 %v5450, %v5502
    %v5504 = vpop.f32.mrf.mxu0
    %v5505 = vadd.f32 %v5452, %v5504
    %5506 = vmatprep.mubr.bf16.mxu0 %v1299
    %5507 = vmatmul.mubr.bf16.gmra.mxu0 %v1298
    %v5508 = vpop.f32.mrf.mxu0
    %v5509 = vadd.f32 %v5456, %v5508
    %v5510 = vpop.f32.mrf.mxu0
    %v5511 = vadd.f32 %v5458, %v5510
    %v5512 = vpop.f32.mrf.mxu0
    %v5513 = vadd.f32 %v5460, %v5512
    %v5514 = vpop.f32.mrf.mxu0
    %v5515 = vadd.f32 %v5462, %v5514
    %5516 = vdwg.mxu0
    %5517 = vmatprep.subr.bf16.mxu0 %v5106
    %5518 = vmatpush1.bf16.msra.mxu0 %v5105
    %5519 = vmatprep.subr.bf16.mxu0 %v5104
    %5520 = vmatpush1.bf16.msra.mxu0 %v5103
    %5521 = vmatprep.subr.bf16.mxu0 %v5102
    %5522 = vmatpush1.bf16.msra.mxu0 %v5101
    %5523 = vmatprep.subr.bf16.mxu0 %v5100
    %5524 = vmatpush1.bf16.msra.mxu0 %v5099
    %5525 = vmatprep.subr.bf16.mxu0 %v5098
    %5526 = vmatpush1.bf16.msra.mxu0 %v5097
    %5527 = vmatprep.subr.bf16.mxu0 %v5096
    %5528 = vmatpush1.bf16.msra.mxu0 %v5095
    %5529 = vmatprep.subr.bf16.mxu0 %v5094
    %5530 = vmatpush1.bf16.msra.mxu0 %v5093
    %5531 = vmatprep.subr.bf16.mxu0 %v5092
    %5532 = vmatpush1.bf16.msra.mxu0 %v5091
    %5533 = vmatprep.subr.bf16.mxu0 %v5122
    %5534 = vmatpush2.bf16.msra.mxu0 %v5121
    %5535 = vmatprep.subr.bf16.mxu0 %v5120
    %5536 = vmatpush2.bf16.msra.mxu0 %v5119
    %5537 = vmatprep.subr.bf16.mxu0 %v5118
    %5538 = vmatpush2.bf16.msra.mxu0 %v5117
    %5539 = vmatprep.subr.bf16.mxu0 %v5116
    %5540 = vmatpush2.bf16.msra.mxu0 %v5115
    %5541 = vmatprep.subr.bf16.mxu0 %v5114
    %5542 = vmatpush2.bf16.msra.mxu0 %v5113
    %5543 = vmatprep.subr.bf16.mxu0 %v5112
    %5544 = vmatpush2.bf16.msra.mxu0 %v5111
    %5545 = vmatprep.subr.bf16.mxu0 %v5110
    %5546 = vmatpush2.bf16.msra.mxu0 %v5109
    %5547 = vmatprep.subr.bf16.mxu0 %v5108
    %5548 = vmatpush2.bf16.msra.mxu0 %v5107
    %5549 = vmatprep.mubr.bf16.mxu0 %v1293
    %5550 = vmatmul.mubr.bf16.gmra.mxu0 %v1292
    %v5551 = vpop.f32.mrf.mxu0
    %v5552 = vadd.f32 %v5499, %v5551
    %v5553 = vpop.f32.mrf.mxu0
    %v5554 = vadd.f32 %v5501, %v5553
    %v5555 = vpop.f32.mrf.mxu0
    %v5556 = vadd.f32 %v5503, %v5555
    %v5557 = vpop.f32.mrf.mxu0
    %v5558 = vadd.f32 %v5505, %v5557
    %5559 = vmatprep.mubr.bf16.mxu0 %v1301
    %5560 = vmatmul.mubr.bf16.gmra.mxu0 %v1300
    %v5561 = vpop.f32.mrf.mxu0
    %v5562 = vadd.f32 %v5509, %v5561
    %v5563 = vpop.f32.mrf.mxu0
    %v5564 = vadd.f32 %v5511, %v5563
    %v5565 = vpop.f32.mrf.mxu0
    %v5566 = vadd.f32 %v5513, %v5565
    %v5567 = vpop.f32.mrf.mxu0
    %v5568 = vadd.f32 %v5515, %v5567
    %5569 = vdwg.mxu0
    %5570 = vmatprep.subr.bf16.mxu0 %v5138
    %5571 = vmatpush1.bf16.msra.mxu0 %v5137
    %5572 = vmatprep.subr.bf16.mxu0 %v5136
    %5573 = vmatpush1.bf16.msra.mxu0 %v5135
    %5574 = vmatprep.subr.bf16.mxu0 %v5134
    %5575 = vmatpush1.bf16.msra.mxu0 %v5133
    %5576 = vmatprep.subr.bf16.mxu0 %v5132
    %5577 = vmatpush1.bf16.msra.mxu0 %v5131
    %5578 = vmatprep.subr.bf16.mxu0 %v5130
    %5579 = vmatpush1.bf16.msra.mxu0 %v5129
    %5580 = vmatprep.subr.bf16.mxu0 %v5128
    %5581 = vmatpush1.bf16.msra.mxu0 %v5127
    %5582 = vmatprep.subr.bf16.mxu0 %v5126
    %5583 = vmatpush1.bf16.msra.mxu0 %v5125
    %5584 = vmatprep.subr.bf16.mxu0 %v5124
    %5585 = vmatpush1.bf16.msra.mxu0 %v5123
    %5586 = vmatprep.subr.bf16.mxu0 %v5154
    %5587 = vmatpush2.bf16.msra.mxu0 %v5153
    %5588 = vmatprep.subr.bf16.mxu0 %v5152
    %5589 = vmatpush2.bf16.msra.mxu0 %v5151
    %5590 = vmatprep.subr.bf16.mxu0 %v5150
    %5591 = vmatpush2.bf16.msra.mxu0 %v5149
    %5592 = vmatprep.subr.bf16.mxu0 %v5148
    %5593 = vmatpush2.bf16.msra.mxu0 %v5147
    %5594 = vmatprep.subr.bf16.mxu0 %v5146
    %5595 = vmatpush2.bf16.msra.mxu0 %v5145
    %5596 = vmatprep.subr.bf16.mxu0 %v5144
    %5597 = vmatpush2.bf16.msra.mxu0 %v5143
    %5598 = vmatprep.subr.bf16.mxu0 %v5142
    %5599 = vmatpush2.bf16.msra.mxu0 %v5141
    %5600 = vmatprep.subr.bf16.mxu0 %v5140
    %5601 = vmatpush2.bf16.msra.mxu0 %v5139
    %5602 = vmatprep.mubr.bf16.mxu0 %v1295
    %5603 = vmatmul.mubr.bf16.gmra.mxu0 %v1294
    %v5604 = vpop.f32.mrf.mxu0
    %v5605 = vadd.f32 %v5552, %v5604
    %v5606 = vpop.f32.mrf.mxu0
    %v5607 = vadd.f32 %v5554, %v5606
    %v5608 = vpop.f32.mrf.mxu0
    %v5609 = vadd.f32 %v5556, %v5608
    %v5610 = vpop.f32.mrf.mxu0
    %v5611 = vadd.f32 %v5558, %v5610
    %5612 = vmatprep.mubr.bf16.mxu0 %v1303
    %5613 = vmatmul.mubr.bf16.gmra.mxu0 %v1302
    %v5614 = vpop.f32.mrf.mxu0
    %v5615 = vadd.f32 %v5562, %v5614
    %v5616 = vpop.f32.mrf.mxu0
    %v5617 = vadd.f32 %v5564, %v5616
    %v5618 = vpop.f32.mrf.mxu0
    %v5619 = vadd.f32 %v5566, %v5618
    %v5620 = vpop.f32.mrf.mxu0
    %v5621 = vadd.f32 %v5568, %v5620
    %5622 = vdwg.mxu0
    %5623 = vmatprep.subr.bf16.mxu0 %v5170
    %5624 = vmatpush1.bf16.msra.mxu0 %v5169
    %5625 = vmatprep.subr.bf16.mxu0 %v5168
    %5626 = vmatpush1.bf16.msra.mxu0 %v5167
    %5627 = vmatprep.subr.bf16.mxu0 %v5166
    %5628 = vmatpush1.bf16.msra.mxu0 %v5165
    %5629 = vmatprep.subr.bf16.mxu0 %v5164
    %5630 = vmatpush1.bf16.msra.mxu0 %v5163
    %5631 = vmatprep.subr.bf16.mxu0 %v5162
    %5632 = vmatpush1.bf16.msra.mxu0 %v5161
    %5633 = vmatprep.subr.bf16.mxu0 %v5160
    %5634 = vmatpush1.bf16.msra.mxu0 %v5159
    %5635 = vmatprep.subr.bf16.mxu0 %v5158
    %5636 = vmatpush1.bf16.msra.mxu0 %v5157
    %5637 = vmatprep.subr.bf16.mxu0 %v5156
    %5638 = vmatpush1.bf16.msra.mxu0 %v5155
    %5639 = vmatprep.subr.bf16.mxu0 %v5186
    %5640 = vmatpush2.bf16.msra.mxu0 %v5185
    %5641 = vmatprep.subr.bf16.mxu0 %v5184
    %5642 = vmatpush2.bf16.msra.mxu0 %v5183
    %5643 = vmatprep.subr.bf16.mxu0 %v5182
    %5644 = vmatpush2.bf16.msra.mxu0 %v5181
    %5645 = vmatprep.subr.bf16.mxu0 %v5180
    %5646 = vmatpush2.bf16.msra.mxu0 %v5179
    %5647 = vmatprep.subr.bf16.mxu0 %v5178
    %5648 = vmatpush2.bf16.msra.mxu0 %v5177
    %5649 = vmatprep.subr.bf16.mxu0 %v5176
    %5650 = vmatpush2.bf16.msra.mxu0 %v5175
    %5651 = vmatprep.subr.bf16.mxu0 %v5174
    %5652 = vmatpush2.bf16.msra.mxu0 %v5173
    %5653 = vmatprep.subr.bf16.mxu0 %v5172
    %5654 = vmatpush2.bf16.msra.mxu0 %v5171
    %5655 = vmatprep.mubr.bf16.mxu0 %v1297
    %5656 = vmatmul.mubr.bf16.gmra.mxu0 %v1296
    %v5657 = vpop.f32.mrf.mxu0
    %v5658 = vadd.f32 %v5605, %v5657
    %v5659 = vpop.f32.mrf.mxu0
    %v5660 = vadd.f32 %v5607, %v5659
    %v5661 = vpop.f32.mrf.mxu0
    %v5662 = vadd.f32 %v5609, %v5661
    %v5663 = vpop.f32.mrf.mxu0
    %v5664 = vadd.f32 %v5611, %v5663
    %5665 = vmatprep.mubr.bf16.mxu0 %v1305
    %5666 = vmatmul.mubr.bf16.gmra.mxu0 %v1304
    %v5667 = vpop.f32.mrf.mxu0
    %v5668 = vadd.f32 %v5615, %v5667
    %v5669 = vpop.f32.mrf.mxu0
    %v5670 = vadd.f32 %v5617, %v5669
    %v5671 = vpop.f32.mrf.mxu0
    %v5672 = vadd.f32 %v5619, %v5671
    %v5673 = vpop.f32.mrf.mxu0
    %v5674 = vadd.f32 %v5621, %v5673
    %5675 = vdwg.mxu0
    %5676 = vmatprep.subr.bf16.mxu0 %v5202
    %5677 = vmatpush1.bf16.msra.mxu0 %v5201
    %5678 = vmatprep.subr.bf16.mxu0 %v5200
    %5679 = vmatpush1.bf16.msra.mxu0 %v5199
    %5680 = vmatprep.subr.bf16.mxu0 %v5198
    %5681 = vmatpush1.bf16.msra.mxu0 %v5197
    %5682 = vmatprep.subr.bf16.mxu0 %v5196
    %5683 = vmatpush1.bf16.msra.mxu0 %v5195
    %5684 = vmatprep.subr.bf16.mxu0 %v5194
    %5685 = vmatpush1.bf16.msra.mxu0 %v5193
    %5686 = vmatprep.subr.bf16.mxu0 %v5192
    %5687 = vmatpush1.bf16.msra.mxu0 %v5191
    %5688 = vmatprep.subr.bf16.mxu0 %v5190
    %5689 = vmatpush1.bf16.msra.mxu0 %v5189
    %5690 = vmatprep.subr.bf16.mxu0 %v5188
    %5691 = vmatpush1.bf16.msra.mxu0 %v5187
    %5692 = vmatprep.subr.bf16.mxu0 %v5218
    %5693 = vmatpush2.bf16.msra.mxu0 %v5217
    %5694 = vmatprep.subr.bf16.mxu0 %v5216
    %5695 = vmatpush2.bf16.msra.mxu0 %v5215
    %5696 = vmatprep.subr.bf16.mxu0 %v5214
    %5697 = vmatpush2.bf16.msra.mxu0 %v5213
    %5698 = vmatprep.subr.bf16.mxu0 %v5212
    %5699 = vmatpush2.bf16.msra.mxu0 %v5211
    %5700 = vmatprep.subr.bf16.mxu0 %v5210
    %5701 = vmatpush2.bf16.msra.mxu0 %v5209
    %5702 = vmatprep.subr.bf16.mxu0 %v5208
    %5703 = vmatpush2.bf16.msra.mxu0 %v5207
    %5704 = vmatprep.subr.bf16.mxu0 %v5206
    %5705 = vmatpush2.bf16.msra.mxu0 %v5205
    %5706 = vmatprep.subr.bf16.mxu0 %v5204
    %5707 = vmatpush2.bf16.msra.mxu0 %v5203
    %5708 = vmatprep.mubr.bf16.mxu0 %v1299
    %5709 = vmatmul.mubr.bf16.gmra.mxu0 %v1298
    %v5710 = vpop.f32.mrf.mxu0
    %v5711 = vadd.f32 %v5658, %v5710
    %v5712 = vpop.f32.mrf.mxu0
    %v5713 = vadd.f32 %v5660, %v5712
    %v5714 = vpop.f32.mrf.mxu0
    %v5715 = vadd.f32 %v5662, %v5714
    %v5716 = vpop.f32.mrf.mxu0
    %v5717 = vadd.f32 %v5664, %v5716
    %5718 = vmatprep.mubr.bf16.mxu0 %v1307
    %5719 = vmatmul.mubr.bf16.gmra.mxu0 %v1306
    %v5720 = vpop.f32.mrf.mxu0
    %v5721 = vadd.f32 %v5668, %v5720
    %v5722 = vpop.f32.mrf.mxu0
    %v5723 = vadd.f32 %v5670, %v5722
    %v5724 = vpop.f32.mrf.mxu0
    %v5725 = vadd.f32 %v5672, %v5724
    %v5726 = vpop.f32.mrf.mxu0
    %v5727 = vadd.f32 %v5674, %v5726
    %5728 = vdwg.mxu0
    %v5729 = vmax.f32 %v4250, %v5711
    %v5730 = vmax.f32 %v4251, %v5713
    %v5731 = vmax.f32 %v4252, %v5715
    %v5732 = vmax.f32 %v4253, %v5717
    %v5733 = vmax.f32 %v4254, %v5721
    %v5734 = vmax.f32 %v4255, %v5723
    %v5735 = vmax.f32 %v4256, %v5725
    %v5736 = vmax.f32 %v4257, %v5727
    %s5737 = scalar_lea.vmem [#allocation9], 4608
    %v5738 = vld [vmem:[%s5737] sm:$0xff]
    %v5739 = vld [vmem:[%s5737 + $0x8] sm:$0xff]
    %v5740 = vld [vmem:[%s5737 + $0x10] sm:$0xff]
    %v5741 = vld [vmem:[%s5737 + $0x18] sm:$0xff]
    %v5742 = vld [vmem:[%s5737 + $0x20] sm:$0xff]
    %v5743 = vld [vmem:[%s5737 + $0x28] sm:$0xff]
    %v5744 = vld [vmem:[%s5737 + $0x30] sm:$0xff]
    %v5745 = vld [vmem:[%s5737 + $0x38] sm:$0xff]
    %v5746 = vld [vmem:[%s5737 + $0x40] sm:$0xff]
    %v5747 = vld [vmem:[%s5737 + $0x48] sm:$0xff]
    %v5748 = vld [vmem:[%s5737 + $0x50] sm:$0xff]
    %v5749 = vld [vmem:[%s5737 + $0x58] sm:$0xff]
    %v5750 = vld [vmem:[%s5737 + $0x60] sm:$0xff]
    %v5751 = vld [vmem:[%s5737 + $0x68] sm:$0xff]
    %v5752 = vld [vmem:[%s5737 + $0x70] sm:$0xff]
    %v5753 = vld [vmem:[%s5737 + $0x78] sm:$0xff]
    %v5754 = vld [vmem:[%s5737 + $0x80] sm:$0xff]
    %v5755 = vld [vmem:[%s5737 + $0x88] sm:$0xff]
    %v5756 = vld [vmem:[%s5737 + $0x90] sm:$0xff]
    %v5757 = vld [vmem:[%s5737 + $0x98] sm:$0xff]
    %v5758 = vld [vmem:[%s5737 + $0xa0] sm:$0xff]
    %v5759 = vld [vmem:[%s5737 + $0xa8] sm:$0xff]
    %v5760 = vld [vmem:[%s5737 + $0xb0] sm:$0xff]
    %v5761 = vld [vmem:[%s5737 + $0xb8] sm:$0xff]
    %v5762 = vld [vmem:[%s5737 + $0xc0] sm:$0xff]
    %v5763 = vld [vmem:[%s5737 + $0xc8] sm:$0xff]
    %v5764 = vld [vmem:[%s5737 + $0xd0] sm:$0xff]
    %v5765 = vld [vmem:[%s5737 + $0xd8] sm:$0xff]
    %v5766 = vld [vmem:[%s5737 + $0xe0] sm:$0xff]
    %v5767 = vld [vmem:[%s5737 + $0xe8] sm:$0xff]
    %v5768 = vld [vmem:[%s5737 + $0xf0] sm:$0xff]
    %v5769 = vld [vmem:[%s5737 + $0xf8] sm:$0xff]
    %v5770 = vld [vmem:[%s5737 + $0x100] sm:$0xff]
    %v5771 = vld [vmem:[%s5737 + $0x108] sm:$0xff]
    %v5772 = vld [vmem:[%s5737 + $0x110] sm:$0xff]
    %v5773 = vld [vmem:[%s5737 + $0x118] sm:$0xff]
    %v5774 = vld [vmem:[%s5737 + $0x120] sm:$0xff]
    %v5775 = vld [vmem:[%s5737 + $0x128] sm:$0xff]
    %v5776 = vld [vmem:[%s5737 + $0x130] sm:$0xff]
    %v5777 = vld [vmem:[%s5737 + $0x138] sm:$0xff]
    %v5778 = vld [vmem:[%s5737 + $0x140] sm:$0xff]
    %v5779 = vld [vmem:[%s5737 + $0x148] sm:$0xff]
    %v5780 = vld [vmem:[%s5737 + $0x150] sm:$0xff]
    %v5781 = vld [vmem:[%s5737 + $0x158] sm:$0xff]
    %v5782 = vld [vmem:[%s5737 + $0x160] sm:$0xff]
    %v5783 = vld [vmem:[%s5737 + $0x168] sm:$0xff]
    %v5784 = vld [vmem:[%s5737 + $0x170] sm:$0xff]
    %v5785 = vld [vmem:[%s5737 + $0x178] sm:$0xff]
    %v5786 = vld [vmem:[%s5737 + $0x180] sm:$0xff]
    %v5787 = vld [vmem:[%s5737 + $0x188] sm:$0xff]
    %v5788 = vld [vmem:[%s5737 + $0x190] sm:$0xff]
    %v5789 = vld [vmem:[%s5737 + $0x198] sm:$0xff]
    %v5790 = vld [vmem:[%s5737 + $0x1a0] sm:$0xff]
    %v5791 = vld [vmem:[%s5737 + $0x1a8] sm:$0xff]
    %v5792 = vld [vmem:[%s5737 + $0x1b0] sm:$0xff]
    %v5793 = vld [vmem:[%s5737 + $0x1b8] sm:$0xff]
    %v5794 = vld [vmem:[%s5737 + $0x1c0] sm:$0xff]
    %v5795 = vld [vmem:[%s5737 + $0x1c8] sm:$0xff]
    %v5796 = vld [vmem:[%s5737 + $0x1d0] sm:$0xff]
    %v5797 = vld [vmem:[%s5737 + $0x1d8] sm:$0xff]
    %v5798 = vld [vmem:[%s5737 + $0x1e0] sm:$0xff]
    %v5799 = vld [vmem:[%s5737 + $0x1e8] sm:$0xff]
    %v5800 = vld [vmem:[%s5737 + $0x1f0] sm:$0xff]
    %v5801 = vld [vmem:[%s5737 + $0x1f8] sm:$0xff]
    %v5802 = vld [vmem:[%s5737 + $0x200] sm:$0xff]
    %v5803 = vld [vmem:[%s5737 + $0x208] sm:$0xff]
    %v5804 = vld [vmem:[%s5737 + $0x210] sm:$0xff]
    %v5805 = vld [vmem:[%s5737 + $0x218] sm:$0xff]
    %v5806 = vld [vmem:[%s5737 + $0x220] sm:$0xff]
    %v5807 = vld [vmem:[%s5737 + $0x228] sm:$0xff]
    %v5808 = vld [vmem:[%s5737 + $0x230] sm:$0xff]
    %v5809 = vld [vmem:[%s5737 + $0x238] sm:$0xff]
    %v5810 = vld [vmem:[%s5737 + $0x240] sm:$0xff]
    %v5811 = vld [vmem:[%s5737 + $0x248] sm:$0xff]
    %v5812 = vld [vmem:[%s5737 + $0x250] sm:$0xff]
    %v5813 = vld [vmem:[%s5737 + $0x258] sm:$0xff]
    %v5814 = vld [vmem:[%s5737 + $0x260] sm:$0xff]
    %v5815 = vld [vmem:[%s5737 + $0x268] sm:$0xff]
    %v5816 = vld [vmem:[%s5737 + $0x270] sm:$0xff]
    %v5817 = vld [vmem:[%s5737 + $0x278] sm:$0xff]
    %v5818 = vld [vmem:[%s5737 + $0x280] sm:$0xff]
    %v5819 = vld [vmem:[%s5737 + $0x288] sm:$0xff]
    %v5820 = vld [vmem:[%s5737 + $0x290] sm:$0xff]
    %v5821 = vld [vmem:[%s5737 + $0x298] sm:$0xff]
    %v5822 = vld [vmem:[%s5737 + $0x2a0] sm:$0xff]
    %v5823 = vld [vmem:[%s5737 + $0x2a8] sm:$0xff]
    %v5824 = vld [vmem:[%s5737 + $0x2b0] sm:$0xff]
    %v5825 = vld [vmem:[%s5737 + $0x2b8] sm:$0xff]
    %v5826 = vld [vmem:[%s5737 + $0x2c0] sm:$0xff]
    %v5827 = vld [vmem:[%s5737 + $0x2c8] sm:$0xff]
    %v5828 = vld [vmem:[%s5737 + $0x2d0] sm:$0xff]
    %v5829 = vld [vmem:[%s5737 + $0x2d8] sm:$0xff]
    %v5830 = vld [vmem:[%s5737 + $0x2e0] sm:$0xff]
    %v5831 = vld [vmem:[%s5737 + $0x2e8] sm:$0xff]
    %v5832 = vld [vmem:[%s5737 + $0x2f0] sm:$0xff]
    %v5833 = vld [vmem:[%s5737 + $0x2f8] sm:$0xff]
    %v5834 = vld [vmem:[%s5737 + $0x300] sm:$0xff]
    %v5835 = vld [vmem:[%s5737 + $0x308] sm:$0xff]
    %v5836 = vld [vmem:[%s5737 + $0x310] sm:$0xff]
    %v5837 = vld [vmem:[%s5737 + $0x318] sm:$0xff]
    %v5838 = vld [vmem:[%s5737 + $0x320] sm:$0xff]
    %v5839 = vld [vmem:[%s5737 + $0x328] sm:$0xff]
    %v5840 = vld [vmem:[%s5737 + $0x330] sm:$0xff]
    %v5841 = vld [vmem:[%s5737 + $0x338] sm:$0xff]
    %v5842 = vld [vmem:[%s5737 + $0x340] sm:$0xff]
    %v5843 = vld [vmem:[%s5737 + $0x348] sm:$0xff]
    %v5844 = vld [vmem:[%s5737 + $0x350] sm:$0xff]
    %v5845 = vld [vmem:[%s5737 + $0x358] sm:$0xff]
    %v5846 = vld [vmem:[%s5737 + $0x360] sm:$0xff]
    %v5847 = vld [vmem:[%s5737 + $0x368] sm:$0xff]
    %v5848 = vld [vmem:[%s5737 + $0x370] sm:$0xff]
    %v5849 = vld [vmem:[%s5737 + $0x378] sm:$0xff]
    %v5850 = vld [vmem:[%s5737 + $0x380] sm:$0xff]
    %v5851 = vld [vmem:[%s5737 + $0x388] sm:$0xff]
    %v5852 = vld [vmem:[%s5737 + $0x390] sm:$0xff]
    %v5853 = vld [vmem:[%s5737 + $0x398] sm:$0xff]
    %v5854 = vld [vmem:[%s5737 + $0x3a0] sm:$0xff]
    %v5855 = vld [vmem:[%s5737 + $0x3a8] sm:$0xff]
    %v5856 = vld [vmem:[%s5737 + $0x3b0] sm:$0xff]
    %v5857 = vld [vmem:[%s5737 + $0x3b8] sm:$0xff]
    %v5858 = vld [vmem:[%s5737 + $0x3c0] sm:$0xff]
    %v5859 = vld [vmem:[%s5737 + $0x3c8] sm:$0xff]
    %v5860 = vld [vmem:[%s5737 + $0x3d0] sm:$0xff]
    %v5861 = vld [vmem:[%s5737 + $0x3d8] sm:$0xff]
    %v5862 = vld [vmem:[%s5737 + $0x3e0] sm:$0xff]
    %v5863 = vld [vmem:[%s5737 + $0x3e8] sm:$0xff]
    %v5864 = vld [vmem:[%s5737 + $0x3f0] sm:$0xff]
    %v5865 = vld [vmem:[%s5737 + $0x3f8] sm:$0xff]
    %v5866 = vld [vmem:[%s5737 + $0x400] sm:$0xff]
    %v5867 = vld [vmem:[%s5737 + $0x408] sm:$0xff]
    %v5868 = vld [vmem:[%s5737 + $0x410] sm:$0xff]
    %v5869 = vld [vmem:[%s5737 + $0x418] sm:$0xff]
    %v5870 = vld [vmem:[%s5737 + $0x420] sm:$0xff]
    %v5871 = vld [vmem:[%s5737 + $0x428] sm:$0xff]
    %v5872 = vld [vmem:[%s5737 + $0x430] sm:$0xff]
    %v5873 = vld [vmem:[%s5737 + $0x438] sm:$0xff]
    %v5874 = vld [vmem:[%s5737 + $0x440] sm:$0xff]
    %v5875 = vld [vmem:[%s5737 + $0x448] sm:$0xff]
    %v5876 = vld [vmem:[%s5737 + $0x450] sm:$0xff]
    %v5877 = vld [vmem:[%s5737 + $0x458] sm:$0xff]
    %v5878 = vld [vmem:[%s5737 + $0x460] sm:$0xff]
    %v5879 = vld [vmem:[%s5737 + $0x468] sm:$0xff]
    %v5880 = vld [vmem:[%s5737 + $0x470] sm:$0xff]
    %v5881 = vld [vmem:[%s5737 + $0x478] sm:$0xff]
    %v5882 = vld [vmem:[%s5737 + $0x480] sm:$0xff]
    %v5883 = vld [vmem:[%s5737 + $0x488] sm:$0xff]
    %v5884 = vld [vmem:[%s5737 + $0x490] sm:$0xff]
    %v5885 = vld [vmem:[%s5737 + $0x498] sm:$0xff]
    %v5886 = vld [vmem:[%s5737 + $0x4a0] sm:$0xff]
    %v5887 = vld [vmem:[%s5737 + $0x4a8] sm:$0xff]
    %v5888 = vld [vmem:[%s5737 + $0x4b0] sm:$0xff]
    %v5889 = vld [vmem:[%s5737 + $0x4b8] sm:$0xff]
    %v5890 = vld [vmem:[%s5737 + $0x4c0] sm:$0xff]
    %v5891 = vld [vmem:[%s5737 + $0x4c8] sm:$0xff]
    %v5892 = vld [vmem:[%s5737 + $0x4d0] sm:$0xff]
    %v5893 = vld [vmem:[%s5737 + $0x4d8] sm:$0xff]
    %v5894 = vld [vmem:[%s5737 + $0x4e0] sm:$0xff]
    %v5895 = vld [vmem:[%s5737 + $0x4e8] sm:$0xff]
    %v5896 = vld [vmem:[%s5737 + $0x4f0] sm:$0xff]
    %v5897 = vld [vmem:[%s5737 + $0x4f8] sm:$0xff]
    %v5898 = vld [vmem:[%s5737 + $0x500] sm:$0xff]
    %v5899 = vld [vmem:[%s5737 + $0x508] sm:$0xff]
    %v5900 = vld [vmem:[%s5737 + $0x510] sm:$0xff]
    %v5901 = vld [vmem:[%s5737 + $0x518] sm:$0xff]
    %v5902 = vld [vmem:[%s5737 + $0x520] sm:$0xff]
    %v5903 = vld [vmem:[%s5737 + $0x528] sm:$0xff]
    %v5904 = vld [vmem:[%s5737 + $0x530] sm:$0xff]
    %v5905 = vld [vmem:[%s5737 + $0x538] sm:$0xff]
    %v5906 = vld [vmem:[%s5737 + $0x540] sm:$0xff]
    %v5907 = vld [vmem:[%s5737 + $0x548] sm:$0xff]
    %v5908 = vld [vmem:[%s5737 + $0x550] sm:$0xff]
    %v5909 = vld [vmem:[%s5737 + $0x558] sm:$0xff]
    %v5910 = vld [vmem:[%s5737 + $0x560] sm:$0xff]
    %v5911 = vld [vmem:[%s5737 + $0x568] sm:$0xff]
    %v5912 = vld [vmem:[%s5737 + $0x570] sm:$0xff]
    %v5913 = vld [vmem:[%s5737 + $0x578] sm:$0xff]
    %v5914 = vld [vmem:[%s5737 + $0x580] sm:$0xff]
    %v5915 = vld [vmem:[%s5737 + $0x588] sm:$0xff]
    %v5916 = vld [vmem:[%s5737 + $0x590] sm:$0xff]
    %v5917 = vld [vmem:[%s5737 + $0x598] sm:$0xff]
    %v5918 = vld [vmem:[%s5737 + $0x5a0] sm:$0xff]
    %v5919 = vld [vmem:[%s5737 + $0x5a8] sm:$0xff]
    %v5920 = vld [vmem:[%s5737 + $0x5b0] sm:$0xff]
    %v5921 = vld [vmem:[%s5737 + $0x5b8] sm:$0xff]
    %v5922 = vld [vmem:[%s5737 + $0x5c0] sm:$0xff]
    %v5923 = vld [vmem:[%s5737 + $0x5c8] sm:$0xff]
    %v5924 = vld [vmem:[%s5737 + $0x5d0] sm:$0xff]
    %v5925 = vld [vmem:[%s5737 + $0x5d8] sm:$0xff]
    %v5926 = vld [vmem:[%s5737 + $0x5e0] sm:$0xff]
    %v5927 = vld [vmem:[%s5737 + $0x5e8] sm:$0xff]
    %v5928 = vld [vmem:[%s5737 + $0x5f0] sm:$0xff]
    %v5929 = vld [vmem:[%s5737 + $0x5f8] sm:$0xff]
    %v6122 = vunpack.c.l.b16 %v5738
    %v6123 = vunpack.c.h.b16 %v5738
    %v6124 = vunpack.c.l.b16 %v5739
    %v6125 = vunpack.c.h.b16 %v5739
    %v6126 = vunpack.c.l.b16 %v5740
    %v6127 = vunpack.c.h.b16 %v5740
    %v6128 = vunpack.c.l.b16 %v5741
    %v6129 = vunpack.c.h.b16 %v5741
    %v6130 = vunpack.c.l.b16 %v5742
    %v6131 = vunpack.c.h.b16 %v5742
    %v6132 = vunpack.c.l.b16 %v5743
    %v6133 = vunpack.c.h.b16 %v5743
    %v6134 = vunpack.c.l.b16 %v5744
    %v6135 = vunpack.c.h.b16 %v5744
    %v6136 = vunpack.c.l.b16 %v5745
    %v6137 = vunpack.c.h.b16 %v5745
    %v6138 = vunpack.c.l.b16 %v5746
    %v6139 = vunpack.c.h.b16 %v5746
    %v6140 = vunpack.c.l.b16 %v5747
    %v6141 = vunpack.c.h.b16 %v5747
    %v6142 = vunpack.c.l.b16 %v5748
    %v6143 = vunpack.c.h.b16 %v5748
    %v6144 = vunpack.c.l.b16 %v5749
    %v6145 = vunpack.c.h.b16 %v5749
    %v6146 = vunpack.c.l.b16 %v5750
    %v6147 = vunpack.c.h.b16 %v5750
    %v6148 = vunpack.c.l.b16 %v5751
    %v6149 = vunpack.c.h.b16 %v5751
    %v6150 = vunpack.c.l.b16 %v5752
    %v6151 = vunpack.c.h.b16 %v5752
    %v6152 = vunpack.c.l.b16 %v5753
    %v6153 = vunpack.c.h.b16 %v5753
    %v6154 = vunpack.c.l.b16 %v5754
    %v6155 = vunpack.c.h.b16 %v5754
    %v6156 = vunpack.c.l.b16 %v5755
    %v6157 = vunpack.c.h.b16 %v5755
    %v6158 = vunpack.c.l.b16 %v5756
    %v6159 = vunpack.c.h.b16 %v5756
    %v6160 = vunpack.c.l.b16 %v5757
    %v6161 = vunpack.c.h.b16 %v5757
    %v6162 = vunpack.c.l.b16 %v5758
    %v6163 = vunpack.c.h.b16 %v5758
    %v6164 = vunpack.c.l.b16 %v5759
    %v6165 = vunpack.c.h.b16 %v5759
    %v6166 = vunpack.c.l.b16 %v5760
    %v6167 = vunpack.c.h.b16 %v5760
    %v6168 = vunpack.c.l.b16 %v5761
    %v6169 = vunpack.c.h.b16 %v5761
    %v6170 = vunpack.c.l.b16 %v5762
    %v6171 = vunpack.c.h.b16 %v5762
    %v6172 = vunpack.c.l.b16 %v5763
    %v6173 = vunpack.c.h.b16 %v5763
    %v6174 = vunpack.c.l.b16 %v5764
    %v6175 = vunpack.c.h.b16 %v5764
    %v6176 = vunpack.c.l.b16 %v5765
    %v6177 = vunpack.c.h.b16 %v5765
    %v6178 = vunpack.c.l.b16 %v5766
    %v6179 = vunpack.c.h.b16 %v5766
    %v6180 = vunpack.c.l.b16 %v5767
    %v6181 = vunpack.c.h.b16 %v5767
    %v6182 = vunpack.c.l.b16 %v5768
    %v6183 = vunpack.c.h.b16 %v5768
    %v6184 = vunpack.c.l.b16 %v5769
    %v6185 = vunpack.c.h.b16 %v5769
    %v6186 = vunpack.c.l.b16 %v5770
    %v6187 = vunpack.c.h.b16 %v5770
    %v6188 = vunpack.c.l.b16 %v5771
    %v6189 = vunpack.c.h.b16 %v5771
    %v6190 = vunpack.c.l.b16 %v5772
    %v6191 = vunpack.c.h.b16 %v5772
    %v6192 = vunpack.c.l.b16 %v5773
    %v6193 = vunpack.c.h.b16 %v5773
    %v6194 = vunpack.c.l.b16 %v5774
    %v6195 = vunpack.c.h.b16 %v5774
    %v6196 = vunpack.c.l.b16 %v5775
    %v6197 = vunpack.c.h.b16 %v5775
    %v6198 = vunpack.c.l.b16 %v5776
    %v6199 = vunpack.c.h.b16 %v5776
    %v6200 = vunpack.c.l.b16 %v5777
    %v6201 = vunpack.c.h.b16 %v5777
    %v6202 = vunpack.c.l.b16 %v5778
    %v6203 = vunpack.c.h.b16 %v5778
    %v6204 = vunpack.c.l.b16 %v5779
    %v6205 = vunpack.c.h.b16 %v5779
    %v6206 = vunpack.c.l.b16 %v5780
    %v6207 = vunpack.c.h.b16 %v5780
    %v6208 = vunpack.c.l.b16 %v5781
    %v6209 = vunpack.c.h.b16 %v5781
    %v6210 = vunpack.c.l.b16 %v5782
    %v6211 = vunpack.c.h.b16 %v5782
    %v6212 = vunpack.c.l.b16 %v5783
    %v6213 = vunpack.c.h.b16 %v5783
    %v6214 = vunpack.c.l.b16 %v5784
    %v6215 = vunpack.c.h.b16 %v5784
    %v6216 = vunpack.c.l.b16 %v5785
    %v6217 = vunpack.c.h.b16 %v5785
    %v6218 = vunpack.c.l.b16 %v5786
    %v6219 = vunpack.c.h.b16 %v5786
    %v6220 = vunpack.c.l.b16 %v5787
    %v6221 = vunpack.c.h.b16 %v5787
    %v6222 = vunpack.c.l.b16 %v5788
    %v6223 = vunpack.c.h.b16 %v5788
    %v6224 = vunpack.c.l.b16 %v5789
    %v6225 = vunpack.c.h.b16 %v5789
    %v6226 = vunpack.c.l.b16 %v5790
    %v6227 = vunpack.c.h.b16 %v5790
    %v6228 = vunpack.c.l.b16 %v5791
    %v6229 = vunpack.c.h.b16 %v5791
    %v6230 = vunpack.c.l.b16 %v5792
    %v6231 = vunpack.c.h.b16 %v5792
    %v6232 = vunpack.c.l.b16 %v5793
    %v6233 = vunpack.c.h.b16 %v5793
    %v6234 = vunpack.c.l.b16 %v5794
    %v6235 = vunpack.c.h.b16 %v5794
    %v6236 = vunpack.c.l.b16 %v5795
    %v6237 = vunpack.c.h.b16 %v5795
    %v6238 = vunpack.c.l.b16 %v5796
    %v6239 = vunpack.c.h.b16 %v5796
    %v6240 = vunpack.c.l.b16 %v5797
    %v6241 = vunpack.c.h.b16 %v5797
    %v6242 = vunpack.c.l.b16 %v5798
    %v6243 = vunpack.c.h.b16 %v5798
    %v6244 = vunpack.c.l.b16 %v5799
    %v6245 = vunpack.c.h.b16 %v5799
    %v6246 = vunpack.c.l.b16 %v5800
    %v6247 = vunpack.c.h.b16 %v5800
    %v6248 = vunpack.c.l.b16 %v5801
    %v6249 = vunpack.c.h.b16 %v5801
    %v6250 = vunpack.c.l.b16 %v5802
    %v6251 = vunpack.c.h.b16 %v5802
    %v6252 = vunpack.c.l.b16 %v5803
    %v6253 = vunpack.c.h.b16 %v5803
    %v6254 = vunpack.c.l.b16 %v5804
    %v6255 = vunpack.c.h.b16 %v5804
    %v6256 = vunpack.c.l.b16 %v5805
    %v6257 = vunpack.c.h.b16 %v5805
    %v6258 = vunpack.c.l.b16 %v5806
    %v6259 = vunpack.c.h.b16 %v5806
    %v6260 = vunpack.c.l.b16 %v5807
    %v6261 = vunpack.c.h.b16 %v5807
    %v6262 = vunpack.c.l.b16 %v5808
    %v6263 = vunpack.c.h.b16 %v5808
    %v6264 = vunpack.c.l.b16 %v5809
    %v6265 = vunpack.c.h.b16 %v5809
    %v6266 = vunpack.c.l.b16 %v5810
    %v6267 = vunpack.c.h.b16 %v5810
    %v6268 = vunpack.c.l.b16 %v5811
    %v6269 = vunpack.c.h.b16 %v5811
    %v6270 = vunpack.c.l.b16 %v5812
    %v6271 = vunpack.c.h.b16 %v5812
    %v6272 = vunpack.c.l.b16 %v5813
    %v6273 = vunpack.c.h.b16 %v5813
    %v6274 = vunpack.c.l.b16 %v5814
    %v6275 = vunpack.c.h.b16 %v5814
    %v6276 = vunpack.c.l.b16 %v5815
    %v6277 = vunpack.c.h.b16 %v5815
    %v6278 = vunpack.c.l.b16 %v5816
    %v6279 = vunpack.c.h.b16 %v5816
    %v6280 = vunpack.c.l.b16 %v5817
    %v6281 = vunpack.c.h.b16 %v5817
    %v6282 = vunpack.c.l.b16 %v5818
    %v6283 = vunpack.c.h.b16 %v5818
    %v6284 = vunpack.c.l.b16 %v5819
    %v6285 = vunpack.c.h.b16 %v5819
    %v6286 = vunpack.c.l.b16 %v5820
    %v6287 = vunpack.c.h.b16 %v5820
    %v6288 = vunpack.c.l.b16 %v5821
    %v6289 = vunpack.c.h.b16 %v5821
    %v6290 = vunpack.c.l.b16 %v5822
    %v6291 = vunpack.c.h.b16 %v5822
    %v6292 = vunpack.c.l.b16 %v5823
    %v6293 = vunpack.c.h.b16 %v5823
    %v6294 = vunpack.c.l.b16 %v5824
    %v6295 = vunpack.c.h.b16 %v5824
    %v6296 = vunpack.c.l.b16 %v5825
    %v6297 = vunpack.c.h.b16 %v5825
    %v6298 = vunpack.c.l.b16 %v5826
    %v6299 = vunpack.c.h.b16 %v5826
    %v6300 = vunpack.c.l.b16 %v5827
    %v6301 = vunpack.c.h.b16 %v5827
    %v6302 = vunpack.c.l.b16 %v5828
    %v6303 = vunpack.c.h.b16 %v5828
    %v6304 = vunpack.c.l.b16 %v5829
    %v6305 = vunpack.c.h.b16 %v5829
    %v6306 = vunpack.c.l.b16 %v5830
    %v6307 = vunpack.c.h.b16 %v5830
    %v6308 = vunpack.c.l.b16 %v5831
    %v6309 = vunpack.c.h.b16 %v5831
    %v6310 = vunpack.c.l.b16 %v5832
    %v6311 = vunpack.c.h.b16 %v5832
    %v6312 = vunpack.c.l.b16 %v5833
    %v6313 = vunpack.c.h.b16 %v5833
    %v6314 = vunpack.c.l.b16 %v5834
    %v6315 = vunpack.c.h.b16 %v5834
    %v6316 = vunpack.c.l.b16 %v5835
    %v6317 = vunpack.c.h.b16 %v5835
    %v6318 = vunpack.c.l.b16 %v5836
    %v6319 = vunpack.c.h.b16 %v5836
    %v6320 = vunpack.c.l.b16 %v5837
    %v6321 = vunpack.c.h.b16 %v5837
    %v6322 = vunpack.c.l.b16 %v5838
    %v6323 = vunpack.c.h.b16 %v5838
    %v6324 = vunpack.c.l.b16 %v5839
    %v6325 = vunpack.c.h.b16 %v5839
    %v6326 = vunpack.c.l.b16 %v5840
    %v6327 = vunpack.c.h.b16 %v5840
    %v6328 = vunpack.c.l.b16 %v5841
    %v6329 = vunpack.c.h.b16 %v5841
    %v6330 = vunpack.c.l.b16 %v5842
    %v6331 = vunpack.c.h.b16 %v5842
    %v6332 = vunpack.c.l.b16 %v5843
    %v6333 = vunpack.c.h.b16 %v5843
    %v6334 = vunpack.c.l.b16 %v5844
    %v6335 = vunpack.c.h.b16 %v5844
    %v6336 = vunpack.c.l.b16 %v5845
    %v6337 = vunpack.c.h.b16 %v5845
    %v6338 = vunpack.c.l.b16 %v5846
    %v6339 = vunpack.c.h.b16 %v5846
    %v6340 = vunpack.c.l.b16 %v5847
    %v6341 = vunpack.c.h.b16 %v5847
    %v6342 = vunpack.c.l.b16 %v5848
    %v6343 = vunpack.c.h.b16 %v5848
    %v6344 = vunpack.c.l.b16 %v5849
    %v6345 = vunpack.c.h.b16 %v5849
    %v6346 = vunpack.c.l.b16 %v5850
    %v6347 = vunpack.c.h.b16 %v5850
    %v6348 = vunpack.c.l.b16 %v5851
    %v6349 = vunpack.c.h.b16 %v5851
    %v6350 = vunpack.c.l.b16 %v5852
    %v6351 = vunpack.c.h.b16 %v5852
    %v6352 = vunpack.c.l.b16 %v5853
    %v6353 = vunpack.c.h.b16 %v5853
    %v6354 = vunpack.c.l.b16 %v5854
    %v6355 = vunpack.c.h.b16 %v5854
    %v6356 = vunpack.c.l.b16 %v5855
    %v6357 = vunpack.c.h.b16 %v5855
    %v6358 = vunpack.c.l.b16 %v5856
    %v6359 = vunpack.c.h.b16 %v5856
    %v6360 = vunpack.c.l.b16 %v5857
    %v6361 = vunpack.c.h.b16 %v5857
    %v6362 = vunpack.c.l.b16 %v5858
    %v6363 = vunpack.c.h.b16 %v5858
    %v6364 = vunpack.c.l.b16 %v5859
    %v6365 = vunpack.c.h.b16 %v5859
    %v6366 = vunpack.c.l.b16 %v5860
    %v6367 = vunpack.c.h.b16 %v5860
    %v6368 = vunpack.c.l.b16 %v5861
    %v6369 = vunpack.c.h.b16 %v5861
    %v6370 = vunpack.c.l.b16 %v5862
    %v6371 = vunpack.c.h.b16 %v5862
    %v6372 = vunpack.c.l.b16 %v5863
    %v6373 = vunpack.c.h.b16 %v5863
    %v6374 = vunpack.c.l.b16 %v5864
    %v6375 = vunpack.c.h.b16 %v5864
    %v6376 = vunpack.c.l.b16 %v5865
    %v6377 = vunpack.c.h.b16 %v5865
    %v6378 = vunpack.c.l.b16 %v5866
    %v6379 = vunpack.c.h.b16 %v5866
    %v6380 = vunpack.c.l.b16 %v5867
    %v6381 = vunpack.c.h.b16 %v5867
    %v6382 = vunpack.c.l.b16 %v5868
    %v6383 = vunpack.c.h.b16 %v5868
    %v6384 = vunpack.c.l.b16 %v5869
    %v6385 = vunpack.c.h.b16 %v5869
    %v6386 = vunpack.c.l.b16 %v5870
    %v6387 = vunpack.c.h.b16 %v5870
    %v6388 = vunpack.c.l.b16 %v5871
    %v6389 = vunpack.c.h.b16 %v5871
    %v6390 = vunpack.c.l.b16 %v5872
    %v6391 = vunpack.c.h.b16 %v5872
    %v6392 = vunpack.c.l.b16 %v5873
    %v6393 = vunpack.c.h.b16 %v5873
    %v6394 = vunpack.c.l.b16 %v5874
    %v6395 = vunpack.c.h.b16 %v5874
    %v6396 = vunpack.c.l.b16 %v5875
    %v6397 = vunpack.c.h.b16 %v5875
    %v6398 = vunpack.c.l.b16 %v5876
    %v6399 = vunpack.c.h.b16 %v5876
    %v6400 = vunpack.c.l.b16 %v5877
    %v6401 = vunpack.c.h.b16 %v5877
    %v6402 = vunpack.c.l.b16 %v5878
    %v6403 = vunpack.c.h.b16 %v5878
    %v6404 = vunpack.c.l.b16 %v5879
    %v6405 = vunpack.c.h.b16 %v5879
    %v6406 = vunpack.c.l.b16 %v5880
    %v6407 = vunpack.c.h.b16 %v5880
    %v6408 = vunpack.c.l.b16 %v5881
    %v6409 = vunpack.c.h.b16 %v5881
    %v6410 = vunpack.c.l.b16 %v5882
    %v6411 = vunpack.c.h.b16 %v5882
    %v6412 = vunpack.c.l.b16 %v5883
    %v6413 = vunpack.c.h.b16 %v5883
    %v6414 = vunpack.c.l.b16 %v5884
    %v6415 = vunpack.c.h.b16 %v5884
    %v6416 = vunpack.c.l.b16 %v5885
    %v6417 = vunpack.c.h.b16 %v5885
    %v6418 = vunpack.c.l.b16 %v5886
    %v6419 = vunpack.c.h.b16 %v5886
    %v6420 = vunpack.c.l.b16 %v5887
    %v6421 = vunpack.c.h.b16 %v5887
    %v6422 = vunpack.c.l.b16 %v5888
    %v6423 = vunpack.c.h.b16 %v5888
    %v6424 = vunpack.c.l.b16 %v5889
    %v6425 = vunpack.c.h.b16 %v5889
    %v6426 = vunpack.c.l.b16 %v5890
    %v6427 = vunpack.c.h.b16 %v5890
    %v6428 = vunpack.c.l.b16 %v5891
    %v6429 = vunpack.c.h.b16 %v5891
    %v6430 = vunpack.c.l.b16 %v5892
    %v6431 = vunpack.c.h.b16 %v5892
    %v6432 = vunpack.c.l.b16 %v5893
    %v6433 = vunpack.c.h.b16 %v5893
    %v6434 = vunpack.c.l.b16 %v5894
    %v6435 = vunpack.c.h.b16 %v5894
    %v6436 = vunpack.c.l.b16 %v5895
    %v6437 = vunpack.c.h.b16 %v5895
    %v6438 = vunpack.c.l.b16 %v5896
    %v6439 = vunpack.c.h.b16 %v5896
    %v6440 = vunpack.c.l.b16 %v5897
    %v6441 = vunpack.c.h.b16 %v5897
    %v6442 = vunpack.c.l.b16 %v5898
    %v6443 = vunpack.c.h.b16 %v5898
    %v6444 = vunpack.c.l.b16 %v5899
    %v6445 = vunpack.c.h.b16 %v5899
    %v6446 = vunpack.c.l.b16 %v5900
    %v6447 = vunpack.c.h.b16 %v5900
    %v6448 = vunpack.c.l.b16 %v5901
    %v6449 = vunpack.c.h.b16 %v5901
    %v6450 = vunpack.c.l.b16 %v5902
    %v6451 = vunpack.c.h.b16 %v5902
    %v6452 = vunpack.c.l.b16 %v5903
    %v6453 = vunpack.c.h.b16 %v5903
    %v6454 = vunpack.c.l.b16 %v5904
    %v6455 = vunpack.c.h.b16 %v5904
    %v6456 = vunpack.c.l.b16 %v5905
    %v6457 = vunpack.c.h.b16 %v5905
    %v6458 = vunpack.c.l.b16 %v5906
    %v6459 = vunpack.c.h.b16 %v5906
    %v6460 = vunpack.c.l.b16 %v5907
    %v6461 = vunpack.c.h.b16 %v5907
    %v6462 = vunpack.c.l.b16 %v5908
    %v6463 = vunpack.c.h.b16 %v5908
    %v6464 = vunpack.c.l.b16 %v5909
    %v6465 = vunpack.c.h.b16 %v5909
    %v6466 = vunpack.c.l.b16 %v5910
    %v6467 = vunpack.c.h.b16 %v5910
    %v6468 = vunpack.c.l.b16 %v5911
    %v6469 = vunpack.c.h.b16 %v5911
    %v6470 = vunpack.c.l.b16 %v5912
    %v6471 = vunpack.c.h.b16 %v5912
    %v6472 = vunpack.c.l.b16 %v5913
    %v6473 = vunpack.c.h.b16 %v5913
    %v6474 = vunpack.c.l.b16 %v5914
    %v6475 = vunpack.c.h.b16 %v5914
    %v6476 = vunpack.c.l.b16 %v5915
    %v6477 = vunpack.c.h.b16 %v5915
    %v6478 = vunpack.c.l.b16 %v5916
    %v6479 = vunpack.c.h.b16 %v5916
    %v6480 = vunpack.c.l.b16 %v5917
    %v6481 = vunpack.c.h.b16 %v5917
    %v6482 = vunpack.c.l.b16 %v5918
    %v6483 = vunpack.c.h.b16 %v5918
    %v6484 = vunpack.c.l.b16 %v5919
    %v6485 = vunpack.c.h.b16 %v5919
    %v6486 = vunpack.c.l.b16 %v5920
    %v6487 = vunpack.c.h.b16 %v5920
    %v6488 = vunpack.c.l.b16 %v5921
    %v6489 = vunpack.c.h.b16 %v5921
    %v6490 = vunpack.c.l.b16 %v5922
    %v6491 = vunpack.c.h.b16 %v5922
    %v6492 = vunpack.c.l.b16 %v5923
    %v6493 = vunpack.c.h.b16 %v5923
    %v6494 = vunpack.c.l.b16 %v5924
    %v6495 = vunpack.c.h.b16 %v5924
    %v6496 = vunpack.c.l.b16 %v5925
    %v6497 = vunpack.c.h.b16 %v5925
    %v6498 = vunpack.c.l.b16 %v5926
    %v6499 = vunpack.c.h.b16 %v5926
    %v6500 = vunpack.c.l.b16 %v5927
    %v6501 = vunpack.c.h.b16 %v5927
    %v6502 = vunpack.c.l.b16 %v5928
    %v6503 = vunpack.c.h.b16 %v5928
    %v6504 = vunpack.c.l.b16 %v5929
    %v6505 = vunpack.c.h.b16 %v5929
    %v6506 = vpack.c.b16 %v6124, %v6122
    %v6507 = vpack.c.b16 %v6125, %v6123
    %v6508 = vpack.c.b16 %v6128, %v6126
    %v6509 = vpack.c.b16 %v6129, %v6127
    %v6510 = vpack.c.b16 %v6132, %v6130
    %v6511 = vpack.c.b16 %v6133, %v6131
    %v6512 = vpack.c.b16 %v6136, %v6134
    %v6513 = vpack.c.b16 %v6137, %v6135
    %v6514 = vpack.c.b16 %v6140, %v6138
    %v6515 = vpack.c.b16 %v6141, %v6139
    %v6516 = vpack.c.b16 %v6144, %v6142
    %v6517 = vpack.c.b16 %v6145, %v6143
    %v6518 = vpack.c.b16 %v6148, %v6146
    %v6519 = vpack.c.b16 %v6149, %v6147
    %v6520 = vpack.c.b16 %v6152, %v6150
    %v6521 = vpack.c.b16 %v6153, %v6151
    %v6522 = vpack.c.b16 %v6156, %v6154
    %v6523 = vpack.c.b16 %v6157, %v6155
    %v6524 = vpack.c.b16 %v6160, %v6158
    %v6525 = vpack.c.b16 %v6161, %v6159
    %v6526 = vpack.c.b16 %v6164, %v6162
    %v6527 = vpack.c.b16 %v6165, %v6163
    %v6528 = vpack.c.b16 %v6168, %v6166
    %v6529 = vpack.c.b16 %v6169, %v6167
    %v6530 = vpack.c.b16 %v6172, %v6170
    %v6531 = vpack.c.b16 %v6173, %v6171
    %v6532 = vpack.c.b16 %v6176, %v6174
    %v6533 = vpack.c.b16 %v6177, %v6175
    %v6534 = vpack.c.b16 %v6180, %v6178
    %v6535 = vpack.c.b16 %v6181, %v6179
    %v6536 = vpack.c.b16 %v6184, %v6182
    %v6537 = vpack.c.b16 %v6185, %v6183
    %v6538 = vpack.c.b16 %v6188, %v6186
    %v6539 = vpack.c.b16 %v6189, %v6187
    %v6540 = vpack.c.b16 %v6192, %v6190
    %v6541 = vpack.c.b16 %v6193, %v6191
    %v6542 = vpack.c.b16 %v6196, %v6194
    %v6543 = vpack.c.b16 %v6197, %v6195
    %v6544 = vpack.c.b16 %v6200, %v6198
    %v6545 = vpack.c.b16 %v6201, %v6199
    %v6546 = vpack.c.b16 %v6204, %v6202
    %v6547 = vpack.c.b16 %v6205, %v6203
    %v6548 = vpack.c.b16 %v6208, %v6206
    %v6549 = vpack.c.b16 %v6209, %v6207
    %v6550 = vpack.c.b16 %v6212, %v6210
    %v6551 = vpack.c.b16 %v6213, %v6211
    %v6552 = vpack.c.b16 %v6216, %v6214
    %v6553 = vpack.c.b16 %v6217, %v6215
    %v6554 = vpack.c.b16 %v6220, %v6218
    %v6555 = vpack.c.b16 %v6221, %v6219
    %v6556 = vpack.c.b16 %v6224, %v6222
    %v6557 = vpack.c.b16 %v6225, %v6223
    %v6558 = vpack.c.b16 %v6228, %v6226
    %v6559 = vpack.c.b16 %v6229, %v6227
    %v6560 = vpack.c.b16 %v6232, %v6230
    %v6561 = vpack.c.b16 %v6233, %v6231
    %v6562 = vpack.c.b16 %v6236, %v6234
    %v6563 = vpack.c.b16 %v6237, %v6235
    %v6564 = vpack.c.b16 %v6240, %v6238
    %v6565 = vpack.c.b16 %v6241, %v6239
    %v6566 = vpack.c.b16 %v6244, %v6242
    %v6567 = vpack.c.b16 %v6245, %v6243
    %v6568 = vpack.c.b16 %v6248, %v6246
    %v6569 = vpack.c.b16 %v6249, %v6247
    %v6570 = vpack.c.b16 %v6252, %v6250
    %v6571 = vpack.c.b16 %v6253, %v6251
    %v6572 = vpack.c.b16 %v6256, %v6254
    %v6573 = vpack.c.b16 %v6257, %v6255
    %v6574 = vpack.c.b16 %v6260, %v6258
    %v6575 = vpack.c.b16 %v6261, %v6259
    %v6576 = vpack.c.b16 %v6264, %v6262
    %v6577 = vpack.c.b16 %v6265, %v6263
    %v6578 = vpack.c.b16 %v6268, %v6266
    %v6579 = vpack.c.b16 %v6269, %v6267
    %v6580 = vpack.c.b16 %v6272, %v6270
    %v6581 = vpack.c.b16 %v6273, %v6271
    %v6582 = vpack.c.b16 %v6276, %v6274
    %v6583 = vpack.c.b16 %v6277, %v6275
    %v6584 = vpack.c.b16 %v6280, %v6278
    %v6585 = vpack.c.b16 %v6281, %v6279
    %v6586 = vpack.c.b16 %v6284, %v6282
    %v6587 = vpack.c.b16 %v6285, %v6283
    %v6588 = vpack.c.b16 %v6288, %v6286
    %v6589 = vpack.c.b16 %v6289, %v6287
    %v6590 = vpack.c.b16 %v6292, %v6290
    %v6591 = vpack.c.b16 %v6293, %v6291
    %v6592 = vpack.c.b16 %v6296, %v6294
    %v6593 = vpack.c.b16 %v6297, %v6295
    %v6594 = vpack.c.b16 %v6300, %v6298
    %v6595 = vpack.c.b16 %v6301, %v6299
    %v6596 = vpack.c.b16 %v6304, %v6302
    %v6597 = vpack.c.b16 %v6305, %v6303
    %v6598 = vpack.c.b16 %v6308, %v6306
    %v6599 = vpack.c.b16 %v6309, %v6307
    %v6600 = vpack.c.b16 %v6312, %v6310
    %v6601 = vpack.c.b16 %v6313, %v6311
    %v6602 = vpack.c.b16 %v6316, %v6314
    %v6603 = vpack.c.b16 %v6317, %v6315
    %v6604 = vpack.c.b16 %v6320, %v6318
    %v6605 = vpack.c.b16 %v6321, %v6319
    %v6606 = vpack.c.b16 %v6324, %v6322
    %v6607 = vpack.c.b16 %v6325, %v6323
    %v6608 = vpack.c.b16 %v6328, %v6326
    %v6609 = vpack.c.b16 %v6329, %v6327
    %v6610 = vpack.c.b16 %v6332, %v6330
    %v6611 = vpack.c.b16 %v6333, %v6331
    %v6612 = vpack.c.b16 %v6336, %v6334
    %v6613 = vpack.c.b16 %v6337, %v6335
    %v6614 = vpack.c.b16 %v6340, %v6338
    %v6615 = vpack.c.b16 %v6341, %v6339
    %v6616 = vpack.c.b16 %v6344, %v6342
    %v6617 = vpack.c.b16 %v6345, %v6343
    %v6618 = vpack.c.b16 %v6348, %v6346
    %v6619 = vpack.c.b16 %v6349, %v6347
    %v6620 = vpack.c.b16 %v6352, %v6350
    %v6621 = vpack.c.b16 %v6353, %v6351
    %v6622 = vpack.c.b16 %v6356, %v6354
    %v6623 = vpack.c.b16 %v6357, %v6355
    %v6624 = vpack.c.b16 %v6360, %v6358
    %v6625 = vpack.c.b16 %v6361, %v6359
    %v6626 = vpack.c.b16 %v6364, %v6362
    %v6627 = vpack.c.b16 %v6365, %v6363
    %v6628 = vpack.c.b16 %v6368, %v6366
    %v6629 = vpack.c.b16 %v6369, %v6367
    %v6630 = vpack.c.b16 %v6372, %v6370
    %v6631 = vpack.c.b16 %v6373, %v6371
    %v6632 = vpack.c.b16 %v6376, %v6374
    %v6633 = vpack.c.b16 %v6377, %v6375
    %v6634 = vpack.c.b16 %v6380, %v6378
    %v6635 = vpack.c.b16 %v6381, %v6379
    %v6636 = vpack.c.b16 %v6384, %v6382
    %v6637 = vpack.c.b16 %v6385, %v6383
    %v6638 = vpack.c.b16 %v6388, %v6386
    %v6639 = vpack.c.b16 %v6389, %v6387
    %v6640 = vpack.c.b16 %v6392, %v6390
    %v6641 = vpack.c.b16 %v6393, %v6391
    %v6642 = vpack.c.b16 %v6396, %v6394
    %v6643 = vpack.c.b16 %v6397, %v6395
    %v6644 = vpack.c.b16 %v6400, %v6398
    %v6645 = vpack.c.b16 %v6401, %v6399
    %v6646 = vpack.c.b16 %v6404, %v6402
    %v6647 = vpack.c.b16 %v6405, %v6403
    %v6648 = vpack.c.b16 %v6408, %v6406
    %v6649 = vpack.c.b16 %v6409, %v6407
    %v6650 = vpack.c.b16 %v6412, %v6410
    %v6651 = vpack.c.b16 %v6413, %v6411
    %v6652 = vpack.c.b16 %v6416, %v6414
    %v6653 = vpack.c.b16 %v6417, %v6415
    %v6654 = vpack.c.b16 %v6420, %v6418
    %v6655 = vpack.c.b16 %v6421, %v6419
    %v6656 = vpack.c.b16 %v6424, %v6422
    %v6657 = vpack.c.b16 %v6425, %v6423
    %v6658 = vpack.c.b16 %v6428, %v6426
    %v6659 = vpack.c.b16 %v6429, %v6427
    %v6660 = vpack.c.b16 %v6432, %v6430
    %v6661 = vpack.c.b16 %v6433, %v6431
    %v6662 = vpack.c.b16 %v6436, %v6434
    %v6663 = vpack.c.b16 %v6437, %v6435
    %v6664 = vpack.c.b16 %v6440, %v6438
    %v6665 = vpack.c.b16 %v6441, %v6439
    %v6666 = vpack.c.b16 %v6444, %v6442
    %v6667 = vpack.c.b16 %v6445, %v6443
    %v6668 = vpack.c.b16 %v6448, %v6446
    %v6669 = vpack.c.b16 %v6449, %v6447
    %v6670 = vpack.c.b16 %v6452, %v6450
    %v6671 = vpack.c.b16 %v6453, %v6451
    %v6672 = vpack.c.b16 %v6456, %v6454
    %v6673 = vpack.c.b16 %v6457, %v6455
    %v6674 = vpack.c.b16 %v6460, %v6458
    %v6675 = vpack.c.b16 %v6461, %v6459
    %v6676 = vpack.c.b16 %v6464, %v6462
    %v6677 = vpack.c.b16 %v6465, %v6463
    %v6678 = vpack.c.b16 %v6468, %v6466
    %v6679 = vpack.c.b16 %v6469, %v6467
    %v6680 = vpack.c.b16 %v6472, %v6470
    %v6681 = vpack.c.b16 %v6473, %v6471
    %v6682 = vpack.c.b16 %v6476, %v6474
    %v6683 = vpack.c.b16 %v6477, %v6475
    %v6684 = vpack.c.b16 %v6480, %v6478
    %v6685 = vpack.c.b16 %v6481, %v6479
    %v6686 = vpack.c.b16 %v6484, %v6482
    %v6687 = vpack.c.b16 %v6485, %v6483
    %v6688 = vpack.c.b16 %v6488, %v6486
    %v6689 = vpack.c.b16 %v6489, %v6487
    %v6690 = vpack.c.b16 %v6492, %v6490
    %v6691 = vpack.c.b16 %v6493, %v6491
    %v6692 = vpack.c.b16 %v6496, %v6494
    %v6693 = vpack.c.b16 %v6497, %v6495
    %v6694 = vpack.c.b16 %v6500, %v6498
    %v6695 = vpack.c.b16 %v6501, %v6499
    %v6696 = vpack.c.b16 %v6504, %v6502
    %v6697 = vpack.c.b16 %v6505, %v6503
    %6890 = vmatprep.subr.bf16.mxu0 %v6521
    %6891 = vmatpush1.bf16.msra.mxu0 %v6520
    %6892 = vmatprep.subr.bf16.mxu0 %v6519
    %6893 = vmatpush1.bf16.msra.mxu0 %v6518
    %6894 = vmatprep.subr.bf16.mxu0 %v6517
    %6895 = vmatpush1.bf16.msra.mxu0 %v6516
    %6896 = vmatprep.subr.bf16.mxu0 %v6515
    %6897 = vmatpush1.bf16.msra.mxu0 %v6514
    %6898 = vmatprep.subr.bf16.mxu0 %v6513
    %6899 = vmatpush1.bf16.msra.mxu0 %v6512
    %6900 = vmatprep.subr.bf16.mxu0 %v6511
    %6901 = vmatpush1.bf16.msra.mxu0 %v6510
    %6902 = vmatprep.subr.bf16.mxu0 %v6509
    %6903 = vmatpush1.bf16.msra.mxu0 %v6508
    %6904 = vmatprep.subr.bf16.mxu0 %v6507
    %6905 = vmatpush1.bf16.msra.mxu0 %v6506
    %6906 = vmatprep.subr.bf16.mxu0 %v6537
    %6907 = vmatpush2.bf16.msra.mxu0 %v6536
    %6908 = vmatprep.subr.bf16.mxu0 %v6535
    %6909 = vmatpush2.bf16.msra.mxu0 %v6534
    %6910 = vmatprep.subr.bf16.mxu0 %v6533
    %6911 = vmatpush2.bf16.msra.mxu0 %v6532
    %6912 = vmatprep.subr.bf16.mxu0 %v6531
    %6913 = vmatpush2.bf16.msra.mxu0 %v6530
    %6914 = vmatprep.subr.bf16.mxu0 %v6529
    %6915 = vmatpush2.bf16.msra.mxu0 %v6528
    %6916 = vmatprep.subr.bf16.mxu0 %v6527
    %6917 = vmatpush2.bf16.msra.mxu0 %v6526
    %6918 = vmatprep.subr.bf16.mxu0 %v6525
    %6919 = vmatpush2.bf16.msra.mxu0 %v6524
    %6920 = vmatprep.subr.bf16.mxu0 %v6523
    %6921 = vmatpush2.bf16.msra.mxu0 %v6522
    %6922 = vmatprep.mubr.bf16.mxu0 %v1289
    %6923 = vmatmul.mubr.bf16.gmra.mxu0 %v1288
    %v6924 = vpop.f32.mrf.mxu0
    %v6925 = vadd.f32 0.0, %v6924
    %v6926 = vpop.f32.mrf.mxu0
    %v6927 = vadd.f32 0.0, %v6926
    %v6928 = vpop.f32.mrf.mxu0
    %v6929 = vadd.f32 0.0, %v6928
    %v6930 = vpop.f32.mrf.mxu0
    %v6931 = vadd.f32 0.0, %v6930
    %6932 = vmatprep.mubr.bf16.mxu0 %v1297
    %6933 = vmatmul.mubr.bf16.gmra.mxu0 %v1296
    %v6934 = vpop.f32.mrf.mxu0
    %v6935 = vadd.f32 0.0, %v6934
    %v6936 = vpop.f32.mrf.mxu0
    %v6937 = vadd.f32 0.0, %v6936
    %v6938 = vpop.f32.mrf.mxu0
    %v6939 = vadd.f32 0.0, %v6938
    %v6940 = vpop.f32.mrf.mxu0
    %v6941 = vadd.f32 0.0, %v6940
    %6942 = vdwg.mxu0
    %6943 = vmatprep.subr.bf16.mxu0 %v6553
    %6944 = vmatpush1.bf16.msra.mxu0 %v6552
    %6945 = vmatprep.subr.bf16.mxu0 %v6551
    %6946 = vmatpush1.bf16.msra.mxu0 %v6550
    %6947 = vmatprep.subr.bf16.mxu0 %v6549
    %6948 = vmatpush1.bf16.msra.mxu0 %v6548
    %6949 = vmatprep.subr.bf16.mxu0 %v6547
    %6950 = vmatpush1.bf16.msra.mxu0 %v6546
    %6951 = vmatprep.subr.bf16.mxu0 %v6545
    %6952 = vmatpush1.bf16.msra.mxu0 %v6544
    %6953 = vmatprep.subr.bf16.mxu0 %v6543
    %6954 = vmatpush1.bf16.msra.mxu0 %v6542
    %6955 = vmatprep.subr.bf16.mxu0 %v6541
    %6956 = vmatpush1.bf16.msra.mxu0 %v6540
    %6957 = vmatprep.subr.bf16.mxu0 %v6539
    %6958 = vmatpush1.bf16.msra.mxu0 %v6538
    %6959 = vmatprep.subr.bf16.mxu0 %v6569
    %6960 = vmatpush2.bf16.msra.mxu0 %v6568
    %6961 = vmatprep.subr.bf16.mxu0 %v6567
    %6962 = vmatpush2.bf16.msra.mxu0 %v6566
    %6963 = vmatprep.subr.bf16.mxu0 %v6565
    %6964 = vmatpush2.bf16.msra.mxu0 %v6564
    %6965 = vmatprep.subr.bf16.mxu0 %v6563
    %6966 = vmatpush2.bf16.msra.mxu0 %v6562
    %6967 = vmatprep.subr.bf16.mxu0 %v6561
    %6968 = vmatpush2.bf16.msra.mxu0 %v6560
    %6969 = vmatprep.subr.bf16.mxu0 %v6559
    %6970 = vmatpush2.bf16.msra.mxu0 %v6558
    %6971 = vmatprep.subr.bf16.mxu0 %v6557
    %6972 = vmatpush2.bf16.msra.mxu0 %v6556
    %6973 = vmatprep.subr.bf16.mxu0 %v6555
    %6974 = vmatpush2.bf16.msra.mxu0 %v6554
    %6975 = vmatprep.mubr.bf16.mxu0 %v1291
    %6976 = vmatmul.mubr.bf16.gmra.mxu0 %v1290
    %v6977 = vpop.f32.mrf.mxu0
    %v6978 = vadd.f32 %v6925, %v6977
    %v6979 = vpop.f32.mrf.mxu0
    %v6980 = vadd.f32 %v6927, %v6979
    %v6981 = vpop.f32.mrf.mxu0
    %v6982 = vadd.f32 %v6929, %v6981
    %v6983 = vpop.f32.mrf.mxu0
    %v6984 = vadd.f32 %v6931, %v6983
    %6985 = vmatprep.mubr.bf16.mxu0 %v1299
    %6986 = vmatmul.mubr.bf16.gmra.mxu0 %v1298
    %v6987 = vpop.f32.mrf.mxu0
    %v6988 = vadd.f32 %v6935, %v6987
    %v6989 = vpop.f32.mrf.mxu0
    %v6990 = vadd.f32 %v6937, %v6989
    %v6991 = vpop.f32.mrf.mxu0
    %v6992 = vadd.f32 %v6939, %v6991
    %v6993 = vpop.f32.mrf.mxu0
    %v6994 = vadd.f32 %v6941, %v6993
    %6995 = vdwg.mxu0
    %6996 = vmatprep.subr.bf16.mxu0 %v6585
    %6997 = vmatpush1.bf16.msra.mxu0 %v6584
    %6998 = vmatprep.subr.bf16.mxu0 %v6583
    %6999 = vmatpush1.bf16.msra.mxu0 %v6582
    %7000 = vmatprep.subr.bf16.mxu0 %v6581
    %7001 = vmatpush1.bf16.msra.mxu0 %v6580
    %7002 = vmatprep.subr.bf16.mxu0 %v6579
    %7003 = vmatpush1.bf16.msra.mxu0 %v6578
    %7004 = vmatprep.subr.bf16.mxu0 %v6577
    %7005 = vmatpush1.bf16.msra.mxu0 %v6576
    %7006 = vmatprep.subr.bf16.mxu0 %v6575
    %7007 = vmatpush1.bf16.msra.mxu0 %v6574
    %7008 = vmatprep.subr.bf16.mxu0 %v6573
    %7009 = vmatpush1.bf16.msra.mxu0 %v6572
    %7010 = vmatprep.subr.bf16.mxu0 %v6571
    %7011 = vmatpush1.bf16.msra.mxu0 %v6570
    %7012 = vmatprep.subr.bf16.mxu0 %v6601
    %7013 = vmatpush2.bf16.msra.mxu0 %v6600
    %7014 = vmatprep.subr.bf16.mxu0 %v6599
    %7015 = vmatpush2.bf16.msra.mxu0 %v6598
    %7016 = vmatprep.subr.bf16.mxu0 %v6597
    %7017 = vmatpush2.bf16.msra.mxu0 %v6596
    %7018 = vmatprep.subr.bf16.mxu0 %v6595
    %7019 = vmatpush2.bf16.msra.mxu0 %v6594
    %7020 = vmatprep.subr.bf16.mxu0 %v6593
    %7021 = vmatpush2.bf16.msra.mxu0 %v6592
    %7022 = vmatprep.subr.bf16.mxu0 %v6591
    %7023 = vmatpush2.bf16.msra.mxu0 %v6590
    %7024 = vmatprep.subr.bf16.mxu0 %v6589
    %7025 = vmatpush2.bf16.msra.mxu0 %v6588
    %7026 = vmatprep.subr.bf16.mxu0 %v6587
    %7027 = vmatpush2.bf16.msra.mxu0 %v6586
    %7028 = vmatprep.mubr.bf16.mxu0 %v1293
    %7029 = vmatmul.mubr.bf16.gmra.mxu0 %v1292
    %v7030 = vpop.f32.mrf.mxu0
    %v7031 = vadd.f32 %v6978, %v7030
    %v7032 = vpop.f32.mrf.mxu0
    %v7033 = vadd.f32 %v6980, %v7032
    %v7034 = vpop.f32.mrf.mxu0
    %v7035 = vadd.f32 %v6982, %v7034
    %v7036 = vpop.f32.mrf.mxu0
    %v7037 = vadd.f32 %v6984, %v7036
    %7038 = vmatprep.mubr.bf16.mxu0 %v1301
    %7039 = vmatmul.mubr.bf16.gmra.mxu0 %v1300
    %v7040 = vpop.f32.mrf.mxu0
    %v7041 = vadd.f32 %v6988, %v7040
    %v7042 = vpop.f32.mrf.mxu0
    %v7043 = vadd.f32 %v6990, %v7042
    %v7044 = vpop.f32.mrf.mxu0
    %v7045 = vadd.f32 %v6992, %v7044
    %v7046 = vpop.f32.mrf.mxu0
    %v7047 = vadd.f32 %v6994, %v7046
    %7048 = vdwg.mxu0
    %7049 = vmatprep.subr.bf16.mxu0 %v6617
    %7050 = vmatpush1.bf16.msra.mxu0 %v6616
    %7051 = vmatprep.subr.bf16.mxu0 %v6615
    %7052 = vmatpush1.bf16.msra.mxu0 %v6614
    %7053 = vmatprep.subr.bf16.mxu0 %v6613
    %7054 = vmatpush1.bf16.msra.mxu0 %v6612
    %7055 = vmatprep.subr.bf16.mxu0 %v6611
    %7056 = vmatpush1.bf16.msra.mxu0 %v6610
    %7057 = vmatprep.subr.bf16.mxu0 %v6609
    %7058 = vmatpush1.bf16.msra.mxu0 %v6608
    %7059 = vmatprep.subr.bf16.mxu0 %v6607
    %7060 = vmatpush1.bf16.msra.mxu0 %v6606
    %7061 = vmatprep.subr.bf16.mxu0 %v6605
    %7062 = vmatpush1.bf16.msra.mxu0 %v6604
    %7063 = vmatprep.subr.bf16.mxu0 %v6603
    %7064 = vmatpush1.bf16.msra.mxu0 %v6602
    %7065 = vmatprep.subr.bf16.mxu0 %v6633
    %7066 = vmatpush2.bf16.msra.mxu0 %v6632
    %7067 = vmatprep.subr.bf16.mxu0 %v6631
    %7068 = vmatpush2.bf16.msra.mxu0 %v6630
    %7069 = vmatprep.subr.bf16.mxu0 %v6629
    %7070 = vmatpush2.bf16.msra.mxu0 %v6628
    %7071 = vmatprep.subr.bf16.mxu0 %v6627
    %7072 = vmatpush2.bf16.msra.mxu0 %v6626
    %7073 = vmatprep.subr.bf16.mxu0 %v6625
    %7074 = vmatpush2.bf16.msra.mxu0 %v6624
    %7075 = vmatprep.subr.bf16.mxu0 %v6623
    %7076 = vmatpush2.bf16.msra.mxu0 %v6622
    %7077 = vmatprep.subr.bf16.mxu0 %v6621
    %7078 = vmatpush2.bf16.msra.mxu0 %v6620
    %7079 = vmatprep.subr.bf16.mxu0 %v6619
    %7080 = vmatpush2.bf16.msra.mxu0 %v6618
    %7081 = vmatprep.mubr.bf16.mxu0 %v1295
    %7082 = vmatmul.mubr.bf16.gmra.mxu0 %v1294
    %v7083 = vpop.f32.mrf.mxu0
    %v7084 = vadd.f32 %v7031, %v7083
    %v7085 = vpop.f32.mrf.mxu0
    %v7086 = vadd.f32 %v7033, %v7085
    %v7087 = vpop.f32.mrf.mxu0
    %v7088 = vadd.f32 %v7035, %v7087
    %v7089 = vpop.f32.mrf.mxu0
    %v7090 = vadd.f32 %v7037, %v7089
    %7091 = vmatprep.mubr.bf16.mxu0 %v1303
    %7092 = vmatmul.mubr.bf16.gmra.mxu0 %v1302
    %v7093 = vpop.f32.mrf.mxu0
    %v7094 = vadd.f32 %v7041, %v7093
    %v7095 = vpop.f32.mrf.mxu0
    %v7096 = vadd.f32 %v7043, %v7095
    %v7097 = vpop.f32.mrf.mxu0
    %v7098 = vadd.f32 %v7045, %v7097
    %v7099 = vpop.f32.mrf.mxu0
    %v7100 = vadd.f32 %v7047, %v7099
    %7101 = vdwg.mxu0
    %7102 = vmatprep.subr.bf16.mxu0 %v6649
    %7103 = vmatpush1.bf16.msra.mxu0 %v6648
    %7104 = vmatprep.subr.bf16.mxu0 %v6647
    %7105 = vmatpush1.bf16.msra.mxu0 %v6646
    %7106 = vmatprep.subr.bf16.mxu0 %v6645
    %7107 = vmatpush1.bf16.msra.mxu0 %v6644
    %7108 = vmatprep.subr.bf16.mxu0 %v6643
    %7109 = vmatpush1.bf16.msra.mxu0 %v6642
    %7110 = vmatprep.subr.bf16.mxu0 %v6641
    %7111 = vmatpush1.bf16.msra.mxu0 %v6640
    %7112 = vmatprep.subr.bf16.mxu0 %v6639
    %7113 = vmatpush1.bf16.msra.mxu0 %v6638
    %7114 = vmatprep.subr.bf16.mxu0 %v6637
    %7115 = vmatpush1.bf16.msra.mxu0 %v6636
    %7116 = vmatprep.subr.bf16.mxu0 %v6635
    %7117 = vmatpush1.bf16.msra.mxu0 %v6634
    %7118 = vmatprep.subr.bf16.mxu0 %v6665
    %7119 = vmatpush2.bf16.msra.mxu0 %v6664
    %7120 = vmatprep.subr.bf16.mxu0 %v6663
    %7121 = vmatpush2.bf16.msra.mxu0 %v6662
    %7122 = vmatprep.subr.bf16.mxu0 %v6661
    %7123 = vmatpush2.bf16.msra.mxu0 %v6660
    %7124 = vmatprep.subr.bf16.mxu0 %v6659
    %7125 = vmatpush2.bf16.msra.mxu0 %v6658
    %7126 = vmatprep.subr.bf16.mxu0 %v6657
    %7127 = vmatpush2.bf16.msra.mxu0 %v6656
    %7128 = vmatprep.subr.bf16.mxu0 %v6655
    %7129 = vmatpush2.bf16.msra.mxu0 %v6654
    %7130 = vmatprep.subr.bf16.mxu0 %v6653
    %7131 = vmatpush2.bf16.msra.mxu0 %v6652
    %7132 = vmatprep.subr.bf16.mxu0 %v6651
    %7133 = vmatpush2.bf16.msra.mxu0 %v6650
    %7134 = vmatprep.mubr.bf16.mxu0 %v1297
    %7135 = vmatmul.mubr.bf16.gmra.mxu0 %v1296
    %v7136 = vpop.f32.mrf.mxu0
    %v7137 = vadd.f32 %v7084, %v7136
    %v7138 = vpop.f32.mrf.mxu0
    %v7139 = vadd.f32 %v7086, %v7138
    %v7140 = vpop.f32.mrf.mxu0
    %v7141 = vadd.f32 %v7088, %v7140
    %v7142 = vpop.f32.mrf.mxu0
    %v7143 = vadd.f32 %v7090, %v7142
    %7144 = vmatprep.mubr.bf16.mxu0 %v1305
    %7145 = vmatmul.mubr.bf16.gmra.mxu0 %v1304
    %v7146 = vpop.f32.mrf.mxu0
    %v7147 = vadd.f32 %v7094, %v7146
    %v7148 = vpop.f32.mrf.mxu0
    %v7149 = vadd.f32 %v7096, %v7148
    %v7150 = vpop.f32.mrf.mxu0
    %v7151 = vadd.f32 %v7098, %v7150
    %v7152 = vpop.f32.mrf.mxu0
    %v7153 = vadd.f32 %v7100, %v7152
    %7154 = vdwg.mxu0
    %7155 = vmatprep.subr.bf16.mxu0 %v6681
    %7156 = vmatpush1.bf16.msra.mxu0 %v6680
    %7157 = vmatprep.subr.bf16.mxu0 %v6679
    %7158 = vmatpush1.bf16.msra.mxu0 %v6678
    %7159 = vmatprep.subr.bf16.mxu0 %v6677
    %7160 = vmatpush1.bf16.msra.mxu0 %v6676
    %7161 = vmatprep.subr.bf16.mxu0 %v6675
    %7162 = vmatpush1.bf16.msra.mxu0 %v6674
    %7163 = vmatprep.subr.bf16.mxu0 %v6673
    %7164 = vmatpush1.bf16.msra.mxu0 %v6672
    %7165 = vmatprep.subr.bf16.mxu0 %v6671
    %7166 = vmatpush1.bf16.msra.mxu0 %v6670
    %7167 = vmatprep.subr.bf16.mxu0 %v6669
    %7168 = vmatpush1.bf16.msra.mxu0 %v6668
    %7169 = vmatprep.subr.bf16.mxu0 %v6667
    %7170 = vmatpush1.bf16.msra.mxu0 %v6666
    %7171 = vmatprep.subr.bf16.mxu0 %v6697
    %7172 = vmatpush2.bf16.msra.mxu0 %v6696
    %7173 = vmatprep.subr.bf16.mxu0 %v6695
    %7174 = vmatpush2.bf16.msra.mxu0 %v6694
    %7175 = vmatprep.subr.bf16.mxu0 %v6693
    %7176 = vmatpush2.bf16.msra.mxu0 %v6692
    %7177 = vmatprep.subr.bf16.mxu0 %v6691
    %7178 = vmatpush2.bf16.msra.mxu0 %v6690
    %7179 = vmatprep.subr.bf16.mxu0 %v6689
    %7180 = vmatpush2.bf16.msra.mxu0 %v6688
    %7181 = vmatprep.subr.bf16.mxu0 %v6687
    %7182 = vmatpush2.bf16.msra.mxu0 %v6686
    %7183 = vmatprep.subr.bf16.mxu0 %v6685
    %7184 = vmatpush2.bf16.msra.mxu0 %v6684
    %7185 = vmatprep.subr.bf16.mxu0 %v6683
    %7186 = vmatpush2.bf16.msra.mxu0 %v6682
    %7187 = vmatprep.mubr.bf16.mxu0 %v1299
    %7188 = vmatmul.mubr.bf16.gmra.mxu0 %v1298
    %v7189 = vpop.f32.mrf.mxu0
    %v7190 = vadd.f32 %v7137, %v7189
    %v7191 = vpop.f32.mrf.mxu0
    %v7192 = vadd.f32 %v7139, %v7191
    %v7193 = vpop.f32.mrf.mxu0
    %v7194 = vadd.f32 %v7141, %v7193
    %v7195 = vpop.f32.mrf.mxu0
    %v7196 = vadd.f32 %v7143, %v7195
    %7197 = vmatprep.mubr.bf16.mxu0 %v1307
    %7198 = vmatmul.mubr.bf16.gmra.mxu0 %v1306
    %v7199 = vpop.f32.mrf.mxu0
    %v7200 = vadd.f32 %v7147, %v7199
    %v7201 = vpop.f32.mrf.mxu0
    %v7202 = vadd.f32 %v7149, %v7201
    %v7203 = vpop.f32.mrf.mxu0
    %v7204 = vadd.f32 %v7151, %v7203
    %v7205 = vpop.f32.mrf.mxu0
    %v7206 = vadd.f32 %v7153, %v7205
    %7207 = vdwg.mxu0
    %v7208 = vmax.f32 %v5729, %v7190
    %v7209 = vmax.f32 %v5730, %v7192
    %v7210 = vmax.f32 %v5731, %v7194
    %v7211 = vmax.f32 %v5732, %v7196
    %v7212 = vmax.f32 %v5733, %v7200
    %v7213 = vmax.f32 %v5734, %v7202
    %v7214 = vmax.f32 %v5735, %v7204
    %v7215 = vmax.f32 %v5736, %v7206
    %v7217 = vlaneseq
    %v7218 = vshrl.u32 %v7217, 7
    %v7219 = vsub.s32 0, %v7218
    %v7220 = vrot.slane %v1308, %v7219
    %v7221 = vlaneseq
    %v7222 = vshrl.u32 %v7221, 7
    %v7223 = vsub.s32 1, %v7222
    %v7224 = vrot.slane %v1308, %v7223
    %v7227 = vadd.f32 %v7208, %v7220
    %v7228 = vadd.f32 %v7209, %v7224
    %v7229 = vadd.f32 %v7210, %v7220
    %v7230 = vadd.f32 %v7211, %v7224
    %v7231 = vadd.f32 %v7212, %v7220
    %v7232 = vadd.f32 %v7213, %v7224
    %v7233 = vadd.f32 %v7214, %v7220
    %v7234 = vadd.f32 %v7215, %v7224
    %v7235 = vmax.f32 %v7227, 0.0
    %v7236 = vmax.f32 %v7228, 0.0
    %v7237 = vmax.f32 %v7229, 0.0
    %v7238 = vmax.f32 %v7230, 0.0
    %v7239 = vmax.f32 %v7231, 0.0
    %v7240 = vmax.f32 %v7232, 0.0
    %v7241 = vmax.f32 %v7233, 0.0
    %v7242 = vmax.f32 %v7234, 0.0
    %v7243 = vpack.c.bf16 %v7235, %v7235
    %v7244 = vpack.c.bf16 %v7236, %v7236
    %v7245 = vpack.c.bf16 %v7237, %v7237
    %v7246 = vpack.c.bf16 %v7238, %v7238
    %v7247 = vpack.c.bf16 %v7239, %v7239
    %v7248 = vpack.c.bf16 %v7240, %v7240
    %v7249 = vpack.c.bf16 %v7241, %v7241
    %v7250 = vpack.c.bf16 %v7242, %v7242
    %v7251 = vld [vmem:[%s6] sm:$0xff]
    %v7252 = vld [vmem:[%s6 + $0x8] sm:$0xff]
    %v7253 = vld [vmem:[%s6 + $0x10] sm:$0xff]
    %v7254 = vld [vmem:[%s6 + $0x18] sm:$0xff]
    %v7255 = vld [vmem:[%s6 + $0x20] sm:$0xff]
    %v7256 = vld [vmem:[%s6 + $0x28] sm:$0xff]
    %v7257 = vld [vmem:[%s6 + $0x30] sm:$0xff]
    %v7258 = vld [vmem:[%s6 + $0x38] sm:$0xff]
    %v7259 = vld [vmem:[%s6 + $0x40] sm:$0xff]
    %v7260 = vld [vmem:[%s6 + $0x48] sm:$0xff]
    %v7261 = vld [vmem:[%s6 + $0x50] sm:$0xff]
    %v7262 = vld [vmem:[%s6 + $0x58] sm:$0xff]
    %v7263 = vld [vmem:[%s6 + $0x60] sm:$0xff]
    %v7264 = vld [vmem:[%s6 + $0x68] sm:$0xff]
    %v7265 = vld [vmem:[%s6 + $0x70] sm:$0xff]
    %v7266 = vld [vmem:[%s6 + $0x78] sm:$0xff]
    %v7267 = vld [vmem:[%s6 + $0x80] sm:$0xff]
    %v7268 = vld [vmem:[%s6 + $0x88] sm:$0xff]
    %v7269 = vld [vmem:[%s6 + $0x90] sm:$0xff]
    %v7270 = vld [vmem:[%s6 + $0x98] sm:$0xff]
    %v7271 = vld [vmem:[%s6 + $0xa0] sm:$0xff]
    %v7272 = vld [vmem:[%s6 + $0xa8] sm:$0xff]
    %v7273 = vld [vmem:[%s6 + $0xb0] sm:$0xff]
    %v7274 = vld [vmem:[%s6 + $0xb8] sm:$0xff]
    %v7275 = vld [vmem:[%s6 + $0xc0] sm:$0xff]
    %v7276 = vld [vmem:[%s6 + $0xc8] sm:$0xff]
    %v7277 = vld [vmem:[%s6 + $0xd0] sm:$0xff]
    %v7278 = vld [vmem:[%s6 + $0xd8] sm:$0xff]
    %v7279 = vld [vmem:[%s6 + $0xe0] sm:$0xff]
    %v7280 = vld [vmem:[%s6 + $0xe8] sm:$0xff]
    %v7281 = vld [vmem:[%s6 + $0xf0] sm:$0xff]
    %v7282 = vld [vmem:[%s6 + $0xf8] sm:$0xff]
    %v7283 = vld [vmem:[%s6 + $0x100] sm:$0xff]
    %v7284 = vld [vmem:[%s6 + $0x108] sm:$0xff]
    %v7285 = vld [vmem:[%s6 + $0x110] sm:$0xff]
    %v7286 = vld [vmem:[%s6 + $0x118] sm:$0xff]
    %v7287 = vld [vmem:[%s6 + $0x120] sm:$0xff]
    %v7288 = vld [vmem:[%s6 + $0x128] sm:$0xff]
    %v7289 = vld [vmem:[%s6 + $0x130] sm:$0xff]
    %v7290 = vld [vmem:[%s6 + $0x138] sm:$0xff]
    %v7291 = vld [vmem:[%s6 + $0x140] sm:$0xff]
    %v7292 = vld [vmem:[%s6 + $0x148] sm:$0xff]
    %v7293 = vld [vmem:[%s6 + $0x150] sm:$0xff]
    %v7294 = vld [vmem:[%s6 + $0x158] sm:$0xff]
    %v7295 = vld [vmem:[%s6 + $0x160] sm:$0xff]
    %v7296 = vld [vmem:[%s6 + $0x168] sm:$0xff]
    %v7297 = vld [vmem:[%s6 + $0x170] sm:$0xff]
    %v7298 = vld [vmem:[%s6 + $0x178] sm:$0xff]
    %v7299 = vld [vmem:[%s6 + $0x180] sm:$0xff]
    %v7300 = vld [vmem:[%s6 + $0x188] sm:$0xff]
    %v7301 = vld [vmem:[%s6 + $0x190] sm:$0xff]
    %v7302 = vld [vmem:[%s6 + $0x198] sm:$0xff]
    %v7303 = vld [vmem:[%s6 + $0x1a0] sm:$0xff]
    %v7304 = vld [vmem:[%s6 + $0x1a8] sm:$0xff]
    %v7305 = vld [vmem:[%s6 + $0x1b0] sm:$0xff]
    %v7306 = vld [vmem:[%s6 + $0x1b8] sm:$0xff]
    %v7307 = vld [vmem:[%s6 + $0x1c0] sm:$0xff]
    %v7308 = vld [vmem:[%s6 + $0x1c8] sm:$0xff]
    %v7309 = vld [vmem:[%s6 + $0x1d0] sm:$0xff]
    %v7310 = vld [vmem:[%s6 + $0x1d8] sm:$0xff]
    %v7311 = vld [vmem:[%s6 + $0x1e0] sm:$0xff]
    %v7312 = vld [vmem:[%s6 + $0x1e8] sm:$0xff]
    %v7313 = vld [vmem:[%s6 + $0x1f0] sm:$0xff]
    %v7314 = vld [vmem:[%s6 + $0x1f8] sm:$0xff]
    %v7315 = vld [vmem:[%s6 + $0x200] sm:$0xff]
    %v7316 = vld [vmem:[%s6 + $0x208] sm:$0xff]
    %v7317 = vld [vmem:[%s6 + $0x210] sm:$0xff]
    %v7318 = vld [vmem:[%s6 + $0x218] sm:$0xff]
    %v7319 = vld [vmem:[%s6 + $0x220] sm:$0xff]
    %v7320 = vld [vmem:[%s6 + $0x228] sm:$0xff]
    %v7321 = vld [vmem:[%s6 + $0x230] sm:$0xff]
    %v7322 = vld [vmem:[%s6 + $0x238] sm:$0xff]
    %v7323 = vld [vmem:[%s6 + $0x240] sm:$0xff]
    %v7324 = vld [vmem:[%s6 + $0x248] sm:$0xff]
    %v7325 = vld [vmem:[%s6 + $0x250] sm:$0xff]
    %v7326 = vld [vmem:[%s6 + $0x258] sm:$0xff]
    %v7327 = vld [vmem:[%s6 + $0x260] sm:$0xff]
    %v7328 = vld [vmem:[%s6 + $0x268] sm:$0xff]
    %v7329 = vld [vmem:[%s6 + $0x270] sm:$0xff]
    %v7330 = vld [vmem:[%s6 + $0x278] sm:$0xff]
    %v7331 = vld [vmem:[%s6 + $0x280] sm:$0xff]
    %v7332 = vld [vmem:[%s6 + $0x288] sm:$0xff]
    %v7333 = vld [vmem:[%s6 + $0x290] sm:$0xff]
    %v7334 = vld [vmem:[%s6 + $0x298] sm:$0xff]
    %v7335 = vld [vmem:[%s6 + $0x2a0] sm:$0xff]
    %v7336 = vld [vmem:[%s6 + $0x2a8] sm:$0xff]
    %v7337 = vld [vmem:[%s6 + $0x2b0] sm:$0xff]
    %v7338 = vld [vmem:[%s6 + $0x2b8] sm:$0xff]
    %v7339 = vld [vmem:[%s6 + $0x2c0] sm:$0xff]
    %v7340 = vld [vmem:[%s6 + $0x2c8] sm:$0xff]
    %v7341 = vld [vmem:[%s6 + $0x2d0] sm:$0xff]
    %v7342 = vld [vmem:[%s6 + $0x2d8] sm:$0xff]
    %v7343 = vld [vmem:[%s6 + $0x2e0] sm:$0xff]
    %v7344 = vld [vmem:[%s6 + $0x2e8] sm:$0xff]
    %v7345 = vld [vmem:[%s6 + $0x2f0] sm:$0xff]
    %v7346 = vld [vmem:[%s6 + $0x2f8] sm:$0xff]
    %v7347 = vld [vmem:[%s6 + $0x300] sm:$0xff]
    %v7348 = vld [vmem:[%s6 + $0x308] sm:$0xff]
    %v7349 = vld [vmem:[%s6 + $0x310] sm:$0xff]
    %v7350 = vld [vmem:[%s6 + $0x318] sm:$0xff]
    %v7351 = vld [vmem:[%s6 + $0x320] sm:$0xff]
    %v7352 = vld [vmem:[%s6 + $0x328] sm:$0xff]
    %v7353 = vld [vmem:[%s6 + $0x330] sm:$0xff]
    %v7354 = vld [vmem:[%s6 + $0x338] sm:$0xff]
    %v7355 = vld [vmem:[%s6 + $0x340] sm:$0xff]
    %v7356 = vld [vmem:[%s6 + $0x348] sm:$0xff]
    %v7357 = vld [vmem:[%s6 + $0x350] sm:$0xff]
    %v7358 = vld [vmem:[%s6 + $0x358] sm:$0xff]
    %v7359 = vld [vmem:[%s6 + $0x360] sm:$0xff]
    %v7360 = vld [vmem:[%s6 + $0x368] sm:$0xff]
    %v7361 = vld [vmem:[%s6 + $0x370] sm:$0xff]
    %v7362 = vld [vmem:[%s6 + $0x378] sm:$0xff]
    %v7363 = vld [vmem:[%s6 + $0x380] sm:$0xff]
    %v7364 = vld [vmem:[%s6 + $0x388] sm:$0xff]
    %v7365 = vld [vmem:[%s6 + $0x390] sm:$0xff]
    %v7366 = vld [vmem:[%s6 + $0x398] sm:$0xff]
    %v7367 = vld [vmem:[%s6 + $0x3a0] sm:$0xff]
    %v7368 = vld [vmem:[%s6 + $0x3a8] sm:$0xff]
    %v7369 = vld [vmem:[%s6 + $0x3b0] sm:$0xff]
    %v7370 = vld [vmem:[%s6 + $0x3b8] sm:$0xff]
    %v7371 = vld [vmem:[%s6 + $0x3c0] sm:$0xff]
    %v7372 = vld [vmem:[%s6 + $0x3c8] sm:$0xff]
    %v7373 = vld [vmem:[%s6 + $0x3d0] sm:$0xff]
    %v7374 = vld [vmem:[%s6 + $0x3d8] sm:$0xff]
    %v7375 = vld [vmem:[%s6 + $0x3e0] sm:$0xff]
    %v7376 = vld [vmem:[%s6 + $0x3e8] sm:$0xff]
    %v7377 = vld [vmem:[%s6 + $0x3f0] sm:$0xff]
    %v7378 = vld [vmem:[%s6 + $0x3f8] sm:$0xff]
    %v7379 = vld [vmem:[%s6 + $0x400] sm:$0xff]
    %v7380 = vld [vmem:[%s6 + $0x408] sm:$0xff]
    %v7381 = vld [vmem:[%s6 + $0x410] sm:$0xff]
    %v7382 = vld [vmem:[%s6 + $0x418] sm:$0xff]
    %v7383 = vld [vmem:[%s6 + $0x420] sm:$0xff]
    %v7384 = vld [vmem:[%s6 + $0x428] sm:$0xff]
    %v7385 = vld [vmem:[%s6 + $0x430] sm:$0xff]
    %v7386 = vld [vmem:[%s6 + $0x438] sm:$0xff]
    %v7387 = vld [vmem:[%s6 + $0x440] sm:$0xff]
    %v7388 = vld [vmem:[%s6 + $0x448] sm:$0xff]
    %v7389 = vld [vmem:[%s6 + $0x450] sm:$0xff]
    %v7390 = vld [vmem:[%s6 + $0x458] sm:$0xff]
    %v7391 = vld [vmem:[%s6 + $0x460] sm:$0xff]
    %v7392 = vld [vmem:[%s6 + $0x468] sm:$0xff]
    %v7393 = vld [vmem:[%s6 + $0x470] sm:$0xff]
    %v7394 = vld [vmem:[%s6 + $0x478] sm:$0xff]
    %v7395 = vld [vmem:[%s6 + $0x480] sm:$0xff]
    %v7396 = vld [vmem:[%s6 + $0x488] sm:$0xff]
    %v7397 = vld [vmem:[%s6 + $0x490] sm:$0xff]
    %v7398 = vld [vmem:[%s6 + $0x498] sm:$0xff]
    %v7399 = vld [vmem:[%s6 + $0x4a0] sm:$0xff]
    %v7400 = vld [vmem:[%s6 + $0x4a8] sm:$0xff]
    %v7401 = vld [vmem:[%s6 + $0x4b0] sm:$0xff]
    %v7402 = vld [vmem:[%s6 + $0x4b8] sm:$0xff]
    %v7403 = vld [vmem:[%s6 + $0x4c0] sm:$0xff]
    %v7404 = vld [vmem:[%s6 + $0x4c8] sm:$0xff]
    %v7405 = vld [vmem:[%s6 + $0x4d0] sm:$0xff]
    %v7406 = vld [vmem:[%s6 + $0x4d8] sm:$0xff]
    %v7407 = vld [vmem:[%s6 + $0x4e0] sm:$0xff]
    %v7408 = vld [vmem:[%s6 + $0x4e8] sm:$0xff]
    %v7409 = vld [vmem:[%s6 + $0x4f0] sm:$0xff]
    %v7410 = vld [vmem:[%s6 + $0x4f8] sm:$0xff]
    %v7411 = vld [vmem:[%s6 + $0x500] sm:$0xff]
    %v7412 = vld [vmem:[%s6 + $0x508] sm:$0xff]
    %v7413 = vld [vmem:[%s6 + $0x510] sm:$0xff]
    %v7414 = vld [vmem:[%s6 + $0x518] sm:$0xff]
    %v7415 = vld [vmem:[%s6 + $0x520] sm:$0xff]
    %v7416 = vld [vmem:[%s6 + $0x528] sm:$0xff]
    %v7417 = vld [vmem:[%s6 + $0x530] sm:$0xff]
    %v7418 = vld [vmem:[%s6 + $0x538] sm:$0xff]
    %v7419 = vld [vmem:[%s6 + $0x540] sm:$0xff]
    %v7420 = vld [vmem:[%s6 + $0x548] sm:$0xff]
    %v7421 = vld [vmem:[%s6 + $0x550] sm:$0xff]
    %v7422 = vld [vmem:[%s6 + $0x558] sm:$0xff]
    %v7423 = vld [vmem:[%s6 + $0x560] sm:$0xff]
    %v7424 = vld [vmem:[%s6 + $0x568] sm:$0xff]
    %v7425 = vld [vmem:[%s6 + $0x570] sm:$0xff]
    %v7426 = vld [vmem:[%s6 + $0x578] sm:$0xff]
    %v7427 = vld [vmem:[%s6 + $0x580] sm:$0xff]
    %v7428 = vld [vmem:[%s6 + $0x588] sm:$0xff]
    %v7429 = vld [vmem:[%s6 + $0x590] sm:$0xff]
    %v7430 = vld [vmem:[%s6 + $0x598] sm:$0xff]
    %v7431 = vld [vmem:[%s6 + $0x5a0] sm:$0xff]
    %v7432 = vld [vmem:[%s6 + $0x5a8] sm:$0xff]
    %v7433 = vld [vmem:[%s6 + $0x5b0] sm:$0xff]
    %v7434 = vld [vmem:[%s6 + $0x5b8] sm:$0xff]
    %v7435 = vld [vmem:[%s6 + $0x5c0] sm:$0xff]
    %v7436 = vld [vmem:[%s6 + $0x5c8] sm:$0xff]
    %v7437 = vld [vmem:[%s6 + $0x5d0] sm:$0xff]
    %v7438 = vld [vmem:[%s6 + $0x5d8] sm:$0xff]
    %v7439 = vld [vmem:[%s6 + $0x5e0] sm:$0xff]
    %v7440 = vld [vmem:[%s6 + $0x5e8] sm:$0xff]
    %v7441 = vld [vmem:[%s6 + $0x5f0] sm:$0xff]
    %v7442 = vld [vmem:[%s6 + $0x5f8] sm:$0xff]
    %v7443 = vld [vmem:[%s6 + $0x600] sm:$0xff]
    %v7444 = vld [vmem:[%s6 + $0x608] sm:$0xff]
    %v7445 = vld [vmem:[%s6 + $0x610] sm:$0xff]
    %v7446 = vld [vmem:[%s6 + $0x618] sm:$0xff]
    %v7447 = vld [vmem:[%s6 + $0x620] sm:$0xff]
    %v7448 = vld [vmem:[%s6 + $0x628] sm:$0xff]
    %v7449 = vld [vmem:[%s6 + $0x630] sm:$0xff]
    %v7450 = vld [vmem:[%s6 + $0x638] sm:$0xff]
    %v7451 = vld [vmem:[%s6 + $0x640] sm:$0xff]
    %v7452 = vld [vmem:[%s6 + $0x648] sm:$0xff]
    %v7453 = vld [vmem:[%s6 + $0x650] sm:$0xff]
    %v7454 = vld [vmem:[%s6 + $0x658] sm:$0xff]
    %v7455 = vld [vmem:[%s6 + $0x660] sm:$0xff]
    %v7456 = vld [vmem:[%s6 + $0x668] sm:$0xff]
    %v7457 = vld [vmem:[%s6 + $0x670] sm:$0xff]
    %v7458 = vld [vmem:[%s6 + $0x678] sm:$0xff]
    %v7459 = vld [vmem:[%s6 + $0x680] sm:$0xff]
    %v7460 = vld [vmem:[%s6 + $0x688] sm:$0xff]
    %v7461 = vld [vmem:[%s6 + $0x690] sm:$0xff]
    %v7462 = vld [vmem:[%s6 + $0x698] sm:$0xff]
    %v7463 = vld [vmem:[%s6 + $0x6a0] sm:$0xff]
    %v7464 = vld [vmem:[%s6 + $0x6a8] sm:$0xff]
    %v7465 = vld [vmem:[%s6 + $0x6b0] sm:$0xff]
    %v7466 = vld [vmem:[%s6 + $0x6b8] sm:$0xff]
    %v7467 = vld [vmem:[%s6 + $0x6c0] sm:$0xff]
    %v7468 = vld [vmem:[%s6 + $0x6c8] sm:$0xff]
    %v7469 = vld [vmem:[%s6 + $0x6d0] sm:$0xff]
    %v7470 = vld [vmem:[%s6 + $0x6d8] sm:$0xff]
    %v7471 = vld [vmem:[%s6 + $0x6e0] sm:$0xff]
    %v7472 = vld [vmem:[%s6 + $0x6e8] sm:$0xff]
    %v7473 = vld [vmem:[%s6 + $0x6f0] sm:$0xff]
    %v7474 = vld [vmem:[%s6 + $0x6f8] sm:$0xff]
    %v7475 = vld [vmem:[%s6 + $0x700] sm:$0xff]
    %v7476 = vld [vmem:[%s6 + $0x708] sm:$0xff]
    %v7477 = vld [vmem:[%s6 + $0x710] sm:$0xff]
    %v7478 = vld [vmem:[%s6 + $0x718] sm:$0xff]
    %v7479 = vld [vmem:[%s6 + $0x720] sm:$0xff]
    %v7480 = vld [vmem:[%s6 + $0x728] sm:$0xff]
    %v7481 = vld [vmem:[%s6 + $0x730] sm:$0xff]
    %v7482 = vld [vmem:[%s6 + $0x738] sm:$0xff]
    %v7483 = vld [vmem:[%s6 + $0x740] sm:$0xff]
    %v7484 = vld [vmem:[%s6 + $0x748] sm:$0xff]
    %v7485 = vld [vmem:[%s6 + $0x750] sm:$0xff]
    %v7486 = vld [vmem:[%s6 + $0x758] sm:$0xff]
    %v7487 = vld [vmem:[%s6 + $0x760] sm:$0xff]
    %v7488 = vld [vmem:[%s6 + $0x768] sm:$0xff]
    %v7489 = vld [vmem:[%s6 + $0x770] sm:$0xff]
    %v7490 = vld [vmem:[%s6 + $0x778] sm:$0xff]
    %v7491 = vld [vmem:[%s6 + $0x780] sm:$0xff]
    %v7492 = vld [vmem:[%s6 + $0x788] sm:$0xff]
    %v7493 = vld [vmem:[%s6 + $0x790] sm:$0xff]
    %v7494 = vld [vmem:[%s6 + $0x798] sm:$0xff]
    %v7495 = vld [vmem:[%s6 + $0x7a0] sm:$0xff]
    %v7496 = vld [vmem:[%s6 + $0x7a8] sm:$0xff]
    %v7497 = vld [vmem:[%s6 + $0x7b0] sm:$0xff]
    %v7498 = vld [vmem:[%s6 + $0x7b8] sm:$0xff]
    %v7499 = vld [vmem:[%s6 + $0x7c0] sm:$0xff]
    %v7500 = vld [vmem:[%s6 + $0x7c8] sm:$0xff]
    %v7501 = vld [vmem:[%s6 + $0x7d0] sm:$0xff]
    %v7502 = vld [vmem:[%s6 + $0x7d8] sm:$0xff]
    %v7503 = vld [vmem:[%s6 + $0x7e0] sm:$0xff]
    %v7504 = vld [vmem:[%s6 + $0x7e8] sm:$0xff]
    %v7505 = vld [vmem:[%s6 + $0x7f0] sm:$0xff]
    %v7506 = vld [vmem:[%s6 + $0x7f8] sm:$0xff]
    %v7507 = vld [vmem:[#allocation12] sm:$0xf]
    %v7509 = vlaneseq
    %v7510 = vshrl.u32 %v7509, 7
    %v7511 = vsub.s32 0, %v7510
    %v7512 = vrot.slane %v7507, %v7511
    %v7513 = vlaneseq
    %v7514 = vshrl.u32 %v7513, 7
    %v7515 = vsub.s32 1, %v7514
    %v7516 = vrot.slane %v7507, %v7515
    %v7517 = vlaneseq
    %v7518 = vshrl.u32 %v7517, 7
    %v7519 = vsub.s32 2, %v7518
    %v7520 = vrot.slane %v7507, %v7519
    %v7521 = vlaneseq
    %v7522 = vshrl.u32 %v7521, 7
    %v7523 = vsub.s32 3, %v7522
    %v7524 = vrot.slane %v7507, %v7523
    %v7785 = vunpack.c.l.b16 %v7251
    %v7786 = vunpack.c.h.b16 %v7251
    %v7787 = vunpack.c.l.b16 %v7252
    %v7788 = vunpack.c.h.b16 %v7252
    %v7789 = vunpack.c.l.b16 %v7253
    %v7790 = vunpack.c.h.b16 %v7253
    %v7791 = vunpack.c.l.b16 %v7254
    %v7792 = vunpack.c.h.b16 %v7254
    %v7793 = vunpack.c.l.b16 %v7255
    %v7794 = vunpack.c.h.b16 %v7255
    %v7795 = vunpack.c.l.b16 %v7256
    %v7796 = vunpack.c.h.b16 %v7256
    %v7797 = vunpack.c.l.b16 %v7257
    %v7798 = vunpack.c.h.b16 %v7257
    %v7799 = vunpack.c.l.b16 %v7258
    %v7800 = vunpack.c.h.b16 %v7258
    %v7801 = vunpack.c.l.b16 %v7259
    %v7802 = vunpack.c.h.b16 %v7259
    %v7803 = vunpack.c.l.b16 %v7260
    %v7804 = vunpack.c.h.b16 %v7260
    %v7805 = vunpack.c.l.b16 %v7261
    %v7806 = vunpack.c.h.b16 %v7261
    %v7807 = vunpack.c.l.b16 %v7262
    %v7808 = vunpack.c.h.b16 %v7262
    %v7809 = vunpack.c.l.b16 %v7263
    %v7810 = vunpack.c.h.b16 %v7263
    %v7811 = vunpack.c.l.b16 %v7264
    %v7812 = vunpack.c.h.b16 %v7264
    %v7813 = vunpack.c.l.b16 %v7265
    %v7814 = vunpack.c.h.b16 %v7265
    %v7815 = vunpack.c.l.b16 %v7266
    %v7816 = vunpack.c.h.b16 %v7266
    %v7817 = vunpack.c.l.b16 %v7267
    %v7818 = vunpack.c.h.b16 %v7267
    %v7819 = vunpack.c.l.b16 %v7268
    %v7820 = vunpack.c.h.b16 %v7268
    %v7821 = vunpack.c.l.b16 %v7269
    %v7822 = vunpack.c.h.b16 %v7269
    %v7823 = vunpack.c.l.b16 %v7270
    %v7824 = vunpack.c.h.b16 %v7270
    %v7825 = vunpack.c.l.b16 %v7271
    %v7826 = vunpack.c.h.b16 %v7271
    %v7827 = vunpack.c.l.b16 %v7272
    %v7828 = vunpack.c.h.b16 %v7272
    %v7829 = vunpack.c.l.b16 %v7273
    %v7830 = vunpack.c.h.b16 %v7273
    %v7831 = vunpack.c.l.b16 %v7274
    %v7832 = vunpack.c.h.b16 %v7274
    %v7833 = vunpack.c.l.b16 %v7275
    %v7834 = vunpack.c.h.b16 %v7275
    %v7835 = vunpack.c.l.b16 %v7276
    %v7836 = vunpack.c.h.b16 %v7276
    %v7837 = vunpack.c.l.b16 %v7277
    %v7838 = vunpack.c.h.b16 %v7277
    %v7839 = vunpack.c.l.b16 %v7278
    %v7840 = vunpack.c.h.b16 %v7278
    %v7841 = vunpack.c.l.b16 %v7279
    %v7842 = vunpack.c.h.b16 %v7279
    %v7843 = vunpack.c.l.b16 %v7280
    %v7844 = vunpack.c.h.b16 %v7280
    %v7845 = vunpack.c.l.b16 %v7281
    %v7846 = vunpack.c.h.b16 %v7281
    %v7847 = vunpack.c.l.b16 %v7282
    %v7848 = vunpack.c.h.b16 %v7282
    %v7849 = vunpack.c.l.b16 %v7283
    %v7850 = vunpack.c.h.b16 %v7283
    %v7851 = vunpack.c.l.b16 %v7284
    %v7852 = vunpack.c.h.b16 %v7284
    %v7853 = vunpack.c.l.b16 %v7285
    %v7854 = vunpack.c.h.b16 %v7285
    %v7855 = vunpack.c.l.b16 %v7286
    %v7856 = vunpack.c.h.b16 %v7286
    %v7857 = vunpack.c.l.b16 %v7287
    %v7858 = vunpack.c.h.b16 %v7287
    %v7859 = vunpack.c.l.b16 %v7288
    %v7860 = vunpack.c.h.b16 %v7288
    %v7861 = vunpack.c.l.b16 %v7289
    %v7862 = vunpack.c.h.b16 %v7289
    %v7863 = vunpack.c.l.b16 %v7290
    %v7864 = vunpack.c.h.b16 %v7290
    %v7865 = vunpack.c.l.b16 %v7291
    %v7866 = vunpack.c.h.b16 %v7291
    %v7867 = vunpack.c.l.b16 %v7292
    %v7868 = vunpack.c.h.b16 %v7292
    %v7869 = vunpack.c.l.b16 %v7293
    %v7870 = vunpack.c.h.b16 %v7293
    %v7871 = vunpack.c.l.b16 %v7294
    %v7872 = vunpack.c.h.b16 %v7294
    %v7873 = vunpack.c.l.b16 %v7295
    %v7874 = vunpack.c.h.b16 %v7295
    %v7875 = vunpack.c.l.b16 %v7296
    %v7876 = vunpack.c.h.b16 %v7296
    %v7877 = vunpack.c.l.b16 %v7297
    %v7878 = vunpack.c.h.b16 %v7297
    %v7879 = vunpack.c.l.b16 %v7298
    %v7880 = vunpack.c.h.b16 %v7298
    %v7881 = vunpack.c.l.b16 %v7299
    %v7882 = vunpack.c.h.b16 %v7299
    %v7883 = vunpack.c.l.b16 %v7300
    %v7884 = vunpack.c.h.b16 %v7300
    %v7885 = vunpack.c.l.b16 %v7301
    %v7886 = vunpack.c.h.b16 %v7301
    %v7887 = vunpack.c.l.b16 %v7302
    %v7888 = vunpack.c.h.b16 %v7302
    %v7889 = vunpack.c.l.b16 %v7303
    %v7890 = vunpack.c.h.b16 %v7303
    %v7891 = vunpack.c.l.b16 %v7304
    %v7892 = vunpack.c.h.b16 %v7304
    %v7893 = vunpack.c.l.b16 %v7305
    %v7894 = vunpack.c.h.b16 %v7305
    %v7895 = vunpack.c.l.b16 %v7306
    %v7896 = vunpack.c.h.b16 %v7306
    %v7897 = vunpack.c.l.b16 %v7307
    %v7898 = vunpack.c.h.b16 %v7307
    %v7899 = vunpack.c.l.b16 %v7308
    %v7900 = vunpack.c.h.b16 %v7308
    %v7901 = vunpack.c.l.b16 %v7309
    %v7902 = vunpack.c.h.b16 %v7309
    %v7903 = vunpack.c.l.b16 %v7310
    %v7904 = vunpack.c.h.b16 %v7310
    %v7905 = vunpack.c.l.b16 %v7311
    %v7906 = vunpack.c.h.b16 %v7311
    %v7907 = vunpack.c.l.b16 %v7312
    %v7908 = vunpack.c.h.b16 %v7312
    %v7909 = vunpack.c.l.b16 %v7313
    %v7910 = vunpack.c.h.b16 %v7313
    %v7911 = vunpack.c.l.b16 %v7314
    %v7912 = vunpack.c.h.b16 %v7314
    %v7913 = vunpack.c.l.b16 %v7315
    %v7914 = vunpack.c.h.b16 %v7315
    %v7915 = vunpack.c.l.b16 %v7316
    %v7916 = vunpack.c.h.b16 %v7316
    %v7917 = vunpack.c.l.b16 %v7317
    %v7918 = vunpack.c.h.b16 %v7317
    %v7919 = vunpack.c.l.b16 %v7318
    %v7920 = vunpack.c.h.b16 %v7318
    %v7921 = vunpack.c.l.b16 %v7319
    %v7922 = vunpack.c.h.b16 %v7319
    %v7923 = vunpack.c.l.b16 %v7320
    %v7924 = vunpack.c.h.b16 %v7320
    %v7925 = vunpack.c.l.b16 %v7321
    %v7926 = vunpack.c.h.b16 %v7321
    %v7927 = vunpack.c.l.b16 %v7322
    %v7928 = vunpack.c.h.b16 %v7322
    %v7929 = vunpack.c.l.b16 %v7323
    %v7930 = vunpack.c.h.b16 %v7323
    %v7931 = vunpack.c.l.b16 %v7324
    %v7932 = vunpack.c.h.b16 %v7324
    %v7933 = vunpack.c.l.b16 %v7325
    %v7934 = vunpack.c.h.b16 %v7325
    %v7935 = vunpack.c.l.b16 %v7326
    %v7936 = vunpack.c.h.b16 %v7326
    %v7937 = vunpack.c.l.b16 %v7327
    %v7938 = vunpack.c.h.b16 %v7327
    %v7939 = vunpack.c.l.b16 %v7328
    %v7940 = vunpack.c.h.b16 %v7328
    %v7941 = vunpack.c.l.b16 %v7329
    %v7942 = vunpack.c.h.b16 %v7329
    %v7943 = vunpack.c.l.b16 %v7330
    %v7944 = vunpack.c.h.b16 %v7330
    %v7945 = vunpack.c.l.b16 %v7331
    %v7946 = vunpack.c.h.b16 %v7331
    %v7947 = vunpack.c.l.b16 %v7332
    %v7948 = vunpack.c.h.b16 %v7332
    %v7949 = vunpack.c.l.b16 %v7333
    %v7950 = vunpack.c.h.b16 %v7333
    %v7951 = vunpack.c.l.b16 %v7334
    %v7952 = vunpack.c.h.b16 %v7334
    %v7953 = vunpack.c.l.b16 %v7335
    %v7954 = vunpack.c.h.b16 %v7335
    %v7955 = vunpack.c.l.b16 %v7336
    %v7956 = vunpack.c.h.b16 %v7336
    %v7957 = vunpack.c.l.b16 %v7337
    %v7958 = vunpack.c.h.b16 %v7337
    %v7959 = vunpack.c.l.b16 %v7338
    %v7960 = vunpack.c.h.b16 %v7338
    %v7961 = vunpack.c.l.b16 %v7339
    %v7962 = vunpack.c.h.b16 %v7339
    %v7963 = vunpack.c.l.b16 %v7340
    %v7964 = vunpack.c.h.b16 %v7340
    %v7965 = vunpack.c.l.b16 %v7341
    %v7966 = vunpack.c.h.b16 %v7341
    %v7967 = vunpack.c.l.b16 %v7342
    %v7968 = vunpack.c.h.b16 %v7342
    %v7969 = vunpack.c.l.b16 %v7343
    %v7970 = vunpack.c.h.b16 %v7343
    %v7971 = vunpack.c.l.b16 %v7344
    %v7972 = vunpack.c.h.b16 %v7344
    %v7973 = vunpack.c.l.b16 %v7345
    %v7974 = vunpack.c.h.b16 %v7345
    %v7975 = vunpack.c.l.b16 %v7346
    %v7976 = vunpack.c.h.b16 %v7346
    %v7977 = vunpack.c.l.b16 %v7347
    %v7978 = vunpack.c.h.b16 %v7347
    %v7979 = vunpack.c.l.b16 %v7348
    %v7980 = vunpack.c.h.b16 %v7348
    %v7981 = vunpack.c.l.b16 %v7349
    %v7982 = vunpack.c.h.b16 %v7349
    %v7983 = vunpack.c.l.b16 %v7350
    %v7984 = vunpack.c.h.b16 %v7350
    %v7985 = vunpack.c.l.b16 %v7351
    %v7986 = vunpack.c.h.b16 %v7351
    %v7987 = vunpack.c.l.b16 %v7352
    %v7988 = vunpack.c.h.b16 %v7352
    %v7989 = vunpack.c.l.b16 %v7353
    %v7990 = vunpack.c.h.b16 %v7353
    %v7991 = vunpack.c.l.b16 %v7354
    %v7992 = vunpack.c.h.b16 %v7354
    %v7993 = vunpack.c.l.b16 %v7355
    %v7994 = vunpack.c.h.b16 %v7355
    %v7995 = vunpack.c.l.b16 %v7356
    %v7996 = vunpack.c.h.b16 %v7356
    %v7997 = vunpack.c.l.b16 %v7357
    %v7998 = vunpack.c.h.b16 %v7357
    %v7999 = vunpack.c.l.b16 %v7358
    %v8000 = vunpack.c.h.b16 %v7358
    %v8001 = vunpack.c.l.b16 %v7359
    %v8002 = vunpack.c.h.b16 %v7359
    %v8003 = vunpack.c.l.b16 %v7360
    %v8004 = vunpack.c.h.b16 %v7360
    %v8005 = vunpack.c.l.b16 %v7361
    %v8006 = vunpack.c.h.b16 %v7361
    %v8007 = vunpack.c.l.b16 %v7362
    %v8008 = vunpack.c.h.b16 %v7362
    %v8009 = vunpack.c.l.b16 %v7363
    %v8010 = vunpack.c.h.b16 %v7363
    %v8011 = vunpack.c.l.b16 %v7364
    %v8012 = vunpack.c.h.b16 %v7364
    %v8013 = vunpack.c.l.b16 %v7365
    %v8014 = vunpack.c.h.b16 %v7365
    %v8015 = vunpack.c.l.b16 %v7366
    %v8016 = vunpack.c.h.b16 %v7366
    %v8017 = vunpack.c.l.b16 %v7367
    %v8018 = vunpack.c.h.b16 %v7367
    %v8019 = vunpack.c.l.b16 %v7368
    %v8020 = vunpack.c.h.b16 %v7368
    %v8021 = vunpack.c.l.b16 %v7369
    %v8022 = vunpack.c.h.b16 %v7369
    %v8023 = vunpack.c.l.b16 %v7370
    %v8024 = vunpack.c.h.b16 %v7370
    %v8025 = vunpack.c.l.b16 %v7371
    %v8026 = vunpack.c.h.b16 %v7371
    %v8027 = vunpack.c.l.b16 %v7372
    %v8028 = vunpack.c.h.b16 %v7372
    %v8029 = vunpack.c.l.b16 %v7373
    %v8030 = vunpack.c.h.b16 %v7373
    %v8031 = vunpack.c.l.b16 %v7374
    %v8032 = vunpack.c.h.b16 %v7374
    %v8033 = vunpack.c.l.b16 %v7375
    %v8034 = vunpack.c.h.b16 %v7375
    %v8035 = vunpack.c.l.b16 %v7376
    %v8036 = vunpack.c.h.b16 %v7376
    %v8037 = vunpack.c.l.b16 %v7377
    %v8038 = vunpack.c.h.b16 %v7377
    %v8039 = vunpack.c.l.b16 %v7378
    %v8040 = vunpack.c.h.b16 %v7378
    %v8041 = vunpack.c.l.b16 %v7379
    %v8042 = vunpack.c.h.b16 %v7379
    %v8043 = vunpack.c.l.b16 %v7380
    %v8044 = vunpack.c.h.b16 %v7380
    %v8045 = vunpack.c.l.b16 %v7381
    %v8046 = vunpack.c.h.b16 %v7381
    %v8047 = vunpack.c.l.b16 %v7382
    %v8048 = vunpack.c.h.b16 %v7382
    %v8049 = vunpack.c.l.b16 %v7383
    %v8050 = vunpack.c.h.b16 %v7383
    %v8051 = vunpack.c.l.b16 %v7384
    %v8052 = vunpack.c.h.b16 %v7384
    %v8053 = vunpack.c.l.b16 %v7385
    %v8054 = vunpack.c.h.b16 %v7385
    %v8055 = vunpack.c.l.b16 %v7386
    %v8056 = vunpack.c.h.b16 %v7386
    %v8057 = vunpack.c.l.b16 %v7387
    %v8058 = vunpack.c.h.b16 %v7387
    %v8059 = vunpack.c.l.b16 %v7388
    %v8060 = vunpack.c.h.b16 %v7388
    %v8061 = vunpack.c.l.b16 %v7389
    %v8062 = vunpack.c.h.b16 %v7389
    %v8063 = vunpack.c.l.b16 %v7390
    %v8064 = vunpack.c.h.b16 %v7390
    %v8065 = vunpack.c.l.b16 %v7391
    %v8066 = vunpack.c.h.b16 %v7391
    %v8067 = vunpack.c.l.b16 %v7392
    %v8068 = vunpack.c.h.b16 %v7392
    %v8069 = vunpack.c.l.b16 %v7393
    %v8070 = vunpack.c.h.b16 %v7393
    %v8071 = vunpack.c.l.b16 %v7394
    %v8072 = vunpack.c.h.b16 %v7394
    %v8073 = vunpack.c.l.b16 %v7395
    %v8074 = vunpack.c.h.b16 %v7395
    %v8075 = vunpack.c.l.b16 %v7396
    %v8076 = vunpack.c.h.b16 %v7396
    %v8077 = vunpack.c.l.b16 %v7397
    %v8078 = vunpack.c.h.b16 %v7397
    %v8079 = vunpack.c.l.b16 %v7398
    %v8080 = vunpack.c.h.b16 %v7398
    %v8081 = vunpack.c.l.b16 %v7399
    %v8082 = vunpack.c.h.b16 %v7399
    %v8083 = vunpack.c.l.b16 %v7400
    %v8084 = vunpack.c.h.b16 %v7400
    %v8085 = vunpack.c.l.b16 %v7401
    %v8086 = vunpack.c.h.b16 %v7401
    %v8087 = vunpack.c.l.b16 %v7402
    %v8088 = vunpack.c.h.b16 %v7402
    %v8089 = vunpack.c.l.b16 %v7403
    %v8090 = vunpack.c.h.b16 %v7403
    %v8091 = vunpack.c.l.b16 %v7404
    %v8092 = vunpack.c.h.b16 %v7404
    %v8093 = vunpack.c.l.b16 %v7405
    %v8094 = vunpack.c.h.b16 %v7405
    %v8095 = vunpack.c.l.b16 %v7406
    %v8096 = vunpack.c.h.b16 %v7406
    %v8097 = vunpack.c.l.b16 %v7407
    %v8098 = vunpack.c.h.b16 %v7407
    %v8099 = vunpack.c.l.b16 %v7408
    %v8100 = vunpack.c.h.b16 %v7408
    %v8101 = vunpack.c.l.b16 %v7409
    %v8102 = vunpack.c.h.b16 %v7409
    %v8103 = vunpack.c.l.b16 %v7410
    %v8104 = vunpack.c.h.b16 %v7410
    %v8105 = vunpack.c.l.b16 %v7411
    %v8106 = vunpack.c.h.b16 %v7411
    %v8107 = vunpack.c.l.b16 %v7412
    %v8108 = vunpack.c.h.b16 %v7412
    %v8109 = vunpack.c.l.b16 %v7413
    %v8110 = vunpack.c.h.b16 %v7413
    %v8111 = vunpack.c.l.b16 %v7414
    %v8112 = vunpack.c.h.b16 %v7414
    %v8113 = vunpack.c.l.b16 %v7415
    %v8114 = vunpack.c.h.b16 %v7415
    %v8115 = vunpack.c.l.b16 %v7416
    %v8116 = vunpack.c.h.b16 %v7416
    %v8117 = vunpack.c.l.b16 %v7417
    %v8118 = vunpack.c.h.b16 %v7417
    %v8119 = vunpack.c.l.b16 %v7418
    %v8120 = vunpack.c.h.b16 %v7418
    %v8121 = vunpack.c.l.b16 %v7419
    %v8122 = vunpack.c.h.b16 %v7419
    %v8123 = vunpack.c.l.b16 %v7420
    %v8124 = vunpack.c.h.b16 %v7420
    %v8125 = vunpack.c.l.b16 %v7421
    %v8126 = vunpack.c.h.b16 %v7421
    %v8127 = vunpack.c.l.b16 %v7422
    %v8128 = vunpack.c.h.b16 %v7422
    %v8129 = vunpack.c.l.b16 %v7423
    %v8130 = vunpack.c.h.b16 %v7423
    %v8131 = vunpack.c.l.b16 %v7424
    %v8132 = vunpack.c.h.b16 %v7424
    %v8133 = vunpack.c.l.b16 %v7425
    %v8134 = vunpack.c.h.b16 %v7425
    %v8135 = vunpack.c.l.b16 %v7426
    %v8136 = vunpack.c.h.b16 %v7426
    %v8137 = vunpack.c.l.b16 %v7427
    %v8138 = vunpack.c.h.b16 %v7427
    %v8139 = vunpack.c.l.b16 %v7428
    %v8140 = vunpack.c.h.b16 %v7428
    %v8141 = vunpack.c.l.b16 %v7429
    %v8142 = vunpack.c.h.b16 %v7429
    %v8143 = vunpack.c.l.b16 %v7430
    %v8144 = vunpack.c.h.b16 %v7430
    %v8145 = vunpack.c.l.b16 %v7431
    %v8146 = vunpack.c.h.b16 %v7431
    %v8147 = vunpack.c.l.b16 %v7432
    %v8148 = vunpack.c.h.b16 %v7432
    %v8149 = vunpack.c.l.b16 %v7433
    %v8150 = vunpack.c.h.b16 %v7433
    %v8151 = vunpack.c.l.b16 %v7434
    %v8152 = vunpack.c.h.b16 %v7434
    %v8153 = vunpack.c.l.b16 %v7435
    %v8154 = vunpack.c.h.b16 %v7435
    %v8155 = vunpack.c.l.b16 %v7436
    %v8156 = vunpack.c.h.b16 %v7436
    %v8157 = vunpack.c.l.b16 %v7437
    %v8158 = vunpack.c.h.b16 %v7437
    %v8159 = vunpack.c.l.b16 %v7438
    %v8160 = vunpack.c.h.b16 %v7438
    %v8161 = vunpack.c.l.b16 %v7439
    %v8162 = vunpack.c.h.b16 %v7439
    %v8163 = vunpack.c.l.b16 %v7440
    %v8164 = vunpack.c.h.b16 %v7440
    %v8165 = vunpack.c.l.b16 %v7441
    %v8166 = vunpack.c.h.b16 %v7441
    %v8167 = vunpack.c.l.b16 %v7442
    %v8168 = vunpack.c.h.b16 %v7442
    %v8169 = vunpack.c.l.b16 %v7443
    %v8170 = vunpack.c.h.b16 %v7443
    %v8171 = vunpack.c.l.b16 %v7444
    %v8172 = vunpack.c.h.b16 %v7444
    %v8173 = vunpack.c.l.b16 %v7445
    %v8174 = vunpack.c.h.b16 %v7445
    %v8175 = vunpack.c.l.b16 %v7446
    %v8176 = vunpack.c.h.b16 %v7446
    %v8177 = vunpack.c.l.b16 %v7447
    %v8178 = vunpack.c.h.b16 %v7447
    %v8179 = vunpack.c.l.b16 %v7448
    %v8180 = vunpack.c.h.b16 %v7448
    %v8181 = vunpack.c.l.b16 %v7449
    %v8182 = vunpack.c.h.b16 %v7449
    %v8183 = vunpack.c.l.b16 %v7450
    %v8184 = vunpack.c.h.b16 %v7450
    %v8185 = vunpack.c.l.b16 %v7451
    %v8186 = vunpack.c.h.b16 %v7451
    %v8187 = vunpack.c.l.b16 %v7452
    %v8188 = vunpack.c.h.b16 %v7452
    %v8189 = vunpack.c.l.b16 %v7453
    %v8190 = vunpack.c.h.b16 %v7453
    %v8191 = vunpack.c.l.b16 %v7454
    %v8192 = vunpack.c.h.b16 %v7454
    %v8193 = vunpack.c.l.b16 %v7455
    %v8194 = vunpack.c.h.b16 %v7455
    %v8195 = vunpack.c.l.b16 %v7456
    %v8196 = vunpack.c.h.b16 %v7456
    %v8197 = vunpack.c.l.b16 %v7457
    %v8198 = vunpack.c.h.b16 %v7457
    %v8199 = vunpack.c.l.b16 %v7458
    %v8200 = vunpack.c.h.b16 %v7458
    %v8201 = vunpack.c.l.b16 %v7459
    %v8202 = vunpack.c.h.b16 %v7459
    %v8203 = vunpack.c.l.b16 %v7460
    %v8204 = vunpack.c.h.b16 %v7460
    %v8205 = vunpack.c.l.b16 %v7461
    %v8206 = vunpack.c.h.b16 %v7461
    %v8207 = vunpack.c.l.b16 %v7462
    %v8208 = vunpack.c.h.b16 %v7462
    %v8209 = vunpack.c.l.b16 %v7463
    %v8210 = vunpack.c.h.b16 %v7463
    %v8211 = vunpack.c.l.b16 %v7464
    %v8212 = vunpack.c.h.b16 %v7464
    %v8213 = vunpack.c.l.b16 %v7465
    %v8214 = vunpack.c.h.b16 %v7465
    %v8215 = vunpack.c.l.b16 %v7466
    %v8216 = vunpack.c.h.b16 %v7466
    %v8217 = vunpack.c.l.b16 %v7467
    %v8218 = vunpack.c.h.b16 %v7467
    %v8219 = vunpack.c.l.b16 %v7468
    %v8220 = vunpack.c.h.b16 %v7468
    %v8221 = vunpack.c.l.b16 %v7469
    %v8222 = vunpack.c.h.b16 %v7469
    %v8223 = vunpack.c.l.b16 %v7470
    %v8224 = vunpack.c.h.b16 %v7470
    %v8225 = vunpack.c.l.b16 %v7471
    %v8226 = vunpack.c.h.b16 %v7471
    %v8227 = vunpack.c.l.b16 %v7472
    %v8228 = vunpack.c.h.b16 %v7472
    %v8229 = vunpack.c.l.b16 %v7473
    %v8230 = vunpack.c.h.b16 %v7473
    %v8231 = vunpack.c.l.b16 %v7474
    %v8232 = vunpack.c.h.b16 %v7474
    %v8233 = vunpack.c.l.b16 %v7475
    %v8234 = vunpack.c.h.b16 %v7475
    %v8235 = vunpack.c.l.b16 %v7476
    %v8236 = vunpack.c.h.b16 %v7476
    %v8237 = vunpack.c.l.b16 %v7477
    %v8238 = vunpack.c.h.b16 %v7477
    %v8239 = vunpack.c.l.b16 %v7478
    %v8240 = vunpack.c.h.b16 %v7478
    %v8241 = vunpack.c.l.b16 %v7479
    %v8242 = vunpack.c.h.b16 %v7479
    %v8243 = vunpack.c.l.b16 %v7480
    %v8244 = vunpack.c.h.b16 %v7480
    %v8245 = vunpack.c.l.b16 %v7481
    %v8246 = vunpack.c.h.b16 %v7481
    %v8247 = vunpack.c.l.b16 %v7482
    %v8248 = vunpack.c.h.b16 %v7482
    %v8249 = vunpack.c.l.b16 %v7483
    %v8250 = vunpack.c.h.b16 %v7483
    %v8251 = vunpack.c.l.b16 %v7484
    %v8252 = vunpack.c.h.b16 %v7484
    %v8253 = vunpack.c.l.b16 %v7485
    %v8254 = vunpack.c.h.b16 %v7485
    %v8255 = vunpack.c.l.b16 %v7486
    %v8256 = vunpack.c.h.b16 %v7486
    %v8257 = vunpack.c.l.b16 %v7487
    %v8258 = vunpack.c.h.b16 %v7487
    %v8259 = vunpack.c.l.b16 %v7488
    %v8260 = vunpack.c.h.b16 %v7488
    %v8261 = vunpack.c.l.b16 %v7489
    %v8262 = vunpack.c.h.b16 %v7489
    %v8263 = vunpack.c.l.b16 %v7490
    %v8264 = vunpack.c.h.b16 %v7490
    %v8265 = vunpack.c.l.b16 %v7491
    %v8266 = vunpack.c.h.b16 %v7491
    %v8267 = vunpack.c.l.b16 %v7492
    %v8268 = vunpack.c.h.b16 %v7492
    %v8269 = vunpack.c.l.b16 %v7493
    %v8270 = vunpack.c.h.b16 %v7493
    %v8271 = vunpack.c.l.b16 %v7494
    %v8272 = vunpack.c.h.b16 %v7494
    %v8273 = vunpack.c.l.b16 %v7495
    %v8274 = vunpack.c.h.b16 %v7495
    %v8275 = vunpack.c.l.b16 %v7496
    %v8276 = vunpack.c.h.b16 %v7496
    %v8277 = vunpack.c.l.b16 %v7497
    %v8278 = vunpack.c.h.b16 %v7497
    %v8279 = vunpack.c.l.b16 %v7498
    %v8280 = vunpack.c.h.b16 %v7498
    %v8281 = vunpack.c.l.b16 %v7499
    %v8282 = vunpack.c.h.b16 %v7499
    %v8283 = vunpack.c.l.b16 %v7500
    %v8284 = vunpack.c.h.b16 %v7500
    %v8285 = vunpack.c.l.b16 %v7501
    %v8286 = vunpack.c.h.b16 %v7501
    %v8287 = vunpack.c.l.b16 %v7502
    %v8288 = vunpack.c.h.b16 %v7502
    %v8289 = vunpack.c.l.b16 %v7503
    %v8290 = vunpack.c.h.b16 %v7503
    %v8291 = vunpack.c.l.b16 %v7504
    %v8292 = vunpack.c.h.b16 %v7504
    %v8293 = vunpack.c.l.b16 %v7505
    %v8294 = vunpack.c.h.b16 %v7505
    %v8295 = vunpack.c.l.b16 %v7506
    %v8296 = vunpack.c.h.b16 %v7506
    %v8297 = vpack.c.b16 %v7789, %v7785
    %v8298 = vpack.c.b16 %v7790, %v7786
    %v8299 = vpack.c.b16 %v7791, %v7787
    %v8300 = vpack.c.b16 %v7792, %v7788
    %v8301 = vpack.c.b16 %v7797, %v7793
    %v8302 = vpack.c.b16 %v7798, %v7794
    %v8303 = vpack.c.b16 %v7799, %v7795
    %v8304 = vpack.c.b16 %v7800, %v7796
    %v8305 = vpack.c.b16 %v7805, %v7801
    %v8306 = vpack.c.b16 %v7806, %v7802
    %v8307 = vpack.c.b16 %v7807, %v7803
    %v8308 = vpack.c.b16 %v7808, %v7804
    %v8309 = vpack.c.b16 %v7813, %v7809
    %v8310 = vpack.c.b16 %v7814, %v7810
    %v8311 = vpack.c.b16 %v7815, %v7811
    %v8312 = vpack.c.b16 %v7816, %v7812
    %v8313 = vpack.c.b16 %v7821, %v7817
    %v8314 = vpack.c.b16 %v7822, %v7818
    %v8315 = vpack.c.b16 %v7823, %v7819
    %v8316 = vpack.c.b16 %v7824, %v7820
    %v8317 = vpack.c.b16 %v7829, %v7825
    %v8318 = vpack.c.b16 %v7830, %v7826
    %v8319 = vpack.c.b16 %v7831, %v7827
    %v8320 = vpack.c.b16 %v7832, %v7828
    %v8321 = vpack.c.b16 %v7837, %v7833
    %v8322 = vpack.c.b16 %v7838, %v7834
    %v8323 = vpack.c.b16 %v7839, %v7835
    %v8324 = vpack.c.b16 %v7840, %v7836
    %v8325 = vpack.c.b16 %v7845, %v7841
    %v8326 = vpack.c.b16 %v7846, %v7842
    %v8327 = vpack.c.b16 %v7847, %v7843
    %v8328 = vpack.c.b16 %v7848, %v7844
    %v8329 = vpack.c.b16 %v7853, %v7849
    %v8330 = vpack.c.b16 %v7854, %v7850
    %v8331 = vpack.c.b16 %v7855, %v7851
    %v8332 = vpack.c.b16 %v7856, %v7852
    %v8333 = vpack.c.b16 %v7861, %v7857
    %v8334 = vpack.c.b16 %v7862, %v7858
    %v8335 = vpack.c.b16 %v7863, %v7859
    %v8336 = vpack.c.b16 %v7864, %v7860
    %v8337 = vpack.c.b16 %v7869, %v7865
    %v8338 = vpack.c.b16 %v7870, %v7866
    %v8339 = vpack.c.b16 %v7871, %v7867
    %v8340 = vpack.c.b16 %v7872, %v7868
    %v8341 = vpack.c.b16 %v7877, %v7873
    %v8342 = vpack.c.b16 %v7878, %v7874
    %v8343 = vpack.c.b16 %v7879, %v7875
    %v8344 = vpack.c.b16 %v7880, %v7876
    %v8345 = vpack.c.b16 %v7885, %v7881
    %v8346 = vpack.c.b16 %v7886, %v7882
    %v8347 = vpack.c.b16 %v7887, %v7883
    %v8348 = vpack.c.b16 %v7888, %v7884
    %v8349 = vpack.c.b16 %v7893, %v7889
    %v8350 = vpack.c.b16 %v7894, %v7890
    %v8351 = vpack.c.b16 %v7895, %v7891
    %v8352 = vpack.c.b16 %v7896, %v7892
    %v8353 = vpack.c.b16 %v7901, %v7897
    %v8354 = vpack.c.b16 %v7902, %v7898
    %v8355 = vpack.c.b16 %v7903, %v7899
    %v8356 = vpack.c.b16 %v7904, %v7900
    %v8357 = vpack.c.b16 %v7909, %v7905
    %v8358 = vpack.c.b16 %v7910, %v7906
    %v8359 = vpack.c.b16 %v7911, %v7907
    %v8360 = vpack.c.b16 %v7912, %v7908
    %v8361 = vpack.c.b16 %v7917, %v7913
    %v8362 = vpack.c.b16 %v7918, %v7914
    %v8363 = vpack.c.b16 %v7919, %v7915
    %v8364 = vpack.c.b16 %v7920, %v7916
    %v8365 = vpack.c.b16 %v7925, %v7921
    %v8366 = vpack.c.b16 %v7926, %v7922
    %v8367 = vpack.c.b16 %v7927, %v7923
    %v8368 = vpack.c.b16 %v7928, %v7924
    %v8369 = vpack.c.b16 %v7933, %v7929
    %v8370 = vpack.c.b16 %v7934, %v7930
    %v8371 = vpack.c.b16 %v7935, %v7931
    %v8372 = vpack.c.b16 %v7936, %v7932
    %v8373 = vpack.c.b16 %v7941, %v7937
    %v8374 = vpack.c.b16 %v7942, %v7938
    %v8375 = vpack.c.b16 %v7943, %v7939
    %v8376 = vpack.c.b16 %v7944, %v7940
    %v8377 = vpack.c.b16 %v7949, %v7945
    %v8378 = vpack.c.b16 %v7950, %v7946
    %v8379 = vpack.c.b16 %v7951, %v7947
    %v8380 = vpack.c.b16 %v7952, %v7948
    %v8381 = vpack.c.b16 %v7957, %v7953
    %v8382 = vpack.c.b16 %v7958, %v7954
    %v8383 = vpack.c.b16 %v7959, %v7955
    %v8384 = vpack.c.b16 %v7960, %v7956
    %v8385 = vpack.c.b16 %v7965, %v7961
    %v8386 = vpack.c.b16 %v7966, %v7962
    %v8387 = vpack.c.b16 %v7967, %v7963
    %v8388 = vpack.c.b16 %v7968, %v7964
    %v8389 = vpack.c.b16 %v7973, %v7969
    %v8390 = vpack.c.b16 %v7974, %v7970
    %v8391 = vpack.c.b16 %v7975, %v7971
    %v8392 = vpack.c.b16 %v7976, %v7972
    %v8393 = vpack.c.b16 %v7981, %v7977
    %v8394 = vpack.c.b16 %v7982, %v7978
    %v8395 = vpack.c.b16 %v7983, %v7979
    %v8396 = vpack.c.b16 %v7984, %v7980
    %v8397 = vpack.c.b16 %v7989, %v7985
    %v8398 = vpack.c.b16 %v7990, %v7986
    %v8399 = vpack.c.b16 %v7991, %v7987
    %v8400 = vpack.c.b16 %v7992, %v7988
    %v8401 = vpack.c.b16 %v7997, %v7993
    %v8402 = vpack.c.b16 %v7998, %v7994
    %v8403 = vpack.c.b16 %v7999, %v7995
    %v8404 = vpack.c.b16 %v8000, %v7996
    %v8405 = vpack.c.b16 %v8005, %v8001
    %v8406 = vpack.c.b16 %v8006, %v8002
    %v8407 = vpack.c.b16 %v8007, %v8003
    %v8408 = vpack.c.b16 %v8008, %v8004
    %v8409 = vpack.c.b16 %v8013, %v8009
    %v8410 = vpack.c.b16 %v8014, %v8010
    %v8411 = vpack.c.b16 %v8015, %v8011
    %v8412 = vpack.c.b16 %v8016, %v8012
    %v8413 = vpack.c.b16 %v8021, %v8017
    %v8414 = vpack.c.b16 %v8022, %v8018
    %v8415 = vpack.c.b16 %v8023, %v8019
    %v8416 = vpack.c.b16 %v8024, %v8020
    %v8417 = vpack.c.b16 %v8029, %v8025
    %v8418 = vpack.c.b16 %v8030, %v8026
    %v8419 = vpack.c.b16 %v8031, %v8027
    %v8420 = vpack.c.b16 %v8032, %v8028
    %v8421 = vpack.c.b16 %v8037, %v8033
    %v8422 = vpack.c.b16 %v8038, %v8034
    %v8423 = vpack.c.b16 %v8039, %v8035
    %v8424 = vpack.c.b16 %v8040, %v8036
    %v8425 = vpack.c.b16 %v8045, %v8041
    %v8426 = vpack.c.b16 %v8046, %v8042
    %v8427 = vpack.c.b16 %v8047, %v8043
    %v8428 = vpack.c.b16 %v8048, %v8044
    %v8429 = vpack.c.b16 %v8053, %v8049
    %v8430 = vpack.c.b16 %v8054, %v8050
    %v8431 = vpack.c.b16 %v8055, %v8051
    %v8432 = vpack.c.b16 %v8056, %v8052
    %v8433 = vpack.c.b16 %v8061, %v8057
    %v8434 = vpack.c.b16 %v8062, %v8058
    %v8435 = vpack.c.b16 %v8063, %v8059
    %v8436 = vpack.c.b16 %v8064, %v8060
    %v8437 = vpack.c.b16 %v8069, %v8065
    %v8438 = vpack.c.b16 %v8070, %v8066
    %v8439 = vpack.c.b16 %v8071, %v8067
    %v8440 = vpack.c.b16 %v8072, %v8068
    %v8441 = vpack.c.b16 %v8077, %v8073
    %v8442 = vpack.c.b16 %v8078, %v8074
    %v8443 = vpack.c.b16 %v8079, %v8075
    %v8444 = vpack.c.b16 %v8080, %v8076
    %v8445 = vpack.c.b16 %v8085, %v8081
    %v8446 = vpack.c.b16 %v8086, %v8082
    %v8447 = vpack.c.b16 %v8087, %v8083
    %v8448 = vpack.c.b16 %v8088, %v8084
    %v8449 = vpack.c.b16 %v8093, %v8089
    %v8450 = vpack.c.b16 %v8094, %v8090
    %v8451 = vpack.c.b16 %v8095, %v8091
    %v8452 = vpack.c.b16 %v8096, %v8092
    %v8453 = vpack.c.b16 %v8101, %v8097
    %v8454 = vpack.c.b16 %v8102, %v8098
    %v8455 = vpack.c.b16 %v8103, %v8099
    %v8456 = vpack.c.b16 %v8104, %v8100
    %v8457 = vpack.c.b16 %v8109, %v8105
    %v8458 = vpack.c.b16 %v8110, %v8106
    %v8459 = vpack.c.b16 %v8111, %v8107
    %v8460 = vpack.c.b16 %v8112, %v8108
    %v8461 = vpack.c.b16 %v8117, %v8113
    %v8462 = vpack.c.b16 %v8118, %v8114
    %v8463 = vpack.c.b16 %v8119, %v8115
    %v8464 = vpack.c.b16 %v8120, %v8116
    %v8465 = vpack.c.b16 %v8125, %v8121
    %v8466 = vpack.c.b16 %v8126, %v8122
    %v8467 = vpack.c.b16 %v8127, %v8123
    %v8468 = vpack.c.b16 %v8128, %v8124
    %v8469 = vpack.c.b16 %v8133, %v8129
    %v8470 = vpack.c.b16 %v8134, %v8130
    %v8471 = vpack.c.b16 %v8135, %v8131
    %v8472 = vpack.c.b16 %v8136, %v8132
    %v8473 = vpack.c.b16 %v8141, %v8137
    %v8474 = vpack.c.b16 %v8142, %v8138
    %v8475 = vpack.c.b16 %v8143, %v8139
    %v8476 = vpack.c.b16 %v8144, %v8140
    %v8477 = vpack.c.b16 %v8149, %v8145
    %v8478 = vpack.c.b16 %v8150, %v8146
    %v8479 = vpack.c.b16 %v8151, %v8147
    %v8480 = vpack.c.b16 %v8152, %v8148
    %v8481 = vpack.c.b16 %v8157, %v8153
    %v8482 = vpack.c.b16 %v8158, %v8154
    %v8483 = vpack.c.b16 %v8159, %v8155
    %v8484 = vpack.c.b16 %v8160, %v8156
    %v8485 = vpack.c.b16 %v8165, %v8161
    %v8486 = vpack.c.b16 %v8166, %v8162
    %v8487 = vpack.c.b16 %v8167, %v8163
    %v8488 = vpack.c.b16 %v8168, %v8164
    %v8489 = vpack.c.b16 %v8173, %v8169
    %v8490 = vpack.c.b16 %v8174, %v8170
    %v8491 = vpack.c.b16 %v8175, %v8171
    %v8492 = vpack.c.b16 %v8176, %v8172
    %v8493 = vpack.c.b16 %v8181, %v8177
    %v8494 = vpack.c.b16 %v8182, %v8178
    %v8495 = vpack.c.b16 %v8183, %v8179
    %v8496 = vpack.c.b16 %v8184, %v8180
    %v8497 = vpack.c.b16 %v8189, %v8185
    %v8498 = vpack.c.b16 %v8190, %v8186
    %v8499 = vpack.c.b16 %v8191, %v8187
    %v8500 = vpack.c.b16 %v8192, %v8188
    %v8501 = vpack.c.b16 %v8197, %v8193
    %v8502 = vpack.c.b16 %v8198, %v8194
    %v8503 = vpack.c.b16 %v8199, %v8195
    %v8504 = vpack.c.b16 %v8200, %v8196
    %v8505 = vpack.c.b16 %v8205, %v8201
    %v8506 = vpack.c.b16 %v8206, %v8202
    %v8507 = vpack.c.b16 %v8207, %v8203
    %v8508 = vpack.c.b16 %v8208, %v8204
    %v8509 = vpack.c.b16 %v8213, %v8209
    %v8510 = vpack.c.b16 %v8214, %v8210
    %v8511 = vpack.c.b16 %v8215, %v8211
    %v8512 = vpack.c.b16 %v8216, %v8212
    %v8513 = vpack.c.b16 %v8221, %v8217
    %v8514 = vpack.c.b16 %v8222, %v8218
    %v8515 = vpack.c.b16 %v8223, %v8219
    %v8516 = vpack.c.b16 %v8224, %v8220
    %v8517 = vpack.c.b16 %v8229, %v8225
    %v8518 = vpack.c.b16 %v8230, %v8226
    %v8519 = vpack.c.b16 %v8231, %v8227
    %v8520 = vpack.c.b16 %v8232, %v8228
    %v8521 = vpack.c.b16 %v8237, %v8233
    %v8522 = vpack.c.b16 %v8238, %v8234
    %v8523 = vpack.c.b16 %v8239, %v8235
    %v8524 = vpack.c.b16 %v8240, %v8236
    %v8525 = vpack.c.b16 %v8245, %v8241
    %v8526 = vpack.c.b16 %v8246, %v8242
    %v8527 = vpack.c.b16 %v8247, %v8243
    %v8528 = vpack.c.b16 %v8248, %v8244
    %v8529 = vpack.c.b16 %v8253, %v8249
    %v8530 = vpack.c.b16 %v8254, %v8250
    %v8531 = vpack.c.b16 %v8255, %v8251
    %v8532 = vpack.c.b16 %v8256, %v8252
    %v8533 = vpack.c.b16 %v8261, %v8257
    %v8534 = vpack.c.b16 %v8262, %v8258
    %v8535 = vpack.c.b16 %v8263, %v8259
    %v8536 = vpack.c.b16 %v8264, %v8260
    %v8537 = vpack.c.b16 %v8269, %v8265
    %v8538 = vpack.c.b16 %v8270, %v8266
    %v8539 = vpack.c.b16 %v8271, %v8267
    %v8540 = vpack.c.b16 %v8272, %v8268
    %v8541 = vpack.c.b16 %v8277, %v8273
    %v8542 = vpack.c.b16 %v8278, %v8274
    %v8543 = vpack.c.b16 %v8279, %v8275
    %v8544 = vpack.c.b16 %v8280, %v8276
    %v8545 = vpack.c.b16 %v8285, %v8281
    %v8546 = vpack.c.b16 %v8286, %v8282
    %v8547 = vpack.c.b16 %v8287, %v8283
    %v8548 = vpack.c.b16 %v8288, %v8284
    %v8549 = vpack.c.b16 %v8293, %v8289
    %v8550 = vpack.c.b16 %v8294, %v8290
    %v8551 = vpack.c.b16 %v8295, %v8291
    %v8552 = vpack.c.b16 %v8296, %v8292
    %8809 = vmatprep.subr.bf16.mxu0 %v8326
    %8810 = vmatpush1.bf16.msra.mxu0 %v8325
    %8811 = vmatprep.subr.bf16.mxu0 %v8322
    %8812 = vmatpush1.bf16.msra.mxu0 %v8321
    %8813 = vmatprep.subr.bf16.mxu0 %v8318
    %8814 = vmatpush1.bf16.msra.mxu0 %v8317
    %8815 = vmatprep.subr.bf16.mxu0 %v8314
    %8816 = vmatpush1.bf16.msra.mxu0 %v8313
    %8817 = vmatprep.subr.bf16.mxu0 %v8310
    %8818 = vmatpush1.bf16.msra.mxu0 %v8309
    %8819 = vmatprep.subr.bf16.mxu0 %v8306
    %8820 = vmatpush1.bf16.msra.mxu0 %v8305
    %8821 = vmatprep.subr.bf16.mxu0 %v8302
    %8822 = vmatpush1.bf16.msra.mxu0 %v8301
    %8823 = vmatprep.subr.bf16.mxu0 %v8298
    %8824 = vmatpush1.bf16.msra.mxu0 %v8297
    %8825 = vmatprep.subr.bf16.mxu0 %v8358
    %8826 = vmatpush2.bf16.msra.mxu0 %v8357
    %8827 = vmatprep.subr.bf16.mxu0 %v8354
    %8828 = vmatpush2.bf16.msra.mxu0 %v8353
    %8829 = vmatprep.subr.bf16.mxu0 %v8350
    %8830 = vmatpush2.bf16.msra.mxu0 %v8349
    %8831 = vmatprep.subr.bf16.mxu0 %v8346
    %8832 = vmatpush2.bf16.msra.mxu0 %v8345
    %8833 = vmatprep.subr.bf16.mxu0 %v8342
    %8834 = vmatpush2.bf16.msra.mxu0 %v8341
    %8835 = vmatprep.subr.bf16.mxu0 %v8338
    %8836 = vmatpush2.bf16.msra.mxu0 %v8337
    %8837 = vmatprep.subr.bf16.mxu0 %v8334
    %8838 = vmatpush2.bf16.msra.mxu0 %v8333
    %8839 = vmatprep.subr.bf16.mxu0 %v8330
    %8840 = vmatpush2.bf16.msra.mxu0 %v8329
    %8841 = vmatprep.mubr.bf16.mxu0 %v7244
    %8842 = vmatmul.mubr.bf16.gmra.mxu0 %v7243
    %v8843 = vpop.f32.mrf.mxu0
    %v8844 = vadd.f32 %v7512, %v8843
    %v8845 = vpop.f32.mrf.mxu0
    %v8846 = vadd.f32 %v7516, %v8845
    %v8847 = vpop.f32.mrf.mxu0
    %v8848 = vpop.f32.mrf.mxu0
    %8849 = vdwg.mxu0
    %8850 = vmatprep.subr.bf16.mxu0 %v8390
    %8851 = vmatpush1.bf16.msra.mxu0 %v8389
    %8852 = vmatprep.subr.bf16.mxu0 %v8386
    %8853 = vmatpush1.bf16.msra.mxu0 %v8385
    %8854 = vmatprep.subr.bf16.mxu0 %v8382
    %8855 = vmatpush1.bf16.msra.mxu0 %v8381
    %8856 = vmatprep.subr.bf16.mxu0 %v8378
    %8857 = vmatpush1.bf16.msra.mxu0 %v8377
    %8858 = vmatprep.subr.bf16.mxu0 %v8374
    %8859 = vmatpush1.bf16.msra.mxu0 %v8373
    %8860 = vmatprep.subr.bf16.mxu0 %v8370
    %8861 = vmatpush1.bf16.msra.mxu0 %v8369
    %8862 = vmatprep.subr.bf16.mxu0 %v8366
    %8863 = vmatpush1.bf16.msra.mxu0 %v8365
    %8864 = vmatprep.subr.bf16.mxu0 %v8362
    %8865 = vmatpush1.bf16.msra.mxu0 %v8361
    %8866 = vmatprep.subr.bf16.mxu0 %v8422
    %8867 = vmatpush2.bf16.msra.mxu0 %v8421
    %8868 = vmatprep.subr.bf16.mxu0 %v8418
    %8869 = vmatpush2.bf16.msra.mxu0 %v8417
    %8870 = vmatprep.subr.bf16.mxu0 %v8414
    %8871 = vmatpush2.bf16.msra.mxu0 %v8413
    %8872 = vmatprep.subr.bf16.mxu0 %v8410
    %8873 = vmatpush2.bf16.msra.mxu0 %v8409
    %8874 = vmatprep.subr.bf16.mxu0 %v8406
    %8875 = vmatpush2.bf16.msra.mxu0 %v8405
    %8876 = vmatprep.subr.bf16.mxu0 %v8402
    %8877 = vmatpush2.bf16.msra.mxu0 %v8401
    %8878 = vmatprep.subr.bf16.mxu0 %v8398
    %8879 = vmatpush2.bf16.msra.mxu0 %v8397
    %8880 = vmatprep.subr.bf16.mxu0 %v8394
    %8881 = vmatpush2.bf16.msra.mxu0 %v8393
    %8882 = vmatprep.mubr.bf16.mxu0 %v7246
    %8883 = vmatmul.mubr.bf16.gmra.mxu0 %v7245
    %v8884 = vpop.f32.mrf.mxu0
    %v8885 = vadd.f32 %v8844, %v8884
    %v8886 = vpop.f32.mrf.mxu0
    %v8887 = vadd.f32 %v8846, %v8886
    %v8888 = vpop.f32.mrf.mxu0
    %v8889 = vpop.f32.mrf.mxu0
    %8890 = vdwg.mxu0
    %8891 = vmatprep.subr.bf16.mxu0 %v8454
    %8892 = vmatpush1.bf16.msra.mxu0 %v8453
    %8893 = vmatprep.subr.bf16.mxu0 %v8450
    %8894 = vmatpush1.bf16.msra.mxu0 %v8449
    %8895 = vmatprep.subr.bf16.mxu0 %v8446
    %8896 = vmatpush1.bf16.msra.mxu0 %v8445
    %8897 = vmatprep.subr.bf16.mxu0 %v8442
    %8898 = vmatpush1.bf16.msra.mxu0 %v8441
    %8899 = vmatprep.subr.bf16.mxu0 %v8438
    %8900 = vmatpush1.bf16.msra.mxu0 %v8437
    %8901 = vmatprep.subr.bf16.mxu0 %v8434
    %8902 = vmatpush1.bf16.msra.mxu0 %v8433
    %8903 = vmatprep.subr.bf16.mxu0 %v8430
    %8904 = vmatpush1.bf16.msra.mxu0 %v8429
    %8905 = vmatprep.subr.bf16.mxu0 %v8426
    %8906 = vmatpush1.bf16.msra.mxu0 %v8425
    %8907 = vmatprep.subr.bf16.mxu0 %v8486
    %8908 = vmatpush2.bf16.msra.mxu0 %v8485
    %8909 = vmatprep.subr.bf16.mxu0 %v8482
    %8910 = vmatpush2.bf16.msra.mxu0 %v8481
    %8911 = vmatprep.subr.bf16.mxu0 %v8478
    %8912 = vmatpush2.bf16.msra.mxu0 %v8477
    %8913 = vmatprep.subr.bf16.mxu0 %v8474
    %8914 = vmatpush2.bf16.msra.mxu0 %v8473
    %8915 = vmatprep.subr.bf16.mxu0 %v8470
    %8916 = vmatpush2.bf16.msra.mxu0 %v8469
    %8917 = vmatprep.subr.bf16.mxu0 %v8466
    %8918 = vmatpush2.bf16.msra.mxu0 %v8465
    %8919 = vmatprep.subr.bf16.mxu0 %v8462
    %8920 = vmatpush2.bf16.msra.mxu0 %v8461
    %8921 = vmatprep.subr.bf16.mxu0 %v8458
    %8922 = vmatpush2.bf16.msra.mxu0 %v8457
    %8923 = vmatprep.mubr.bf16.mxu0 %v7248
    %8924 = vmatmul.mubr.bf16.gmra.mxu0 %v7247
    %v8925 = vpop.f32.mrf.mxu0
    %v8926 = vadd.f32 %v8885, %v8925
    %v8927 = vpop.f32.mrf.mxu0
    %v8928 = vadd.f32 %v8887, %v8927
    %v8929 = vpop.f32.mrf.mxu0
    %v8930 = vpop.f32.mrf.mxu0
    %8931 = vdwg.mxu0
    %8932 = vmatprep.subr.bf16.mxu0 %v8518
    %8933 = vmatpush1.bf16.msra.mxu0 %v8517
    %8934 = vmatprep.subr.bf16.mxu0 %v8514
    %8935 = vmatpush1.bf16.msra.mxu0 %v8513
    %8936 = vmatprep.subr.bf16.mxu0 %v8510
    %8937 = vmatpush1.bf16.msra.mxu0 %v8509
    %8938 = vmatprep.subr.bf16.mxu0 %v8506
    %8939 = vmatpush1.bf16.msra.mxu0 %v8505
    %8940 = vmatprep.subr.bf16.mxu0 %v8502
    %8941 = vmatpush1.bf16.msra.mxu0 %v8501
    %8942 = vmatprep.subr.bf16.mxu0 %v8498
    %8943 = vmatpush1.bf16.msra.mxu0 %v8497
    %8944 = vmatprep.subr.bf16.mxu0 %v8494
    %8945 = vmatpush1.bf16.msra.mxu0 %v8493
    %8946 = vmatprep.subr.bf16.mxu0 %v8490
    %8947 = vmatpush1.bf16.msra.mxu0 %v8489
    %8948 = vmatprep.subr.bf16.mxu0 %v8550
    %8949 = vmatpush2.bf16.msra.mxu0 %v8549
    %8950 = vmatprep.subr.bf16.mxu0 %v8546
    %8951 = vmatpush2.bf16.msra.mxu0 %v8545
    %8952 = vmatprep.subr.bf16.mxu0 %v8542
    %8953 = vmatpush2.bf16.msra.mxu0 %v8541
    %8954 = vmatprep.subr.bf16.mxu0 %v8538
    %8955 = vmatpush2.bf16.msra.mxu0 %v8537
    %8956 = vmatprep.subr.bf16.mxu0 %v8534
    %8957 = vmatpush2.bf16.msra.mxu0 %v8533
    %8958 = vmatprep.subr.bf16.mxu0 %v8530
    %8959 = vmatpush2.bf16.msra.mxu0 %v8529
    %8960 = vmatprep.subr.bf16.mxu0 %v8526
    %8961 = vmatpush2.bf16.msra.mxu0 %v8525
    %8962 = vmatprep.subr.bf16.mxu0 %v8522
    %8963 = vmatpush2.bf16.msra.mxu0 %v8521
    %8964 = vmatprep.mubr.bf16.mxu0 %v7250
    %8965 = vmatmul.mubr.bf16.gmra.mxu0 %v7249
    %v8966 = vpop.f32.mrf.mxu0
    %v8967 = vadd.f32 %v8926, %v8966
    %v8968 = vpop.f32.mrf.mxu0
    %v8969 = vadd.f32 %v8928, %v8968
    %v8970 = vpop.f32.mrf.mxu0
    %v8971 = vpop.f32.mrf.mxu0
    %8972 = vdwg.mxu0
    %8973 = vmatprep.subr.bf16.mxu0 %v8328
    %8974 = vmatpush1.bf16.msra.mxu0 %v8327
    %8975 = vmatprep.subr.bf16.mxu0 %v8324
    %8976 = vmatpush1.bf16.msra.mxu0 %v8323
    %8977 = vmatprep.subr.bf16.mxu0 %v8320
    %8978 = vmatpush1.bf16.msra.mxu0 %v8319
    %8979 = vmatprep.subr.bf16.mxu0 %v8316
    %8980 = vmatpush1.bf16.msra.mxu0 %v8315
    %8981 = vmatprep.subr.bf16.mxu0 %v8312
    %8982 = vmatpush1.bf16.msra.mxu0 %v8311
    %8983 = vmatprep.subr.bf16.mxu0 %v8308
    %8984 = vmatpush1.bf16.msra.mxu0 %v8307
    %8985 = vmatprep.subr.bf16.mxu0 %v8304
    %8986 = vmatpush1.bf16.msra.mxu0 %v8303
    %8987 = vmatprep.subr.bf16.mxu0 %v8300
    %8988 = vmatpush1.bf16.msra.mxu0 %v8299
    %8989 = vmatprep.subr.bf16.mxu0 %v8360
    %8990 = vmatpush2.bf16.msra.mxu0 %v8359
    %8991 = vmatprep.subr.bf16.mxu0 %v8356
    %8992 = vmatpush2.bf16.msra.mxu0 %v8355
    %8993 = vmatprep.subr.bf16.mxu0 %v8352
    %8994 = vmatpush2.bf16.msra.mxu0 %v8351
    %8995 = vmatprep.subr.bf16.mxu0 %v8348
    %8996 = vmatpush2.bf16.msra.mxu0 %v8347
    %8997 = vmatprep.subr.bf16.mxu0 %v8344
    %8998 = vmatpush2.bf16.msra.mxu0 %v8343
    %8999 = vmatprep.subr.bf16.mxu0 %v8340
    %9000 = vmatpush2.bf16.msra.mxu0 %v8339
    %9001 = vmatprep.subr.bf16.mxu0 %v8336
    %9002 = vmatpush2.bf16.msra.mxu0 %v8335
    %9003 = vmatprep.subr.bf16.mxu0 %v8332
    %9004 = vmatpush2.bf16.msra.mxu0 %v8331
    %9005 = vmatprep.mubr.bf16.mxu0 %v7244
    %9006 = vmatmul.mubr.bf16.gmra.mxu0 %v7243
    %v9007 = vpop.f32.mrf.mxu0
    %v9008 = vadd.f32 %v7520, %v9007
    %v9009 = vpop.f32.mrf.mxu0
    %v9010 = vadd.f32 %v7524, %v9009
    %v9011 = vpop.f32.mrf.mxu0
    %v9012 = vpop.f32.mrf.mxu0
    %9013 = vdwg.mxu0
    %9014 = vmatprep.subr.bf16.mxu0 %v8392
    %9015 = vmatpush1.bf16.msra.mxu0 %v8391
    %9016 = vmatprep.subr.bf16.mxu0 %v8388
    %9017 = vmatpush1.bf16.msra.mxu0 %v8387
    %9018 = vmatprep.subr.bf16.mxu0 %v8384
    %9019 = vmatpush1.bf16.msra.mxu0 %v8383
    %9020 = vmatprep.subr.bf16.mxu0 %v8380
    %9021 = vmatpush1.bf16.msra.mxu0 %v8379
    %9022 = vmatprep.subr.bf16.mxu0 %v8376
    %9023 = vmatpush1.bf16.msra.mxu0 %v8375
    %9024 = vmatprep.subr.bf16.mxu0 %v8372
    %9025 = vmatpush1.bf16.msra.mxu0 %v8371
    %9026 = vmatprep.subr.bf16.mxu0 %v8368
    %9027 = vmatpush1.bf16.msra.mxu0 %v8367
    %9028 = vmatprep.subr.bf16.mxu0 %v8364
    %9029 = vmatpush1.bf16.msra.mxu0 %v8363
    %9030 = vmatprep.subr.bf16.mxu0 %v8424
    %9031 = vmatpush2.bf16.msra.mxu0 %v8423
    %9032 = vmatprep.subr.bf16.mxu0 %v8420
    %9033 = vmatpush2.bf16.msra.mxu0 %v8419
    %9034 = vmatprep.subr.bf16.mxu0 %v8416
    %9035 = vmatpush2.bf16.msra.mxu0 %v8415
    %9036 = vmatprep.subr.bf16.mxu0 %v8412
    %9037 = vmatpush2.bf16.msra.mxu0 %v8411
    %9038 = vmatprep.subr.bf16.mxu0 %v8408
    %9039 = vmatpush2.bf16.msra.mxu0 %v8407
    %9040 = vmatprep.subr.bf16.mxu0 %v8404
    %9041 = vmatpush2.bf16.msra.mxu0 %v8403
    %9042 = vmatprep.subr.bf16.mxu0 %v8400
    %9043 = vmatpush2.bf16.msra.mxu0 %v8399
    %9044 = vmatprep.subr.bf16.mxu0 %v8396
    %9045 = vmatpush2.bf16.msra.mxu0 %v8395
    %9046 = vmatprep.mubr.bf16.mxu0 %v7246
    %9047 = vmatmul.mubr.bf16.gmra.mxu0 %v7245
    %v9048 = vpop.f32.mrf.mxu0
    %v9049 = vadd.f32 %v9008, %v9048
    %v9050 = vpop.f32.mrf.mxu0
    %v9051 = vadd.f32 %v9010, %v9050
    %v9052 = vpop.f32.mrf.mxu0
    %v9053 = vpop.f32.mrf.mxu0
    %9054 = vdwg.mxu0
    %9055 = vmatprep.subr.bf16.mxu0 %v8456
    %9056 = vmatpush1.bf16.msra.mxu0 %v8455
    %9057 = vmatprep.subr.bf16.mxu0 %v8452
    %9058 = vmatpush1.bf16.msra.mxu0 %v8451
    %9059 = vmatprep.subr.bf16.mxu0 %v8448
    %9060 = vmatpush1.bf16.msra.mxu0 %v8447
    %9061 = vmatprep.subr.bf16.mxu0 %v8444
    %9062 = vmatpush1.bf16.msra.mxu0 %v8443
    %9063 = vmatprep.subr.bf16.mxu0 %v8440
    %9064 = vmatpush1.bf16.msra.mxu0 %v8439
    %9065 = vmatprep.subr.bf16.mxu0 %v8436
    %9066 = vmatpush1.bf16.msra.mxu0 %v8435
    %9067 = vmatprep.subr.bf16.mxu0 %v8432
    %9068 = vmatpush1.bf16.msra.mxu0 %v8431
    %9069 = vmatprep.subr.bf16.mxu0 %v8428
    %9070 = vmatpush1.bf16.msra.mxu0 %v8427
    %9071 = vmatprep.subr.bf16.mxu0 %v8488
    %9072 = vmatpush2.bf16.msra.mxu0 %v8487
    %9073 = vmatprep.subr.bf16.mxu0 %v8484
    %9074 = vmatpush2.bf16.msra.mxu0 %v8483
    %9075 = vmatprep.subr.bf16.mxu0 %v8480
    %9076 = vmatpush2.bf16.msra.mxu0 %v8479
    %9077 = vmatprep.subr.bf16.mxu0 %v8476
    %9078 = vmatpush2.bf16.msra.mxu0 %v8475
    %9079 = vmatprep.subr.bf16.mxu0 %v8472
    %9080 = vmatpush2.bf16.msra.mxu0 %v8471
    %9081 = vmatprep.subr.bf16.mxu0 %v8468
    %9082 = vmatpush2.bf16.msra.mxu0 %v8467
    %9083 = vmatprep.subr.bf16.mxu0 %v8464
    %9084 = vmatpush2.bf16.msra.mxu0 %v8463
    %9085 = vmatprep.subr.bf16.mxu0 %v8460
    %9086 = vmatpush2.bf16.msra.mxu0 %v8459
    %9087 = vmatprep.mubr.bf16.mxu0 %v7248
    %9088 = vmatmul.mubr.bf16.gmra.mxu0 %v7247
    %v9089 = vpop.f32.mrf.mxu0
    %v9090 = vadd.f32 %v9049, %v9089
    %v9091 = vpop.f32.mrf.mxu0
    %v9092 = vadd.f32 %v9051, %v9091
    %v9093 = vpop.f32.mrf.mxu0
    %v9094 = vpop.f32.mrf.mxu0
    %9095 = vdwg.mxu0
    %9096 = vmatprep.subr.bf16.mxu0 %v8520
    %9097 = vmatpush1.bf16.msra.mxu0 %v8519
    %9098 = vmatprep.subr.bf16.mxu0 %v8516
    %9099 = vmatpush1.bf16.msra.mxu0 %v8515
    %9100 = vmatprep.subr.bf16.mxu0 %v8512
    %9101 = vmatpush1.bf16.msra.mxu0 %v8511
    %9102 = vmatprep.subr.bf16.mxu0 %v8508
    %9103 = vmatpush1.bf16.msra.mxu0 %v8507
    %9104 = vmatprep.subr.bf16.mxu0 %v8504
    %9105 = vmatpush1.bf16.msra.mxu0 %v8503
    %9106 = vmatprep.subr.bf16.mxu0 %v8500
    %9107 = vmatpush1.bf16.msra.mxu0 %v8499
    %9108 = vmatprep.subr.bf16.mxu0 %v8496
    %9109 = vmatpush1.bf16.msra.mxu0 %v8495
    %9110 = vmatprep.subr.bf16.mxu0 %v8492
    %9111 = vmatpush1.bf16.msra.mxu0 %v8491
    %9112 = vmatprep.subr.bf16.mxu0 %v8552
    %9113 = vmatpush2.bf16.msra.mxu0 %v8551
    %9114 = vmatprep.subr.bf16.mxu0 %v8548
    %9115 = vmatpush2.bf16.msra.mxu0 %v8547
    %9116 = vmatprep.subr.bf16.mxu0 %v8544
    %9117 = vmatpush2.bf16.msra.mxu0 %v8543
    %9118 = vmatprep.subr.bf16.mxu0 %v8540
    %9119 = vmatpush2.bf16.msra.mxu0 %v8539
    %9120 = vmatprep.subr.bf16.mxu0 %v8536
    %9121 = vmatpush2.bf16.msra.mxu0 %v8535
    %9122 = vmatprep.subr.bf16.mxu0 %v8532
    %9123 = vmatpush2.bf16.msra.mxu0 %v8531
    %9124 = vmatprep.subr.bf16.mxu0 %v8528
    %9125 = vmatpush2.bf16.msra.mxu0 %v8527
    %9126 = vmatprep.subr.bf16.mxu0 %v8524
    %9127 = vmatpush2.bf16.msra.mxu0 %v8523
    %9128 = vmatprep.mubr.bf16.mxu0 %v7250
    %9129 = vmatmul.mubr.bf16.gmra.mxu0 %v7249
    %v9130 = vpop.f32.mrf.mxu0
    %v9131 = vadd.f32 %v9090, %v9130
    %v9132 = vpop.f32.mrf.mxu0
    %v9133 = vadd.f32 %v9092, %v9132
    %v9134 = vpop.f32.mrf.mxu0
    %v9135 = vpop.f32.mrf.mxu0
    %9136 = vdwg.mxu0
    %v9137 = vmax.f32 %v8967, 0.0
    %v9138 = vmax.f32 %v8969, 0.0
    %v9139 = vmax.f32 %v9131, 0.0
    %v9140 = vmax.f32 %v9133, 0.0
    %v9141 = vpack.c.bf16 %v9137, %v9137
    %v9142 = vpack.c.bf16 %v9138, %v9138
    %v9143 = vpack.c.bf16 %v9139, %v9139
    %v9144 = vpack.c.bf16 %v9140, %v9140
    %v9145 = vld [vmem:[#allocation13] sm:$0xf]
    %v9146 = vld [vmem:[#allocation13 + $0x4] sm:$0xf]
    %v9147 = vld [vmem:[#allocation13 + $0x8] sm:$0xf]
    %v9148 = vld [vmem:[#allocation13 + $0xc] sm:$0xf]
    %v9149 = vld [vmem:[#allocation13 + $0x10] sm:$0xf]
    %v9150 = vld [vmem:[#allocation13 + $0x14] sm:$0xf]
    %v9151 = vld [vmem:[#allocation13 + $0x18] sm:$0xf]
    %v9152 = vld [vmem:[#allocation13 + $0x1c] sm:$0xf]
    %v9153 = vld [vmem:[#allocation13 + $0x20] sm:$0xf]
    %v9154 = vld [vmem:[#allocation13 + $0x24] sm:$0xf]
    %v9155 = vld [vmem:[#allocation13 + $0x28] sm:$0xf]
    %v9156 = vld [vmem:[#allocation13 + $0x2c] sm:$0xf]
    %v9157 = vld [vmem:[#allocation13 + $0x30] sm:$0xf]
    %v9158 = vld [vmem:[#allocation13 + $0x34] sm:$0xf]
    %v9159 = vld [vmem:[#allocation13 + $0x38] sm:$0xf]
    %v9160 = vld [vmem:[#allocation13 + $0x3c] sm:$0xf]
    %v9161 = vld [vmem:[#allocation13 + $0x40] sm:$0xf]
    %v9162 = vld [vmem:[#allocation13 + $0x44] sm:$0xf]
    %v9163 = vld [vmem:[#allocation13 + $0x48] sm:$0xf]
    %v9164 = vld [vmem:[#allocation13 + $0x4c] sm:$0xf]
    %v9165 = vld [vmem:[#allocation13 + $0x50] sm:$0xf]
    %v9166 = vld [vmem:[#allocation13 + $0x54] sm:$0xf]
    %v9167 = vld [vmem:[#allocation13 + $0x58] sm:$0xf]
    %v9168 = vld [vmem:[#allocation13 + $0x5c] sm:$0xf]
    %v9169 = vld [vmem:[#allocation13 + $0x60] sm:$0xf]
    %v9170 = vld [vmem:[#allocation13 + $0x64] sm:$0xf]
    %v9171 = vld [vmem:[#allocation13 + $0x68] sm:$0xf]
    %v9172 = vld [vmem:[#allocation13 + $0x6c] sm:$0xf]
    %v9173 = vld [vmem:[#allocation13 + $0x70] sm:$0xf]
    %v9174 = vld [vmem:[#allocation13 + $0x74] sm:$0xf]
    %v9175 = vld [vmem:[#allocation13 + $0x78] sm:$0xf]
    %v9176 = vld [vmem:[#allocation13 + $0x7c] sm:$0xf]
    %v9177 = vld [vmem:[#allocation13 + $0x80] sm:$0xf]
    %v9178 = vld [vmem:[#allocation13 + $0x84] sm:$0xf]
    %v9179 = vld [vmem:[#allocation13 + $0x88] sm:$0xf]
    %v9180 = vld [vmem:[#allocation13 + $0x8c] sm:$0xf]
    %v9181 = vld [vmem:[#allocation13 + $0x90] sm:$0xf]
    %v9182 = vld [vmem:[#allocation13 + $0x94] sm:$0xf]
    %v9183 = vld [vmem:[#allocation13 + $0x98] sm:$0xf]
    %v9184 = vld [vmem:[#allocation13 + $0x9c] sm:$0xf]
    %v9185 = vld [vmem:[#allocation13 + $0xa0] sm:$0xf]
    %v9186 = vld [vmem:[#allocation13 + $0xa4] sm:$0xf]
    %v9187 = vld [vmem:[#allocation13 + $0xa8] sm:$0xf]
    %v9188 = vld [vmem:[#allocation13 + $0xac] sm:$0xf]
    %v9189 = vld [vmem:[#allocation13 + $0xb0] sm:$0xf]
    %v9190 = vld [vmem:[#allocation13 + $0xb4] sm:$0xf]
    %v9191 = vld [vmem:[#allocation13 + $0xb8] sm:$0xf]
    %v9192 = vld [vmem:[#allocation13 + $0xbc] sm:$0xf]
    %v9193 = vld [vmem:[#allocation13 + $0xc0] sm:$0xf]
    %v9194 = vld [vmem:[#allocation13 + $0xc4] sm:$0xf]
    %v9195 = vld [vmem:[#allocation13 + $0xc8] sm:$0xf]
    %v9196 = vld [vmem:[#allocation13 + $0xcc] sm:$0xf]
    %v9197 = vld [vmem:[#allocation13 + $0xd0] sm:$0xf]
    %v9198 = vld [vmem:[#allocation13 + $0xd4] sm:$0xf]
    %v9199 = vld [vmem:[#allocation13 + $0xd8] sm:$0xf]
    %v9200 = vld [vmem:[#allocation13 + $0xdc] sm:$0xf]
    %v9201 = vld [vmem:[#allocation13 + $0xe0] sm:$0xf]
    %v9202 = vld [vmem:[#allocation13 + $0xe4] sm:$0xf]
    %v9203 = vld [vmem:[#allocation13 + $0xe8] sm:$0xf]
    %v9204 = vld [vmem:[#allocation13 + $0xec] sm:$0xf]
    %v9205 = vld [vmem:[#allocation13 + $0xf0] sm:$0xf]
    %v9206 = vld [vmem:[#allocation13 + $0xf4] sm:$0xf]
    %v9207 = vld [vmem:[#allocation13 + $0xf8] sm:$0x3]
    %v9208 = vld [vmem:[#allocation15] sm:$0x1]
    %v9210 = vlaneseq
    %v9211 = vshrl.u32 %v9210, 7
    %v9212 = vsub.s32 0, %v9211
    %v9213 = vrot.slane %v9208, %v9212
    %v9278 = vunpack.c.l.b16 %v9145
    %v9279 = vunpack.c.l.b16 %v9146
    %v9280 = vunpack.c.l.b16 %v9147
    %v9281 = vunpack.c.l.b16 %v9148
    %v9282 = vunpack.c.l.b16 %v9149
    %v9283 = vunpack.c.l.b16 %v9150
    %v9284 = vunpack.c.l.b16 %v9151
    %v9285 = vunpack.c.l.b16 %v9152
    %v9286 = vunpack.c.l.b16 %v9153
    %v9287 = vunpack.c.l.b16 %v9154
    %v9288 = vunpack.c.l.b16 %v9155
    %v9289 = vunpack.c.l.b16 %v9156
    %v9290 = vunpack.c.l.b16 %v9157
    %v9291 = vunpack.c.l.b16 %v9158
    %v9292 = vunpack.c.l.b16 %v9159
    %v9293 = vunpack.c.l.b16 %v9160
    %v9294 = vunpack.c.l.b16 %v9161
    %v9295 = vunpack.c.l.b16 %v9162
    %v9296 = vunpack.c.l.b16 %v9163
    %v9297 = vunpack.c.l.b16 %v9164
    %v9298 = vunpack.c.l.b16 %v9165
    %v9299 = vunpack.c.l.b16 %v9166
    %v9300 = vunpack.c.l.b16 %v9167
    %v9301 = vunpack.c.l.b16 %v9168
    %v9302 = vunpack.c.l.b16 %v9169
    %v9303 = vunpack.c.l.b16 %v9170
    %v9304 = vunpack.c.l.b16 %v9171
    %v9305 = vunpack.c.l.b16 %v9172
    %v9306 = vunpack.c.l.b16 %v9173
    %v9307 = vunpack.c.l.b16 %v9174
    %v9308 = vunpack.c.l.b16 %v9175
    %v9309 = vunpack.c.l.b16 %v9176
    %v9310 = vunpack.c.l.b16 %v9177
    %v9311 = vunpack.c.l.b16 %v9178
    %v9312 = vunpack.c.l.b16 %v9179
    %v9313 = vunpack.c.l.b16 %v9180
    %v9314 = vunpack.c.l.b16 %v9181
    %v9315 = vunpack.c.l.b16 %v9182
    %v9316 = vunpack.c.l.b16 %v9183
    %v9317 = vunpack.c.l.b16 %v9184
    %v9318 = vunpack.c.l.b16 %v9185
    %v9319 = vunpack.c.l.b16 %v9186
    %v9320 = vunpack.c.l.b16 %v9187
    %v9321 = vunpack.c.l.b16 %v9188
    %v9322 = vunpack.c.l.b16 %v9189
    %v9323 = vunpack.c.l.b16 %v9190
    %v9324 = vunpack.c.l.b16 %v9191
    %v9325 = vunpack.c.l.b16 %v9192
    %v9326 = vunpack.c.l.b16 %v9193
    %v9327 = vunpack.c.l.b16 %v9194
    %v9328 = vunpack.c.l.b16 %v9195
    %v9329 = vunpack.c.l.b16 %v9196
    %v9330 = vunpack.c.l.b16 %v9197
    %v9331 = vunpack.c.l.b16 %v9198
    %v9332 = vunpack.c.l.b16 %v9199
    %v9333 = vunpack.c.l.b16 %v9200
    %v9334 = vunpack.c.l.b16 %v9201
    %v9335 = vunpack.c.l.b16 %v9202
    %v9336 = vunpack.c.l.b16 %v9203
    %v9337 = vunpack.c.l.b16 %v9204
    %v9338 = vunpack.c.l.b16 %v9205
    %v9339 = vunpack.c.l.b16 %v9206
    %v9340 = vunpack.c.l.b16 %v9207
    %v9341 = vpack.c.b16 %v9279, %v9278
    %v9342 = vpack.c.b16 %v9281, %v9280
    %v9343 = vpack.c.b16 %v9283, %v9282
    %v9344 = vpack.c.b16 %v9285, %v9284
    %v9345 = vpack.c.b16 %v9287, %v9286
    %v9346 = vpack.c.b16 %v9289, %v9288
    %v9347 = vpack.c.b16 %v9291, %v9290
    %v9348 = vpack.c.b16 %v9293, %v9292
    %v9349 = vpack.c.b16 %v9295, %v9294
    %v9350 = vpack.c.b16 %v9297, %v9296
    %v9351 = vpack.c.b16 %v9299, %v9298
    %v9352 = vpack.c.b16 %v9301, %v9300
    %v9353 = vpack.c.b16 %v9303, %v9302
    %v9354 = vpack.c.b16 %v9305, %v9304
    %v9355 = vpack.c.b16 %v9307, %v9306
    %v9356 = vpack.c.b16 %v9309, %v9308
    %v9357 = vpack.c.b16 %v9311, %v9310
    %v9358 = vpack.c.b16 %v9313, %v9312
    %v9359 = vpack.c.b16 %v9315, %v9314
    %v9360 = vpack.c.b16 %v9317, %v9316
    %v9361 = vpack.c.b16 %v9319, %v9318
    %v9362 = vpack.c.b16 %v9321, %v9320
    %v9363 = vpack.c.b16 %v9323, %v9322
    %v9364 = vpack.c.b16 %v9325, %v9324
    %v9365 = vpack.c.b16 %v9327, %v9326
    %v9366 = vpack.c.b16 %v9329, %v9328
    %v9367 = vpack.c.b16 %v9331, %v9330
    %v9368 = vpack.c.b16 %v9333, %v9332
    %v9369 = vpack.c.b16 %v9335, %v9334
    %v9370 = vpack.c.b16 %v9337, %v9336
    %v9371 = vpack.c.b16 %v9339, %v9338
    %v9372 = vpack.c.b16 %v9340, %v9340
    %vm9404 = vcmask 949248
    %v9406 = vsel %vm9404, %v9144, 0
    %vm9408 = vcmask 1041408
    %v9410 = vsel %vm9408, %v9372, 0
    %9412 = vmatprep.subr.bf16.mxu0 0
    %9413 = vmatpush1.bf16.msra.mxu0 %v9348
    %9414 = vmatprep.subr.bf16.mxu0 0
    %9415 = vmatpush1.bf16.msra.mxu0 %v9347
    %9416 = vmatprep.subr.bf16.mxu0 0
    %9417 = vmatpush1.bf16.msra.mxu0 %v9346
    %9418 = vmatprep.subr.bf16.mxu0 0
    %9419 = vmatpush1.bf16.msra.mxu0 %v9345
    %9420 = vmatprep.subr.bf16.mxu0 0
    %9421 = vmatpush1.bf16.msra.mxu0 %v9344
    %9422 = vmatprep.subr.bf16.mxu0 0
    %9423 = vmatpush1.bf16.msra.mxu0 %v9343
    %9424 = vmatprep.subr.bf16.mxu0 0
    %9425 = vmatpush1.bf16.msra.mxu0 %v9342
    %9426 = vmatprep.subr.bf16.mxu0 0
    %9427 = vmatpush1.bf16.msra.mxu0 %v9341
    %9428 = vmatprep.subr.bf16.mxu0 0
    %9429 = vmatpush2.bf16.msra.mxu0 %v9356
    %9430 = vmatprep.subr.bf16.mxu0 0
    %9431 = vmatpush2.bf16.msra.mxu0 %v9355
    %9432 = vmatprep.subr.bf16.mxu0 0
    %9433 = vmatpush2.bf16.msra.mxu0 %v9354
    %9434 = vmatprep.subr.bf16.mxu0 0
    %9435 = vmatpush2.bf16.msra.mxu0 %v9353
    %9436 = vmatprep.subr.bf16.mxu0 0
    %9437 = vmatpush2.bf16.msra.mxu0 %v9352
    %9438 = vmatprep.subr.bf16.mxu0 0
    %9439 = vmatpush2.bf16.msra.mxu0 %v9351
    %9440 = vmatprep.subr.bf16.mxu0 0
    %9441 = vmatpush2.bf16.msra.mxu0 %v9350
    %9442 = vmatprep.subr.bf16.mxu0 0
    %9443 = vmatpush2.bf16.msra.mxu0 %v9349
    %9444 = vmatprep.mubr.bf16.mxu0 %v9142
    %9445 = vmatmul.mubr.bf16.gmra.mxu0 %v9141
    %v9446 = vpop.f32.mrf.mxu0
    %v9447 = vadd.f32 %v9213, %v9446
    %v9448 = vpop.f32.mrf.mxu0
    %v9449 = vpop.f32.mrf.mxu0
    %v9450 = vpop.f32.mrf.mxu0
    %9451 = vdwg.mxu0
    %9452 = vmatprep.subr.bf16.mxu0 0
    %9453 = vmatpush1.bf16.msra.mxu0 %v9364
    %9454 = vmatprep.subr.bf16.mxu0 0
    %9455 = vmatpush1.bf16.msra.mxu0 %v9363
    %9456 = vmatprep.subr.bf16.mxu0 0
    %9457 = vmatpush1.bf16.msra.mxu0 %v9362
    %9458 = vmatprep.subr.bf16.mxu0 0
    %9459 = vmatpush1.bf16.msra.mxu0 %v9361
    %9460 = vmatprep.subr.bf16.mxu0 0
    %9461 = vmatpush1.bf16.msra.mxu0 %v9360
    %9462 = vmatprep.subr.bf16.mxu0 0
    %9463 = vmatpush1.bf16.msra.mxu0 %v9359
    %9464 = vmatprep.subr.bf16.mxu0 0
    %9465 = vmatpush1.bf16.msra.mxu0 %v9358
    %9466 = vmatprep.subr.bf16.mxu0 0
    %9467 = vmatpush1.bf16.msra.mxu0 %v9357
    %9468 = vmatprep.subr.bf16.mxu0 0
    %9469 = vmatpush2.bf16.msra.mxu0 %v9410
    %9470 = vmatprep.subr.bf16.mxu0 0
    %9471 = vmatpush2.bf16.msra.mxu0 %v9371
    %9472 = vmatprep.subr.bf16.mxu0 0
    %9473 = vmatpush2.bf16.msra.mxu0 %v9370
    %9474 = vmatprep.subr.bf16.mxu0 0
    %9475 = vmatpush2.bf16.msra.mxu0 %v9369
    %9476 = vmatprep.subr.bf16.mxu0 0
    %9477 = vmatpush2.bf16.msra.mxu0 %v9368
    %9478 = vmatprep.subr.bf16.mxu0 0
    %9479 = vmatpush2.bf16.msra.mxu0 %v9367
    %9480 = vmatprep.subr.bf16.mxu0 0
    %9481 = vmatpush2.bf16.msra.mxu0 %v9366
    %9482 = vmatprep.subr.bf16.mxu0 0
    %9483 = vmatpush2.bf16.msra.mxu0 %v9365
    %9484 = vmatprep.mubr.bf16.mxu0 %v9406
    %9485 = vmatmul.mubr.bf16.gmra.mxu0 %v9143
    %v9486 = vpop.f32.mrf.mxu0
    %v9487 = vadd.f32 %v9447, %v9486
    %v9488 = vpop.f32.mrf.mxu0
    %v9489 = vpop.f32.mrf.mxu0
    %v9490 = vpop.f32.mrf.mxu0
    %9491 = vdwg.mxu0
    %v9492 = vtanh.pop %v9487
    %v9493 = vld [vmem:[#allocation16] sm:$0x1]
    %v9495 = vlaneseq
    %v9496 = vshrl.u32 %v9495, 7
    %v9497 = vsub.s32 0, %v9496
    %v9498 = vrot.slane %v9493, %v9497
    %v9500 = vmul.f32 %v9492, %v9498
    %9501 = vadd.xlane.f32.xlu0 %v9500
    %v9502 = vpop.xlane.xlu0 %9501
    %v9503 = vld [vmem:[#allocation2] sm:$0x1]
    %v9505 = vlaneseq
    %v9506 = vshrl.u32 %v9505, 7
    %v9507 = vsub.s32 0, %v9506
    %v9508 = vrot.slane %v9503, %v9507
    %v9510 = vadd.f32 %v9502, %v9508
    %v9511 = vld [vmem:[%s1] sm:$0xff]
    %v9512 = vadd.f32 %v9510, %v9511
    %vm9513 = vcmask 7168
    %v9514 = vsel %vm9513, %v9512, -inf
    %v9515 = vrot.slane %v9514, 4
    %v9516 = vmax.f32 %v9514, %v9515
    %v9517 = vrot.slane %v9516, 2
    %v9518 = vmax.f32 %v9516, %v9517
    %v9519 = vrot.slane %v9518, 1
    %v9520 = vmax.f32 %v9518, %v9519
    %v9521 = vsub.f32 %v9512, %v9520
    %v9522 = vmul.f32 %v9521, 1.442695
    %v9523 = vpow.pop %v9522
    %v9524 = vsel %vm9513, %v9523, 0.0
    %v9525 = vrot.slane %v9524, 4
    %v9526 = vadd.f32 %v9524, %v9525
    %v9527 = vrot.slane %v9526, 2
    %v9528 = vadd.f32 %v9526, %v9527
    %v9529 = vrot.slane %v9528, 1
    %v9530 = vadd.f32 %v9528, %v9529
    %v9531 = vrcp.pop %v9530
    %v9532 = vmul.f32 %v9523, %v9531
    %9534 = vset.pattern.permute.xlu0 0
    %9535 = vperm.xlu0 %9534, %v9532
    %v9536 = vpop.permute.xlu0 %9535
    %v9538 = vmul.f32 %v9536, %v9137
    %v9539 = vmul.f32 %v9536, %v9138
    %v9540 = vmul.f32 %v9536, %v9139
    %v9541 = vmul.f32 %v9536, %v9140
    %v9542 = vrot.slane %v9538, 4
    %v9543 = vadd.f32 %v9538, %v9542
    %v9544 = vrot.slane %v9543, 2
    %v9545 = vadd.f32 %v9543, %v9544
    %v9546 = vrot.slane %v9545, 1
    %v9547 = vadd.f32 %v9545, %v9546
    %v9548 = vrot.slane %v9539, 4
    %v9549 = vadd.f32 %v9539, %v9548
    %v9550 = vrot.slane %v9549, 2
    %v9551 = vadd.f32 %v9549, %v9550
    %v9552 = vrot.slane %v9551, 1
    %v9553 = vadd.f32 %v9551, %v9552
    %v9554 = vrot.slane %v9540, 4
    %v9555 = vadd.f32 %v9540, %v9554
    %v9556 = vrot.slane %v9555, 2
    %v9557 = vadd.f32 %v9555, %v9556
    %v9558 = vrot.slane %v9557, 1
    %v9559 = vadd.f32 %v9557, %v9558
    %v9560 = vsel %vm9404, %v9541, 0.0
    %v9561 = vrot.slane %v9560, 4
    %v9562 = vadd.f32 %v9560, %v9561
    %v9563 = vrot.slane %v9562, 2
    %v9564 = vadd.f32 %v9562, %v9563
    %v9565 = vrot.slane %v9564, 1
    %v9566 = vadd.f32 %v9564, %v9565
    %v9567 = vld [vmem:[#allocation18] sm:$0xf]
    %v9569 = vlaneseq
    %v9570 = vshrl.u32 %v9569, 7
    %v9571 = vsub.s32 0, %v9570
    %v9572 = vrot.slane %v9567, %v9571
    %v9573 = vlaneseq
    %v9574 = vshrl.u32 %v9573, 7
    %v9575 = vsub.s32 1, %v9574
    %v9576 = vrot.slane %v9567, %v9575
    %v9577 = vlaneseq
    %v9578 = vshrl.u32 %v9577, 7
    %v9579 = vsub.s32 2, %v9578
    %v9580 = vrot.slane %v9567, %v9579
    %v9581 = vlaneseq
    %v9582 = vshrl.u32 %v9581, 7
    %v9583 = vsub.s32 3, %v9582
    %v9584 = vrot.slane %v9567, %v9583
    %v9589 = vmul.f32 %v9547, %v9572
    %v9590 = vmul.f32 %v9553, %v9576
    %v9591 = vmul.f32 %v9559, %v9580
    %v9592 = vmul.f32 %v9566, %v9584
    %vm9593 = vcmask 1040384
    %v9594 = vsel %vm9593, %v9589, 0.0
    %v9595 = vsel %vm9593, %v9590, 0.0
    %v9596 = vadd.f32 %v9594, %v9595
    %v9597 = vsel %vm9593, %v9591, 0.0
    %v9598 = vadd.f32 %v9596, %v9597
    %vm9599 = vcmask 942080
    %v9600 = vsel %vm9599, %v9592, 0.0
    %v9601 = vadd.f32 %v9598, %v9600
    %9602 = vadd.xlane.f32.xlu0 %v9601
    %v9603 = vpop.xlane.xlu0 %9602
    %v9604 = vld [vmem:[#allocation3] sm:$0x1]
    %v9605 = vadd.f32 %v9603, %v9604
    %v9606 = vsub.f32 0.0, %v9605
    %v9607 = vmul.f32 %v9606, 1.442695
    %v9608 = vpow.pop %v9607
    %v9609 = vadd.f32 %v9608, 1.0
    %v9610 = vrcp.pop %v9609
    %v9611 = vmul.f32 1.0, %v9610
    %vm9612 = vcmask 0
    %9613 = vst.msk [vmem:[#allocation19] sm:$0x1] %vm9612, %v9611
    %vm9614 = vcmp.ge.f32.partialorder %v9611, 0.5
    %v9615 = vsel %vm9614, 1.0, 0.0
    %9616 = vst.msk [vmem:[#allocation20] sm:$0x1] %vm9612, %v9615
    %v9617 = vlaneseq
    %v9618 = vshrl.u32 %v9617, 7
    %v9619 = vlaneseq
    %v9620 = vand.u32 %v9619, 127
    %vm9621 = vcmp.eq.s32.totalorder %v9618, %v9620
    %v9622 = vsel %vm9621, %v9536, 0.0
    %vm9623 = vcmask 64512
    %v9624 = vsel %vm9623, %v9622, 0.0
    %v9625 = vrot.slane %v9624, 4
    %v9626 = vadd.f32 %v9624, %v9625
    %v9627 = vrot.slane %v9626, 2
    %v9628 = vadd.f32 %v9626, %v9627
    %v9629 = vrot.slane %v9628, 1
    %v9630 = vadd.f32 %v9628, %v9629
    %vm9631 = vcmask 57344
    %9632 = vst.msk [vmem:[#allocation22] sm:$0x1] %vm9631, %v9630
    // Predicated region
    $region94: #{forward.1} parent=1 // pred_check
      _
    $region95: #{forward.1} parent=1 // pred_check_branch
      %9634 = sbr.rel (0) target = $region97
    $region96: #{forward.1} parent=1 // pred_region
      %s9636 = ssub.s32 16, 16
      %9637 = vsyncadd [#allocation6], %s9636
      %s9639 = sshll.u32 [#allocation19], 4
      %s9640 = int_to_ptr.vmem [resolvable:$true] %s9639
      %9642 = dma.vmem_to_hbm [thread:$0]  %s9640, 16, %s14, [#allocation6]
    $region97: #{forward.1} parent=1 // pred_fallthru
      _
    // Predicated region
    $region98: #{forward.1} parent=1 // pred_check
      _
    $region99: #{forward.1} parent=1 // pred_check_branch
      %9644 = sbr.rel (0) target = $region101
    $region100: #{forward.1} parent=1 // pred_region
      %s9646 = ssub.s32 16, 16
      %9647 = vsyncadd [#allocation21], %s9646
      %s9649 = sshll.u32 [#allocation20], 4
      %s9650 = int_to_ptr.vmem [resolvable:$true] %s9649
      %9652 = dma.vmem_to_hbm [thread:$0]  %s9650, 16, %s15, [#allocation21]
    $region101: #{forward.1} parent=1 // pred_fallthru
      _
    // Predicated region
    $region102: #{forward.1} parent=1 // pred_check
      _
    $region103: #{forward.1} parent=1 // pred_check_branch
      %9654 = sbr.rel (0) target = $region105
    $region104: #{forward.1} parent=1 // pred_region
      %s9656 = ssub.s32 16, 16
      %9657 = vsyncadd [#allocation21], %s9656
      %s9659 = sshll.u32 [#allocation22], 4
      %s9660 = int_to_ptr.vmem [resolvable:$true] %s9659
      %9662 = dma.vmem_to_hbm [thread:$0]  %s9660, 16, %s16, [#allocation21]
    $region105: #{forward.1} parent=1 // pred_fallthru
      _
    // Predicated region
    $region106: #{forward.1} parent=1 // pred_check
      _
    $region107: #{forward.1} parent=1 // pred_check_branch
      %9664 = sbr.rel (0) target = $region109
    $region108: #{forward.1} parent=1 // pred_region
      %9665 = dma.done [#allocation6], 16
    $region109: #{forward.1} parent=1 // pred_fallthru
      _
    // Predicated region
    $region110: #{forward.1} parent=1 // pred_check
      _
    $region111: #{forward.1} parent=1 // pred_check_branch
      %9667 = sbr.rel (0) target = $region113
    $region112: #{forward.1} parent=1 // pred_region
      %9668 = dma.done [#allocation21], 16
    $region113: #{forward.1} parent=1 // pred_fallthru
      _
    // Predicated region
    $region114: #{forward.1} parent=1 // pred_check
      _
    $region115: #{forward.1} parent=1 // pred_check_branch
      %9670 = sbr.rel (0) target = $region117
    $region116: #{forward.1} parent=1 // pred_region
      %9671 = dma.done [#allocation21], 16
    $region117: #{forward.1} parent=1 // pred_fallthru
      _
    %9672 = vsyncpa [#allocation5], 1
    %9673 = vsyncpa [#allocation8], 1
    %9674 = vsyncpa [#allocation11], 1
    %9675 = vsyncpa [#allocation14], 1
    %9676 = vsyncpa [#allocation17], 1
    %9677 = vsyncpa [#allocation6], 1
    %9678 = vsyncpa [#allocation21], 1

</llo_original>
